<compile_context>
chip_gen: v6e
topology: v6e:2x2x1
jax: 0.10.0
libtpu: 0.0.40
codegen_flags: <defaults>
</compile_context>

<pallas_src>
import functools

import jax
import jax.numpy as jnp
from jax import lax
from jax.experimental import pallas as pl
from jax.experimental.pallas import tpu as pltpu


def _curve_ca_kernel(x_ref, w1_ref, b1_ref, w2_ref, b2_ref, w3_ref, b3_ref,
                     o_ref, *, H, W, C, n_curve):
    HW = H * W
    x_cf = x_ref[0].astype(jnp.float32)                      # (C, H*W) lane-dense

    # ---- flat-index iotas for boundary masks (float path: no int div/mod) ----
    idx_i = lax.broadcasted_iota(jnp.int32, (1, HW), 1)
    idx_f = idx_i.astype(jnp.float32)
    row_f = jnp.floor(idx_f / float(W))                       # h = idx // W
    col_f = idx_f - row_f * float(W)                          # w = idx %  W

    # Separable validity masks for spatial offsets -2..2 (covers 5x5 and 3x3).
    #   vy[o]: 0 <= h + o < H      vx[o]: 0 <= w + o < W
    vy = {o: jnp.logical_and(idx_i >= (-o) * W, idx_i < (H - o) * W)
          for o in range(-2, 3)}
    vx = {o: jnp.logical_and(col_f >= float(-o), col_f < float(W - o))
          for o in range(-2, 3)}

    def conv_relu(inp_cf, w_s, b_s, K, P):
        """KxK conv (stride 1, zero pad P) + ReLU via shift-and-accumulate on
        lane-dense (C, H*W) planes.  Returns a list of C rows of shape (1, H*W)."""
        accs = [jnp.zeros((1, HW), jnp.float32) + b_s[co] for co in range(C)]
        for dy in range(K):
            oy = dy - P
            for dx in range(K):
                ox = dx - P
                s = oy * W + ox                               # flat tap offset
                sh = inp_cf if s == 0 else pltpu.roll(inp_cf, (-s) % HW, axis=1)
                tap = jnp.where(jnp.logical_and(vy[oy], vx[ox]), sh, 0.0)
                rows = [tap[ci:ci + 1, :] for ci in range(C)]
                for co in range(C):
                    acc = accs[co]
                    for ci in range(C):
                        wv = w_s[((co * C + ci) * K + dy) * K + dx]
                        acc = acc + wv * rows[ci]
                    accs[co] = acc
        return [jnp.maximum(a, 0.0) for a in accs]

    # conv1: 5x5 pad 2 + ReLU;  conv2: 3x3 pad 1 + ReLU (on the post-ReLU h1)
    h1_rows = conv_relu(x_cf, w1_ref, b1_ref, 5, 2)
    h1_cf = jnp.concatenate(h1_rows, axis=0)                  # (C, H*W)
    h2_rows = conv_relu(h1_cf, w2_ref, b2_ref, 3, 1)

    # conv3: 1x1 + sigmoid -> per-curve lane-dense rows a_j of shape (1, H*W)
    a_rows = []
    for j in range(n_curve):
        acc = jnp.zeros((1, HW), jnp.float32) + b3_ref[j]
        for ci in range(C):
            acc = acc + w3_ref[j * C + ci] * h2_rows[ci]
        a_rows.append(jax.nn.sigmoid(acc))

    # curve adjustment: clamp to [0,1] via relu(x)-relu(x-1), then n_curve steps
    y = jnp.maximum(x_cf, 0.0) - jnp.maximum(x_cf - 1.0, 0.0)
    for j in range(n_curve):
        y = y + a_rows[j] * y * (1.0 - y)

    o_ref[0] = y.astype(o_ref.dtype)


def prepare_curve_ca_params(w1, b1, w2, b2, w3, b3):
    """One-time weight prep: flatten conv weights (OIHW) to 1-D SMEM tables.
    Kept out of the per-call path (perf-review item 9)."""
    return dict(w1=jnp.asarray(w1, jnp.float32).reshape(-1),
                b1=jnp.asarray(b1, jnp.float32),
                w2=jnp.asarray(w2, jnp.float32).reshape(-1),
                b2=jnp.asarray(b2, jnp.float32),
                w3=jnp.asarray(w3, jnp.float32).reshape(-1),
                b3=jnp.asarray(b3, jnp.float32))


@functools.partial(jax.jit, static_argnums=(2,))
def curve_ca_layer(x, params, n_curve):
    """x: (N, C, H, W) NCHW float array.  params: from prepare_curve_ca_params."""
    N, C, H, W = x.shape
    HW = H * W
    x_flat = x.reshape(N, C, HW)                              # metadata-only view

    kernel = functools.partial(_curve_ca_kernel, H=H, W=W, C=C,
                               n_curve=n_curve)
    smem = pl.BlockSpec(memory_space=pltpu.MemorySpace.SMEM)

    out = pl.pallas_call(
        kernel,
        out_shape=jax.ShapeDtypeStruct((N, C, HW), x.dtype),
        grid=(N,),
        in_specs=[pl.BlockSpec((1, C, HW), lambda n: (n, 0, 0)),
                  smem, smem, smem, smem, smem, smem],
        out_specs=pl.BlockSpec((1, C, HW), lambda n: (n, 0, 0)),
        compiler_params=pltpu.CompilerParams(
            dimension_semantics=("parallel",)),
    )(x_flat, params["w1"], params["b1"], params["w2"], params["b2"],
      params["w3"], params["b3"])
    return out.reshape(N, C, H, W)                            # metadata-only


def curve_ca_reference(x, w1, b1, w2, b2, w3, b3, n_curve):
    """Pure-JAX reference matching the PyTorch module (NCHW, OIHW weights)."""
    dn = ('NCHW', 'OIHW', 'NCHW')
    h = lax.conv_general_dilated(x, w1, (1, 1), [(2, 2), (2, 2)],
                                 dimension_numbers=dn) + b1[None, :, None, None]
    h = jnp.maximum(h, 0.0)
    h = lax.conv_general_dilated(h, w2, (1, 1), [(1, 1), (1, 1)],
                                 dimension_numbers=dn) + b2[None, :, None, None]
    h = jnp.maximum(h, 0.0)
    a = lax.conv_general_dilated(h, w3, (1, 1), [(0, 0), (0, 0)],
                                 dimension_numbers=dn) + b3[None, :, None, None]
    a = jax.nn.sigmoid(a)
    y = jnp.maximum(x, 0.0) - jnp.maximum(x - 1.0, 0.0)
    for i in range(n_curve):
        y = y + a[:, i:i + 1] * y * (1.0 - y)
    return y


if __name__ == "__main__":
    N, C, H, W = 2, 4, 16, 16
    n_curve = 3

    key = jax.random.PRNGKey(0)
    kx, k1, k2, k3, k4, k5, k6 = jax.random.split(key, 7)

    x = jax.random.normal(kx, (N, C, H, W), jnp.float32)

    # Deterministic parameters (PyTorch Conv2d OIHW layout).
    w1 = jax.random.normal(k1, (C, C, 5, 5), jnp.float32) * 0.1
    b1 = jax.random.normal(k2, (C,), jnp.float32) * 0.1
    w2 = jax.random.normal(k3, (C, C, 3, 3), jnp.float32) * 0.1
    b2 = jax.random.normal(k4, (C,), jnp.float32) * 0.1
    w3 = jax.random.normal(k5, (n_curve, C, 1, 1), jnp.float32) * 0.1
    b3 = jax.random.normal(k6, (n_curve,), jnp.float32) * 0.1

    params = prepare_curve_ca_params(w1, b1, w2, b2, w3, b3)

    out = jax.block_until_ready(curve_ca_layer(x, params, n_curve))
    ref = jax.block_until_ready(
        curve_ca_reference(x, w1, b1, w2, b2, w3, b3, n_curve))

    assert out.shape == (N, C, H, W), out.shape
    err = float(jnp.max(jnp.abs(out - ref)))
    assert err < 1e-4, err

    print("KERNEL_OK")
</pallas_src>

<mosaic_0001>
module attributes {stable_mosaic.version = 11 : i64} {
  func.func @_curve_ca_kernel(%arg0: i32, %arg1: memref<1x4x256xf32, #tpu.memory_space<vmem>>, %arg2: memref<400xf32, #tpu.memory_space<smem>>, %arg3: memref<4xf32, #tpu.memory_space<smem>>, %arg4: memref<144xf32, #tpu.memory_space<smem>>, %arg5: memref<4xf32, #tpu.memory_space<smem>>, %arg6: memref<12xf32, #tpu.memory_space<smem>>, %arg7: memref<3xf32, #tpu.memory_space<smem>>, %arg8: memref<1x4x256xf32, #tpu.memory_space<vmem>>) attributes {dimension_semantics = [#tpu.dimension_semantics<parallel>], iteration_bounds = array<i64: 2>, scalar_prefetch = 0 : i64, scratch_operands = 0 : i64, tpu.core_type = #tpu.core_type<tc>, window_params = [{transform_indices = @transform_0, window_bounds = array<i64: 1, 4, 256>}, {transform_indices = @transform_1, window_bounds = array<i64: 400>}, {transform_indices = @transform_2, window_bounds = array<i64: 4>}, {transform_indices = @transform_3, window_bounds = array<i64: 144>}, {transform_indices = @transform_4, window_bounds = array<i64: 4>}, {transform_indices = @transform_5, window_bounds = array<i64: 12>}, {transform_indices = @transform_6, window_bounds = array<i64: 3>}, {transform_indices = @transform_7, window_bounds = array<i64: 1, 4, 256>}]} {
    %c0 = arith.constant 0 : index
    %c0_0 = arith.constant 0 : index
    %c0_1 = arith.constant 0 : index
    %0 = vector.load %arg1[%c0, %c0_0, %c0_1] : memref<1x4x256xf32, #tpu.memory_space<vmem>>, vector<1x4x256xf32>
    %1 = vector.shape_cast %0 : vector<1x4x256xf32> to vector<4x256xf32>
    %2 = tpu.iota {dimensions = array<i32: 1>} : vector<1x256xi32>
    %3 = arith.sitofp %2 : vector<1x256xi32> to vector<1x256xf32>
    %cst = arith.constant 1.600000e+01 : f32
    %4 = vector.broadcast %cst : f32 to vector<1x256xf32>
    %5 = arith.divf %3, %4 : vector<1x256xf32>
    %6 = math.floor %5 : vector<1x256xf32>
    %cst_2 = arith.constant 1.600000e+01 : f32
    %7 = vector.broadcast %cst_2 : f32 to vector<1x256xf32>
    %8 = arith.mulf %6, %7 : vector<1x256xf32>
    %9 = arith.subf %3, %8 : vector<1x256xf32>
    %c32_i32 = arith.constant 32 : i32
    %10 = vector.broadcast %c32_i32 : i32 to vector<1x256xi32>
    %11 = arith.cmpi sge, %2, %10 : vector<1x256xi32>
    %c288_i32 = arith.constant 288 : i32
    %12 = vector.broadcast %c288_i32 : i32 to vector<1x256xi32>
    %13 = arith.cmpi slt, %2, %12 : vector<1x256xi32>
    %14 = arith.andi %11, %13 : vector<1x256xi1>
    %c16_i32 = arith.constant 16 : i32
    %15 = vector.broadcast %c16_i32 : i32 to vector<1x256xi32>
    %16 = arith.cmpi sge, %2, %15 : vector<1x256xi32>
    %c272_i32 = arith.constant 272 : i32
    %17 = vector.broadcast %c272_i32 : i32 to vector<1x256xi32>
    %18 = arith.cmpi slt, %2, %17 : vector<1x256xi32>
    %19 = arith.andi %16, %18 : vector<1x256xi1>
    %c0_i32 = arith.constant 0 : i32
    %20 = vector.broadcast %c0_i32 : i32 to vector<1x256xi32>
    %21 = arith.cmpi sge, %2, %20 : vector<1x256xi32>
    %c256_i32 = arith.constant 256 : i32
    %22 = vector.broadcast %c256_i32 : i32 to vector<1x256xi32>
    %23 = arith.cmpi slt, %2, %22 : vector<1x256xi32>
    %24 = arith.andi %21, %23 : vector<1x256xi1>
    %c-16_i32 = arith.constant -16 : i32
    %25 = vector.broadcast %c-16_i32 : i32 to vector<1x256xi32>
    %26 = arith.cmpi sge, %2, %25 : vector<1x256xi32>
    %c240_i32 = arith.constant 240 : i32
    %27 = vector.broadcast %c240_i32 : i32 to vector<1x256xi32>
    %28 = arith.cmpi slt, %2, %27 : vector<1x256xi32>
    %29 = arith.andi %26, %28 : vector<1x256xi1>
    %c-32_i32 = arith.constant -32 : i32
    %30 = vector.broadcast %c-32_i32 : i32 to vector<1x256xi32>
    %31 = arith.cmpi sge, %2, %30 : vector<1x256xi32>
    %c224_i32 = arith.constant 224 : i32
    %32 = vector.broadcast %c224_i32 : i32 to vector<1x256xi32>
    %33 = arith.cmpi slt, %2, %32 : vector<1x256xi32>
    %34 = arith.andi %31, %33 : vector<1x256xi1>
    %cst_3 = arith.constant 2.000000e+00 : f32
    %35 = vector.broadcast %cst_3 : f32 to vector<1x256xf32>
    %36 = arith.cmpf oge, %9, %35 : vector<1x256xf32>
    %cst_4 = arith.constant 1.800000e+01 : f32
    %37 = vector.broadcast %cst_4 : f32 to vector<1x256xf32>
    %38 = arith.cmpf olt, %9, %37 : vector<1x256xf32>
    %39 = arith.andi %36, %38 : vector<1x256xi1>
    %cst_5 = arith.constant 1.000000e+00 : f32
    %40 = vector.broadcast %cst_5 : f32 to vector<1x256xf32>
    %41 = arith.cmpf oge, %9, %40 : vector<1x256xf32>
    %cst_6 = arith.constant 1.700000e+01 : f32
    %42 = vector.broadcast %cst_6 : f32 to vector<1x256xf32>
    %43 = arith.cmpf olt, %9, %42 : vector<1x256xf32>
    %44 = arith.andi %41, %43 : vector<1x256xi1>
    %cst_7 = arith.constant 0.000000e+00 : f32
    %45 = vector.broadcast %cst_7 : f32 to vector<1x256xf32>
    %46 = arith.cmpf oge, %9, %45 : vector<1x256xf32>
    %cst_8 = arith.constant 1.600000e+01 : f32
    %47 = vector.broadcast %cst_8 : f32 to vector<1x256xf32>
    %48 = arith.cmpf olt, %9, %47 : vector<1x256xf32>
    %49 = arith.andi %46, %48 : vector<1x256xi1>
    %cst_9 = arith.constant -1.000000e+00 : f32
    %50 = vector.broadcast %cst_9 : f32 to vector<1x256xf32>
    %51 = arith.cmpf oge, %9, %50 : vector<1x256xf32>
    %cst_10 = arith.constant 1.500000e+01 : f32
    %52 = vector.broadcast %cst_10 : f32 to vector<1x256xf32>
    %53 = arith.cmpf olt, %9, %52 : vector<1x256xf32>
    %54 = arith.andi %51, %53 : vector<1x256xi1>
    %cst_11 = arith.constant -2.000000e+00 : f32
    %55 = vector.broadcast %cst_11 : f32 to vector<1x256xf32>
    %56 = arith.cmpf oge, %9, %55 : vector<1x256xf32>
    %cst_12 = arith.constant 1.400000e+01 : f32
    %57 = vector.broadcast %cst_12 : f32 to vector<1x256xf32>
    %58 = arith.cmpf olt, %9, %57 : vector<1x256xf32>
    %59 = arith.andi %56, %58 : vector<1x256xi1>
    %cst_13 = arith.constant 0.000000e+00 : f32
    %60 = vector.broadcast %cst_13 : f32 to vector<1x256xf32>
    %c0_14 = arith.constant 0 : index
    %61 = memref.load %arg3[%c0_14] : memref<4xf32, #tpu.memory_space<smem>>
    %62 = vector.broadcast %61 : f32 to vector<1x256xf32>
    %63 = arith.addf %60, %62 : vector<1x256xf32>
    %cst_15 = arith.constant 0.000000e+00 : f32
    %64 = vector.broadcast %cst_15 : f32 to vector<1x256xf32>
    %c1 = arith.constant 1 : index
    %65 = memref.load %arg3[%c1] : memref<4xf32, #tpu.memory_space<smem>>
    %66 = vector.broadcast %65 : f32 to vector<1x256xf32>
    %67 = arith.addf %64, %66 : vector<1x256xf32>
    %cst_16 = arith.constant 0.000000e+00 : f32
    %68 = vector.broadcast %cst_16 : f32 to vector<1x256xf32>
    %c2 = arith.constant 2 : index
    %69 = memref.load %arg3[%c2] : memref<4xf32, #tpu.memory_space<smem>>
    %70 = vector.broadcast %69 : f32 to vector<1x256xf32>
    %71 = arith.addf %68, %70 : vector<1x256xf32>
    %cst_17 = arith.constant 0.000000e+00 : f32
    %72 = vector.broadcast %cst_17 : f32 to vector<1x256xf32>
    %c3 = arith.constant 3 : index
    %73 = memref.load %arg3[%c3] : memref<4xf32, #tpu.memory_space<smem>>
    %74 = vector.broadcast %73 : f32 to vector<1x256xf32>
    %75 = arith.addf %72, %74 : vector<1x256xf32>
    %c34_i32 = arith.constant 34 : i32
    %76 = tpu.dynamic_rotate %1 by %c34_i32 dim 1 : vector<4x256xf32>, i32 -> vector<4x256xf32>
    %77 = arith.andi %14, %39 : vector<1x256xi1>
    %cst_18 = arith.constant 0.000000e+00 : f32
    %78 = vector.shape_cast %77 : vector<1x256xi1> to vector<1x256xi1>
    %79 = vector.broadcast %78 : vector<1x256xi1> to vector<4x256xi1>
    %80 = vector.broadcast %cst_18 : f32 to vector<4x256xf32>
    %81 = arith.select %79, %76, %80 : vector<4x256xi1>, vector<4x256xf32>
    %82 = vector.extract_strided_slice %81 {offsets = [0, 0], sizes = [1, 256], strides = [1, 1]} : vector<4x256xf32> to vector<1x256xf32>
    %83 = vector.extract_strided_slice %81 {offsets = [1, 0], sizes = [1, 256], strides = [1, 1]} : vector<4x256xf32> to vector<1x256xf32>
    %84 = vector.extract_strided_slice %81 {offsets = [2, 0], sizes = [1, 256], strides = [1, 1]} : vector<4x256xf32> to vector<1x256xf32>
    %85 = vector.extract_strided_slice %81 {offsets = [3, 0], sizes = [1, 256], strides = [1, 1]} : vector<4x256xf32> to vector<1x256xf32>
    %c0_19 = arith.constant 0 : index
    %86 = memref.load %arg2[%c0_19] : memref<400xf32, #tpu.memory_space<smem>>
    %87 = vector.broadcast %86 : f32 to vector<1x256xf32>
    %88 = arith.mulf %87, %82 : vector<1x256xf32>
    %89 = arith.addf %63, %88 : vector<1x256xf32>
    %c25 = arith.constant 25 : index
    %90 = memref.load %arg2[%c25] : memref<400xf32, #tpu.memory_space<smem>>
    %91 = vector.broadcast %90 : f32 to vector<1x256xf32>
    %92 = arith.mulf %91, %83 : vector<1x256xf32>
    %93 = arith.addf %89, %92 : vector<1x256xf32>
    %c50 = arith.constant 50 : index
    %94 = memref.load %arg2[%c50] : memref<400xf32, #tpu.memory_space<smem>>
    %95 = vector.broadcast %94 : f32 to vector<1x256xf32>
    %96 = arith.mulf %95, %84 : vector<1x256xf32>
    %97 = arith.addf %93, %96 : vector<1x256xf32>
    %c75 = arith.constant 75 : index
    %98 = memref.load %arg2[%c75] : memref<400xf32, #tpu.memory_space<smem>>
    %99 = vector.broadcast %98 : f32 to vector<1x256xf32>
    %100 = arith.mulf %99, %85 : vector<1x256xf32>
    %101 = arith.addf %97, %100 : vector<1x256xf32>
    %c100 = arith.constant 100 : index
    %102 = memref.load %arg2[%c100] : memref<400xf32, #tpu.memory_space<smem>>
    %103 = vector.broadcast %102 : f32 to vector<1x256xf32>
    %104 = arith.mulf %103, %82 : vector<1x256xf32>
    %105 = arith.addf %67, %104 : vector<1x256xf32>
    %c125 = arith.constant 125 : index
    %106 = memref.load %arg2[%c125] : memref<400xf32, #tpu.memory_space<smem>>
    %107 = vector.broadcast %106 : f32 to vector<1x256xf32>
    %108 = arith.mulf %107, %83 : vector<1x256xf32>
    %109 = arith.addf %105, %108 : vector<1x256xf32>
    %c150 = arith.constant 150 : index
    %110 = memref.load %arg2[%c150] : memref<400xf32, #tpu.memory_space<smem>>
    %111 = vector.broadcast %110 : f32 to vector<1x256xf32>
    %112 = arith.mulf %111, %84 : vector<1x256xf32>
    %113 = arith.addf %109, %112 : vector<1x256xf32>
    %c175 = arith.constant 175 : index
    %114 = memref.load %arg2[%c175] : memref<400xf32, #tpu.memory_space<smem>>
    %115 = vector.broadcast %114 : f32 to vector<1x256xf32>
    %116 = arith.mulf %115, %85 : vector<1x256xf32>
    %117 = arith.addf %113, %116 : vector<1x256xf32>
    %c200 = arith.constant 200 : index
    %118 = memref.load %arg2[%c200] : memref<400xf32, #tpu.memory_space<smem>>
    %119 = vector.broadcast %118 : f32 to vector<1x256xf32>
    %120 = arith.mulf %119, %82 : vector<1x256xf32>
    %121 = arith.addf %71, %120 : vector<1x256xf32>
    %c225 = arith.constant 225 : index
    %122 = memref.load %arg2[%c225] : memref<400xf32, #tpu.memory_space<smem>>
    %123 = vector.broadcast %122 : f32 to vector<1x256xf32>
    %124 = arith.mulf %123, %83 : vector<1x256xf32>
    %125 = arith.addf %121, %124 : vector<1x256xf32>
    %c250 = arith.constant 250 : index
    %126 = memref.load %arg2[%c250] : memref<400xf32, #tpu.memory_space<smem>>
    %127 = vector.broadcast %126 : f32 to vector<1x256xf32>
    %128 = arith.mulf %127, %84 : vector<1x256xf32>
    %129 = arith.addf %125, %128 : vector<1x256xf32>
    %c275 = arith.constant 275 : index
    %130 = memref.load %arg2[%c275] : memref<400xf32, #tpu.memory_space<smem>>
    %131 = vector.broadcast %130 : f32 to vector<1x256xf32>
    %132 = arith.mulf %131, %85 : vector<1x256xf32>
    %133 = arith.addf %129, %132 : vector<1x256xf32>
    %c300 = arith.constant 300 : index
    %134 = memref.load %arg2[%c300] : memref<400xf32, #tpu.memory_space<smem>>
    %135 = vector.broadcast %134 : f32 to vector<1x256xf32>
    %136 = arith.mulf %135, %82 : vector<1x256xf32>
    %137 = arith.addf %75, %136 : vector<1x256xf32>
    %c325 = arith.constant 325 : index
    %138 = memref.load %arg2[%c325] : memref<400xf32, #tpu.memory_space<smem>>
    %139 = vector.broadcast %138 : f32 to vector<1x256xf32>
    %140 = arith.mulf %139, %83 : vector<1x256xf32>
    %141 = arith.addf %137, %140 : vector<1x256xf32>
    %c350 = arith.constant 350 : index
    %142 = memref.load %arg2[%c350] : memref<400xf32, #tpu.memory_space<smem>>
    %143 = vector.broadcast %142 : f32 to vector<1x256xf32>
    %144 = arith.mulf %143, %84 : vector<1x256xf32>
    %145 = arith.addf %141, %144 : vector<1x256xf32>
    %c375 = arith.constant 375 : index
    %146 = memref.load %arg2[%c375] : memref<400xf32, #tpu.memory_space<smem>>
    %147 = vector.broadcast %146 : f32 to vector<1x256xf32>
    %148 = arith.mulf %147, %85 : vector<1x256xf32>
    %149 = arith.addf %145, %148 : vector<1x256xf32>
    %c33_i32 = arith.constant 33 : i32
    %150 = tpu.dynamic_rotate %1 by %c33_i32 dim 1 : vector<4x256xf32>, i32 -> vector<4x256xf32>
    %151 = arith.andi %14, %44 : vector<1x256xi1>
    %cst_20 = arith.constant 0.000000e+00 : f32
    %152 = vector.shape_cast %151 : vector<1x256xi1> to vector<1x256xi1>
    %153 = vector.broadcast %152 : vector<1x256xi1> to vector<4x256xi1>
    %154 = vector.broadcast %cst_20 : f32 to vector<4x256xf32>
    %155 = arith.select %153, %150, %154 : vector<4x256xi1>, vector<4x256xf32>
    %156 = vector.extract_strided_slice %155 {offsets = [0, 0], sizes = [1, 256], strides = [1, 1]} : vector<4x256xf32> to vector<1x256xf32>
    %157 = vector.extract_strided_slice %155 {offsets = [1, 0], sizes = [1, 256], strides = [1, 1]} : vector<4x256xf32> to vector<1x256xf32>
    %158 = vector.extract_strided_slice %155 {offsets = [2, 0], sizes = [1, 256], strides = [1, 1]} : vector<4x256xf32> to vector<1x256xf32>
    %159 = vector.extract_strided_slice %155 {offsets = [3, 0], sizes = [1, 256], strides = [1, 1]} : vector<4x256xf32> to vector<1x256xf32>
    %c1_21 = arith.constant 1 : index
    %160 = memref.load %arg2[%c1_21] : memref<400xf32, #tpu.memory_space<smem>>
    %161 = vector.broadcast %160 : f32 to vector<1x256xf32>
    %162 = arith.mulf %161, %156 : vector<1x256xf32>
    %163 = arith.addf %101, %162 : vector<1x256xf32>
    %c26 = arith.constant 26 : index
    %164 = memref.load %arg2[%c26] : memref<400xf32, #tpu.memory_space<smem>>
    %165 = vector.broadcast %164 : f32 to vector<1x256xf32>
    %166 = arith.mulf %165, %157 : vector<1x256xf32>
    %167 = arith.addf %163, %166 : vector<1x256xf32>
    %c51 = arith.constant 51 : index
    %168 = memref.load %arg2[%c51] : memref<400xf32, #tpu.memory_space<smem>>
    %169 = vector.broadcast %168 : f32 to vector<1x256xf32>
    %170 = arith.mulf %169, %158 : vector<1x256xf32>
    %171 = arith.addf %167, %170 : vector<1x256xf32>
    %c76 = arith.constant 76 : index
    %172 = memref.load %arg2[%c76] : memref<400xf32, #tpu.memory_space<smem>>
    %173 = vector.broadcast %172 : f32 to vector<1x256xf32>
    %174 = arith.mulf %173, %159 : vector<1x256xf32>
    %175 = arith.addf %171, %174 : vector<1x256xf32>
    %c101 = arith.constant 101 : index
    %176 = memref.load %arg2[%c101] : memref<400xf32, #tpu.memory_space<smem>>
    %177 = vector.broadcast %176 : f32 to vector<1x256xf32>
    %178 = arith.mulf %177, %156 : vector<1x256xf32>
    %179 = arith.addf %117, %178 : vector<1x256xf32>
    %c126 = arith.constant 126 : index
    %180 = memref.load %arg2[%c126] : memref<400xf32, #tpu.memory_space<smem>>
    %181 = vector.broadcast %180 : f32 to vector<1x256xf32>
    %182 = arith.mulf %181, %157 : vector<1x256xf32>
    %183 = arith.addf %179, %182 : vector<1x256xf32>
    %c151 = arith.constant 151 : index
    %184 = memref.load %arg2[%c151] : memref<400xf32, #tpu.memory_space<smem>>
    %185 = vector.broadcast %184 : f32 to vector<1x256xf32>
    %186 = arith.mulf %185, %158 : vector<1x256xf32>
    %187 = arith.addf %183, %186 : vector<1x256xf32>
    %c176 = arith.constant 176 : index
    %188 = memref.load %arg2[%c176] : memref<400xf32, #tpu.memory_space<smem>>
    %189 = vector.broadcast %188 : f32 to vector<1x256xf32>
    %190 = arith.mulf %189, %159 : vector<1x256xf32>
    %191 = arith.addf %187, %190 : vector<1x256xf32>
    %c201 = arith.constant 201 : index
    %192 = memref.load %arg2[%c201] : memref<400xf32, #tpu.memory_space<smem>>
    %193 = vector.broadcast %192 : f32 to vector<1x256xf32>
    %194 = arith.mulf %193, %156 : vector<1x256xf32>
    %195 = arith.addf %133, %194 : vector<1x256xf32>
    %c226 = arith.constant 226 : index
    %196 = memref.load %arg2[%c226] : memref<400xf32, #tpu.memory_space<smem>>
    %197 = vector.broadcast %196 : f32 to vector<1x256xf32>
    %198 = arith.mulf %197, %157 : vector<1x256xf32>
    %199 = arith.addf %195, %198 : vector<1x256xf32>
    %c251 = arith.constant 251 : index
    %200 = memref.load %arg2[%c251] : memref<400xf32, #tpu.memory_space<smem>>
    %201 = vector.broadcast %200 : f32 to vector<1x256xf32>
    %202 = arith.mulf %201, %158 : vector<1x256xf32>
    %203 = arith.addf %199, %202 : vector<1x256xf32>
    %c276 = arith.constant 276 : index
    %204 = memref.load %arg2[%c276] : memref<400xf32, #tpu.memory_space<smem>>
    %205 = vector.broadcast %204 : f32 to vector<1x256xf32>
    %206 = arith.mulf %205, %159 : vector<1x256xf32>
    %207 = arith.addf %203, %206 : vector<1x256xf32>
    %c301 = arith.constant 301 : index
    %208 = memref.load %arg2[%c301] : memref<400xf32, #tpu.memory_space<smem>>
    %209 = vector.broadcast %208 : f32 to vector<1x256xf32>
    %210 = arith.mulf %209, %156 : vector<1x256xf32>
    %211 = arith.addf %149, %210 : vector<1x256xf32>
    %c326 = arith.constant 326 : index
    %212 = memref.load %arg2[%c326] : memref<400xf32, #tpu.memory_space<smem>>
    %213 = vector.broadcast %212 : f32 to vector<1x256xf32>
    %214 = arith.mulf %213, %157 : vector<1x256xf32>
    %215 = arith.addf %211, %214 : vector<1x256xf32>
    %c351 = arith.constant 351 : index
    %216 = memref.load %arg2[%c351] : memref<400xf32, #tpu.memory_space<smem>>
    %217 = vector.broadcast %216 : f32 to vector<1x256xf32>
    %218 = arith.mulf %217, %158 : vector<1x256xf32>
    %219 = arith.addf %215, %218 : vector<1x256xf32>
    %c376 = arith.constant 376 : index
    %220 = memref.load %arg2[%c376] : memref<400xf32, #tpu.memory_space<smem>>
    %221 = vector.broadcast %220 : f32 to vector<1x256xf32>
    %222 = arith.mulf %221, %159 : vector<1x256xf32>
    %223 = arith.addf %219, %222 : vector<1x256xf32>
    %c32_i32_22 = arith.constant 32 : i32
    %224 = tpu.dynamic_rotate %1 by %c32_i32_22 dim 1 : vector<4x256xf32>, i32 -> vector<4x256xf32>
    %225 = arith.andi %14, %49 : vector<1x256xi1>
    %cst_23 = arith.constant 0.000000e+00 : f32
    %226 = vector.shape_cast %225 : vector<1x256xi1> to vector<1x256xi1>
    %227 = vector.broadcast %226 : vector<1x256xi1> to vector<4x256xi1>
    %228 = vector.broadcast %cst_23 : f32 to vector<4x256xf32>
    %229 = arith.select %227, %224, %228 : vector<4x256xi1>, vector<4x256xf32>
    %230 = vector.extract_strided_slice %229 {offsets = [0, 0], sizes = [1, 256], strides = [1, 1]} : vector<4x256xf32> to vector<1x256xf32>
    %231 = vector.extract_strided_slice %229 {offsets = [1, 0], sizes = [1, 256], strides = [1, 1]} : vector<4x256xf32> to vector<1x256xf32>
    %232 = vector.extract_strided_slice %229 {offsets = [2, 0], sizes = [1, 256], strides = [1, 1]} : vector<4x256xf32> to vector<1x256xf32>
    %233 = vector.extract_strided_slice %229 {offsets = [3, 0], sizes = [1, 256], strides = [1, 1]} : vector<4x256xf32> to vector<1x256xf32>
    %c2_24 = arith.constant 2 : index
    %234 = memref.load %arg2[%c2_24] : memref<400xf32, #tpu.memory_space<smem>>
    %235 = vector.broadcast %234 : f32 to vector<1x256xf32>
    %236 = arith.mulf %235, %230 : vector<1x256xf32>
    %237 = arith.addf %175, %236 : vector<1x256xf32>
    %c27 = arith.constant 27 : index
    %238 = memref.load %arg2[%c27] : memref<400xf32, #tpu.memory_space<smem>>
    %239 = vector.broadcast %238 : f32 to vector<1x256xf32>
    %240 = arith.mulf %239, %231 : vector<1x256xf32>
    %241 = arith.addf %237, %240 : vector<1x256xf32>
    %c52 = arith.constant 52 : index
    %242 = memref.load %arg2[%c52] : memref<400xf32, #tpu.memory_space<smem>>
    %243 = vector.broadcast %242 : f32 to vector<1x256xf32>
    %244 = arith.mulf %243, %232 : vector<1x256xf32>
    %245 = arith.addf %241, %244 : vector<1x256xf32>
    %c77 = arith.constant 77 : index
    %246 = memref.load %arg2[%c77] : memref<400xf32, #tpu.memory_space<smem>>
    %247 = vector.broadcast %246 : f32 to vector<1x256xf32>
    %248 = arith.mulf %247, %233 : vector<1x256xf32>
    %249 = arith.addf %245, %248 : vector<1x256xf32>
    %c102 = arith.constant 102 : index
    %250 = memref.load %arg2[%c102] : memref<400xf32, #tpu.memory_space<smem>>
    %251 = vector.broadcast %250 : f32 to vector<1x256xf32>
    %252 = arith.mulf %251, %230 : vector<1x256xf32>
    %253 = arith.addf %191, %252 : vector<1x256xf32>
    %c127 = arith.constant 127 : index
    %254 = memref.load %arg2[%c127] : memref<400xf32, #tpu.memory_space<smem>>
    %255 = vector.broadcast %254 : f32 to vector<1x256xf32>
    %256 = arith.mulf %255, %231 : vector<1x256xf32>
    %257 = arith.addf %253, %256 : vector<1x256xf32>
    %c152 = arith.constant 152 : index
    %258 = memref.load %arg2[%c152] : memref<400xf32, #tpu.memory_space<smem>>
    %259 = vector.broadcast %258 : f32 to vector<1x256xf32>
    %260 = arith.mulf %259, %232 : vector<1x256xf32>
    %261 = arith.addf %257, %260 : vector<1x256xf32>
    %c177 = arith.constant 177 : index
    %262 = memref.load %arg2[%c177] : memref<400xf32, #tpu.memory_space<smem>>
    %263 = vector.broadcast %262 : f32 to vector<1x256xf32>
    %264 = arith.mulf %263, %233 : vector<1x256xf32>
    %265 = arith.addf %261, %264 : vector<1x256xf32>
    %c202 = arith.constant 202 : index
    %266 = memref.load %arg2[%c202] : memref<400xf32, #tpu.memory_space<smem>>
    %267 = vector.broadcast %266 : f32 to vector<1x256xf32>
    %268 = arith.mulf %267, %230 : vector<1x256xf32>
    %269 = arith.addf %207, %268 : vector<1x256xf32>
    %c227 = arith.constant 227 : index
    %270 = memref.load %arg2[%c227] : memref<400xf32, #tpu.memory_space<smem>>
    %271 = vector.broadcast %270 : f32 to vector<1x256xf32>
    %272 = arith.mulf %271, %231 : vector<1x256xf32>
    %273 = arith.addf %269, %272 : vector<1x256xf32>
    %c252 = arith.constant 252 : index
    %274 = memref.load %arg2[%c252] : memref<400xf32, #tpu.memory_space<smem>>
    %275 = vector.broadcast %274 : f32 to vector<1x256xf32>
    %276 = arith.mulf %275, %232 : vector<1x256xf32>
    %277 = arith.addf %273, %276 : vector<1x256xf32>
    %c277 = arith.constant 277 : index
    %278 = memref.load %arg2[%c277] : memref<400xf32, #tpu.memory_space<smem>>
    %279 = vector.broadcast %278 : f32 to vector<1x256xf32>
    %280 = arith.mulf %279, %233 : vector<1x256xf32>
    %281 = arith.addf %277, %280 : vector<1x256xf32>
    %c302 = arith.constant 302 : index
    %282 = memref.load %arg2[%c302] : memref<400xf32, #tpu.memory_space<smem>>
    %283 = vector.broadcast %282 : f32 to vector<1x256xf32>
    %284 = arith.mulf %283, %230 : vector<1x256xf32>
    %285 = arith.addf %223, %284 : vector<1x256xf32>
    %c327 = arith.constant 327 : index
    %286 = memref.load %arg2[%c327] : memref<400xf32, #tpu.memory_space<smem>>
    %287 = vector.broadcast %286 : f32 to vector<1x256xf32>
    %288 = arith.mulf %287, %231 : vector<1x256xf32>
    %289 = arith.addf %285, %288 : vector<1x256xf32>
    %c352 = arith.constant 352 : index
    %290 = memref.load %arg2[%c352] : memref<400xf32, #tpu.memory_space<smem>>
    %291 = vector.broadcast %290 : f32 to vector<1x256xf32>
    %292 = arith.mulf %291, %232 : vector<1x256xf32>
    %293 = arith.addf %289, %292 : vector<1x256xf32>
    %c377 = arith.constant 377 : index
    %294 = memref.load %arg2[%c377] : memref<400xf32, #tpu.memory_space<smem>>
    %295 = vector.broadcast %294 : f32 to vector<1x256xf32>
    %296 = arith.mulf %295, %233 : vector<1x256xf32>
    %297 = arith.addf %293, %296 : vector<1x256xf32>
    %c31_i32 = arith.constant 31 : i32
    %298 = tpu.dynamic_rotate %1 by %c31_i32 dim 1 : vector<4x256xf32>, i32 -> vector<4x256xf32>
    %299 = arith.andi %14, %54 : vector<1x256xi1>
    %cst_25 = arith.constant 0.000000e+00 : f32
    %300 = vector.shape_cast %299 : vector<1x256xi1> to vector<1x256xi1>
    %301 = vector.broadcast %300 : vector<1x256xi1> to vector<4x256xi1>
    %302 = vector.broadcast %cst_25 : f32 to vector<4x256xf32>
    %303 = arith.select %301, %298, %302 : vector<4x256xi1>, vector<4x256xf32>
    %304 = vector.extract_strided_slice %303 {offsets = [0, 0], sizes = [1, 256], strides = [1, 1]} : vector<4x256xf32> to vector<1x256xf32>
    %305 = vector.extract_strided_slice %303 {offsets = [1, 0], sizes = [1, 256], strides = [1, 1]} : vector<4x256xf32> to vector<1x256xf32>
    %306 = vector.extract_strided_slice %303 {offsets = [2, 0], sizes = [1, 256], strides = [1, 1]} : vector<4x256xf32> to vector<1x256xf32>
    %307 = vector.extract_strided_slice %303 {offsets = [3, 0], sizes = [1, 256], strides = [1, 1]} : vector<4x256xf32> to vector<1x256xf32>
    %c3_26 = arith.constant 3 : index
    %308 = memref.load %arg2[%c3_26] : memref<400xf32, #tpu.memory_space<smem>>
    %309 = vector.broadcast %308 : f32 to vector<1x256xf32>
    %310 = arith.mulf %309, %304 : vector<1x256xf32>
    %311 = arith.addf %249, %310 : vector<1x256xf32>
    %c28 = arith.constant 28 : index
    %312 = memref.load %arg2[%c28] : memref<400xf32, #tpu.memory_space<smem>>
    %313 = vector.broadcast %312 : f32 to vector<1x256xf32>
    %314 = arith.mulf %313, %305 : vector<1x256xf32>
    %315 = arith.addf %311, %314 : vector<1x256xf32>
    %c53 = arith.constant 53 : index
    %316 = memref.load %arg2[%c53] : memref<400xf32, #tpu.memory_space<smem>>
    %317 = vector.broadcast %316 : f32 to vector<1x256xf32>
    %318 = arith.mulf %317, %306 : vector<1x256xf32>
    %319 = arith.addf %315, %318 : vector<1x256xf32>
    %c78 = arith.constant 78 : index
    %320 = memref.load %arg2[%c78] : memref<400xf32, #tpu.memory_space<smem>>
    %321 = vector.broadcast %320 : f32 to vector<1x256xf32>
    %322 = arith.mulf %321, %307 : vector<1x256xf32>
    %323 = arith.addf %319, %322 : vector<1x256xf32>
    %c103 = arith.constant 103 : index
    %324 = memref.load %arg2[%c103] : memref<400xf32, #tpu.memory_space<smem>>
    %325 = vector.broadcast %324 : f32 to vector<1x256xf32>
    %326 = arith.mulf %325, %304 : vector<1x256xf32>
    %327 = arith.addf %265, %326 : vector<1x256xf32>
    %c128 = arith.constant 128 : index
    %328 = memref.load %arg2[%c128] : memref<400xf32, #tpu.memory_space<smem>>
    %329 = vector.broadcast %328 : f32 to vector<1x256xf32>
    %330 = arith.mulf %329, %305 : vector<1x256xf32>
    %331 = arith.addf %327, %330 : vector<1x256xf32>
    %c153 = arith.constant 153 : index
    %332 = memref.load %arg2[%c153] : memref<400xf32, #tpu.memory_space<smem>>
    %333 = vector.broadcast %332 : f32 to vector<1x256xf32>
    %334 = arith.mulf %333, %306 : vector<1x256xf32>
    %335 = arith.addf %331, %334 : vector<1x256xf32>
    %c178 = arith.constant 178 : index
    %336 = memref.load %arg2[%c178] : memref<400xf32, #tpu.memory_space<smem>>
    %337 = vector.broadcast %336 : f32 to vector<1x256xf32>
    %338 = arith.mulf %337, %307 : vector<1x256xf32>
    %339 = arith.addf %335, %338 : vector<1x256xf32>
    %c203 = arith.constant 203 : index
    %340 = memref.load %arg2[%c203] : memref<400xf32, #tpu.memory_space<smem>>
    %341 = vector.broadcast %340 : f32 to vector<1x256xf32>
    %342 = arith.mulf %341, %304 : vector<1x256xf32>
    %343 = arith.addf %281, %342 : vector<1x256xf32>
    %c228 = arith.constant 228 : index
    %344 = memref.load %arg2[%c228] : memref<400xf32, #tpu.memory_space<smem>>
    %345 = vector.broadcast %344 : f32 to vector<1x256xf32>
    %346 = arith.mulf %345, %305 : vector<1x256xf32>
    %347 = arith.addf %343, %346 : vector<1x256xf32>
    %c253 = arith.constant 253 : index
    %348 = memref.load %arg2[%c253] : memref<400xf32, #tpu.memory_space<smem>>
    %349 = vector.broadcast %348 : f32 to vector<1x256xf32>
    %350 = arith.mulf %349, %306 : vector<1x256xf32>
    %351 = arith.addf %347, %350 : vector<1x256xf32>
    %c278 = arith.constant 278 : index
    %352 = memref.load %arg2[%c278] : memref<400xf32, #tpu.memory_space<smem>>
    %353 = vector.broadcast %352 : f32 to vector<1x256xf32>
    %354 = arith.mulf %353, %307 : vector<1x256xf32>
    %355 = arith.addf %351, %354 : vector<1x256xf32>
    %c303 = arith.constant 303 : index
    %356 = memref.load %arg2[%c303] : memref<400xf32, #tpu.memory_space<smem>>
    %357 = vector.broadcast %356 : f32 to vector<1x256xf32>
    %358 = arith.mulf %357, %304 : vector<1x256xf32>
    %359 = arith.addf %297, %358 : vector<1x256xf32>
    %c328 = arith.constant 328 : index
    %360 = memref.load %arg2[%c328] : memref<400xf32, #tpu.memory_space<smem>>
    %361 = vector.broadcast %360 : f32 to vector<1x256xf32>
    %362 = arith.mulf %361, %305 : vector<1x256xf32>
    %363 = arith.addf %359, %362 : vector<1x256xf32>
    %c353 = arith.constant 353 : index
    %364 = memref.load %arg2[%c353] : memref<400xf32, #tpu.memory_space<smem>>
    %365 = vector.broadcast %364 : f32 to vector<1x256xf32>
    %366 = arith.mulf %365, %306 : vector<1x256xf32>
    %367 = arith.addf %363, %366 : vector<1x256xf32>
    %c378 = arith.constant 378 : index
    %368 = memref.load %arg2[%c378] : memref<400xf32, #tpu.memory_space<smem>>
    %369 = vector.broadcast %368 : f32 to vector<1x256xf32>
    %370 = arith.mulf %369, %307 : vector<1x256xf32>
    %371 = arith.addf %367, %370 : vector<1x256xf32>
    %c30_i32 = arith.constant 30 : i32
    %372 = tpu.dynamic_rotate %1 by %c30_i32 dim 1 : vector<4x256xf32>, i32 -> vector<4x256xf32>
    %373 = arith.andi %14, %59 : vector<1x256xi1>
    %cst_27 = arith.constant 0.000000e+00 : f32
    %374 = vector.shape_cast %373 : vector<1x256xi1> to vector<1x256xi1>
    %375 = vector.broadcast %374 : vector<1x256xi1> to vector<4x256xi1>
    %376 = vector.broadcast %cst_27 : f32 to vector<4x256xf32>
    %377 = arith.select %375, %372, %376 : vector<4x256xi1>, vector<4x256xf32>
    %378 = vector.extract_strided_slice %377 {offsets = [0, 0], sizes = [1, 256], strides = [1, 1]} : vector<4x256xf32> to vector<1x256xf32>
    %379 = vector.extract_strided_slice %377 {offsets = [1, 0], sizes = [1, 256], strides = [1, 1]} : vector<4x256xf32> to vector<1x256xf32>
    %380 = vector.extract_strided_slice %377 {offsets = [2, 0], sizes = [1, 256], strides = [1, 1]} : vector<4x256xf32> to vector<1x256xf32>
    %381 = vector.extract_strided_slice %377 {offsets = [3, 0], sizes = [1, 256], strides = [1, 1]} : vector<4x256xf32> to vector<1x256xf32>
    %c4 = arith.constant 4 : index
    %382 = memref.load %arg2[%c4] : memref<400xf32, #tpu.memory_space<smem>>
    %383 = vector.broadcast %382 : f32 to vector<1x256xf32>
    %384 = arith.mulf %383, %378 : vector<1x256xf32>
    %385 = arith.addf %323, %384 : vector<1x256xf32>
    %c29 = arith.constant 29 : index
    %386 = memref.load %arg2[%c29] : memref<400xf32, #tpu.memory_space<smem>>
    %387 = vector.broadcast %386 : f32 to vector<1x256xf32>
    %388 = arith.mulf %387, %379 : vector<1x256xf32>
    %389 = arith.addf %385, %388 : vector<1x256xf32>
    %c54 = arith.constant 54 : index
    %390 = memref.load %arg2[%c54] : memref<400xf32, #tpu.memory_space<smem>>
    %391 = vector.broadcast %390 : f32 to vector<1x256xf32>
    %392 = arith.mulf %391, %380 : vector<1x256xf32>
    %393 = arith.addf %389, %392 : vector<1x256xf32>
    %c79 = arith.constant 79 : index
    %394 = memref.load %arg2[%c79] : memref<400xf32, #tpu.memory_space<smem>>
    %395 = vector.broadcast %394 : f32 to vector<1x256xf32>
    %396 = arith.mulf %395, %381 : vector<1x256xf32>
    %397 = arith.addf %393, %396 : vector<1x256xf32>
    %c104 = arith.constant 104 : index
    %398 = memref.load %arg2[%c104] : memref<400xf32, #tpu.memory_space<smem>>
    %399 = vector.broadcast %398 : f32 to vector<1x256xf32>
    %400 = arith.mulf %399, %378 : vector<1x256xf32>
    %401 = arith.addf %339, %400 : vector<1x256xf32>
    %c129 = arith.constant 129 : index
    %402 = memref.load %arg2[%c129] : memref<400xf32, #tpu.memory_space<smem>>
    %403 = vector.broadcast %402 : f32 to vector<1x256xf32>
    %404 = arith.mulf %403, %379 : vector<1x256xf32>
    %405 = arith.addf %401, %404 : vector<1x256xf32>
    %c154 = arith.constant 154 : index
    %406 = memref.load %arg2[%c154] : memref<400xf32, #tpu.memory_space<smem>>
    %407 = vector.broadcast %406 : f32 to vector<1x256xf32>
    %408 = arith.mulf %407, %380 : vector<1x256xf32>
    %409 = arith.addf %405, %408 : vector<1x256xf32>
    %c179 = arith.constant 179 : index
    %410 = memref.load %arg2[%c179] : memref<400xf32, #tpu.memory_space<smem>>
    %411 = vector.broadcast %410 : f32 to vector<1x256xf32>
    %412 = arith.mulf %411, %381 : vector<1x256xf32>
    %413 = arith.addf %409, %412 : vector<1x256xf32>
    %c204 = arith.constant 204 : index
    %414 = memref.load %arg2[%c204] : memref<400xf32, #tpu.memory_space<smem>>
    %415 = vector.broadcast %414 : f32 to vector<1x256xf32>
    %416 = arith.mulf %415, %378 : vector<1x256xf32>
    %417 = arith.addf %355, %416 : vector<1x256xf32>
    %c229 = arith.constant 229 : index
    %418 = memref.load %arg2[%c229] : memref<400xf32, #tpu.memory_space<smem>>
    %419 = vector.broadcast %418 : f32 to vector<1x256xf32>
    %420 = arith.mulf %419, %379 : vector<1x256xf32>
    %421 = arith.addf %417, %420 : vector<1x256xf32>
    %c254 = arith.constant 254 : index
    %422 = memref.load %arg2[%c254] : memref<400xf32, #tpu.memory_space<smem>>
    %423 = vector.broadcast %422 : f32 to vector<1x256xf32>
    %424 = arith.mulf %423, %380 : vector<1x256xf32>
    %425 = arith.addf %421, %424 : vector<1x256xf32>
    %c279 = arith.constant 279 : index
    %426 = memref.load %arg2[%c279] : memref<400xf32, #tpu.memory_space<smem>>
    %427 = vector.broadcast %426 : f32 to vector<1x256xf32>
    %428 = arith.mulf %427, %381 : vector<1x256xf32>
    %429 = arith.addf %425, %428 : vector<1x256xf32>
    %c304 = arith.constant 304 : index
    %430 = memref.load %arg2[%c304] : memref<400xf32, #tpu.memory_space<smem>>
    %431 = vector.broadcast %430 : f32 to vector<1x256xf32>
    %432 = arith.mulf %431, %378 : vector<1x256xf32>
    %433 = arith.addf %371, %432 : vector<1x256xf32>
    %c329 = arith.constant 329 : index
    %434 = memref.load %arg2[%c329] : memref<400xf32, #tpu.memory_space<smem>>
    %435 = vector.broadcast %434 : f32 to vector<1x256xf32>
    %436 = arith.mulf %435, %379 : vector<1x256xf32>
    %437 = arith.addf %433, %436 : vector<1x256xf32>
    %c354 = arith.constant 354 : index
    %438 = memref.load %arg2[%c354] : memref<400xf32, #tpu.memory_space<smem>>
    %439 = vector.broadcast %438 : f32 to vector<1x256xf32>
    %440 = arith.mulf %439, %380 : vector<1x256xf32>
    %441 = arith.addf %437, %440 : vector<1x256xf32>
    %c379 = arith.constant 379 : index
    %442 = memref.load %arg2[%c379] : memref<400xf32, #tpu.memory_space<smem>>
    %443 = vector.broadcast %442 : f32 to vector<1x256xf32>
    %444 = arith.mulf %443, %381 : vector<1x256xf32>
    %445 = arith.addf %441, %444 : vector<1x256xf32>
    %c18_i32 = arith.constant 18 : i32
    %446 = tpu.dynamic_rotate %1 by %c18_i32 dim 1 : vector<4x256xf32>, i32 -> vector<4x256xf32>
    %447 = arith.andi %19, %39 : vector<1x256xi1>
    %cst_28 = arith.constant 0.000000e+00 : f32
    %448 = vector.shape_cast %447 : vector<1x256xi1> to vector<1x256xi1>
    %449 = vector.broadcast %448 : vector<1x256xi1> to vector<4x256xi1>
    %450 = vector.broadcast %cst_28 : f32 to vector<4x256xf32>
    %451 = arith.select %449, %446, %450 : vector<4x256xi1>, vector<4x256xf32>
    %452 = vector.extract_strided_slice %451 {offsets = [0, 0], sizes = [1, 256], strides = [1, 1]} : vector<4x256xf32> to vector<1x256xf32>
    %453 = vector.extract_strided_slice %451 {offsets = [1, 0], sizes = [1, 256], strides = [1, 1]} : vector<4x256xf32> to vector<1x256xf32>
    %454 = vector.extract_strided_slice %451 {offsets = [2, 0], sizes = [1, 256], strides = [1, 1]} : vector<4x256xf32> to vector<1x256xf32>
    %455 = vector.extract_strided_slice %451 {offsets = [3, 0], sizes = [1, 256], strides = [1, 1]} : vector<4x256xf32> to vector<1x256xf32>
    %c5 = arith.constant 5 : index
    %456 = memref.load %arg2[%c5] : memref<400xf32, #tpu.memory_space<smem>>
    %457 = vector.broadcast %456 : f32 to vector<1x256xf32>
    %458 = arith.mulf %457, %452 : vector<1x256xf32>
    %459 = arith.addf %397, %458 : vector<1x256xf32>
    %c30 = arith.constant 30 : index
    %460 = memref.load %arg2[%c30] : memref<400xf32, #tpu.memory_space<smem>>
    %461 = vector.broadcast %460 : f32 to vector<1x256xf32>
    %462 = arith.mulf %461, %453 : vector<1x256xf32>
    %463 = arith.addf %459, %462 : vector<1x256xf32>
    %c55 = arith.constant 55 : index
    %464 = memref.load %arg2[%c55] : memref<400xf32, #tpu.memory_space<smem>>
    %465 = vector.broadcast %464 : f32 to vector<1x256xf32>
    %466 = arith.mulf %465, %454 : vector<1x256xf32>
    %467 = arith.addf %463, %466 : vector<1x256xf32>
    %c80 = arith.constant 80 : index
    %468 = memref.load %arg2[%c80] : memref<400xf32, #tpu.memory_space<smem>>
    %469 = vector.broadcast %468 : f32 to vector<1x256xf32>
    %470 = arith.mulf %469, %455 : vector<1x256xf32>
    %471 = arith.addf %467, %470 : vector<1x256xf32>
    %c105 = arith.constant 105 : index
    %472 = memref.load %arg2[%c105] : memref<400xf32, #tpu.memory_space<smem>>
    %473 = vector.broadcast %472 : f32 to vector<1x256xf32>
    %474 = arith.mulf %473, %452 : vector<1x256xf32>
    %475 = arith.addf %413, %474 : vector<1x256xf32>
    %c130 = arith.constant 130 : index
    %476 = memref.load %arg2[%c130] : memref<400xf32, #tpu.memory_space<smem>>
    %477 = vector.broadcast %476 : f32 to vector<1x256xf32>
    %478 = arith.mulf %477, %453 : vector<1x256xf32>
    %479 = arith.addf %475, %478 : vector<1x256xf32>
    %c155 = arith.constant 155 : index
    %480 = memref.load %arg2[%c155] : memref<400xf32, #tpu.memory_space<smem>>
    %481 = vector.broadcast %480 : f32 to vector<1x256xf32>
    %482 = arith.mulf %481, %454 : vector<1x256xf32>
    %483 = arith.addf %479, %482 : vector<1x256xf32>
    %c180 = arith.constant 180 : index
    %484 = memref.load %arg2[%c180] : memref<400xf32, #tpu.memory_space<smem>>
    %485 = vector.broadcast %484 : f32 to vector<1x256xf32>
    %486 = arith.mulf %485, %455 : vector<1x256xf32>
    %487 = arith.addf %483, %486 : vector<1x256xf32>
    %c205 = arith.constant 205 : index
    %488 = memref.load %arg2[%c205] : memref<400xf32, #tpu.memory_space<smem>>
    %489 = vector.broadcast %488 : f32 to vector<1x256xf32>
    %490 = arith.mulf %489, %452 : vector<1x256xf32>
    %491 = arith.addf %429, %490 : vector<1x256xf32>
    %c230 = arith.constant 230 : index
    %492 = memref.load %arg2[%c230] : memref<400xf32, #tpu.memory_space<smem>>
    %493 = vector.broadcast %492 : f32 to vector<1x256xf32>
    %494 = arith.mulf %493, %453 : vector<1x256xf32>
    %495 = arith.addf %491, %494 : vector<1x256xf32>
    %c255 = arith.constant 255 : index
    %496 = memref.load %arg2[%c255] : memref<400xf32, #tpu.memory_space<smem>>
    %497 = vector.broadcast %496 : f32 to vector<1x256xf32>
    %498 = arith.mulf %497, %454 : vector<1x256xf32>
    %499 = arith.addf %495, %498 : vector<1x256xf32>
    %c280 = arith.constant 280 : index
    %500 = memref.load %arg2[%c280] : memref<400xf32, #tpu.memory_space<smem>>
    %501 = vector.broadcast %500 : f32 to vector<1x256xf32>
    %502 = arith.mulf %501, %455 : vector<1x256xf32>
    %503 = arith.addf %499, %502 : vector<1x256xf32>
    %c305 = arith.constant 305 : index
    %504 = memref.load %arg2[%c305] : memref<400xf32, #tpu.memory_space<smem>>
    %505 = vector.broadcast %504 : f32 to vector<1x256xf32>
    %506 = arith.mulf %505, %452 : vector<1x256xf32>
    %507 = arith.addf %445, %506 : vector<1x256xf32>
    %c330 = arith.constant 330 : index
    %508 = memref.load %arg2[%c330] : memref<400xf32, #tpu.memory_space<smem>>
    %509 = vector.broadcast %508 : f32 to vector<1x256xf32>
    %510 = arith.mulf %509, %453 : vector<1x256xf32>
    %511 = arith.addf %507, %510 : vector<1x256xf32>
    %c355 = arith.constant 355 : index
    %512 = memref.load %arg2[%c355] : memref<400xf32, #tpu.memory_space<smem>>
    %513 = vector.broadcast %512 : f32 to vector<1x256xf32>
    %514 = arith.mulf %513, %454 : vector<1x256xf32>
    %515 = arith.addf %511, %514 : vector<1x256xf32>
    %c380 = arith.constant 380 : index
    %516 = memref.load %arg2[%c380] : memref<400xf32, #tpu.memory_space<smem>>
    %517 = vector.broadcast %516 : f32 to vector<1x256xf32>
    %518 = arith.mulf %517, %455 : vector<1x256xf32>
    %519 = arith.addf %515, %518 : vector<1x256xf32>
    %c17_i32 = arith.constant 17 : i32
    %520 = tpu.dynamic_rotate %1 by %c17_i32 dim 1 : vector<4x256xf32>, i32 -> vector<4x256xf32>
    %521 = arith.andi %19, %44 : vector<1x256xi1>
    %cst_29 = arith.constant 0.000000e+00 : f32
    %522 = vector.shape_cast %521 : vector<1x256xi1> to vector<1x256xi1>
    %523 = vector.broadcast %522 : vector<1x256xi1> to vector<4x256xi1>
    %524 = vector.broadcast %cst_29 : f32 to vector<4x256xf32>
    %525 = arith.select %523, %520, %524 : vector<4x256xi1>, vector<4x256xf32>
    %526 = vector.extract_strided_slice %525 {offsets = [0, 0], sizes = [1, 256], strides = [1, 1]} : vector<4x256xf32> to vector<1x256xf32>
    %527 = vector.extract_strided_slice %525 {offsets = [1, 0], sizes = [1, 256], strides = [1, 1]} : vector<4x256xf32> to vector<1x256xf32>
    %528 = vector.extract_strided_slice %525 {offsets = [2, 0], sizes = [1, 256], strides = [1, 1]} : vector<4x256xf32> to vector<1x256xf32>
    %529 = vector.extract_strided_slice %525 {offsets = [3, 0], sizes = [1, 256], strides = [1, 1]} : vector<4x256xf32> to vector<1x256xf32>
    %c6 = arith.constant 6 : index
    %530 = memref.load %arg2[%c6] : memref<400xf32, #tpu.memory_space<smem>>
    %531 = vector.broadcast %530 : f32 to vector<1x256xf32>
    %532 = arith.mulf %531, %526 : vector<1x256xf32>
    %533 = arith.addf %471, %532 : vector<1x256xf32>
    %c31 = arith.constant 31 : index
    %534 = memref.load %arg2[%c31] : memref<400xf32, #tpu.memory_space<smem>>
    %535 = vector.broadcast %534 : f32 to vector<1x256xf32>
    %536 = arith.mulf %535, %527 : vector<1x256xf32>
    %537 = arith.addf %533, %536 : vector<1x256xf32>
    %c56 = arith.constant 56 : index
    %538 = memref.load %arg2[%c56] : memref<400xf32, #tpu.memory_space<smem>>
    %539 = vector.broadcast %538 : f32 to vector<1x256xf32>
    %540 = arith.mulf %539, %528 : vector<1x256xf32>
    %541 = arith.addf %537, %540 : vector<1x256xf32>
    %c81 = arith.constant 81 : index
    %542 = memref.load %arg2[%c81] : memref<400xf32, #tpu.memory_space<smem>>
    %543 = vector.broadcast %542 : f32 to vector<1x256xf32>
    %544 = arith.mulf %543, %529 : vector<1x256xf32>
    %545 = arith.addf %541, %544 : vector<1x256xf32>
    %c106 = arith.constant 106 : index
    %546 = memref.load %arg2[%c106] : memref<400xf32, #tpu.memory_space<smem>>
    %547 = vector.broadcast %546 : f32 to vector<1x256xf32>
    %548 = arith.mulf %547, %526 : vector<1x256xf32>
    %549 = arith.addf %487, %548 : vector<1x256xf32>
    %c131 = arith.constant 131 : index
    %550 = memref.load %arg2[%c131] : memref<400xf32, #tpu.memory_space<smem>>
    %551 = vector.broadcast %550 : f32 to vector<1x256xf32>
    %552 = arith.mulf %551, %527 : vector<1x256xf32>
    %553 = arith.addf %549, %552 : vector<1x256xf32>
    %c156 = arith.constant 156 : index
    %554 = memref.load %arg2[%c156] : memref<400xf32, #tpu.memory_space<smem>>
    %555 = vector.broadcast %554 : f32 to vector<1x256xf32>
    %556 = arith.mulf %555, %528 : vector<1x256xf32>
    %557 = arith.addf %553, %556 : vector<1x256xf32>
    %c181 = arith.constant 181 : index
    %558 = memref.load %arg2[%c181] : memref<400xf32, #tpu.memory_space<smem>>
    %559 = vector.broadcast %558 : f32 to vector<1x256xf32>
    %560 = arith.mulf %559, %529 : vector<1x256xf32>
    %561 = arith.addf %557, %560 : vector<1x256xf32>
    %c206 = arith.constant 206 : index
    %562 = memref.load %arg2[%c206] : memref<400xf32, #tpu.memory_space<smem>>
    %563 = vector.broadcast %562 : f32 to vector<1x256xf32>
    %564 = arith.mulf %563, %526 : vector<1x256xf32>
    %565 = arith.addf %503, %564 : vector<1x256xf32>
    %c231 = arith.constant 231 : index
    %566 = memref.load %arg2[%c231] : memref<400xf32, #tpu.memory_space<smem>>
    %567 = vector.broadcast %566 : f32 to vector<1x256xf32>
    %568 = arith.mulf %567, %527 : vector<1x256xf32>
    %569 = arith.addf %565, %568 : vector<1x256xf32>
    %c256 = arith.constant 256 : index
    %570 = memref.load %arg2[%c256] : memref<400xf32, #tpu.memory_space<smem>>
    %571 = vector.broadcast %570 : f32 to vector<1x256xf32>
    %572 = arith.mulf %571, %528 : vector<1x256xf32>
    %573 = arith.addf %569, %572 : vector<1x256xf32>
    %c281 = arith.constant 281 : index
    %574 = memref.load %arg2[%c281] : memref<400xf32, #tpu.memory_space<smem>>
    %575 = vector.broadcast %574 : f32 to vector<1x256xf32>
    %576 = arith.mulf %575, %529 : vector<1x256xf32>
    %577 = arith.addf %573, %576 : vector<1x256xf32>
    %c306 = arith.constant 306 : index
    %578 = memref.load %arg2[%c306] : memref<400xf32, #tpu.memory_space<smem>>
    %579 = vector.broadcast %578 : f32 to vector<1x256xf32>
    %580 = arith.mulf %579, %526 : vector<1x256xf32>
    %581 = arith.addf %519, %580 : vector<1x256xf32>
    %c331 = arith.constant 331 : index
    %582 = memref.load %arg2[%c331] : memref<400xf32, #tpu.memory_space<smem>>
    %583 = vector.broadcast %582 : f32 to vector<1x256xf32>
    %584 = arith.mulf %583, %527 : vector<1x256xf32>
    %585 = arith.addf %581, %584 : vector<1x256xf32>
    %c356 = arith.constant 356 : index
    %586 = memref.load %arg2[%c356] : memref<400xf32, #tpu.memory_space<smem>>
    %587 = vector.broadcast %586 : f32 to vector<1x256xf32>
    %588 = arith.mulf %587, %528 : vector<1x256xf32>
    %589 = arith.addf %585, %588 : vector<1x256xf32>
    %c381 = arith.constant 381 : index
    %590 = memref.load %arg2[%c381] : memref<400xf32, #tpu.memory_space<smem>>
    %591 = vector.broadcast %590 : f32 to vector<1x256xf32>
    %592 = arith.mulf %591, %529 : vector<1x256xf32>
    %593 = arith.addf %589, %592 : vector<1x256xf32>
    %c16_i32_30 = arith.constant 16 : i32
    %594 = tpu.dynamic_rotate %1 by %c16_i32_30 dim 1 : vector<4x256xf32>, i32 -> vector<4x256xf32>
    %595 = arith.andi %19, %49 : vector<1x256xi1>
    %cst_31 = arith.constant 0.000000e+00 : f32
    %596 = vector.shape_cast %595 : vector<1x256xi1> to vector<1x256xi1>
    %597 = vector.broadcast %596 : vector<1x256xi1> to vector<4x256xi1>
    %598 = vector.broadcast %cst_31 : f32 to vector<4x256xf32>
    %599 = arith.select %597, %594, %598 : vector<4x256xi1>, vector<4x256xf32>
    %600 = vector.extract_strided_slice %599 {offsets = [0, 0], sizes = [1, 256], strides = [1, 1]} : vector<4x256xf32> to vector<1x256xf32>
    %601 = vector.extract_strided_slice %599 {offsets = [1, 0], sizes = [1, 256], strides = [1, 1]} : vector<4x256xf32> to vector<1x256xf32>
    %602 = vector.extract_strided_slice %599 {offsets = [2, 0], sizes = [1, 256], strides = [1, 1]} : vector<4x256xf32> to vector<1x256xf32>
    %603 = vector.extract_strided_slice %599 {offsets = [3, 0], sizes = [1, 256], strides = [1, 1]} : vector<4x256xf32> to vector<1x256xf32>
    %c7 = arith.constant 7 : index
    %604 = memref.load %arg2[%c7] : memref<400xf32, #tpu.memory_space<smem>>
    %605 = vector.broadcast %604 : f32 to vector<1x256xf32>
    %606 = arith.mulf %605, %600 : vector<1x256xf32>
    %607 = arith.addf %545, %606 : vector<1x256xf32>
    %c32 = arith.constant 32 : index
    %608 = memref.load %arg2[%c32] : memref<400xf32, #tpu.memory_space<smem>>
    %609 = vector.broadcast %608 : f32 to vector<1x256xf32>
    %610 = arith.mulf %609, %601 : vector<1x256xf32>
    %611 = arith.addf %607, %610 : vector<1x256xf32>
    %c57 = arith.constant 57 : index
    %612 = memref.load %arg2[%c57] : memref<400xf32, #tpu.memory_space<smem>>
    %613 = vector.broadcast %612 : f32 to vector<1x256xf32>
    %614 = arith.mulf %613, %602 : vector<1x256xf32>
    %615 = arith.addf %611, %614 : vector<1x256xf32>
    %c82 = arith.constant 82 : index
    %616 = memref.load %arg2[%c82] : memref<400xf32, #tpu.memory_space<smem>>
    %617 = vector.broadcast %616 : f32 to vector<1x256xf32>
    %618 = arith.mulf %617, %603 : vector<1x256xf32>
    %619 = arith.addf %615, %618 : vector<1x256xf32>
    %c107 = arith.constant 107 : index
    %620 = memref.load %arg2[%c107] : memref<400xf32, #tpu.memory_space<smem>>
    %621 = vector.broadcast %620 : f32 to vector<1x256xf32>
    %622 = arith.mulf %621, %600 : vector<1x256xf32>
    %623 = arith.addf %561, %622 : vector<1x256xf32>
    %c132 = arith.constant 132 : index
    %624 = memref.load %arg2[%c132] : memref<400xf32, #tpu.memory_space<smem>>
    %625 = vector.broadcast %624 : f32 to vector<1x256xf32>
    %626 = arith.mulf %625, %601 : vector<1x256xf32>
    %627 = arith.addf %623, %626 : vector<1x256xf32>
    %c157 = arith.constant 157 : index
    %628 = memref.load %arg2[%c157] : memref<400xf32, #tpu.memory_space<smem>>
    %629 = vector.broadcast %628 : f32 to vector<1x256xf32>
    %630 = arith.mulf %629, %602 : vector<1x256xf32>
    %631 = arith.addf %627, %630 : vector<1x256xf32>
    %c182 = arith.constant 182 : index
    %632 = memref.load %arg2[%c182] : memref<400xf32, #tpu.memory_space<smem>>
    %633 = vector.broadcast %632 : f32 to vector<1x256xf32>
    %634 = arith.mulf %633, %603 : vector<1x256xf32>
    %635 = arith.addf %631, %634 : vector<1x256xf32>
    %c207 = arith.constant 207 : index
    %636 = memref.load %arg2[%c207] : memref<400xf32, #tpu.memory_space<smem>>
    %637 = vector.broadcast %636 : f32 to vector<1x256xf32>
    %638 = arith.mulf %637, %600 : vector<1x256xf32>
    %639 = arith.addf %577, %638 : vector<1x256xf32>
    %c232 = arith.constant 232 : index
    %640 = memref.load %arg2[%c232] : memref<400xf32, #tpu.memory_space<smem>>
    %641 = vector.broadcast %640 : f32 to vector<1x256xf32>
    %642 = arith.mulf %641, %601 : vector<1x256xf32>
    %643 = arith.addf %639, %642 : vector<1x256xf32>
    %c257 = arith.constant 257 : index
    %644 = memref.load %arg2[%c257] : memref<400xf32, #tpu.memory_space<smem>>
    %645 = vector.broadcast %644 : f32 to vector<1x256xf32>
    %646 = arith.mulf %645, %602 : vector<1x256xf32>
    %647 = arith.addf %643, %646 : vector<1x256xf32>
    %c282 = arith.constant 282 : index
    %648 = memref.load %arg2[%c282] : memref<400xf32, #tpu.memory_space<smem>>
    %649 = vector.broadcast %648 : f32 to vector<1x256xf32>
    %650 = arith.mulf %649, %603 : vector<1x256xf32>
    %651 = arith.addf %647, %650 : vector<1x256xf32>
    %c307 = arith.constant 307 : index
    %652 = memref.load %arg2[%c307] : memref<400xf32, #tpu.memory_space<smem>>
    %653 = vector.broadcast %652 : f32 to vector<1x256xf32>
    %654 = arith.mulf %653, %600 : vector<1x256xf32>
    %655 = arith.addf %593, %654 : vector<1x256xf32>
    %c332 = arith.constant 332 : index
    %656 = memref.load %arg2[%c332] : memref<400xf32, #tpu.memory_space<smem>>
    %657 = vector.broadcast %656 : f32 to vector<1x256xf32>
    %658 = arith.mulf %657, %601 : vector<1x256xf32>
    %659 = arith.addf %655, %658 : vector<1x256xf32>
    %c357 = arith.constant 357 : index
    %660 = memref.load %arg2[%c357] : memref<400xf32, #tpu.memory_space<smem>>
    %661 = vector.broadcast %660 : f32 to vector<1x256xf32>
    %662 = arith.mulf %661, %602 : vector<1x256xf32>
    %663 = arith.addf %659, %662 : vector<1x256xf32>
    %c382 = arith.constant 382 : index
    %664 = memref.load %arg2[%c382] : memref<400xf32, #tpu.memory_space<smem>>
    %665 = vector.broadcast %664 : f32 to vector<1x256xf32>
    %666 = arith.mulf %665, %603 : vector<1x256xf32>
    %667 = arith.addf %663, %666 : vector<1x256xf32>
    %c15_i32 = arith.constant 15 : i32
    %668 = tpu.dynamic_rotate %1 by %c15_i32 dim 1 : vector<4x256xf32>, i32 -> vector<4x256xf32>
    %669 = arith.andi %19, %54 : vector<1x256xi1>
    %cst_32 = arith.constant 0.000000e+00 : f32
    %670 = vector.shape_cast %669 : vector<1x256xi1> to vector<1x256xi1>
    %671 = vector.broadcast %670 : vector<1x256xi1> to vector<4x256xi1>
    %672 = vector.broadcast %cst_32 : f32 to vector<4x256xf32>
    %673 = arith.select %671, %668, %672 : vector<4x256xi1>, vector<4x256xf32>
    %674 = vector.extract_strided_slice %673 {offsets = [0, 0], sizes = [1, 256], strides = [1, 1]} : vector<4x256xf32> to vector<1x256xf32>
    %675 = vector.extract_strided_slice %673 {offsets = [1, 0], sizes = [1, 256], strides = [1, 1]} : vector<4x256xf32> to vector<1x256xf32>
    %676 = vector.extract_strided_slice %673 {offsets = [2, 0], sizes = [1, 256], strides = [1, 1]} : vector<4x256xf32> to vector<1x256xf32>
    %677 = vector.extract_strided_slice %673 {offsets = [3, 0], sizes = [1, 256], strides = [1, 1]} : vector<4x256xf32> to vector<1x256xf32>
    %c8 = arith.constant 8 : index
    %678 = memref.load %arg2[%c8] : memref<400xf32, #tpu.memory_space<smem>>
    %679 = vector.broadcast %678 : f32 to vector<1x256xf32>
    %680 = arith.mulf %679, %674 : vector<1x256xf32>
    %681 = arith.addf %619, %680 : vector<1x256xf32>
    %c33 = arith.constant 33 : index
    %682 = memref.load %arg2[%c33] : memref<400xf32, #tpu.memory_space<smem>>
    %683 = vector.broadcast %682 : f32 to vector<1x256xf32>
    %684 = arith.mulf %683, %675 : vector<1x256xf32>
    %685 = arith.addf %681, %684 : vector<1x256xf32>
    %c58 = arith.constant 58 : index
    %686 = memref.load %arg2[%c58] : memref<400xf32, #tpu.memory_space<smem>>
    %687 = vector.broadcast %686 : f32 to vector<1x256xf32>
    %688 = arith.mulf %687, %676 : vector<1x256xf32>
    %689 = arith.addf %685, %688 : vector<1x256xf32>
    %c83 = arith.constant 83 : index
    %690 = memref.load %arg2[%c83] : memref<400xf32, #tpu.memory_space<smem>>
    %691 = vector.broadcast %690 : f32 to vector<1x256xf32>
    %692 = arith.mulf %691, %677 : vector<1x256xf32>
    %693 = arith.addf %689, %692 : vector<1x256xf32>
    %c108 = arith.constant 108 : index
    %694 = memref.load %arg2[%c108] : memref<400xf32, #tpu.memory_space<smem>>
    %695 = vector.broadcast %694 : f32 to vector<1x256xf32>
    %696 = arith.mulf %695, %674 : vector<1x256xf32>
    %697 = arith.addf %635, %696 : vector<1x256xf32>
    %c133 = arith.constant 133 : index
    %698 = memref.load %arg2[%c133] : memref<400xf32, #tpu.memory_space<smem>>
    %699 = vector.broadcast %698 : f32 to vector<1x256xf32>
    %700 = arith.mulf %699, %675 : vector<1x256xf32>
    %701 = arith.addf %697, %700 : vector<1x256xf32>
    %c158 = arith.constant 158 : index
    %702 = memref.load %arg2[%c158] : memref<400xf32, #tpu.memory_space<smem>>
    %703 = vector.broadcast %702 : f32 to vector<1x256xf32>
    %704 = arith.mulf %703, %676 : vector<1x256xf32>
    %705 = arith.addf %701, %704 : vector<1x256xf32>
    %c183 = arith.constant 183 : index
    %706 = memref.load %arg2[%c183] : memref<400xf32, #tpu.memory_space<smem>>
    %707 = vector.broadcast %706 : f32 to vector<1x256xf32>
    %708 = arith.mulf %707, %677 : vector<1x256xf32>
    %709 = arith.addf %705, %708 : vector<1x256xf32>
    %c208 = arith.constant 208 : index
    %710 = memref.load %arg2[%c208] : memref<400xf32, #tpu.memory_space<smem>>
    %711 = vector.broadcast %710 : f32 to vector<1x256xf32>
    %712 = arith.mulf %711, %674 : vector<1x256xf32>
    %713 = arith.addf %651, %712 : vector<1x256xf32>
    %c233 = arith.constant 233 : index
    %714 = memref.load %arg2[%c233] : memref<400xf32, #tpu.memory_space<smem>>
    %715 = vector.broadcast %714 : f32 to vector<1x256xf32>
    %716 = arith.mulf %715, %675 : vector<1x256xf32>
    %717 = arith.addf %713, %716 : vector<1x256xf32>
    %c258 = arith.constant 258 : index
    %718 = memref.load %arg2[%c258] : memref<400xf32, #tpu.memory_space<smem>>
    %719 = vector.broadcast %718 : f32 to vector<1x256xf32>
    %720 = arith.mulf %719, %676 : vector<1x256xf32>
    %721 = arith.addf %717, %720 : vector<1x256xf32>
    %c283 = arith.constant 283 : index
    %722 = memref.load %arg2[%c283] : memref<400xf32, #tpu.memory_space<smem>>
    %723 = vector.broadcast %722 : f32 to vector<1x256xf32>
    %724 = arith.mulf %723, %677 : vector<1x256xf32>
    %725 = arith.addf %721, %724 : vector<1x256xf32>
    %c308 = arith.constant 308 : index
    %726 = memref.load %arg2[%c308] : memref<400xf32, #tpu.memory_space<smem>>
    %727 = vector.broadcast %726 : f32 to vector<1x256xf32>
    %728 = arith.mulf %727, %674 : vector<1x256xf32>
    %729 = arith.addf %667, %728 : vector<1x256xf32>
    %c333 = arith.constant 333 : index
    %730 = memref.load %arg2[%c333] : memref<400xf32, #tpu.memory_space<smem>>
    %731 = vector.broadcast %730 : f32 to vector<1x256xf32>
    %732 = arith.mulf %731, %675 : vector<1x256xf32>
    %733 = arith.addf %729, %732 : vector<1x256xf32>
    %c358 = arith.constant 358 : index
    %734 = memref.load %arg2[%c358] : memref<400xf32, #tpu.memory_space<smem>>
    %735 = vector.broadcast %734 : f32 to vector<1x256xf32>
    %736 = arith.mulf %735, %676 : vector<1x256xf32>
    %737 = arith.addf %733, %736 : vector<1x256xf32>
    %c383 = arith.constant 383 : index
    %738 = memref.load %arg2[%c383] : memref<400xf32, #tpu.memory_space<smem>>
    %739 = vector.broadcast %738 : f32 to vector<1x256xf32>
    %740 = arith.mulf %739, %677 : vector<1x256xf32>
    %741 = arith.addf %737, %740 : vector<1x256xf32>
    %c14_i32 = arith.constant 14 : i32
    %742 = tpu.dynamic_rotate %1 by %c14_i32 dim 1 : vector<4x256xf32>, i32 -> vector<4x256xf32>
    %743 = arith.andi %19, %59 : vector<1x256xi1>
    %cst_33 = arith.constant 0.000000e+00 : f32
    %744 = vector.shape_cast %743 : vector<1x256xi1> to vector<1x256xi1>
    %745 = vector.broadcast %744 : vector<1x256xi1> to vector<4x256xi1>
    %746 = vector.broadcast %cst_33 : f32 to vector<4x256xf32>
    %747 = arith.select %745, %742, %746 : vector<4x256xi1>, vector<4x256xf32>
    %748 = vector.extract_strided_slice %747 {offsets = [0, 0], sizes = [1, 256], strides = [1, 1]} : vector<4x256xf32> to vector<1x256xf32>
    %749 = vector.extract_strided_slice %747 {offsets = [1, 0], sizes = [1, 256], strides = [1, 1]} : vector<4x256xf32> to vector<1x256xf32>
    %750 = vector.extract_strided_slice %747 {offsets = [2, 0], sizes = [1, 256], strides = [1, 1]} : vector<4x256xf32> to vector<1x256xf32>
    %751 = vector.extract_strided_slice %747 {offsets = [3, 0], sizes = [1, 256], strides = [1, 1]} : vector<4x256xf32> to vector<1x256xf32>
    %c9 = arith.constant 9 : index
    %752 = memref.load %arg2[%c9] : memref<400xf32, #tpu.memory_space<smem>>
    %753 = vector.broadcast %752 : f32 to vector<1x256xf32>
    %754 = arith.mulf %753, %748 : vector<1x256xf32>
    %755 = arith.addf %693, %754 : vector<1x256xf32>
    %c34 = arith.constant 34 : index
    %756 = memref.load %arg2[%c34] : memref<400xf32, #tpu.memory_space<smem>>
    %757 = vector.broadcast %756 : f32 to vector<1x256xf32>
    %758 = arith.mulf %757, %749 : vector<1x256xf32>
    %759 = arith.addf %755, %758 : vector<1x256xf32>
    %c59 = arith.constant 59 : index
    %760 = memref.load %arg2[%c59] : memref<400xf32, #tpu.memory_space<smem>>
    %761 = vector.broadcast %760 : f32 to vector<1x256xf32>
    %762 = arith.mulf %761, %750 : vector<1x256xf32>
    %763 = arith.addf %759, %762 : vector<1x256xf32>
    %c84 = arith.constant 84 : index
    %764 = memref.load %arg2[%c84] : memref<400xf32, #tpu.memory_space<smem>>
    %765 = vector.broadcast %764 : f32 to vector<1x256xf32>
    %766 = arith.mulf %765, %751 : vector<1x256xf32>
    %767 = arith.addf %763, %766 : vector<1x256xf32>
    %c109 = arith.constant 109 : index
    %768 = memref.load %arg2[%c109] : memref<400xf32, #tpu.memory_space<smem>>
    %769 = vector.broadcast %768 : f32 to vector<1x256xf32>
    %770 = arith.mulf %769, %748 : vector<1x256xf32>
    %771 = arith.addf %709, %770 : vector<1x256xf32>
    %c134 = arith.constant 134 : index
    %772 = memref.load %arg2[%c134] : memref<400xf32, #tpu.memory_space<smem>>
    %773 = vector.broadcast %772 : f32 to vector<1x256xf32>
    %774 = arith.mulf %773, %749 : vector<1x256xf32>
    %775 = arith.addf %771, %774 : vector<1x256xf32>
    %c159 = arith.constant 159 : index
    %776 = memref.load %arg2[%c159] : memref<400xf32, #tpu.memory_space<smem>>
    %777 = vector.broadcast %776 : f32 to vector<1x256xf32>
    %778 = arith.mulf %777, %750 : vector<1x256xf32>
    %779 = arith.addf %775, %778 : vector<1x256xf32>
    %c184 = arith.constant 184 : index
    %780 = memref.load %arg2[%c184] : memref<400xf32, #tpu.memory_space<smem>>
    %781 = vector.broadcast %780 : f32 to vector<1x256xf32>
    %782 = arith.mulf %781, %751 : vector<1x256xf32>
    %783 = arith.addf %779, %782 : vector<1x256xf32>
    %c209 = arith.constant 209 : index
    %784 = memref.load %arg2[%c209] : memref<400xf32, #tpu.memory_space<smem>>
    %785 = vector.broadcast %784 : f32 to vector<1x256xf32>
    %786 = arith.mulf %785, %748 : vector<1x256xf32>
    %787 = arith.addf %725, %786 : vector<1x256xf32>
    %c234 = arith.constant 234 : index
    %788 = memref.load %arg2[%c234] : memref<400xf32, #tpu.memory_space<smem>>
    %789 = vector.broadcast %788 : f32 to vector<1x256xf32>
    %790 = arith.mulf %789, %749 : vector<1x256xf32>
    %791 = arith.addf %787, %790 : vector<1x256xf32>
    %c259 = arith.constant 259 : index
    %792 = memref.load %arg2[%c259] : memref<400xf32, #tpu.memory_space<smem>>
    %793 = vector.broadcast %792 : f32 to vector<1x256xf32>
    %794 = arith.mulf %793, %750 : vector<1x256xf32>
    %795 = arith.addf %791, %794 : vector<1x256xf32>
    %c284 = arith.constant 284 : index
    %796 = memref.load %arg2[%c284] : memref<400xf32, #tpu.memory_space<smem>>
    %797 = vector.broadcast %796 : f32 to vector<1x256xf32>
    %798 = arith.mulf %797, %751 : vector<1x256xf32>
    %799 = arith.addf %795, %798 : vector<1x256xf32>
    %c309 = arith.constant 309 : index
    %800 = memref.load %arg2[%c309] : memref<400xf32, #tpu.memory_space<smem>>
    %801 = vector.broadcast %800 : f32 to vector<1x256xf32>
    %802 = arith.mulf %801, %748 : vector<1x256xf32>
    %803 = arith.addf %741, %802 : vector<1x256xf32>
    %c334 = arith.constant 334 : index
    %804 = memref.load %arg2[%c334] : memref<400xf32, #tpu.memory_space<smem>>
    %805 = vector.broadcast %804 : f32 to vector<1x256xf32>
    %806 = arith.mulf %805, %749 : vector<1x256xf32>
    %807 = arith.addf %803, %806 : vector<1x256xf32>
    %c359 = arith.constant 359 : index
    %808 = memref.load %arg2[%c359] : memref<400xf32, #tpu.memory_space<smem>>
    %809 = vector.broadcast %808 : f32 to vector<1x256xf32>
    %810 = arith.mulf %809, %750 : vector<1x256xf32>
    %811 = arith.addf %807, %810 : vector<1x256xf32>
    %c384 = arith.constant 384 : index
    %812 = memref.load %arg2[%c384] : memref<400xf32, #tpu.memory_space<smem>>
    %813 = vector.broadcast %812 : f32 to vector<1x256xf32>
    %814 = arith.mulf %813, %751 : vector<1x256xf32>
    %815 = arith.addf %811, %814 : vector<1x256xf32>
    %c2_i32 = arith.constant 2 : i32
    %816 = tpu.dynamic_rotate %1 by %c2_i32 dim 1 : vector<4x256xf32>, i32 -> vector<4x256xf32>
    %817 = arith.andi %24, %39 : vector<1x256xi1>
    %cst_34 = arith.constant 0.000000e+00 : f32
    %818 = vector.shape_cast %817 : vector<1x256xi1> to vector<1x256xi1>
    %819 = vector.broadcast %818 : vector<1x256xi1> to vector<4x256xi1>
    %820 = vector.broadcast %cst_34 : f32 to vector<4x256xf32>
    %821 = arith.select %819, %816, %820 : vector<4x256xi1>, vector<4x256xf32>
    %822 = vector.extract_strided_slice %821 {offsets = [0, 0], sizes = [1, 256], strides = [1, 1]} : vector<4x256xf32> to vector<1x256xf32>
    %823 = vector.extract_strided_slice %821 {offsets = [1, 0], sizes = [1, 256], strides = [1, 1]} : vector<4x256xf32> to vector<1x256xf32>
    %824 = vector.extract_strided_slice %821 {offsets = [2, 0], sizes = [1, 256], strides = [1, 1]} : vector<4x256xf32> to vector<1x256xf32>
    %825 = vector.extract_strided_slice %821 {offsets = [3, 0], sizes = [1, 256], strides = [1, 1]} : vector<4x256xf32> to vector<1x256xf32>
    %c10 = arith.constant 10 : index
    %826 = memref.load %arg2[%c10] : memref<400xf32, #tpu.memory_space<smem>>
    %827 = vector.broadcast %826 : f32 to vector<1x256xf32>
    %828 = arith.mulf %827, %822 : vector<1x256xf32>
    %829 = arith.addf %767, %828 : vector<1x256xf32>
    %c35 = arith.constant 35 : index
    %830 = memref.load %arg2[%c35] : memref<400xf32, #tpu.memory_space<smem>>
    %831 = vector.broadcast %830 : f32 to vector<1x256xf32>
    %832 = arith.mulf %831, %823 : vector<1x256xf32>
    %833 = arith.addf %829, %832 : vector<1x256xf32>
    %c60 = arith.constant 60 : index
    %834 = memref.load %arg2[%c60] : memref<400xf32, #tpu.memory_space<smem>>
    %835 = vector.broadcast %834 : f32 to vector<1x256xf32>
    %836 = arith.mulf %835, %824 : vector<1x256xf32>
    %837 = arith.addf %833, %836 : vector<1x256xf32>
    %c85 = arith.constant 85 : index
    %838 = memref.load %arg2[%c85] : memref<400xf32, #tpu.memory_space<smem>>
    %839 = vector.broadcast %838 : f32 to vector<1x256xf32>
    %840 = arith.mulf %839, %825 : vector<1x256xf32>
    %841 = arith.addf %837, %840 : vector<1x256xf32>
    %c110 = arith.constant 110 : index
    %842 = memref.load %arg2[%c110] : memref<400xf32, #tpu.memory_space<smem>>
    %843 = vector.broadcast %842 : f32 to vector<1x256xf32>
    %844 = arith.mulf %843, %822 : vector<1x256xf32>
    %845 = arith.addf %783, %844 : vector<1x256xf32>
    %c135 = arith.constant 135 : index
    %846 = memref.load %arg2[%c135] : memref<400xf32, #tpu.memory_space<smem>>
    %847 = vector.broadcast %846 : f32 to vector<1x256xf32>
    %848 = arith.mulf %847, %823 : vector<1x256xf32>
    %849 = arith.addf %845, %848 : vector<1x256xf32>
    %c160 = arith.constant 160 : index
    %850 = memref.load %arg2[%c160] : memref<400xf32, #tpu.memory_space<smem>>
    %851 = vector.broadcast %850 : f32 to vector<1x256xf32>
    %852 = arith.mulf %851, %824 : vector<1x256xf32>
    %853 = arith.addf %849, %852 : vector<1x256xf32>
    %c185 = arith.constant 185 : index
    %854 = memref.load %arg2[%c185] : memref<400xf32, #tpu.memory_space<smem>>
    %855 = vector.broadcast %854 : f32 to vector<1x256xf32>
    %856 = arith.mulf %855, %825 : vector<1x256xf32>
    %857 = arith.addf %853, %856 : vector<1x256xf32>
    %c210 = arith.constant 210 : index
    %858 = memref.load %arg2[%c210] : memref<400xf32, #tpu.memory_space<smem>>
    %859 = vector.broadcast %858 : f32 to vector<1x256xf32>
    %860 = arith.mulf %859, %822 : vector<1x256xf32>
    %861 = arith.addf %799, %860 : vector<1x256xf32>
    %c235 = arith.constant 235 : index
    %862 = memref.load %arg2[%c235] : memref<400xf32, #tpu.memory_space<smem>>
    %863 = vector.broadcast %862 : f32 to vector<1x256xf32>
    %864 = arith.mulf %863, %823 : vector<1x256xf32>
    %865 = arith.addf %861, %864 : vector<1x256xf32>
    %c260 = arith.constant 260 : index
    %866 = memref.load %arg2[%c260] : memref<400xf32, #tpu.memory_space<smem>>
    %867 = vector.broadcast %866 : f32 to vector<1x256xf32>
    %868 = arith.mulf %867, %824 : vector<1x256xf32>
    %869 = arith.addf %865, %868 : vector<1x256xf32>
    %c285 = arith.constant 285 : index
    %870 = memref.load %arg2[%c285] : memref<400xf32, #tpu.memory_space<smem>>
    %871 = vector.broadcast %870 : f32 to vector<1x256xf32>
    %872 = arith.mulf %871, %825 : vector<1x256xf32>
    %873 = arith.addf %869, %872 : vector<1x256xf32>
    %c310 = arith.constant 310 : index
    %874 = memref.load %arg2[%c310] : memref<400xf32, #tpu.memory_space<smem>>
    %875 = vector.broadcast %874 : f32 to vector<1x256xf32>
    %876 = arith.mulf %875, %822 : vector<1x256xf32>
    %877 = arith.addf %815, %876 : vector<1x256xf32>
    %c335 = arith.constant 335 : index
    %878 = memref.load %arg2[%c335] : memref<400xf32, #tpu.memory_space<smem>>
    %879 = vector.broadcast %878 : f32 to vector<1x256xf32>
    %880 = arith.mulf %879, %823 : vector<1x256xf32>
    %881 = arith.addf %877, %880 : vector<1x256xf32>
    %c360 = arith.constant 360 : index
    %882 = memref.load %arg2[%c360] : memref<400xf32, #tpu.memory_space<smem>>
    %883 = vector.broadcast %882 : f32 to vector<1x256xf32>
    %884 = arith.mulf %883, %824 : vector<1x256xf32>
    %885 = arith.addf %881, %884 : vector<1x256xf32>
    %c385 = arith.constant 385 : index
    %886 = memref.load %arg2[%c385] : memref<400xf32, #tpu.memory_space<smem>>
    %887 = vector.broadcast %886 : f32 to vector<1x256xf32>
    %888 = arith.mulf %887, %825 : vector<1x256xf32>
    %889 = arith.addf %885, %888 : vector<1x256xf32>
    %c1_i32 = arith.constant 1 : i32
    %890 = tpu.dynamic_rotate %1 by %c1_i32 dim 1 : vector<4x256xf32>, i32 -> vector<4x256xf32>
    %891 = arith.andi %24, %44 : vector<1x256xi1>
    %cst_35 = arith.constant 0.000000e+00 : f32
    %892 = vector.shape_cast %891 : vector<1x256xi1> to vector<1x256xi1>
    %893 = vector.broadcast %892 : vector<1x256xi1> to vector<4x256xi1>
    %894 = vector.broadcast %cst_35 : f32 to vector<4x256xf32>
    %895 = arith.select %893, %890, %894 : vector<4x256xi1>, vector<4x256xf32>
    %896 = vector.extract_strided_slice %895 {offsets = [0, 0], sizes = [1, 256], strides = [1, 1]} : vector<4x256xf32> to vector<1x256xf32>
    %897 = vector.extract_strided_slice %895 {offsets = [1, 0], sizes = [1, 256], strides = [1, 1]} : vector<4x256xf32> to vector<1x256xf32>
    %898 = vector.extract_strided_slice %895 {offsets = [2, 0], sizes = [1, 256], strides = [1, 1]} : vector<4x256xf32> to vector<1x256xf32>
    %899 = vector.extract_strided_slice %895 {offsets = [3, 0], sizes = [1, 256], strides = [1, 1]} : vector<4x256xf32> to vector<1x256xf32>
    %c11 = arith.constant 11 : index
    %900 = memref.load %arg2[%c11] : memref<400xf32, #tpu.memory_space<smem>>
    %901 = vector.broadcast %900 : f32 to vector<1x256xf32>
    %902 = arith.mulf %901, %896 : vector<1x256xf32>
    %903 = arith.addf %841, %902 : vector<1x256xf32>
    %c36 = arith.constant 36 : index
    %904 = memref.load %arg2[%c36] : memref<400xf32, #tpu.memory_space<smem>>
    %905 = vector.broadcast %904 : f32 to vector<1x256xf32>
    %906 = arith.mulf %905, %897 : vector<1x256xf32>
    %907 = arith.addf %903, %906 : vector<1x256xf32>
    %c61 = arith.constant 61 : index
    %908 = memref.load %arg2[%c61] : memref<400xf32, #tpu.memory_space<smem>>
    %909 = vector.broadcast %908 : f32 to vector<1x256xf32>
    %910 = arith.mulf %909, %898 : vector<1x256xf32>
    %911 = arith.addf %907, %910 : vector<1x256xf32>
    %c86 = arith.constant 86 : index
    %912 = memref.load %arg2[%c86] : memref<400xf32, #tpu.memory_space<smem>>
    %913 = vector.broadcast %912 : f32 to vector<1x256xf32>
    %914 = arith.mulf %913, %899 : vector<1x256xf32>
    %915 = arith.addf %911, %914 : vector<1x256xf32>
    %c111 = arith.constant 111 : index
    %916 = memref.load %arg2[%c111] : memref<400xf32, #tpu.memory_space<smem>>
    %917 = vector.broadcast %916 : f32 to vector<1x256xf32>
    %918 = arith.mulf %917, %896 : vector<1x256xf32>
    %919 = arith.addf %857, %918 : vector<1x256xf32>
    %c136 = arith.constant 136 : index
    %920 = memref.load %arg2[%c136] : memref<400xf32, #tpu.memory_space<smem>>
    %921 = vector.broadcast %920 : f32 to vector<1x256xf32>
    %922 = arith.mulf %921, %897 : vector<1x256xf32>
    %923 = arith.addf %919, %922 : vector<1x256xf32>
    %c161 = arith.constant 161 : index
    %924 = memref.load %arg2[%c161] : memref<400xf32, #tpu.memory_space<smem>>
    %925 = vector.broadcast %924 : f32 to vector<1x256xf32>
    %926 = arith.mulf %925, %898 : vector<1x256xf32>
    %927 = arith.addf %923, %926 : vector<1x256xf32>
    %c186 = arith.constant 186 : index
    %928 = memref.load %arg2[%c186] : memref<400xf32, #tpu.memory_space<smem>>
    %929 = vector.broadcast %928 : f32 to vector<1x256xf32>
    %930 = arith.mulf %929, %899 : vector<1x256xf32>
    %931 = arith.addf %927, %930 : vector<1x256xf32>
    %c211 = arith.constant 211 : index
    %932 = memref.load %arg2[%c211] : memref<400xf32, #tpu.memory_space<smem>>
    %933 = vector.broadcast %932 : f32 to vector<1x256xf32>
    %934 = arith.mulf %933, %896 : vector<1x256xf32>
    %935 = arith.addf %873, %934 : vector<1x256xf32>
    %c236 = arith.constant 236 : index
    %936 = memref.load %arg2[%c236] : memref<400xf32, #tpu.memory_space<smem>>
    %937 = vector.broadcast %936 : f32 to vector<1x256xf32>
    %938 = arith.mulf %937, %897 : vector<1x256xf32>
    %939 = arith.addf %935, %938 : vector<1x256xf32>
    %c261 = arith.constant 261 : index
    %940 = memref.load %arg2[%c261] : memref<400xf32, #tpu.memory_space<smem>>
    %941 = vector.broadcast %940 : f32 to vector<1x256xf32>
    %942 = arith.mulf %941, %898 : vector<1x256xf32>
    %943 = arith.addf %939, %942 : vector<1x256xf32>
    %c286 = arith.constant 286 : index
    %944 = memref.load %arg2[%c286] : memref<400xf32, #tpu.memory_space<smem>>
    %945 = vector.broadcast %944 : f32 to vector<1x256xf32>
    %946 = arith.mulf %945, %899 : vector<1x256xf32>
    %947 = arith.addf %943, %946 : vector<1x256xf32>
    %c311 = arith.constant 311 : index
    %948 = memref.load %arg2[%c311] : memref<400xf32, #tpu.memory_space<smem>>
    %949 = vector.broadcast %948 : f32 to vector<1x256xf32>
    %950 = arith.mulf %949, %896 : vector<1x256xf32>
    %951 = arith.addf %889, %950 : vector<1x256xf32>
    %c336 = arith.constant 336 : index
    %952 = memref.load %arg2[%c336] : memref<400xf32, #tpu.memory_space<smem>>
    %953 = vector.broadcast %952 : f32 to vector<1x256xf32>
    %954 = arith.mulf %953, %897 : vector<1x256xf32>
    %955 = arith.addf %951, %954 : vector<1x256xf32>
    %c361 = arith.constant 361 : index
    %956 = memref.load %arg2[%c361] : memref<400xf32, #tpu.memory_space<smem>>
    %957 = vector.broadcast %956 : f32 to vector<1x256xf32>
    %958 = arith.mulf %957, %898 : vector<1x256xf32>
    %959 = arith.addf %955, %958 : vector<1x256xf32>
    %c386 = arith.constant 386 : index
    %960 = memref.load %arg2[%c386] : memref<400xf32, #tpu.memory_space<smem>>
    %961 = vector.broadcast %960 : f32 to vector<1x256xf32>
    %962 = arith.mulf %961, %899 : vector<1x256xf32>
    %963 = arith.addf %959, %962 : vector<1x256xf32>
    %964 = arith.andi %24, %49 : vector<1x256xi1>
    %cst_36 = arith.constant 0.000000e+00 : f32
    %965 = vector.shape_cast %964 : vector<1x256xi1> to vector<1x256xi1>
    %966 = vector.broadcast %965 : vector<1x256xi1> to vector<4x256xi1>
    %967 = vector.broadcast %cst_36 : f32 to vector<4x256xf32>
    %968 = arith.select %966, %1, %967 : vector<4x256xi1>, vector<4x256xf32>
    %969 = vector.extract_strided_slice %968 {offsets = [0, 0], sizes = [1, 256], strides = [1, 1]} : vector<4x256xf32> to vector<1x256xf32>
    %970 = vector.extract_strided_slice %968 {offsets = [1, 0], sizes = [1, 256], strides = [1, 1]} : vector<4x256xf32> to vector<1x256xf32>
    %971 = vector.extract_strided_slice %968 {offsets = [2, 0], sizes = [1, 256], strides = [1, 1]} : vector<4x256xf32> to vector<1x256xf32>
    %972 = vector.extract_strided_slice %968 {offsets = [3, 0], sizes = [1, 256], strides = [1, 1]} : vector<4x256xf32> to vector<1x256xf32>
    %c12 = arith.constant 12 : index
    %973 = memref.load %arg2[%c12] : memref<400xf32, #tpu.memory_space<smem>>
    %974 = vector.broadcast %973 : f32 to vector<1x256xf32>
    %975 = arith.mulf %974, %969 : vector<1x256xf32>
    %976 = arith.addf %915, %975 : vector<1x256xf32>
    %c37 = arith.constant 37 : index
    %977 = memref.load %arg2[%c37] : memref<400xf32, #tpu.memory_space<smem>>
    %978 = vector.broadcast %977 : f32 to vector<1x256xf32>
    %979 = arith.mulf %978, %970 : vector<1x256xf32>
    %980 = arith.addf %976, %979 : vector<1x256xf32>
    %c62 = arith.constant 62 : index
    %981 = memref.load %arg2[%c62] : memref<400xf32, #tpu.memory_space<smem>>
    %982 = vector.broadcast %981 : f32 to vector<1x256xf32>
    %983 = arith.mulf %982, %971 : vector<1x256xf32>
    %984 = arith.addf %980, %983 : vector<1x256xf32>
    %c87 = arith.constant 87 : index
    %985 = memref.load %arg2[%c87] : memref<400xf32, #tpu.memory_space<smem>>
    %986 = vector.broadcast %985 : f32 to vector<1x256xf32>
    %987 = arith.mulf %986, %972 : vector<1x256xf32>
    %988 = arith.addf %984, %987 : vector<1x256xf32>
    %c112 = arith.constant 112 : index
    %989 = memref.load %arg2[%c112] : memref<400xf32, #tpu.memory_space<smem>>
    %990 = vector.broadcast %989 : f32 to vector<1x256xf32>
    %991 = arith.mulf %990, %969 : vector<1x256xf32>
    %992 = arith.addf %931, %991 : vector<1x256xf32>
    %c137 = arith.constant 137 : index
    %993 = memref.load %arg2[%c137] : memref<400xf32, #tpu.memory_space<smem>>
    %994 = vector.broadcast %993 : f32 to vector<1x256xf32>
    %995 = arith.mulf %994, %970 : vector<1x256xf32>
    %996 = arith.addf %992, %995 : vector<1x256xf32>
    %c162 = arith.constant 162 : index
    %997 = memref.load %arg2[%c162] : memref<400xf32, #tpu.memory_space<smem>>
    %998 = vector.broadcast %997 : f32 to vector<1x256xf32>
    %999 = arith.mulf %998, %971 : vector<1x256xf32>
    %1000 = arith.addf %996, %999 : vector<1x256xf32>
    %c187 = arith.constant 187 : index
    %1001 = memref.load %arg2[%c187] : memref<400xf32, #tpu.memory_space<smem>>
    %1002 = vector.broadcast %1001 : f32 to vector<1x256xf32>
    %1003 = arith.mulf %1002, %972 : vector<1x256xf32>
    %1004 = arith.addf %1000, %1003 : vector<1x256xf32>
    %c212 = arith.constant 212 : index
    %1005 = memref.load %arg2[%c212] : memref<400xf32, #tpu.memory_space<smem>>
    %1006 = vector.broadcast %1005 : f32 to vector<1x256xf32>
    %1007 = arith.mulf %1006, %969 : vector<1x256xf32>
    %1008 = arith.addf %947, %1007 : vector<1x256xf32>
    %c237 = arith.constant 237 : index
    %1009 = memref.load %arg2[%c237] : memref<400xf32, #tpu.memory_space<smem>>
    %1010 = vector.broadcast %1009 : f32 to vector<1x256xf32>
    %1011 = arith.mulf %1010, %970 : vector<1x256xf32>
    %1012 = arith.addf %1008, %1011 : vector<1x256xf32>
    %c262 = arith.constant 262 : index
    %1013 = memref.load %arg2[%c262] : memref<400xf32, #tpu.memory_space<smem>>
    %1014 = vector.broadcast %1013 : f32 to vector<1x256xf32>
    %1015 = arith.mulf %1014, %971 : vector<1x256xf32>
    %1016 = arith.addf %1012, %1015 : vector<1x256xf32>
    %c287 = arith.constant 287 : index
    %1017 = memref.load %arg2[%c287] : memref<400xf32, #tpu.memory_space<smem>>
    %1018 = vector.broadcast %1017 : f32 to vector<1x256xf32>
    %1019 = arith.mulf %1018, %972 : vector<1x256xf32>
    %1020 = arith.addf %1016, %1019 : vector<1x256xf32>
    %c312 = arith.constant 312 : index
    %1021 = memref.load %arg2[%c312] : memref<400xf32, #tpu.memory_space<smem>>
    %1022 = vector.broadcast %1021 : f32 to vector<1x256xf32>
    %1023 = arith.mulf %1022, %969 : vector<1x256xf32>
    %1024 = arith.addf %963, %1023 : vector<1x256xf32>
    %c337 = arith.constant 337 : index
    %1025 = memref.load %arg2[%c337] : memref<400xf32, #tpu.memory_space<smem>>
    %1026 = vector.broadcast %1025 : f32 to vector<1x256xf32>
    %1027 = arith.mulf %1026, %970 : vector<1x256xf32>
    %1028 = arith.addf %1024, %1027 : vector<1x256xf32>
    %c362 = arith.constant 362 : index
    %1029 = memref.load %arg2[%c362] : memref<400xf32, #tpu.memory_space<smem>>
    %1030 = vector.broadcast %1029 : f32 to vector<1x256xf32>
    %1031 = arith.mulf %1030, %971 : vector<1x256xf32>
    %1032 = arith.addf %1028, %1031 : vector<1x256xf32>
    %c387 = arith.constant 387 : index
    %1033 = memref.load %arg2[%c387] : memref<400xf32, #tpu.memory_space<smem>>
    %1034 = vector.broadcast %1033 : f32 to vector<1x256xf32>
    %1035 = arith.mulf %1034, %972 : vector<1x256xf32>
    %1036 = arith.addf %1032, %1035 : vector<1x256xf32>
    %c255_i32 = arith.constant 255 : i32
    %1037 = tpu.dynamic_rotate %1 by %c255_i32 dim 1 : vector<4x256xf32>, i32 -> vector<4x256xf32>
    %1038 = arith.andi %24, %54 : vector<1x256xi1>
    %cst_37 = arith.constant 0.000000e+00 : f32
    %1039 = vector.shape_cast %1038 : vector<1x256xi1> to vector<1x256xi1>
    %1040 = vector.broadcast %1039 : vector<1x256xi1> to vector<4x256xi1>
    %1041 = vector.broadcast %cst_37 : f32 to vector<4x256xf32>
    %1042 = arith.select %1040, %1037, %1041 : vector<4x256xi1>, vector<4x256xf32>
    %1043 = vector.extract_strided_slice %1042 {offsets = [0, 0], sizes = [1, 256], strides = [1, 1]} : vector<4x256xf32> to vector<1x256xf32>
    %1044 = vector.extract_strided_slice %1042 {offsets = [1, 0], sizes = [1, 256], strides = [1, 1]} : vector<4x256xf32> to vector<1x256xf32>
    %1045 = vector.extract_strided_slice %1042 {offsets = [2, 0], sizes = [1, 256], strides = [1, 1]} : vector<4x256xf32> to vector<1x256xf32>
    %1046 = vector.extract_strided_slice %1042 {offsets = [3, 0], sizes = [1, 256], strides = [1, 1]} : vector<4x256xf32> to vector<1x256xf32>
    %c13 = arith.constant 13 : index
    %1047 = memref.load %arg2[%c13] : memref<400xf32, #tpu.memory_space<smem>>
    %1048 = vector.broadcast %1047 : f32 to vector<1x256xf32>
    %1049 = arith.mulf %1048, %1043 : vector<1x256xf32>
    %1050 = arith.addf %988, %1049 : vector<1x256xf32>
    %c38 = arith.constant 38 : index
    %1051 = memref.load %arg2[%c38] : memref<400xf32, #tpu.memory_space<smem>>
    %1052 = vector.broadcast %1051 : f32 to vector<1x256xf32>
    %1053 = arith.mulf %1052, %1044 : vector<1x256xf32>
    %1054 = arith.addf %1050, %1053 : vector<1x256xf32>
    %c63 = arith.constant 63 : index
    %1055 = memref.load %arg2[%c63] : memref<400xf32, #tpu.memory_space<smem>>
    %1056 = vector.broadcast %1055 : f32 to vector<1x256xf32>
    %1057 = arith.mulf %1056, %1045 : vector<1x256xf32>
    %1058 = arith.addf %1054, %1057 : vector<1x256xf32>
    %c88 = arith.constant 88 : index
    %1059 = memref.load %arg2[%c88] : memref<400xf32, #tpu.memory_space<smem>>
    %1060 = vector.broadcast %1059 : f32 to vector<1x256xf32>
    %1061 = arith.mulf %1060, %1046 : vector<1x256xf32>
    %1062 = arith.addf %1058, %1061 : vector<1x256xf32>
    %c113 = arith.constant 113 : index
    %1063 = memref.load %arg2[%c113] : memref<400xf32, #tpu.memory_space<smem>>
    %1064 = vector.broadcast %1063 : f32 to vector<1x256xf32>
    %1065 = arith.mulf %1064, %1043 : vector<1x256xf32>
    %1066 = arith.addf %1004, %1065 : vector<1x256xf32>
    %c138 = arith.constant 138 : index
    %1067 = memref.load %arg2[%c138] : memref<400xf32, #tpu.memory_space<smem>>
    %1068 = vector.broadcast %1067 : f32 to vector<1x256xf32>
    %1069 = arith.mulf %1068, %1044 : vector<1x256xf32>
    %1070 = arith.addf %1066, %1069 : vector<1x256xf32>
    %c163 = arith.constant 163 : index
    %1071 = memref.load %arg2[%c163] : memref<400xf32, #tpu.memory_space<smem>>
    %1072 = vector.broadcast %1071 : f32 to vector<1x256xf32>
    %1073 = arith.mulf %1072, %1045 : vector<1x256xf32>
    %1074 = arith.addf %1070, %1073 : vector<1x256xf32>
    %c188 = arith.constant 188 : index
    %1075 = memref.load %arg2[%c188] : memref<400xf32, #tpu.memory_space<smem>>
    %1076 = vector.broadcast %1075 : f32 to vector<1x256xf32>
    %1077 = arith.mulf %1076, %1046 : vector<1x256xf32>
    %1078 = arith.addf %1074, %1077 : vector<1x256xf32>
    %c213 = arith.constant 213 : index
    %1079 = memref.load %arg2[%c213] : memref<400xf32, #tpu.memory_space<smem>>
    %1080 = vector.broadcast %1079 : f32 to vector<1x256xf32>
    %1081 = arith.mulf %1080, %1043 : vector<1x256xf32>
    %1082 = arith.addf %1020, %1081 : vector<1x256xf32>
    %c238 = arith.constant 238 : index
    %1083 = memref.load %arg2[%c238] : memref<400xf32, #tpu.memory_space<smem>>
    %1084 = vector.broadcast %1083 : f32 to vector<1x256xf32>
    %1085 = arith.mulf %1084, %1044 : vector<1x256xf32>
    %1086 = arith.addf %1082, %1085 : vector<1x256xf32>
    %c263 = arith.constant 263 : index
    %1087 = memref.load %arg2[%c263] : memref<400xf32, #tpu.memory_space<smem>>
    %1088 = vector.broadcast %1087 : f32 to vector<1x256xf32>
    %1089 = arith.mulf %1088, %1045 : vector<1x256xf32>
    %1090 = arith.addf %1086, %1089 : vector<1x256xf32>
    %c288 = arith.constant 288 : index
    %1091 = memref.load %arg2[%c288] : memref<400xf32, #tpu.memory_space<smem>>
    %1092 = vector.broadcast %1091 : f32 to vector<1x256xf32>
    %1093 = arith.mulf %1092, %1046 : vector<1x256xf32>
    %1094 = arith.addf %1090, %1093 : vector<1x256xf32>
    %c313 = arith.constant 313 : index
    %1095 = memref.load %arg2[%c313] : memref<400xf32, #tpu.memory_space<smem>>
    %1096 = vector.broadcast %1095 : f32 to vector<1x256xf32>
    %1097 = arith.mulf %1096, %1043 : vector<1x256xf32>
    %1098 = arith.addf %1036, %1097 : vector<1x256xf32>
    %c338 = arith.constant 338 : index
    %1099 = memref.load %arg2[%c338] : memref<400xf32, #tpu.memory_space<smem>>
    %1100 = vector.broadcast %1099 : f32 to vector<1x256xf32>
    %1101 = arith.mulf %1100, %1044 : vector<1x256xf32>
    %1102 = arith.addf %1098, %1101 : vector<1x256xf32>
    %c363 = arith.constant 363 : index
    %1103 = memref.load %arg2[%c363] : memref<400xf32, #tpu.memory_space<smem>>
    %1104 = vector.broadcast %1103 : f32 to vector<1x256xf32>
    %1105 = arith.mulf %1104, %1045 : vector<1x256xf32>
    %1106 = arith.addf %1102, %1105 : vector<1x256xf32>
    %c388 = arith.constant 388 : index
    %1107 = memref.load %arg2[%c388] : memref<400xf32, #tpu.memory_space<smem>>
    %1108 = vector.broadcast %1107 : f32 to vector<1x256xf32>
    %1109 = arith.mulf %1108, %1046 : vector<1x256xf32>
    %1110 = arith.addf %1106, %1109 : vector<1x256xf32>
    %c254_i32 = arith.constant 254 : i32
    %1111 = tpu.dynamic_rotate %1 by %c254_i32 dim 1 : vector<4x256xf32>, i32 -> vector<4x256xf32>
    %1112 = arith.andi %24, %59 : vector<1x256xi1>
    %cst_38 = arith.constant 0.000000e+00 : f32
    %1113 = vector.shape_cast %1112 : vector<1x256xi1> to vector<1x256xi1>
    %1114 = vector.broadcast %1113 : vector<1x256xi1> to vector<4x256xi1>
    %1115 = vector.broadcast %cst_38 : f32 to vector<4x256xf32>
    %1116 = arith.select %1114, %1111, %1115 : vector<4x256xi1>, vector<4x256xf32>
    %1117 = vector.extract_strided_slice %1116 {offsets = [0, 0], sizes = [1, 256], strides = [1, 1]} : vector<4x256xf32> to vector<1x256xf32>
    %1118 = vector.extract_strided_slice %1116 {offsets = [1, 0], sizes = [1, 256], strides = [1, 1]} : vector<4x256xf32> to vector<1x256xf32>
    %1119 = vector.extract_strided_slice %1116 {offsets = [2, 0], sizes = [1, 256], strides = [1, 1]} : vector<4x256xf32> to vector<1x256xf32>
    %1120 = vector.extract_strided_slice %1116 {offsets = [3, 0], sizes = [1, 256], strides = [1, 1]} : vector<4x256xf32> to vector<1x256xf32>
    %c14 = arith.constant 14 : index
    %1121 = memref.load %arg2[%c14] : memref<400xf32, #tpu.memory_space<smem>>
    %1122 = vector.broadcast %1121 : f32 to vector<1x256xf32>
    %1123 = arith.mulf %1122, %1117 : vector<1x256xf32>
    %1124 = arith.addf %1062, %1123 : vector<1x256xf32>
    %c39 = arith.constant 39 : index
    %1125 = memref.load %arg2[%c39] : memref<400xf32, #tpu.memory_space<smem>>
    %1126 = vector.broadcast %1125 : f32 to vector<1x256xf32>
    %1127 = arith.mulf %1126, %1118 : vector<1x256xf32>
    %1128 = arith.addf %1124, %1127 : vector<1x256xf32>
    %c64 = arith.constant 64 : index
    %1129 = memref.load %arg2[%c64] : memref<400xf32, #tpu.memory_space<smem>>
    %1130 = vector.broadcast %1129 : f32 to vector<1x256xf32>
    %1131 = arith.mulf %1130, %1119 : vector<1x256xf32>
    %1132 = arith.addf %1128, %1131 : vector<1x256xf32>
    %c89 = arith.constant 89 : index
    %1133 = memref.load %arg2[%c89] : memref<400xf32, #tpu.memory_space<smem>>
    %1134 = vector.broadcast %1133 : f32 to vector<1x256xf32>
    %1135 = arith.mulf %1134, %1120 : vector<1x256xf32>
    %1136 = arith.addf %1132, %1135 : vector<1x256xf32>
    %c114 = arith.constant 114 : index
    %1137 = memref.load %arg2[%c114] : memref<400xf32, #tpu.memory_space<smem>>
    %1138 = vector.broadcast %1137 : f32 to vector<1x256xf32>
    %1139 = arith.mulf %1138, %1117 : vector<1x256xf32>
    %1140 = arith.addf %1078, %1139 : vector<1x256xf32>
    %c139 = arith.constant 139 : index
    %1141 = memref.load %arg2[%c139] : memref<400xf32, #tpu.memory_space<smem>>
    %1142 = vector.broadcast %1141 : f32 to vector<1x256xf32>
    %1143 = arith.mulf %1142, %1118 : vector<1x256xf32>
    %1144 = arith.addf %1140, %1143 : vector<1x256xf32>
    %c164 = arith.constant 164 : index
    %1145 = memref.load %arg2[%c164] : memref<400xf32, #tpu.memory_space<smem>>
    %1146 = vector.broadcast %1145 : f32 to vector<1x256xf32>
    %1147 = arith.mulf %1146, %1119 : vector<1x256xf32>
    %1148 = arith.addf %1144, %1147 : vector<1x256xf32>
    %c189 = arith.constant 189 : index
    %1149 = memref.load %arg2[%c189] : memref<400xf32, #tpu.memory_space<smem>>
    %1150 = vector.broadcast %1149 : f32 to vector<1x256xf32>
    %1151 = arith.mulf %1150, %1120 : vector<1x256xf32>
    %1152 = arith.addf %1148, %1151 : vector<1x256xf32>
    %c214 = arith.constant 214 : index
    %1153 = memref.load %arg2[%c214] : memref<400xf32, #tpu.memory_space<smem>>
    %1154 = vector.broadcast %1153 : f32 to vector<1x256xf32>
    %1155 = arith.mulf %1154, %1117 : vector<1x256xf32>
    %1156 = arith.addf %1094, %1155 : vector<1x256xf32>
    %c239 = arith.constant 239 : index
    %1157 = memref.load %arg2[%c239] : memref<400xf32, #tpu.memory_space<smem>>
    %1158 = vector.broadcast %1157 : f32 to vector<1x256xf32>
    %1159 = arith.mulf %1158, %1118 : vector<1x256xf32>
    %1160 = arith.addf %1156, %1159 : vector<1x256xf32>
    %c264 = arith.constant 264 : index
    %1161 = memref.load %arg2[%c264] : memref<400xf32, #tpu.memory_space<smem>>
    %1162 = vector.broadcast %1161 : f32 to vector<1x256xf32>
    %1163 = arith.mulf %1162, %1119 : vector<1x256xf32>
    %1164 = arith.addf %1160, %1163 : vector<1x256xf32>
    %c289 = arith.constant 289 : index
    %1165 = memref.load %arg2[%c289] : memref<400xf32, #tpu.memory_space<smem>>
    %1166 = vector.broadcast %1165 : f32 to vector<1x256xf32>
    %1167 = arith.mulf %1166, %1120 : vector<1x256xf32>
    %1168 = arith.addf %1164, %1167 : vector<1x256xf32>
    %c314 = arith.constant 314 : index
    %1169 = memref.load %arg2[%c314] : memref<400xf32, #tpu.memory_space<smem>>
    %1170 = vector.broadcast %1169 : f32 to vector<1x256xf32>
    %1171 = arith.mulf %1170, %1117 : vector<1x256xf32>
    %1172 = arith.addf %1110, %1171 : vector<1x256xf32>
    %c339 = arith.constant 339 : index
    %1173 = memref.load %arg2[%c339] : memref<400xf32, #tpu.memory_space<smem>>
    %1174 = vector.broadcast %1173 : f32 to vector<1x256xf32>
    %1175 = arith.mulf %1174, %1118 : vector<1x256xf32>
    %1176 = arith.addf %1172, %1175 : vector<1x256xf32>
    %c364 = arith.constant 364 : index
    %1177 = memref.load %arg2[%c364] : memref<400xf32, #tpu.memory_space<smem>>
    %1178 = vector.broadcast %1177 : f32 to vector<1x256xf32>
    %1179 = arith.mulf %1178, %1119 : vector<1x256xf32>
    %1180 = arith.addf %1176, %1179 : vector<1x256xf32>
    %c389 = arith.constant 389 : index
    %1181 = memref.load %arg2[%c389] : memref<400xf32, #tpu.memory_space<smem>>
    %1182 = vector.broadcast %1181 : f32 to vector<1x256xf32>
    %1183 = arith.mulf %1182, %1120 : vector<1x256xf32>
    %1184 = arith.addf %1180, %1183 : vector<1x256xf32>
    %c242_i32 = arith.constant 242 : i32
    %1185 = tpu.dynamic_rotate %1 by %c242_i32 dim 1 : vector<4x256xf32>, i32 -> vector<4x256xf32>
    %1186 = arith.andi %29, %39 : vector<1x256xi1>
    %cst_39 = arith.constant 0.000000e+00 : f32
    %1187 = vector.shape_cast %1186 : vector<1x256xi1> to vector<1x256xi1>
    %1188 = vector.broadcast %1187 : vector<1x256xi1> to vector<4x256xi1>
    %1189 = vector.broadcast %cst_39 : f32 to vector<4x256xf32>
    %1190 = arith.select %1188, %1185, %1189 : vector<4x256xi1>, vector<4x256xf32>
    %1191 = vector.extract_strided_slice %1190 {offsets = [0, 0], sizes = [1, 256], strides = [1, 1]} : vector<4x256xf32> to vector<1x256xf32>
    %1192 = vector.extract_strided_slice %1190 {offsets = [1, 0], sizes = [1, 256], strides = [1, 1]} : vector<4x256xf32> to vector<1x256xf32>
    %1193 = vector.extract_strided_slice %1190 {offsets = [2, 0], sizes = [1, 256], strides = [1, 1]} : vector<4x256xf32> to vector<1x256xf32>
    %1194 = vector.extract_strided_slice %1190 {offsets = [3, 0], sizes = [1, 256], strides = [1, 1]} : vector<4x256xf32> to vector<1x256xf32>
    %c15 = arith.constant 15 : index
    %1195 = memref.load %arg2[%c15] : memref<400xf32, #tpu.memory_space<smem>>
    %1196 = vector.broadcast %1195 : f32 to vector<1x256xf32>
    %1197 = arith.mulf %1196, %1191 : vector<1x256xf32>
    %1198 = arith.addf %1136, %1197 : vector<1x256xf32>
    %c40 = arith.constant 40 : index
    %1199 = memref.load %arg2[%c40] : memref<400xf32, #tpu.memory_space<smem>>
    %1200 = vector.broadcast %1199 : f32 to vector<1x256xf32>
    %1201 = arith.mulf %1200, %1192 : vector<1x256xf32>
    %1202 = arith.addf %1198, %1201 : vector<1x256xf32>
    %c65 = arith.constant 65 : index
    %1203 = memref.load %arg2[%c65] : memref<400xf32, #tpu.memory_space<smem>>
    %1204 = vector.broadcast %1203 : f32 to vector<1x256xf32>
    %1205 = arith.mulf %1204, %1193 : vector<1x256xf32>
    %1206 = arith.addf %1202, %1205 : vector<1x256xf32>
    %c90 = arith.constant 90 : index
    %1207 = memref.load %arg2[%c90] : memref<400xf32, #tpu.memory_space<smem>>
    %1208 = vector.broadcast %1207 : f32 to vector<1x256xf32>
    %1209 = arith.mulf %1208, %1194 : vector<1x256xf32>
    %1210 = arith.addf %1206, %1209 : vector<1x256xf32>
    %c115 = arith.constant 115 : index
    %1211 = memref.load %arg2[%c115] : memref<400xf32, #tpu.memory_space<smem>>
    %1212 = vector.broadcast %1211 : f32 to vector<1x256xf32>
    %1213 = arith.mulf %1212, %1191 : vector<1x256xf32>
    %1214 = arith.addf %1152, %1213 : vector<1x256xf32>
    %c140 = arith.constant 140 : index
    %1215 = memref.load %arg2[%c140] : memref<400xf32, #tpu.memory_space<smem>>
    %1216 = vector.broadcast %1215 : f32 to vector<1x256xf32>
    %1217 = arith.mulf %1216, %1192 : vector<1x256xf32>
    %1218 = arith.addf %1214, %1217 : vector<1x256xf32>
    %c165 = arith.constant 165 : index
    %1219 = memref.load %arg2[%c165] : memref<400xf32, #tpu.memory_space<smem>>
    %1220 = vector.broadcast %1219 : f32 to vector<1x256xf32>
    %1221 = arith.mulf %1220, %1193 : vector<1x256xf32>
    %1222 = arith.addf %1218, %1221 : vector<1x256xf32>
    %c190 = arith.constant 190 : index
    %1223 = memref.load %arg2[%c190] : memref<400xf32, #tpu.memory_space<smem>>
    %1224 = vector.broadcast %1223 : f32 to vector<1x256xf32>
    %1225 = arith.mulf %1224, %1194 : vector<1x256xf32>
    %1226 = arith.addf %1222, %1225 : vector<1x256xf32>
    %c215 = arith.constant 215 : index
    %1227 = memref.load %arg2[%c215] : memref<400xf32, #tpu.memory_space<smem>>
    %1228 = vector.broadcast %1227 : f32 to vector<1x256xf32>
    %1229 = arith.mulf %1228, %1191 : vector<1x256xf32>
    %1230 = arith.addf %1168, %1229 : vector<1x256xf32>
    %c240 = arith.constant 240 : index
    %1231 = memref.load %arg2[%c240] : memref<400xf32, #tpu.memory_space<smem>>
    %1232 = vector.broadcast %1231 : f32 to vector<1x256xf32>
    %1233 = arith.mulf %1232, %1192 : vector<1x256xf32>
    %1234 = arith.addf %1230, %1233 : vector<1x256xf32>
    %c265 = arith.constant 265 : index
    %1235 = memref.load %arg2[%c265] : memref<400xf32, #tpu.memory_space<smem>>
    %1236 = vector.broadcast %1235 : f32 to vector<1x256xf32>
    %1237 = arith.mulf %1236, %1193 : vector<1x256xf32>
    %1238 = arith.addf %1234, %1237 : vector<1x256xf32>
    %c290 = arith.constant 290 : index
    %1239 = memref.load %arg2[%c290] : memref<400xf32, #tpu.memory_space<smem>>
    %1240 = vector.broadcast %1239 : f32 to vector<1x256xf32>
    %1241 = arith.mulf %1240, %1194 : vector<1x256xf32>
    %1242 = arith.addf %1238, %1241 : vector<1x256xf32>
    %c315 = arith.constant 315 : index
    %1243 = memref.load %arg2[%c315] : memref<400xf32, #tpu.memory_space<smem>>
    %1244 = vector.broadcast %1243 : f32 to vector<1x256xf32>
    %1245 = arith.mulf %1244, %1191 : vector<1x256xf32>
    %1246 = arith.addf %1184, %1245 : vector<1x256xf32>
    %c340 = arith.constant 340 : index
    %1247 = memref.load %arg2[%c340] : memref<400xf32, #tpu.memory_space<smem>>
    %1248 = vector.broadcast %1247 : f32 to vector<1x256xf32>
    %1249 = arith.mulf %1248, %1192 : vector<1x256xf32>
    %1250 = arith.addf %1246, %1249 : vector<1x256xf32>
    %c365 = arith.constant 365 : index
    %1251 = memref.load %arg2[%c365] : memref<400xf32, #tpu.memory_space<smem>>
    %1252 = vector.broadcast %1251 : f32 to vector<1x256xf32>
    %1253 = arith.mulf %1252, %1193 : vector<1x256xf32>
    %1254 = arith.addf %1250, %1253 : vector<1x256xf32>
    %c390 = arith.constant 390 : index
    %1255 = memref.load %arg2[%c390] : memref<400xf32, #tpu.memory_space<smem>>
    %1256 = vector.broadcast %1255 : f32 to vector<1x256xf32>
    %1257 = arith.mulf %1256, %1194 : vector<1x256xf32>
    %1258 = arith.addf %1254, %1257 : vector<1x256xf32>
    %c241_i32 = arith.constant 241 : i32
    %1259 = tpu.dynamic_rotate %1 by %c241_i32 dim 1 : vector<4x256xf32>, i32 -> vector<4x256xf32>
    %1260 = arith.andi %29, %44 : vector<1x256xi1>
    %cst_40 = arith.constant 0.000000e+00 : f32
    %1261 = vector.shape_cast %1260 : vector<1x256xi1> to vector<1x256xi1>
    %1262 = vector.broadcast %1261 : vector<1x256xi1> to vector<4x256xi1>
    %1263 = vector.broadcast %cst_40 : f32 to vector<4x256xf32>
    %1264 = arith.select %1262, %1259, %1263 : vector<4x256xi1>, vector<4x256xf32>
    %1265 = vector.extract_strided_slice %1264 {offsets = [0, 0], sizes = [1, 256], strides = [1, 1]} : vector<4x256xf32> to vector<1x256xf32>
    %1266 = vector.extract_strided_slice %1264 {offsets = [1, 0], sizes = [1, 256], strides = [1, 1]} : vector<4x256xf32> to vector<1x256xf32>
    %1267 = vector.extract_strided_slice %1264 {offsets = [2, 0], sizes = [1, 256], strides = [1, 1]} : vector<4x256xf32> to vector<1x256xf32>
    %1268 = vector.extract_strided_slice %1264 {offsets = [3, 0], sizes = [1, 256], strides = [1, 1]} : vector<4x256xf32> to vector<1x256xf32>
    %c16 = arith.constant 16 : index
    %1269 = memref.load %arg2[%c16] : memref<400xf32, #tpu.memory_space<smem>>
    %1270 = vector.broadcast %1269 : f32 to vector<1x256xf32>
    %1271 = arith.mulf %1270, %1265 : vector<1x256xf32>
    %1272 = arith.addf %1210, %1271 : vector<1x256xf32>
    %c41 = arith.constant 41 : index
    %1273 = memref.load %arg2[%c41] : memref<400xf32, #tpu.memory_space<smem>>
    %1274 = vector.broadcast %1273 : f32 to vector<1x256xf32>
    %1275 = arith.mulf %1274, %1266 : vector<1x256xf32>
    %1276 = arith.addf %1272, %1275 : vector<1x256xf32>
    %c66 = arith.constant 66 : index
    %1277 = memref.load %arg2[%c66] : memref<400xf32, #tpu.memory_space<smem>>
    %1278 = vector.broadcast %1277 : f32 to vector<1x256xf32>
    %1279 = arith.mulf %1278, %1267 : vector<1x256xf32>
    %1280 = arith.addf %1276, %1279 : vector<1x256xf32>
    %c91 = arith.constant 91 : index
    %1281 = memref.load %arg2[%c91] : memref<400xf32, #tpu.memory_space<smem>>
    %1282 = vector.broadcast %1281 : f32 to vector<1x256xf32>
    %1283 = arith.mulf %1282, %1268 : vector<1x256xf32>
    %1284 = arith.addf %1280, %1283 : vector<1x256xf32>
    %c116 = arith.constant 116 : index
    %1285 = memref.load %arg2[%c116] : memref<400xf32, #tpu.memory_space<smem>>
    %1286 = vector.broadcast %1285 : f32 to vector<1x256xf32>
    %1287 = arith.mulf %1286, %1265 : vector<1x256xf32>
    %1288 = arith.addf %1226, %1287 : vector<1x256xf32>
    %c141 = arith.constant 141 : index
    %1289 = memref.load %arg2[%c141] : memref<400xf32, #tpu.memory_space<smem>>
    %1290 = vector.broadcast %1289 : f32 to vector<1x256xf32>
    %1291 = arith.mulf %1290, %1266 : vector<1x256xf32>
    %1292 = arith.addf %1288, %1291 : vector<1x256xf32>
    %c166 = arith.constant 166 : index
    %1293 = memref.load %arg2[%c166] : memref<400xf32, #tpu.memory_space<smem>>
    %1294 = vector.broadcast %1293 : f32 to vector<1x256xf32>
    %1295 = arith.mulf %1294, %1267 : vector<1x256xf32>
    %1296 = arith.addf %1292, %1295 : vector<1x256xf32>
    %c191 = arith.constant 191 : index
    %1297 = memref.load %arg2[%c191] : memref<400xf32, #tpu.memory_space<smem>>
    %1298 = vector.broadcast %1297 : f32 to vector<1x256xf32>
    %1299 = arith.mulf %1298, %1268 : vector<1x256xf32>
    %1300 = arith.addf %1296, %1299 : vector<1x256xf32>
    %c216 = arith.constant 216 : index
    %1301 = memref.load %arg2[%c216] : memref<400xf32, #tpu.memory_space<smem>>
    %1302 = vector.broadcast %1301 : f32 to vector<1x256xf32>
    %1303 = arith.mulf %1302, %1265 : vector<1x256xf32>
    %1304 = arith.addf %1242, %1303 : vector<1x256xf32>
    %c241 = arith.constant 241 : index
    %1305 = memref.load %arg2[%c241] : memref<400xf32, #tpu.memory_space<smem>>
    %1306 = vector.broadcast %1305 : f32 to vector<1x256xf32>
    %1307 = arith.mulf %1306, %1266 : vector<1x256xf32>
    %1308 = arith.addf %1304, %1307 : vector<1x256xf32>
    %c266 = arith.constant 266 : index
    %1309 = memref.load %arg2[%c266] : memref<400xf32, #tpu.memory_space<smem>>
    %1310 = vector.broadcast %1309 : f32 to vector<1x256xf32>
    %1311 = arith.mulf %1310, %1267 : vector<1x256xf32>
    %1312 = arith.addf %1308, %1311 : vector<1x256xf32>
    %c291 = arith.constant 291 : index
    %1313 = memref.load %arg2[%c291] : memref<400xf32, #tpu.memory_space<smem>>
    %1314 = vector.broadcast %1313 : f32 to vector<1x256xf32>
    %1315 = arith.mulf %1314, %1268 : vector<1x256xf32>
    %1316 = arith.addf %1312, %1315 : vector<1x256xf32>
    %c316 = arith.constant 316 : index
    %1317 = memref.load %arg2[%c316] : memref<400xf32, #tpu.memory_space<smem>>
    %1318 = vector.broadcast %1317 : f32 to vector<1x256xf32>
    %1319 = arith.mulf %1318, %1265 : vector<1x256xf32>
    %1320 = arith.addf %1258, %1319 : vector<1x256xf32>
    %c341 = arith.constant 341 : index
    %1321 = memref.load %arg2[%c341] : memref<400xf32, #tpu.memory_space<smem>>
    %1322 = vector.broadcast %1321 : f32 to vector<1x256xf32>
    %1323 = arith.mulf %1322, %1266 : vector<1x256xf32>
    %1324 = arith.addf %1320, %1323 : vector<1x256xf32>
    %c366 = arith.constant 366 : index
    %1325 = memref.load %arg2[%c366] : memref<400xf32, #tpu.memory_space<smem>>
    %1326 = vector.broadcast %1325 : f32 to vector<1x256xf32>
    %1327 = arith.mulf %1326, %1267 : vector<1x256xf32>
    %1328 = arith.addf %1324, %1327 : vector<1x256xf32>
    %c391 = arith.constant 391 : index
    %1329 = memref.load %arg2[%c391] : memref<400xf32, #tpu.memory_space<smem>>
    %1330 = vector.broadcast %1329 : f32 to vector<1x256xf32>
    %1331 = arith.mulf %1330, %1268 : vector<1x256xf32>
    %1332 = arith.addf %1328, %1331 : vector<1x256xf32>
    %c240_i32_41 = arith.constant 240 : i32
    %1333 = tpu.dynamic_rotate %1 by %c240_i32_41 dim 1 : vector<4x256xf32>, i32 -> vector<4x256xf32>
    %1334 = arith.andi %29, %49 : vector<1x256xi1>
    %cst_42 = arith.constant 0.000000e+00 : f32
    %1335 = vector.shape_cast %1334 : vector<1x256xi1> to vector<1x256xi1>
    %1336 = vector.broadcast %1335 : vector<1x256xi1> to vector<4x256xi1>
    %1337 = vector.broadcast %cst_42 : f32 to vector<4x256xf32>
    %1338 = arith.select %1336, %1333, %1337 : vector<4x256xi1>, vector<4x256xf32>
    %1339 = vector.extract_strided_slice %1338 {offsets = [0, 0], sizes = [1, 256], strides = [1, 1]} : vector<4x256xf32> to vector<1x256xf32>
    %1340 = vector.extract_strided_slice %1338 {offsets = [1, 0], sizes = [1, 256], strides = [1, 1]} : vector<4x256xf32> to vector<1x256xf32>
    %1341 = vector.extract_strided_slice %1338 {offsets = [2, 0], sizes = [1, 256], strides = [1, 1]} : vector<4x256xf32> to vector<1x256xf32>
    %1342 = vector.extract_strided_slice %1338 {offsets = [3, 0], sizes = [1, 256], strides = [1, 1]} : vector<4x256xf32> to vector<1x256xf32>
    %c17 = arith.constant 17 : index
    %1343 = memref.load %arg2[%c17] : memref<400xf32, #tpu.memory_space<smem>>
    %1344 = vector.broadcast %1343 : f32 to vector<1x256xf32>
    %1345 = arith.mulf %1344, %1339 : vector<1x256xf32>
    %1346 = arith.addf %1284, %1345 : vector<1x256xf32>
    %c42 = arith.constant 42 : index
    %1347 = memref.load %arg2[%c42] : memref<400xf32, #tpu.memory_space<smem>>
    %1348 = vector.broadcast %1347 : f32 to vector<1x256xf32>
    %1349 = arith.mulf %1348, %1340 : vector<1x256xf32>
    %1350 = arith.addf %1346, %1349 : vector<1x256xf32>
    %c67 = arith.constant 67 : index
    %1351 = memref.load %arg2[%c67] : memref<400xf32, #tpu.memory_space<smem>>
    %1352 = vector.broadcast %1351 : f32 to vector<1x256xf32>
    %1353 = arith.mulf %1352, %1341 : vector<1x256xf32>
    %1354 = arith.addf %1350, %1353 : vector<1x256xf32>
    %c92 = arith.constant 92 : index
    %1355 = memref.load %arg2[%c92] : memref<400xf32, #tpu.memory_space<smem>>
    %1356 = vector.broadcast %1355 : f32 to vector<1x256xf32>
    %1357 = arith.mulf %1356, %1342 : vector<1x256xf32>
    %1358 = arith.addf %1354, %1357 : vector<1x256xf32>
    %c117 = arith.constant 117 : index
    %1359 = memref.load %arg2[%c117] : memref<400xf32, #tpu.memory_space<smem>>
    %1360 = vector.broadcast %1359 : f32 to vector<1x256xf32>
    %1361 = arith.mulf %1360, %1339 : vector<1x256xf32>
    %1362 = arith.addf %1300, %1361 : vector<1x256xf32>
    %c142 = arith.constant 142 : index
    %1363 = memref.load %arg2[%c142] : memref<400xf32, #tpu.memory_space<smem>>
    %1364 = vector.broadcast %1363 : f32 to vector<1x256xf32>
    %1365 = arith.mulf %1364, %1340 : vector<1x256xf32>
    %1366 = arith.addf %1362, %1365 : vector<1x256xf32>
    %c167 = arith.constant 167 : index
    %1367 = memref.load %arg2[%c167] : memref<400xf32, #tpu.memory_space<smem>>
    %1368 = vector.broadcast %1367 : f32 to vector<1x256xf32>
    %1369 = arith.mulf %1368, %1341 : vector<1x256xf32>
    %1370 = arith.addf %1366, %1369 : vector<1x256xf32>
    %c192 = arith.constant 192 : index
    %1371 = memref.load %arg2[%c192] : memref<400xf32, #tpu.memory_space<smem>>
    %1372 = vector.broadcast %1371 : f32 to vector<1x256xf32>
    %1373 = arith.mulf %1372, %1342 : vector<1x256xf32>
    %1374 = arith.addf %1370, %1373 : vector<1x256xf32>
    %c217 = arith.constant 217 : index
    %1375 = memref.load %arg2[%c217] : memref<400xf32, #tpu.memory_space<smem>>
    %1376 = vector.broadcast %1375 : f32 to vector<1x256xf32>
    %1377 = arith.mulf %1376, %1339 : vector<1x256xf32>
    %1378 = arith.addf %1316, %1377 : vector<1x256xf32>
    %c242 = arith.constant 242 : index
    %1379 = memref.load %arg2[%c242] : memref<400xf32, #tpu.memory_space<smem>>
    %1380 = vector.broadcast %1379 : f32 to vector<1x256xf32>
    %1381 = arith.mulf %1380, %1340 : vector<1x256xf32>
    %1382 = arith.addf %1378, %1381 : vector<1x256xf32>
    %c267 = arith.constant 267 : index
    %1383 = memref.load %arg2[%c267] : memref<400xf32, #tpu.memory_space<smem>>
    %1384 = vector.broadcast %1383 : f32 to vector<1x256xf32>
    %1385 = arith.mulf %1384, %1341 : vector<1x256xf32>
    %1386 = arith.addf %1382, %1385 : vector<1x256xf32>
    %c292 = arith.constant 292 : index
    %1387 = memref.load %arg2[%c292] : memref<400xf32, #tpu.memory_space<smem>>
    %1388 = vector.broadcast %1387 : f32 to vector<1x256xf32>
    %1389 = arith.mulf %1388, %1342 : vector<1x256xf32>
    %1390 = arith.addf %1386, %1389 : vector<1x256xf32>
    %c317 = arith.constant 317 : index
    %1391 = memref.load %arg2[%c317] : memref<400xf32, #tpu.memory_space<smem>>
    %1392 = vector.broadcast %1391 : f32 to vector<1x256xf32>
    %1393 = arith.mulf %1392, %1339 : vector<1x256xf32>
    %1394 = arith.addf %1332, %1393 : vector<1x256xf32>
    %c342 = arith.constant 342 : index
    %1395 = memref.load %arg2[%c342] : memref<400xf32, #tpu.memory_space<smem>>
    %1396 = vector.broadcast %1395 : f32 to vector<1x256xf32>
    %1397 = arith.mulf %1396, %1340 : vector<1x256xf32>
    %1398 = arith.addf %1394, %1397 : vector<1x256xf32>
    %c367 = arith.constant 367 : index
    %1399 = memref.load %arg2[%c367] : memref<400xf32, #tpu.memory_space<smem>>
    %1400 = vector.broadcast %1399 : f32 to vector<1x256xf32>
    %1401 = arith.mulf %1400, %1341 : vector<1x256xf32>
    %1402 = arith.addf %1398, %1401 : vector<1x256xf32>
    %c392 = arith.constant 392 : index
    %1403 = memref.load %arg2[%c392] : memref<400xf32, #tpu.memory_space<smem>>
    %1404 = vector.broadcast %1403 : f32 to vector<1x256xf32>
    %1405 = arith.mulf %1404, %1342 : vector<1x256xf32>
    %1406 = arith.addf %1402, %1405 : vector<1x256xf32>
    %c239_i32 = arith.constant 239 : i32
    %1407 = tpu.dynamic_rotate %1 by %c239_i32 dim 1 : vector<4x256xf32>, i32 -> vector<4x256xf32>
    %1408 = arith.andi %29, %54 : vector<1x256xi1>
    %cst_43 = arith.constant 0.000000e+00 : f32
    %1409 = vector.shape_cast %1408 : vector<1x256xi1> to vector<1x256xi1>
    %1410 = vector.broadcast %1409 : vector<1x256xi1> to vector<4x256xi1>
    %1411 = vector.broadcast %cst_43 : f32 to vector<4x256xf32>
    %1412 = arith.select %1410, %1407, %1411 : vector<4x256xi1>, vector<4x256xf32>
    %1413 = vector.extract_strided_slice %1412 {offsets = [0, 0], sizes = [1, 256], strides = [1, 1]} : vector<4x256xf32> to vector<1x256xf32>
    %1414 = vector.extract_strided_slice %1412 {offsets = [1, 0], sizes = [1, 256], strides = [1, 1]} : vector<4x256xf32> to vector<1x256xf32>
    %1415 = vector.extract_strided_slice %1412 {offsets = [2, 0], sizes = [1, 256], strides = [1, 1]} : vector<4x256xf32> to vector<1x256xf32>
    %1416 = vector.extract_strided_slice %1412 {offsets = [3, 0], sizes = [1, 256], strides = [1, 1]} : vector<4x256xf32> to vector<1x256xf32>
    %c18 = arith.constant 18 : index
    %1417 = memref.load %arg2[%c18] : memref<400xf32, #tpu.memory_space<smem>>
    %1418 = vector.broadcast %1417 : f32 to vector<1x256xf32>
    %1419 = arith.mulf %1418, %1413 : vector<1x256xf32>
    %1420 = arith.addf %1358, %1419 : vector<1x256xf32>
    %c43 = arith.constant 43 : index
    %1421 = memref.load %arg2[%c43] : memref<400xf32, #tpu.memory_space<smem>>
    %1422 = vector.broadcast %1421 : f32 to vector<1x256xf32>
    %1423 = arith.mulf %1422, %1414 : vector<1x256xf32>
    %1424 = arith.addf %1420, %1423 : vector<1x256xf32>
    %c68 = arith.constant 68 : index
    %1425 = memref.load %arg2[%c68] : memref<400xf32, #tpu.memory_space<smem>>
    %1426 = vector.broadcast %1425 : f32 to vector<1x256xf32>
    %1427 = arith.mulf %1426, %1415 : vector<1x256xf32>
    %1428 = arith.addf %1424, %1427 : vector<1x256xf32>
    %c93 = arith.constant 93 : index
    %1429 = memref.load %arg2[%c93] : memref<400xf32, #tpu.memory_space<smem>>
    %1430 = vector.broadcast %1429 : f32 to vector<1x256xf32>
    %1431 = arith.mulf %1430, %1416 : vector<1x256xf32>
    %1432 = arith.addf %1428, %1431 : vector<1x256xf32>
    %c118 = arith.constant 118 : index
    %1433 = memref.load %arg2[%c118] : memref<400xf32, #tpu.memory_space<smem>>
    %1434 = vector.broadcast %1433 : f32 to vector<1x256xf32>
    %1435 = arith.mulf %1434, %1413 : vector<1x256xf32>
    %1436 = arith.addf %1374, %1435 : vector<1x256xf32>
    %c143 = arith.constant 143 : index
    %1437 = memref.load %arg2[%c143] : memref<400xf32, #tpu.memory_space<smem>>
    %1438 = vector.broadcast %1437 : f32 to vector<1x256xf32>
    %1439 = arith.mulf %1438, %1414 : vector<1x256xf32>
    %1440 = arith.addf %1436, %1439 : vector<1x256xf32>
    %c168 = arith.constant 168 : index
    %1441 = memref.load %arg2[%c168] : memref<400xf32, #tpu.memory_space<smem>>
    %1442 = vector.broadcast %1441 : f32 to vector<1x256xf32>
    %1443 = arith.mulf %1442, %1415 : vector<1x256xf32>
    %1444 = arith.addf %1440, %1443 : vector<1x256xf32>
    %c193 = arith.constant 193 : index
    %1445 = memref.load %arg2[%c193] : memref<400xf32, #tpu.memory_space<smem>>
    %1446 = vector.broadcast %1445 : f32 to vector<1x256xf32>
    %1447 = arith.mulf %1446, %1416 : vector<1x256xf32>
    %1448 = arith.addf %1444, %1447 : vector<1x256xf32>
    %c218 = arith.constant 218 : index
    %1449 = memref.load %arg2[%c218] : memref<400xf32, #tpu.memory_space<smem>>
    %1450 = vector.broadcast %1449 : f32 to vector<1x256xf32>
    %1451 = arith.mulf %1450, %1413 : vector<1x256xf32>
    %1452 = arith.addf %1390, %1451 : vector<1x256xf32>
    %c243 = arith.constant 243 : index
    %1453 = memref.load %arg2[%c243] : memref<400xf32, #tpu.memory_space<smem>>
    %1454 = vector.broadcast %1453 : f32 to vector<1x256xf32>
    %1455 = arith.mulf %1454, %1414 : vector<1x256xf32>
    %1456 = arith.addf %1452, %1455 : vector<1x256xf32>
    %c268 = arith.constant 268 : index
    %1457 = memref.load %arg2[%c268] : memref<400xf32, #tpu.memory_space<smem>>
    %1458 = vector.broadcast %1457 : f32 to vector<1x256xf32>
    %1459 = arith.mulf %1458, %1415 : vector<1x256xf32>
    %1460 = arith.addf %1456, %1459 : vector<1x256xf32>
    %c293 = arith.constant 293 : index
    %1461 = memref.load %arg2[%c293] : memref<400xf32, #tpu.memory_space<smem>>
    %1462 = vector.broadcast %1461 : f32 to vector<1x256xf32>
    %1463 = arith.mulf %1462, %1416 : vector<1x256xf32>
    %1464 = arith.addf %1460, %1463 : vector<1x256xf32>
    %c318 = arith.constant 318 : index
    %1465 = memref.load %arg2[%c318] : memref<400xf32, #tpu.memory_space<smem>>
    %1466 = vector.broadcast %1465 : f32 to vector<1x256xf32>
    %1467 = arith.mulf %1466, %1413 : vector<1x256xf32>
    %1468 = arith.addf %1406, %1467 : vector<1x256xf32>
    %c343 = arith.constant 343 : index
    %1469 = memref.load %arg2[%c343] : memref<400xf32, #tpu.memory_space<smem>>
    %1470 = vector.broadcast %1469 : f32 to vector<1x256xf32>
    %1471 = arith.mulf %1470, %1414 : vector<1x256xf32>
    %1472 = arith.addf %1468, %1471 : vector<1x256xf32>
    %c368 = arith.constant 368 : index
    %1473 = memref.load %arg2[%c368] : memref<400xf32, #tpu.memory_space<smem>>
    %1474 = vector.broadcast %1473 : f32 to vector<1x256xf32>
    %1475 = arith.mulf %1474, %1415 : vector<1x256xf32>
    %1476 = arith.addf %1472, %1475 : vector<1x256xf32>
    %c393 = arith.constant 393 : index
    %1477 = memref.load %arg2[%c393] : memref<400xf32, #tpu.memory_space<smem>>
    %1478 = vector.broadcast %1477 : f32 to vector<1x256xf32>
    %1479 = arith.mulf %1478, %1416 : vector<1x256xf32>
    %1480 = arith.addf %1476, %1479 : vector<1x256xf32>
    %c238_i32 = arith.constant 238 : i32
    %1481 = tpu.dynamic_rotate %1 by %c238_i32 dim 1 : vector<4x256xf32>, i32 -> vector<4x256xf32>
    %1482 = arith.andi %29, %59 : vector<1x256xi1>
    %cst_44 = arith.constant 0.000000e+00 : f32
    %1483 = vector.shape_cast %1482 : vector<1x256xi1> to vector<1x256xi1>
    %1484 = vector.broadcast %1483 : vector<1x256xi1> to vector<4x256xi1>
    %1485 = vector.broadcast %cst_44 : f32 to vector<4x256xf32>
    %1486 = arith.select %1484, %1481, %1485 : vector<4x256xi1>, vector<4x256xf32>
    %1487 = vector.extract_strided_slice %1486 {offsets = [0, 0], sizes = [1, 256], strides = [1, 1]} : vector<4x256xf32> to vector<1x256xf32>
    %1488 = vector.extract_strided_slice %1486 {offsets = [1, 0], sizes = [1, 256], strides = [1, 1]} : vector<4x256xf32> to vector<1x256xf32>
    %1489 = vector.extract_strided_slice %1486 {offsets = [2, 0], sizes = [1, 256], strides = [1, 1]} : vector<4x256xf32> to vector<1x256xf32>
    %1490 = vector.extract_strided_slice %1486 {offsets = [3, 0], sizes = [1, 256], strides = [1, 1]} : vector<4x256xf32> to vector<1x256xf32>
    %c19 = arith.constant 19 : index
    %1491 = memref.load %arg2[%c19] : memref<400xf32, #tpu.memory_space<smem>>
    %1492 = vector.broadcast %1491 : f32 to vector<1x256xf32>
    %1493 = arith.mulf %1492, %1487 : vector<1x256xf32>
    %1494 = arith.addf %1432, %1493 : vector<1x256xf32>
    %c44 = arith.constant 44 : index
    %1495 = memref.load %arg2[%c44] : memref<400xf32, #tpu.memory_space<smem>>
    %1496 = vector.broadcast %1495 : f32 to vector<1x256xf32>
    %1497 = arith.mulf %1496, %1488 : vector<1x256xf32>
    %1498 = arith.addf %1494, %1497 : vector<1x256xf32>
    %c69 = arith.constant 69 : index
    %1499 = memref.load %arg2[%c69] : memref<400xf32, #tpu.memory_space<smem>>
    %1500 = vector.broadcast %1499 : f32 to vector<1x256xf32>
    %1501 = arith.mulf %1500, %1489 : vector<1x256xf32>
    %1502 = arith.addf %1498, %1501 : vector<1x256xf32>
    %c94 = arith.constant 94 : index
    %1503 = memref.load %arg2[%c94] : memref<400xf32, #tpu.memory_space<smem>>
    %1504 = vector.broadcast %1503 : f32 to vector<1x256xf32>
    %1505 = arith.mulf %1504, %1490 : vector<1x256xf32>
    %1506 = arith.addf %1502, %1505 : vector<1x256xf32>
    %c119 = arith.constant 119 : index
    %1507 = memref.load %arg2[%c119] : memref<400xf32, #tpu.memory_space<smem>>
    %1508 = vector.broadcast %1507 : f32 to vector<1x256xf32>
    %1509 = arith.mulf %1508, %1487 : vector<1x256xf32>
    %1510 = arith.addf %1448, %1509 : vector<1x256xf32>
    %c144 = arith.constant 144 : index
    %1511 = memref.load %arg2[%c144] : memref<400xf32, #tpu.memory_space<smem>>
    %1512 = vector.broadcast %1511 : f32 to vector<1x256xf32>
    %1513 = arith.mulf %1512, %1488 : vector<1x256xf32>
    %1514 = arith.addf %1510, %1513 : vector<1x256xf32>
    %c169 = arith.constant 169 : index
    %1515 = memref.load %arg2[%c169] : memref<400xf32, #tpu.memory_space<smem>>
    %1516 = vector.broadcast %1515 : f32 to vector<1x256xf32>
    %1517 = arith.mulf %1516, %1489 : vector<1x256xf32>
    %1518 = arith.addf %1514, %1517 : vector<1x256xf32>
    %c194 = arith.constant 194 : index
    %1519 = memref.load %arg2[%c194] : memref<400xf32, #tpu.memory_space<smem>>
    %1520 = vector.broadcast %1519 : f32 to vector<1x256xf32>
    %1521 = arith.mulf %1520, %1490 : vector<1x256xf32>
    %1522 = arith.addf %1518, %1521 : vector<1x256xf32>
    %c219 = arith.constant 219 : index
    %1523 = memref.load %arg2[%c219] : memref<400xf32, #tpu.memory_space<smem>>
    %1524 = vector.broadcast %1523 : f32 to vector<1x256xf32>
    %1525 = arith.mulf %1524, %1487 : vector<1x256xf32>
    %1526 = arith.addf %1464, %1525 : vector<1x256xf32>
    %c244 = arith.constant 244 : index
    %1527 = memref.load %arg2[%c244] : memref<400xf32, #tpu.memory_space<smem>>
    %1528 = vector.broadcast %1527 : f32 to vector<1x256xf32>
    %1529 = arith.mulf %1528, %1488 : vector<1x256xf32>
    %1530 = arith.addf %1526, %1529 : vector<1x256xf32>
    %c269 = arith.constant 269 : index
    %1531 = memref.load %arg2[%c269] : memref<400xf32, #tpu.memory_space<smem>>
    %1532 = vector.broadcast %1531 : f32 to vector<1x256xf32>
    %1533 = arith.mulf %1532, %1489 : vector<1x256xf32>
    %1534 = arith.addf %1530, %1533 : vector<1x256xf32>
    %c294 = arith.constant 294 : index
    %1535 = memref.load %arg2[%c294] : memref<400xf32, #tpu.memory_space<smem>>
    %1536 = vector.broadcast %1535 : f32 to vector<1x256xf32>
    %1537 = arith.mulf %1536, %1490 : vector<1x256xf32>
    %1538 = arith.addf %1534, %1537 : vector<1x256xf32>
    %c319 = arith.constant 319 : index
    %1539 = memref.load %arg2[%c319] : memref<400xf32, #tpu.memory_space<smem>>
    %1540 = vector.broadcast %1539 : f32 to vector<1x256xf32>
    %1541 = arith.mulf %1540, %1487 : vector<1x256xf32>
    %1542 = arith.addf %1480, %1541 : vector<1x256xf32>
    %c344 = arith.constant 344 : index
    %1543 = memref.load %arg2[%c344] : memref<400xf32, #tpu.memory_space<smem>>
    %1544 = vector.broadcast %1543 : f32 to vector<1x256xf32>
    %1545 = arith.mulf %1544, %1488 : vector<1x256xf32>
    %1546 = arith.addf %1542, %1545 : vector<1x256xf32>
    %c369 = arith.constant 369 : index
    %1547 = memref.load %arg2[%c369] : memref<400xf32, #tpu.memory_space<smem>>
    %1548 = vector.broadcast %1547 : f32 to vector<1x256xf32>
    %1549 = arith.mulf %1548, %1489 : vector<1x256xf32>
    %1550 = arith.addf %1546, %1549 : vector<1x256xf32>
    %c394 = arith.constant 394 : index
    %1551 = memref.load %arg2[%c394] : memref<400xf32, #tpu.memory_space<smem>>
    %1552 = vector.broadcast %1551 : f32 to vector<1x256xf32>
    %1553 = arith.mulf %1552, %1490 : vector<1x256xf32>
    %1554 = arith.addf %1550, %1553 : vector<1x256xf32>
    %c226_i32 = arith.constant 226 : i32
    %1555 = tpu.dynamic_rotate %1 by %c226_i32 dim 1 : vector<4x256xf32>, i32 -> vector<4x256xf32>
    %1556 = arith.andi %34, %39 : vector<1x256xi1>
    %cst_45 = arith.constant 0.000000e+00 : f32
    %1557 = vector.shape_cast %1556 : vector<1x256xi1> to vector<1x256xi1>
    %1558 = vector.broadcast %1557 : vector<1x256xi1> to vector<4x256xi1>
    %1559 = vector.broadcast %cst_45 : f32 to vector<4x256xf32>
    %1560 = arith.select %1558, %1555, %1559 : vector<4x256xi1>, vector<4x256xf32>
    %1561 = vector.extract_strided_slice %1560 {offsets = [0, 0], sizes = [1, 256], strides = [1, 1]} : vector<4x256xf32> to vector<1x256xf32>
    %1562 = vector.extract_strided_slice %1560 {offsets = [1, 0], sizes = [1, 256], strides = [1, 1]} : vector<4x256xf32> to vector<1x256xf32>
    %1563 = vector.extract_strided_slice %1560 {offsets = [2, 0], sizes = [1, 256], strides = [1, 1]} : vector<4x256xf32> to vector<1x256xf32>
    %1564 = vector.extract_strided_slice %1560 {offsets = [3, 0], sizes = [1, 256], strides = [1, 1]} : vector<4x256xf32> to vector<1x256xf32>
    %c20 = arith.constant 20 : index
    %1565 = memref.load %arg2[%c20] : memref<400xf32, #tpu.memory_space<smem>>
    %1566 = vector.broadcast %1565 : f32 to vector<1x256xf32>
    %1567 = arith.mulf %1566, %1561 : vector<1x256xf32>
    %1568 = arith.addf %1506, %1567 : vector<1x256xf32>
    %c45 = arith.constant 45 : index
    %1569 = memref.load %arg2[%c45] : memref<400xf32, #tpu.memory_space<smem>>
    %1570 = vector.broadcast %1569 : f32 to vector<1x256xf32>
    %1571 = arith.mulf %1570, %1562 : vector<1x256xf32>
    %1572 = arith.addf %1568, %1571 : vector<1x256xf32>
    %c70 = arith.constant 70 : index
    %1573 = memref.load %arg2[%c70] : memref<400xf32, #tpu.memory_space<smem>>
    %1574 = vector.broadcast %1573 : f32 to vector<1x256xf32>
    %1575 = arith.mulf %1574, %1563 : vector<1x256xf32>
    %1576 = arith.addf %1572, %1575 : vector<1x256xf32>
    %c95 = arith.constant 95 : index
    %1577 = memref.load %arg2[%c95] : memref<400xf32, #tpu.memory_space<smem>>
    %1578 = vector.broadcast %1577 : f32 to vector<1x256xf32>
    %1579 = arith.mulf %1578, %1564 : vector<1x256xf32>
    %1580 = arith.addf %1576, %1579 : vector<1x256xf32>
    %c120 = arith.constant 120 : index
    %1581 = memref.load %arg2[%c120] : memref<400xf32, #tpu.memory_space<smem>>
    %1582 = vector.broadcast %1581 : f32 to vector<1x256xf32>
    %1583 = arith.mulf %1582, %1561 : vector<1x256xf32>
    %1584 = arith.addf %1522, %1583 : vector<1x256xf32>
    %c145 = arith.constant 145 : index
    %1585 = memref.load %arg2[%c145] : memref<400xf32, #tpu.memory_space<smem>>
    %1586 = vector.broadcast %1585 : f32 to vector<1x256xf32>
    %1587 = arith.mulf %1586, %1562 : vector<1x256xf32>
    %1588 = arith.addf %1584, %1587 : vector<1x256xf32>
    %c170 = arith.constant 170 : index
    %1589 = memref.load %arg2[%c170] : memref<400xf32, #tpu.memory_space<smem>>
    %1590 = vector.broadcast %1589 : f32 to vector<1x256xf32>
    %1591 = arith.mulf %1590, %1563 : vector<1x256xf32>
    %1592 = arith.addf %1588, %1591 : vector<1x256xf32>
    %c195 = arith.constant 195 : index
    %1593 = memref.load %arg2[%c195] : memref<400xf32, #tpu.memory_space<smem>>
    %1594 = vector.broadcast %1593 : f32 to vector<1x256xf32>
    %1595 = arith.mulf %1594, %1564 : vector<1x256xf32>
    %1596 = arith.addf %1592, %1595 : vector<1x256xf32>
    %c220 = arith.constant 220 : index
    %1597 = memref.load %arg2[%c220] : memref<400xf32, #tpu.memory_space<smem>>
    %1598 = vector.broadcast %1597 : f32 to vector<1x256xf32>
    %1599 = arith.mulf %1598, %1561 : vector<1x256xf32>
    %1600 = arith.addf %1538, %1599 : vector<1x256xf32>
    %c245 = arith.constant 245 : index
    %1601 = memref.load %arg2[%c245] : memref<400xf32, #tpu.memory_space<smem>>
    %1602 = vector.broadcast %1601 : f32 to vector<1x256xf32>
    %1603 = arith.mulf %1602, %1562 : vector<1x256xf32>
    %1604 = arith.addf %1600, %1603 : vector<1x256xf32>
    %c270 = arith.constant 270 : index
    %1605 = memref.load %arg2[%c270] : memref<400xf32, #tpu.memory_space<smem>>
    %1606 = vector.broadcast %1605 : f32 to vector<1x256xf32>
    %1607 = arith.mulf %1606, %1563 : vector<1x256xf32>
    %1608 = arith.addf %1604, %1607 : vector<1x256xf32>
    %c295 = arith.constant 295 : index
    %1609 = memref.load %arg2[%c295] : memref<400xf32, #tpu.memory_space<smem>>
    %1610 = vector.broadcast %1609 : f32 to vector<1x256xf32>
    %1611 = arith.mulf %1610, %1564 : vector<1x256xf32>
    %1612 = arith.addf %1608, %1611 : vector<1x256xf32>
    %c320 = arith.constant 320 : index
    %1613 = memref.load %arg2[%c320] : memref<400xf32, #tpu.memory_space<smem>>
    %1614 = vector.broadcast %1613 : f32 to vector<1x256xf32>
    %1615 = arith.mulf %1614, %1561 : vector<1x256xf32>
    %1616 = arith.addf %1554, %1615 : vector<1x256xf32>
    %c345 = arith.constant 345 : index
    %1617 = memref.load %arg2[%c345] : memref<400xf32, #tpu.memory_space<smem>>
    %1618 = vector.broadcast %1617 : f32 to vector<1x256xf32>
    %1619 = arith.mulf %1618, %1562 : vector<1x256xf32>
    %1620 = arith.addf %1616, %1619 : vector<1x256xf32>
    %c370 = arith.constant 370 : index
    %1621 = memref.load %arg2[%c370] : memref<400xf32, #tpu.memory_space<smem>>
    %1622 = vector.broadcast %1621 : f32 to vector<1x256xf32>
    %1623 = arith.mulf %1622, %1563 : vector<1x256xf32>
    %1624 = arith.addf %1620, %1623 : vector<1x256xf32>
    %c395 = arith.constant 395 : index
    %1625 = memref.load %arg2[%c395] : memref<400xf32, #tpu.memory_space<smem>>
    %1626 = vector.broadcast %1625 : f32 to vector<1x256xf32>
    %1627 = arith.mulf %1626, %1564 : vector<1x256xf32>
    %1628 = arith.addf %1624, %1627 : vector<1x256xf32>
    %c225_i32 = arith.constant 225 : i32
    %1629 = tpu.dynamic_rotate %1 by %c225_i32 dim 1 : vector<4x256xf32>, i32 -> vector<4x256xf32>
    %1630 = arith.andi %34, %44 : vector<1x256xi1>
    %cst_46 = arith.constant 0.000000e+00 : f32
    %1631 = vector.shape_cast %1630 : vector<1x256xi1> to vector<1x256xi1>
    %1632 = vector.broadcast %1631 : vector<1x256xi1> to vector<4x256xi1>
    %1633 = vector.broadcast %cst_46 : f32 to vector<4x256xf32>
    %1634 = arith.select %1632, %1629, %1633 : vector<4x256xi1>, vector<4x256xf32>
    %1635 = vector.extract_strided_slice %1634 {offsets = [0, 0], sizes = [1, 256], strides = [1, 1]} : vector<4x256xf32> to vector<1x256xf32>
    %1636 = vector.extract_strided_slice %1634 {offsets = [1, 0], sizes = [1, 256], strides = [1, 1]} : vector<4x256xf32> to vector<1x256xf32>
    %1637 = vector.extract_strided_slice %1634 {offsets = [2, 0], sizes = [1, 256], strides = [1, 1]} : vector<4x256xf32> to vector<1x256xf32>
    %1638 = vector.extract_strided_slice %1634 {offsets = [3, 0], sizes = [1, 256], strides = [1, 1]} : vector<4x256xf32> to vector<1x256xf32>
    %c21 = arith.constant 21 : index
    %1639 = memref.load %arg2[%c21] : memref<400xf32, #tpu.memory_space<smem>>
    %1640 = vector.broadcast %1639 : f32 to vector<1x256xf32>
    %1641 = arith.mulf %1640, %1635 : vector<1x256xf32>
    %1642 = arith.addf %1580, %1641 : vector<1x256xf32>
    %c46 = arith.constant 46 : index
    %1643 = memref.load %arg2[%c46] : memref<400xf32, #tpu.memory_space<smem>>
    %1644 = vector.broadcast %1643 : f32 to vector<1x256xf32>
    %1645 = arith.mulf %1644, %1636 : vector<1x256xf32>
    %1646 = arith.addf %1642, %1645 : vector<1x256xf32>
    %c71 = arith.constant 71 : index
    %1647 = memref.load %arg2[%c71] : memref<400xf32, #tpu.memory_space<smem>>
    %1648 = vector.broadcast %1647 : f32 to vector<1x256xf32>
    %1649 = arith.mulf %1648, %1637 : vector<1x256xf32>
    %1650 = arith.addf %1646, %1649 : vector<1x256xf32>
    %c96 = arith.constant 96 : index
    %1651 = memref.load %arg2[%c96] : memref<400xf32, #tpu.memory_space<smem>>
    %1652 = vector.broadcast %1651 : f32 to vector<1x256xf32>
    %1653 = arith.mulf %1652, %1638 : vector<1x256xf32>
    %1654 = arith.addf %1650, %1653 : vector<1x256xf32>
    %c121 = arith.constant 121 : index
    %1655 = memref.load %arg2[%c121] : memref<400xf32, #tpu.memory_space<smem>>
    %1656 = vector.broadcast %1655 : f32 to vector<1x256xf32>
    %1657 = arith.mulf %1656, %1635 : vector<1x256xf32>
    %1658 = arith.addf %1596, %1657 : vector<1x256xf32>
    %c146 = arith.constant 146 : index
    %1659 = memref.load %arg2[%c146] : memref<400xf32, #tpu.memory_space<smem>>
    %1660 = vector.broadcast %1659 : f32 to vector<1x256xf32>
    %1661 = arith.mulf %1660, %1636 : vector<1x256xf32>
    %1662 = arith.addf %1658, %1661 : vector<1x256xf32>
    %c171 = arith.constant 171 : index
    %1663 = memref.load %arg2[%c171] : memref<400xf32, #tpu.memory_space<smem>>
    %1664 = vector.broadcast %1663 : f32 to vector<1x256xf32>
    %1665 = arith.mulf %1664, %1637 : vector<1x256xf32>
    %1666 = arith.addf %1662, %1665 : vector<1x256xf32>
    %c196 = arith.constant 196 : index
    %1667 = memref.load %arg2[%c196] : memref<400xf32, #tpu.memory_space<smem>>
    %1668 = vector.broadcast %1667 : f32 to vector<1x256xf32>
    %1669 = arith.mulf %1668, %1638 : vector<1x256xf32>
    %1670 = arith.addf %1666, %1669 : vector<1x256xf32>
    %c221 = arith.constant 221 : index
    %1671 = memref.load %arg2[%c221] : memref<400xf32, #tpu.memory_space<smem>>
    %1672 = vector.broadcast %1671 : f32 to vector<1x256xf32>
    %1673 = arith.mulf %1672, %1635 : vector<1x256xf32>
    %1674 = arith.addf %1612, %1673 : vector<1x256xf32>
    %c246 = arith.constant 246 : index
    %1675 = memref.load %arg2[%c246] : memref<400xf32, #tpu.memory_space<smem>>
    %1676 = vector.broadcast %1675 : f32 to vector<1x256xf32>
    %1677 = arith.mulf %1676, %1636 : vector<1x256xf32>
    %1678 = arith.addf %1674, %1677 : vector<1x256xf32>
    %c271 = arith.constant 271 : index
    %1679 = memref.load %arg2[%c271] : memref<400xf32, #tpu.memory_space<smem>>
    %1680 = vector.broadcast %1679 : f32 to vector<1x256xf32>
    %1681 = arith.mulf %1680, %1637 : vector<1x256xf32>
    %1682 = arith.addf %1678, %1681 : vector<1x256xf32>
    %c296 = arith.constant 296 : index
    %1683 = memref.load %arg2[%c296] : memref<400xf32, #tpu.memory_space<smem>>
    %1684 = vector.broadcast %1683 : f32 to vector<1x256xf32>
    %1685 = arith.mulf %1684, %1638 : vector<1x256xf32>
    %1686 = arith.addf %1682, %1685 : vector<1x256xf32>
    %c321 = arith.constant 321 : index
    %1687 = memref.load %arg2[%c321] : memref<400xf32, #tpu.memory_space<smem>>
    %1688 = vector.broadcast %1687 : f32 to vector<1x256xf32>
    %1689 = arith.mulf %1688, %1635 : vector<1x256xf32>
    %1690 = arith.addf %1628, %1689 : vector<1x256xf32>
    %c346 = arith.constant 346 : index
    %1691 = memref.load %arg2[%c346] : memref<400xf32, #tpu.memory_space<smem>>
    %1692 = vector.broadcast %1691 : f32 to vector<1x256xf32>
    %1693 = arith.mulf %1692, %1636 : vector<1x256xf32>
    %1694 = arith.addf %1690, %1693 : vector<1x256xf32>
    %c371 = arith.constant 371 : index
    %1695 = memref.load %arg2[%c371] : memref<400xf32, #tpu.memory_space<smem>>
    %1696 = vector.broadcast %1695 : f32 to vector<1x256xf32>
    %1697 = arith.mulf %1696, %1637 : vector<1x256xf32>
    %1698 = arith.addf %1694, %1697 : vector<1x256xf32>
    %c396 = arith.constant 396 : index
    %1699 = memref.load %arg2[%c396] : memref<400xf32, #tpu.memory_space<smem>>
    %1700 = vector.broadcast %1699 : f32 to vector<1x256xf32>
    %1701 = arith.mulf %1700, %1638 : vector<1x256xf32>
    %1702 = arith.addf %1698, %1701 : vector<1x256xf32>
    %c224_i32_47 = arith.constant 224 : i32
    %1703 = tpu.dynamic_rotate %1 by %c224_i32_47 dim 1 : vector<4x256xf32>, i32 -> vector<4x256xf32>
    %1704 = arith.andi %34, %49 : vector<1x256xi1>
    %cst_48 = arith.constant 0.000000e+00 : f32
    %1705 = vector.shape_cast %1704 : vector<1x256xi1> to vector<1x256xi1>
    %1706 = vector.broadcast %1705 : vector<1x256xi1> to vector<4x256xi1>
    %1707 = vector.broadcast %cst_48 : f32 to vector<4x256xf32>
    %1708 = arith.select %1706, %1703, %1707 : vector<4x256xi1>, vector<4x256xf32>
    %1709 = vector.extract_strided_slice %1708 {offsets = [0, 0], sizes = [1, 256], strides = [1, 1]} : vector<4x256xf32> to vector<1x256xf32>
    %1710 = vector.extract_strided_slice %1708 {offsets = [1, 0], sizes = [1, 256], strides = [1, 1]} : vector<4x256xf32> to vector<1x256xf32>
    %1711 = vector.extract_strided_slice %1708 {offsets = [2, 0], sizes = [1, 256], strides = [1, 1]} : vector<4x256xf32> to vector<1x256xf32>
    %1712 = vector.extract_strided_slice %1708 {offsets = [3, 0], sizes = [1, 256], strides = [1, 1]} : vector<4x256xf32> to vector<1x256xf32>
    %c22 = arith.constant 22 : index
    %1713 = memref.load %arg2[%c22] : memref<400xf32, #tpu.memory_space<smem>>
    %1714 = vector.broadcast %1713 : f32 to vector<1x256xf32>
    %1715 = arith.mulf %1714, %1709 : vector<1x256xf32>
    %1716 = arith.addf %1654, %1715 : vector<1x256xf32>
    %c47 = arith.constant 47 : index
    %1717 = memref.load %arg2[%c47] : memref<400xf32, #tpu.memory_space<smem>>
    %1718 = vector.broadcast %1717 : f32 to vector<1x256xf32>
    %1719 = arith.mulf %1718, %1710 : vector<1x256xf32>
    %1720 = arith.addf %1716, %1719 : vector<1x256xf32>
    %c72 = arith.constant 72 : index
    %1721 = memref.load %arg2[%c72] : memref<400xf32, #tpu.memory_space<smem>>
    %1722 = vector.broadcast %1721 : f32 to vector<1x256xf32>
    %1723 = arith.mulf %1722, %1711 : vector<1x256xf32>
    %1724 = arith.addf %1720, %1723 : vector<1x256xf32>
    %c97 = arith.constant 97 : index
    %1725 = memref.load %arg2[%c97] : memref<400xf32, #tpu.memory_space<smem>>
    %1726 = vector.broadcast %1725 : f32 to vector<1x256xf32>
    %1727 = arith.mulf %1726, %1712 : vector<1x256xf32>
    %1728 = arith.addf %1724, %1727 : vector<1x256xf32>
    %c122 = arith.constant 122 : index
    %1729 = memref.load %arg2[%c122] : memref<400xf32, #tpu.memory_space<smem>>
    %1730 = vector.broadcast %1729 : f32 to vector<1x256xf32>
    %1731 = arith.mulf %1730, %1709 : vector<1x256xf32>
    %1732 = arith.addf %1670, %1731 : vector<1x256xf32>
    %c147 = arith.constant 147 : index
    %1733 = memref.load %arg2[%c147] : memref<400xf32, #tpu.memory_space<smem>>
    %1734 = vector.broadcast %1733 : f32 to vector<1x256xf32>
    %1735 = arith.mulf %1734, %1710 : vector<1x256xf32>
    %1736 = arith.addf %1732, %1735 : vector<1x256xf32>
    %c172 = arith.constant 172 : index
    %1737 = memref.load %arg2[%c172] : memref<400xf32, #tpu.memory_space<smem>>
    %1738 = vector.broadcast %1737 : f32 to vector<1x256xf32>
    %1739 = arith.mulf %1738, %1711 : vector<1x256xf32>
    %1740 = arith.addf %1736, %1739 : vector<1x256xf32>
    %c197 = arith.constant 197 : index
    %1741 = memref.load %arg2[%c197] : memref<400xf32, #tpu.memory_space<smem>>
    %1742 = vector.broadcast %1741 : f32 to vector<1x256xf32>
    %1743 = arith.mulf %1742, %1712 : vector<1x256xf32>
    %1744 = arith.addf %1740, %1743 : vector<1x256xf32>
    %c222 = arith.constant 222 : index
    %1745 = memref.load %arg2[%c222] : memref<400xf32, #tpu.memory_space<smem>>
    %1746 = vector.broadcast %1745 : f32 to vector<1x256xf32>
    %1747 = arith.mulf %1746, %1709 : vector<1x256xf32>
    %1748 = arith.addf %1686, %1747 : vector<1x256xf32>
    %c247 = arith.constant 247 : index
    %1749 = memref.load %arg2[%c247] : memref<400xf32, #tpu.memory_space<smem>>
    %1750 = vector.broadcast %1749 : f32 to vector<1x256xf32>
    %1751 = arith.mulf %1750, %1710 : vector<1x256xf32>
    %1752 = arith.addf %1748, %1751 : vector<1x256xf32>
    %c272 = arith.constant 272 : index
    %1753 = memref.load %arg2[%c272] : memref<400xf32, #tpu.memory_space<smem>>
    %1754 = vector.broadcast %1753 : f32 to vector<1x256xf32>
    %1755 = arith.mulf %1754, %1711 : vector<1x256xf32>
    %1756 = arith.addf %1752, %1755 : vector<1x256xf32>
    %c297 = arith.constant 297 : index
    %1757 = memref.load %arg2[%c297] : memref<400xf32, #tpu.memory_space<smem>>
    %1758 = vector.broadcast %1757 : f32 to vector<1x256xf32>
    %1759 = arith.mulf %1758, %1712 : vector<1x256xf32>
    %1760 = arith.addf %1756, %1759 : vector<1x256xf32>
    %c322 = arith.constant 322 : index
    %1761 = memref.load %arg2[%c322] : memref<400xf32, #tpu.memory_space<smem>>
    %1762 = vector.broadcast %1761 : f32 to vector<1x256xf32>
    %1763 = arith.mulf %1762, %1709 : vector<1x256xf32>
    %1764 = arith.addf %1702, %1763 : vector<1x256xf32>
    %c347 = arith.constant 347 : index
    %1765 = memref.load %arg2[%c347] : memref<400xf32, #tpu.memory_space<smem>>
    %1766 = vector.broadcast %1765 : f32 to vector<1x256xf32>
    %1767 = arith.mulf %1766, %1710 : vector<1x256xf32>
    %1768 = arith.addf %1764, %1767 : vector<1x256xf32>
    %c372 = arith.constant 372 : index
    %1769 = memref.load %arg2[%c372] : memref<400xf32, #tpu.memory_space<smem>>
    %1770 = vector.broadcast %1769 : f32 to vector<1x256xf32>
    %1771 = arith.mulf %1770, %1711 : vector<1x256xf32>
    %1772 = arith.addf %1768, %1771 : vector<1x256xf32>
    %c397 = arith.constant 397 : index
    %1773 = memref.load %arg2[%c397] : memref<400xf32, #tpu.memory_space<smem>>
    %1774 = vector.broadcast %1773 : f32 to vector<1x256xf32>
    %1775 = arith.mulf %1774, %1712 : vector<1x256xf32>
    %1776 = arith.addf %1772, %1775 : vector<1x256xf32>
    %c223_i32 = arith.constant 223 : i32
    %1777 = tpu.dynamic_rotate %1 by %c223_i32 dim 1 : vector<4x256xf32>, i32 -> vector<4x256xf32>
    %1778 = arith.andi %34, %54 : vector<1x256xi1>
    %cst_49 = arith.constant 0.000000e+00 : f32
    %1779 = vector.shape_cast %1778 : vector<1x256xi1> to vector<1x256xi1>
    %1780 = vector.broadcast %1779 : vector<1x256xi1> to vector<4x256xi1>
    %1781 = vector.broadcast %cst_49 : f32 to vector<4x256xf32>
    %1782 = arith.select %1780, %1777, %1781 : vector<4x256xi1>, vector<4x256xf32>
    %1783 = vector.extract_strided_slice %1782 {offsets = [0, 0], sizes = [1, 256], strides = [1, 1]} : vector<4x256xf32> to vector<1x256xf32>
    %1784 = vector.extract_strided_slice %1782 {offsets = [1, 0], sizes = [1, 256], strides = [1, 1]} : vector<4x256xf32> to vector<1x256xf32>
    %1785 = vector.extract_strided_slice %1782 {offsets = [2, 0], sizes = [1, 256], strides = [1, 1]} : vector<4x256xf32> to vector<1x256xf32>
    %1786 = vector.extract_strided_slice %1782 {offsets = [3, 0], sizes = [1, 256], strides = [1, 1]} : vector<4x256xf32> to vector<1x256xf32>
    %c23 = arith.constant 23 : index
    %1787 = memref.load %arg2[%c23] : memref<400xf32, #tpu.memory_space<smem>>
    %1788 = vector.broadcast %1787 : f32 to vector<1x256xf32>
    %1789 = arith.mulf %1788, %1783 : vector<1x256xf32>
    %1790 = arith.addf %1728, %1789 : vector<1x256xf32>
    %c48 = arith.constant 48 : index
    %1791 = memref.load %arg2[%c48] : memref<400xf32, #tpu.memory_space<smem>>
    %1792 = vector.broadcast %1791 : f32 to vector<1x256xf32>
    %1793 = arith.mulf %1792, %1784 : vector<1x256xf32>
    %1794 = arith.addf %1790, %1793 : vector<1x256xf32>
    %c73 = arith.constant 73 : index
    %1795 = memref.load %arg2[%c73] : memref<400xf32, #tpu.memory_space<smem>>
    %1796 = vector.broadcast %1795 : f32 to vector<1x256xf32>
    %1797 = arith.mulf %1796, %1785 : vector<1x256xf32>
    %1798 = arith.addf %1794, %1797 : vector<1x256xf32>
    %c98 = arith.constant 98 : index
    %1799 = memref.load %arg2[%c98] : memref<400xf32, #tpu.memory_space<smem>>
    %1800 = vector.broadcast %1799 : f32 to vector<1x256xf32>
    %1801 = arith.mulf %1800, %1786 : vector<1x256xf32>
    %1802 = arith.addf %1798, %1801 : vector<1x256xf32>
    %c123 = arith.constant 123 : index
    %1803 = memref.load %arg2[%c123] : memref<400xf32, #tpu.memory_space<smem>>
    %1804 = vector.broadcast %1803 : f32 to vector<1x256xf32>
    %1805 = arith.mulf %1804, %1783 : vector<1x256xf32>
    %1806 = arith.addf %1744, %1805 : vector<1x256xf32>
    %c148 = arith.constant 148 : index
    %1807 = memref.load %arg2[%c148] : memref<400xf32, #tpu.memory_space<smem>>
    %1808 = vector.broadcast %1807 : f32 to vector<1x256xf32>
    %1809 = arith.mulf %1808, %1784 : vector<1x256xf32>
    %1810 = arith.addf %1806, %1809 : vector<1x256xf32>
    %c173 = arith.constant 173 : index
    %1811 = memref.load %arg2[%c173] : memref<400xf32, #tpu.memory_space<smem>>
    %1812 = vector.broadcast %1811 : f32 to vector<1x256xf32>
    %1813 = arith.mulf %1812, %1785 : vector<1x256xf32>
    %1814 = arith.addf %1810, %1813 : vector<1x256xf32>
    %c198 = arith.constant 198 : index
    %1815 = memref.load %arg2[%c198] : memref<400xf32, #tpu.memory_space<smem>>
    %1816 = vector.broadcast %1815 : f32 to vector<1x256xf32>
    %1817 = arith.mulf %1816, %1786 : vector<1x256xf32>
    %1818 = arith.addf %1814, %1817 : vector<1x256xf32>
    %c223 = arith.constant 223 : index
    %1819 = memref.load %arg2[%c223] : memref<400xf32, #tpu.memory_space<smem>>
    %1820 = vector.broadcast %1819 : f32 to vector<1x256xf32>
    %1821 = arith.mulf %1820, %1783 : vector<1x256xf32>
    %1822 = arith.addf %1760, %1821 : vector<1x256xf32>
    %c248 = arith.constant 248 : index
    %1823 = memref.load %arg2[%c248] : memref<400xf32, #tpu.memory_space<smem>>
    %1824 = vector.broadcast %1823 : f32 to vector<1x256xf32>
    %1825 = arith.mulf %1824, %1784 : vector<1x256xf32>
    %1826 = arith.addf %1822, %1825 : vector<1x256xf32>
    %c273 = arith.constant 273 : index
    %1827 = memref.load %arg2[%c273] : memref<400xf32, #tpu.memory_space<smem>>
    %1828 = vector.broadcast %1827 : f32 to vector<1x256xf32>
    %1829 = arith.mulf %1828, %1785 : vector<1x256xf32>
    %1830 = arith.addf %1826, %1829 : vector<1x256xf32>
    %c298 = arith.constant 298 : index
    %1831 = memref.load %arg2[%c298] : memref<400xf32, #tpu.memory_space<smem>>
    %1832 = vector.broadcast %1831 : f32 to vector<1x256xf32>
    %1833 = arith.mulf %1832, %1786 : vector<1x256xf32>
    %1834 = arith.addf %1830, %1833 : vector<1x256xf32>
    %c323 = arith.constant 323 : index
    %1835 = memref.load %arg2[%c323] : memref<400xf32, #tpu.memory_space<smem>>
    %1836 = vector.broadcast %1835 : f32 to vector<1x256xf32>
    %1837 = arith.mulf %1836, %1783 : vector<1x256xf32>
    %1838 = arith.addf %1776, %1837 : vector<1x256xf32>
    %c348 = arith.constant 348 : index
    %1839 = memref.load %arg2[%c348] : memref<400xf32, #tpu.memory_space<smem>>
    %1840 = vector.broadcast %1839 : f32 to vector<1x256xf32>
    %1841 = arith.mulf %1840, %1784 : vector<1x256xf32>
    %1842 = arith.addf %1838, %1841 : vector<1x256xf32>
    %c373 = arith.constant 373 : index
    %1843 = memref.load %arg2[%c373] : memref<400xf32, #tpu.memory_space<smem>>
    %1844 = vector.broadcast %1843 : f32 to vector<1x256xf32>
    %1845 = arith.mulf %1844, %1785 : vector<1x256xf32>
    %1846 = arith.addf %1842, %1845 : vector<1x256xf32>
    %c398 = arith.constant 398 : index
    %1847 = memref.load %arg2[%c398] : memref<400xf32, #tpu.memory_space<smem>>
    %1848 = vector.broadcast %1847 : f32 to vector<1x256xf32>
    %1849 = arith.mulf %1848, %1786 : vector<1x256xf32>
    %1850 = arith.addf %1846, %1849 : vector<1x256xf32>
    %c222_i32 = arith.constant 222 : i32
    %1851 = tpu.dynamic_rotate %1 by %c222_i32 dim 1 : vector<4x256xf32>, i32 -> vector<4x256xf32>
    %1852 = arith.andi %34, %59 : vector<1x256xi1>
    %cst_50 = arith.constant 0.000000e+00 : f32
    %1853 = vector.shape_cast %1852 : vector<1x256xi1> to vector<1x256xi1>
    %1854 = vector.broadcast %1853 : vector<1x256xi1> to vector<4x256xi1>
    %1855 = vector.broadcast %cst_50 : f32 to vector<4x256xf32>
    %1856 = arith.select %1854, %1851, %1855 : vector<4x256xi1>, vector<4x256xf32>
    %1857 = vector.extract_strided_slice %1856 {offsets = [0, 0], sizes = [1, 256], strides = [1, 1]} : vector<4x256xf32> to vector<1x256xf32>
    %1858 = vector.extract_strided_slice %1856 {offsets = [1, 0], sizes = [1, 256], strides = [1, 1]} : vector<4x256xf32> to vector<1x256xf32>
    %1859 = vector.extract_strided_slice %1856 {offsets = [2, 0], sizes = [1, 256], strides = [1, 1]} : vector<4x256xf32> to vector<1x256xf32>
    %1860 = vector.extract_strided_slice %1856 {offsets = [3, 0], sizes = [1, 256], strides = [1, 1]} : vector<4x256xf32> to vector<1x256xf32>
    %c24 = arith.constant 24 : index
    %1861 = memref.load %arg2[%c24] : memref<400xf32, #tpu.memory_space<smem>>
    %1862 = vector.broadcast %1861 : f32 to vector<1x256xf32>
    %1863 = arith.mulf %1862, %1857 : vector<1x256xf32>
    %1864 = arith.addf %1802, %1863 : vector<1x256xf32>
    %c49 = arith.constant 49 : index
    %1865 = memref.load %arg2[%c49] : memref<400xf32, #tpu.memory_space<smem>>
    %1866 = vector.broadcast %1865 : f32 to vector<1x256xf32>
    %1867 = arith.mulf %1866, %1858 : vector<1x256xf32>
    %1868 = arith.addf %1864, %1867 : vector<1x256xf32>
    %c74 = arith.constant 74 : index
    %1869 = memref.load %arg2[%c74] : memref<400xf32, #tpu.memory_space<smem>>
    %1870 = vector.broadcast %1869 : f32 to vector<1x256xf32>
    %1871 = arith.mulf %1870, %1859 : vector<1x256xf32>
    %1872 = arith.addf %1868, %1871 : vector<1x256xf32>
    %c99 = arith.constant 99 : index
    %1873 = memref.load %arg2[%c99] : memref<400xf32, #tpu.memory_space<smem>>
    %1874 = vector.broadcast %1873 : f32 to vector<1x256xf32>
    %1875 = arith.mulf %1874, %1860 : vector<1x256xf32>
    %1876 = arith.addf %1872, %1875 : vector<1x256xf32>
    %c124 = arith.constant 124 : index
    %1877 = memref.load %arg2[%c124] : memref<400xf32, #tpu.memory_space<smem>>
    %1878 = vector.broadcast %1877 : f32 to vector<1x256xf32>
    %1879 = arith.mulf %1878, %1857 : vector<1x256xf32>
    %1880 = arith.addf %1818, %1879 : vector<1x256xf32>
    %c149 = arith.constant 149 : index
    %1881 = memref.load %arg2[%c149] : memref<400xf32, #tpu.memory_space<smem>>
    %1882 = vector.broadcast %1881 : f32 to vector<1x256xf32>
    %1883 = arith.mulf %1882, %1858 : vector<1x256xf32>
    %1884 = arith.addf %1880, %1883 : vector<1x256xf32>
    %c174 = arith.constant 174 : index
    %1885 = memref.load %arg2[%c174] : memref<400xf32, #tpu.memory_space<smem>>
    %1886 = vector.broadcast %1885 : f32 to vector<1x256xf32>
    %1887 = arith.mulf %1886, %1859 : vector<1x256xf32>
    %1888 = arith.addf %1884, %1887 : vector<1x256xf32>
    %c199 = arith.constant 199 : index
    %1889 = memref.load %arg2[%c199] : memref<400xf32, #tpu.memory_space<smem>>
    %1890 = vector.broadcast %1889 : f32 to vector<1x256xf32>
    %1891 = arith.mulf %1890, %1860 : vector<1x256xf32>
    %1892 = arith.addf %1888, %1891 : vector<1x256xf32>
    %c224 = arith.constant 224 : index
    %1893 = memref.load %arg2[%c224] : memref<400xf32, #tpu.memory_space<smem>>
    %1894 = vector.broadcast %1893 : f32 to vector<1x256xf32>
    %1895 = arith.mulf %1894, %1857 : vector<1x256xf32>
    %1896 = arith.addf %1834, %1895 : vector<1x256xf32>
    %c249 = arith.constant 249 : index
    %1897 = memref.load %arg2[%c249] : memref<400xf32, #tpu.memory_space<smem>>
    %1898 = vector.broadcast %1897 : f32 to vector<1x256xf32>
    %1899 = arith.mulf %1898, %1858 : vector<1x256xf32>
    %1900 = arith.addf %1896, %1899 : vector<1x256xf32>
    %c274 = arith.constant 274 : index
    %1901 = memref.load %arg2[%c274] : memref<400xf32, #tpu.memory_space<smem>>
    %1902 = vector.broadcast %1901 : f32 to vector<1x256xf32>
    %1903 = arith.mulf %1902, %1859 : vector<1x256xf32>
    %1904 = arith.addf %1900, %1903 : vector<1x256xf32>
    %c299 = arith.constant 299 : index
    %1905 = memref.load %arg2[%c299] : memref<400xf32, #tpu.memory_space<smem>>
    %1906 = vector.broadcast %1905 : f32 to vector<1x256xf32>
    %1907 = arith.mulf %1906, %1860 : vector<1x256xf32>
    %1908 = arith.addf %1904, %1907 : vector<1x256xf32>
    %c324 = arith.constant 324 : index
    %1909 = memref.load %arg2[%c324] : memref<400xf32, #tpu.memory_space<smem>>
    %1910 = vector.broadcast %1909 : f32 to vector<1x256xf32>
    %1911 = arith.mulf %1910, %1857 : vector<1x256xf32>
    %1912 = arith.addf %1850, %1911 : vector<1x256xf32>
    %c349 = arith.constant 349 : index
    %1913 = memref.load %arg2[%c349] : memref<400xf32, #tpu.memory_space<smem>>
    %1914 = vector.broadcast %1913 : f32 to vector<1x256xf32>
    %1915 = arith.mulf %1914, %1858 : vector<1x256xf32>
    %1916 = arith.addf %1912, %1915 : vector<1x256xf32>
    %c374 = arith.constant 374 : index
    %1917 = memref.load %arg2[%c374] : memref<400xf32, #tpu.memory_space<smem>>
    %1918 = vector.broadcast %1917 : f32 to vector<1x256xf32>
    %1919 = arith.mulf %1918, %1859 : vector<1x256xf32>
    %1920 = arith.addf %1916, %1919 : vector<1x256xf32>
    %c399 = arith.constant 399 : index
    %1921 = memref.load %arg2[%c399] : memref<400xf32, #tpu.memory_space<smem>>
    %1922 = vector.broadcast %1921 : f32 to vector<1x256xf32>
    %1923 = arith.mulf %1922, %1860 : vector<1x256xf32>
    %1924 = arith.addf %1920, %1923 : vector<1x256xf32>
    %cst_51 = arith.constant 0.000000e+00 : f32
    %1925 = vector.broadcast %cst_51 : f32 to vector<1x256xf32>
    %1926 = arith.maximumf %1876, %1925 : vector<1x256xf32>
    %cst_52 = arith.constant 0.000000e+00 : f32
    %1927 = vector.broadcast %cst_52 : f32 to vector<1x256xf32>
    %1928 = arith.maximumf %1892, %1927 : vector<1x256xf32>
    %cst_53 = arith.constant 0.000000e+00 : f32
    %1929 = vector.broadcast %cst_53 : f32 to vector<1x256xf32>
    %1930 = arith.maximumf %1908, %1929 : vector<1x256xf32>
    %cst_54 = arith.constant 0.000000e+00 : f32
    %1931 = vector.broadcast %cst_54 : f32 to vector<1x256xf32>
    %1932 = arith.maximumf %1924, %1931 : vector<1x256xf32>
    %1933 = tpu.concatenate %1926, %1928, %1930, %1932 in 0 : vector<1x256xf32>, vector<1x256xf32>, vector<1x256xf32>, vector<1x256xf32> -> vector<4x256xf32>
    %cst_55 = arith.constant 0.000000e+00 : f32
    %1934 = vector.broadcast %cst_55 : f32 to vector<1x256xf32>
    %c0_56 = arith.constant 0 : index
    %1935 = memref.load %arg5[%c0_56] : memref<4xf32, #tpu.memory_space<smem>>
    %1936 = vector.broadcast %1935 : f32 to vector<1x256xf32>
    %1937 = arith.addf %1934, %1936 : vector<1x256xf32>
    %cst_57 = arith.constant 0.000000e+00 : f32
    %1938 = vector.broadcast %cst_57 : f32 to vector<1x256xf32>
    %c1_58 = arith.constant 1 : index
    %1939 = memref.load %arg5[%c1_58] : memref<4xf32, #tpu.memory_space<smem>>
    %1940 = vector.broadcast %1939 : f32 to vector<1x256xf32>
    %1941 = arith.addf %1938, %1940 : vector<1x256xf32>
    %cst_59 = arith.constant 0.000000e+00 : f32
    %1942 = vector.broadcast %cst_59 : f32 to vector<1x256xf32>
    %c2_60 = arith.constant 2 : index
    %1943 = memref.load %arg5[%c2_60] : memref<4xf32, #tpu.memory_space<smem>>
    %1944 = vector.broadcast %1943 : f32 to vector<1x256xf32>
    %1945 = arith.addf %1942, %1944 : vector<1x256xf32>
    %cst_61 = arith.constant 0.000000e+00 : f32
    %1946 = vector.broadcast %cst_61 : f32 to vector<1x256xf32>
    %c3_62 = arith.constant 3 : index
    %1947 = memref.load %arg5[%c3_62] : memref<4xf32, #tpu.memory_space<smem>>
    %1948 = vector.broadcast %1947 : f32 to vector<1x256xf32>
    %1949 = arith.addf %1946, %1948 : vector<1x256xf32>
    %c17_i32_63 = arith.constant 17 : i32
    %1950 = tpu.dynamic_rotate %1933 by %c17_i32_63 dim 1 : vector<4x256xf32>, i32 -> vector<4x256xf32>
    %1951 = arith.andi %19, %44 : vector<1x256xi1>
    %cst_64 = arith.constant 0.000000e+00 : f32
    %1952 = vector.shape_cast %1951 : vector<1x256xi1> to vector<1x256xi1>
    %1953 = vector.broadcast %1952 : vector<1x256xi1> to vector<4x256xi1>
    %1954 = vector.broadcast %cst_64 : f32 to vector<4x256xf32>
    %1955 = arith.select %1953, %1950, %1954 : vector<4x256xi1>, vector<4x256xf32>
    %1956 = vector.extract_strided_slice %1955 {offsets = [0, 0], sizes = [1, 256], strides = [1, 1]} : vector<4x256xf32> to vector<1x256xf32>
    %1957 = vector.extract_strided_slice %1955 {offsets = [1, 0], sizes = [1, 256], strides = [1, 1]} : vector<4x256xf32> to vector<1x256xf32>
    %1958 = vector.extract_strided_slice %1955 {offsets = [2, 0], sizes = [1, 256], strides = [1, 1]} : vector<4x256xf32> to vector<1x256xf32>
    %1959 = vector.extract_strided_slice %1955 {offsets = [3, 0], sizes = [1, 256], strides = [1, 1]} : vector<4x256xf32> to vector<1x256xf32>
    %c0_65 = arith.constant 0 : index
    %1960 = memref.load %arg4[%c0_65] : memref<144xf32, #tpu.memory_space<smem>>
    %1961 = vector.broadcast %1960 : f32 to vector<1x256xf32>
    %1962 = arith.mulf %1961, %1956 : vector<1x256xf32>
    %1963 = arith.addf %1937, %1962 : vector<1x256xf32>
    %c9_66 = arith.constant 9 : index
    %1964 = memref.load %arg4[%c9_66] : memref<144xf32, #tpu.memory_space<smem>>
    %1965 = vector.broadcast %1964 : f32 to vector<1x256xf32>
    %1966 = arith.mulf %1965, %1957 : vector<1x256xf32>
    %1967 = arith.addf %1963, %1966 : vector<1x256xf32>
    %c18_67 = arith.constant 18 : index
    %1968 = memref.load %arg4[%c18_67] : memref<144xf32, #tpu.memory_space<smem>>
    %1969 = vector.broadcast %1968 : f32 to vector<1x256xf32>
    %1970 = arith.mulf %1969, %1958 : vector<1x256xf32>
    %1971 = arith.addf %1967, %1970 : vector<1x256xf32>
    %c27_68 = arith.constant 27 : index
    %1972 = memref.load %arg4[%c27_68] : memref<144xf32, #tpu.memory_space<smem>>
    %1973 = vector.broadcast %1972 : f32 to vector<1x256xf32>
    %1974 = arith.mulf %1973, %1959 : vector<1x256xf32>
    %1975 = arith.addf %1971, %1974 : vector<1x256xf32>
    %c36_69 = arith.constant 36 : index
    %1976 = memref.load %arg4[%c36_69] : memref<144xf32, #tpu.memory_space<smem>>
    %1977 = vector.broadcast %1976 : f32 to vector<1x256xf32>
    %1978 = arith.mulf %1977, %1956 : vector<1x256xf32>
    %1979 = arith.addf %1941, %1978 : vector<1x256xf32>
    %c45_70 = arith.constant 45 : index
    %1980 = memref.load %arg4[%c45_70] : memref<144xf32, #tpu.memory_space<smem>>
    %1981 = vector.broadcast %1980 : f32 to vector<1x256xf32>
    %1982 = arith.mulf %1981, %1957 : vector<1x256xf32>
    %1983 = arith.addf %1979, %1982 : vector<1x256xf32>
    %c54_71 = arith.constant 54 : index
    %1984 = memref.load %arg4[%c54_71] : memref<144xf32, #tpu.memory_space<smem>>
    %1985 = vector.broadcast %1984 : f32 to vector<1x256xf32>
    %1986 = arith.mulf %1985, %1958 : vector<1x256xf32>
    %1987 = arith.addf %1983, %1986 : vector<1x256xf32>
    %c63_72 = arith.constant 63 : index
    %1988 = memref.load %arg4[%c63_72] : memref<144xf32, #tpu.memory_space<smem>>
    %1989 = vector.broadcast %1988 : f32 to vector<1x256xf32>
    %1990 = arith.mulf %1989, %1959 : vector<1x256xf32>
    %1991 = arith.addf %1987, %1990 : vector<1x256xf32>
    %c72_73 = arith.constant 72 : index
    %1992 = memref.load %arg4[%c72_73] : memref<144xf32, #tpu.memory_space<smem>>
    %1993 = vector.broadcast %1992 : f32 to vector<1x256xf32>
    %1994 = arith.mulf %1993, %1956 : vector<1x256xf32>
    %1995 = arith.addf %1945, %1994 : vector<1x256xf32>
    %c81_74 = arith.constant 81 : index
    %1996 = memref.load %arg4[%c81_74] : memref<144xf32, #tpu.memory_space<smem>>
    %1997 = vector.broadcast %1996 : f32 to vector<1x256xf32>
    %1998 = arith.mulf %1997, %1957 : vector<1x256xf32>
    %1999 = arith.addf %1995, %1998 : vector<1x256xf32>
    %c90_75 = arith.constant 90 : index
    %2000 = memref.load %arg4[%c90_75] : memref<144xf32, #tpu.memory_space<smem>>
    %2001 = vector.broadcast %2000 : f32 to vector<1x256xf32>
    %2002 = arith.mulf %2001, %1958 : vector<1x256xf32>
    %2003 = arith.addf %1999, %2002 : vector<1x256xf32>
    %c99_76 = arith.constant 99 : index
    %2004 = memref.load %arg4[%c99_76] : memref<144xf32, #tpu.memory_space<smem>>
    %2005 = vector.broadcast %2004 : f32 to vector<1x256xf32>
    %2006 = arith.mulf %2005, %1959 : vector<1x256xf32>
    %2007 = arith.addf %2003, %2006 : vector<1x256xf32>
    %c108_77 = arith.constant 108 : index
    %2008 = memref.load %arg4[%c108_77] : memref<144xf32, #tpu.memory_space<smem>>
    %2009 = vector.broadcast %2008 : f32 to vector<1x256xf32>
    %2010 = arith.mulf %2009, %1956 : vector<1x256xf32>
    %2011 = arith.addf %1949, %2010 : vector<1x256xf32>
    %c117_78 = arith.constant 117 : index
    %2012 = memref.load %arg4[%c117_78] : memref<144xf32, #tpu.memory_space<smem>>
    %2013 = vector.broadcast %2012 : f32 to vector<1x256xf32>
    %2014 = arith.mulf %2013, %1957 : vector<1x256xf32>
    %2015 = arith.addf %2011, %2014 : vector<1x256xf32>
    %c126_79 = arith.constant 126 : index
    %2016 = memref.load %arg4[%c126_79] : memref<144xf32, #tpu.memory_space<smem>>
    %2017 = vector.broadcast %2016 : f32 to vector<1x256xf32>
    %2018 = arith.mulf %2017, %1958 : vector<1x256xf32>
    %2019 = arith.addf %2015, %2018 : vector<1x256xf32>
    %c135_80 = arith.constant 135 : index
    %2020 = memref.load %arg4[%c135_80] : memref<144xf32, #tpu.memory_space<smem>>
    %2021 = vector.broadcast %2020 : f32 to vector<1x256xf32>
    %2022 = arith.mulf %2021, %1959 : vector<1x256xf32>
    %2023 = arith.addf %2019, %2022 : vector<1x256xf32>
    %c16_i32_81 = arith.constant 16 : i32
    %2024 = tpu.dynamic_rotate %1933 by %c16_i32_81 dim 1 : vector<4x256xf32>, i32 -> vector<4x256xf32>
    %2025 = arith.andi %19, %49 : vector<1x256xi1>
    %cst_82 = arith.constant 0.000000e+00 : f32
    %2026 = vector.shape_cast %2025 : vector<1x256xi1> to vector<1x256xi1>
    %2027 = vector.broadcast %2026 : vector<1x256xi1> to vector<4x256xi1>
    %2028 = vector.broadcast %cst_82 : f32 to vector<4x256xf32>
    %2029 = arith.select %2027, %2024, %2028 : vector<4x256xi1>, vector<4x256xf32>
    %2030 = vector.extract_strided_slice %2029 {offsets = [0, 0], sizes = [1, 256], strides = [1, 1]} : vector<4x256xf32> to vector<1x256xf32>
    %2031 = vector.extract_strided_slice %2029 {offsets = [1, 0], sizes = [1, 256], strides = [1, 1]} : vector<4x256xf32> to vector<1x256xf32>
    %2032 = vector.extract_strided_slice %2029 {offsets = [2, 0], sizes = [1, 256], strides = [1, 1]} : vector<4x256xf32> to vector<1x256xf32>
    %2033 = vector.extract_strided_slice %2029 {offsets = [3, 0], sizes = [1, 256], strides = [1, 1]} : vector<4x256xf32> to vector<1x256xf32>
    %c1_83 = arith.constant 1 : index
    %2034 = memref.load %arg4[%c1_83] : memref<144xf32, #tpu.memory_space<smem>>
    %2035 = vector.broadcast %2034 : f32 to vector<1x256xf32>
    %2036 = arith.mulf %2035, %2030 : vector<1x256xf32>
    %2037 = arith.addf %1975, %2036 : vector<1x256xf32>
    %c10_84 = arith.constant 10 : index
    %2038 = memref.load %arg4[%c10_84] : memref<144xf32, #tpu.memory_space<smem>>
    %2039 = vector.broadcast %2038 : f32 to vector<1x256xf32>
    %2040 = arith.mulf %2039, %2031 : vector<1x256xf32>
    %2041 = arith.addf %2037, %2040 : vector<1x256xf32>
    %c19_85 = arith.constant 19 : index
    %2042 = memref.load %arg4[%c19_85] : memref<144xf32, #tpu.memory_space<smem>>
    %2043 = vector.broadcast %2042 : f32 to vector<1x256xf32>
    %2044 = arith.mulf %2043, %2032 : vector<1x256xf32>
    %2045 = arith.addf %2041, %2044 : vector<1x256xf32>
    %c28_86 = arith.constant 28 : index
    %2046 = memref.load %arg4[%c28_86] : memref<144xf32, #tpu.memory_space<smem>>
    %2047 = vector.broadcast %2046 : f32 to vector<1x256xf32>
    %2048 = arith.mulf %2047, %2033 : vector<1x256xf32>
    %2049 = arith.addf %2045, %2048 : vector<1x256xf32>
    %c37_87 = arith.constant 37 : index
    %2050 = memref.load %arg4[%c37_87] : memref<144xf32, #tpu.memory_space<smem>>
    %2051 = vector.broadcast %2050 : f32 to vector<1x256xf32>
    %2052 = arith.mulf %2051, %2030 : vector<1x256xf32>
    %2053 = arith.addf %1991, %2052 : vector<1x256xf32>
    %c46_88 = arith.constant 46 : index
    %2054 = memref.load %arg4[%c46_88] : memref<144xf32, #tpu.memory_space<smem>>
    %2055 = vector.broadcast %2054 : f32 to vector<1x256xf32>
    %2056 = arith.mulf %2055, %2031 : vector<1x256xf32>
    %2057 = arith.addf %2053, %2056 : vector<1x256xf32>
    %c55_89 = arith.constant 55 : index
    %2058 = memref.load %arg4[%c55_89] : memref<144xf32, #tpu.memory_space<smem>>
    %2059 = vector.broadcast %2058 : f32 to vector<1x256xf32>
    %2060 = arith.mulf %2059, %2032 : vector<1x256xf32>
    %2061 = arith.addf %2057, %2060 : vector<1x256xf32>
    %c64_90 = arith.constant 64 : index
    %2062 = memref.load %arg4[%c64_90] : memref<144xf32, #tpu.memory_space<smem>>
    %2063 = vector.broadcast %2062 : f32 to vector<1x256xf32>
    %2064 = arith.mulf %2063, %2033 : vector<1x256xf32>
    %2065 = arith.addf %2061, %2064 : vector<1x256xf32>
    %c73_91 = arith.constant 73 : index
    %2066 = memref.load %arg4[%c73_91] : memref<144xf32, #tpu.memory_space<smem>>
    %2067 = vector.broadcast %2066 : f32 to vector<1x256xf32>
    %2068 = arith.mulf %2067, %2030 : vector<1x256xf32>
    %2069 = arith.addf %2007, %2068 : vector<1x256xf32>
    %c82_92 = arith.constant 82 : index
    %2070 = memref.load %arg4[%c82_92] : memref<144xf32, #tpu.memory_space<smem>>
    %2071 = vector.broadcast %2070 : f32 to vector<1x256xf32>
    %2072 = arith.mulf %2071, %2031 : vector<1x256xf32>
    %2073 = arith.addf %2069, %2072 : vector<1x256xf32>
    %c91_93 = arith.constant 91 : index
    %2074 = memref.load %arg4[%c91_93] : memref<144xf32, #tpu.memory_space<smem>>
    %2075 = vector.broadcast %2074 : f32 to vector<1x256xf32>
    %2076 = arith.mulf %2075, %2032 : vector<1x256xf32>
    %2077 = arith.addf %2073, %2076 : vector<1x256xf32>
    %c100_94 = arith.constant 100 : index
    %2078 = memref.load %arg4[%c100_94] : memref<144xf32, #tpu.memory_space<smem>>
    %2079 = vector.broadcast %2078 : f32 to vector<1x256xf32>
    %2080 = arith.mulf %2079, %2033 : vector<1x256xf32>
    %2081 = arith.addf %2077, %2080 : vector<1x256xf32>
    %c109_95 = arith.constant 109 : index
    %2082 = memref.load %arg4[%c109_95] : memref<144xf32, #tpu.memory_space<smem>>
    %2083 = vector.broadcast %2082 : f32 to vector<1x256xf32>
    %2084 = arith.mulf %2083, %2030 : vector<1x256xf32>
    %2085 = arith.addf %2023, %2084 : vector<1x256xf32>
    %c118_96 = arith.constant 118 : index
    %2086 = memref.load %arg4[%c118_96] : memref<144xf32, #tpu.memory_space<smem>>
    %2087 = vector.broadcast %2086 : f32 to vector<1x256xf32>
    %2088 = arith.mulf %2087, %2031 : vector<1x256xf32>
    %2089 = arith.addf %2085, %2088 : vector<1x256xf32>
    %c127_97 = arith.constant 127 : index
    %2090 = memref.load %arg4[%c127_97] : memref<144xf32, #tpu.memory_space<smem>>
    %2091 = vector.broadcast %2090 : f32 to vector<1x256xf32>
    %2092 = arith.mulf %2091, %2032 : vector<1x256xf32>
    %2093 = arith.addf %2089, %2092 : vector<1x256xf32>
    %c136_98 = arith.constant 136 : index
    %2094 = memref.load %arg4[%c136_98] : memref<144xf32, #tpu.memory_space<smem>>
    %2095 = vector.broadcast %2094 : f32 to vector<1x256xf32>
    %2096 = arith.mulf %2095, %2033 : vector<1x256xf32>
    %2097 = arith.addf %2093, %2096 : vector<1x256xf32>
    %c15_i32_99 = arith.constant 15 : i32
    %2098 = tpu.dynamic_rotate %1933 by %c15_i32_99 dim 1 : vector<4x256xf32>, i32 -> vector<4x256xf32>
    %2099 = arith.andi %19, %54 : vector<1x256xi1>
    %cst_100 = arith.constant 0.000000e+00 : f32
    %2100 = vector.shape_cast %2099 : vector<1x256xi1> to vector<1x256xi1>
    %2101 = vector.broadcast %2100 : vector<1x256xi1> to vector<4x256xi1>
    %2102 = vector.broadcast %cst_100 : f32 to vector<4x256xf32>
    %2103 = arith.select %2101, %2098, %2102 : vector<4x256xi1>, vector<4x256xf32>
    %2104 = vector.extract_strided_slice %2103 {offsets = [0, 0], sizes = [1, 256], strides = [1, 1]} : vector<4x256xf32> to vector<1x256xf32>
    %2105 = vector.extract_strided_slice %2103 {offsets = [1, 0], sizes = [1, 256], strides = [1, 1]} : vector<4x256xf32> to vector<1x256xf32>
    %2106 = vector.extract_strided_slice %2103 {offsets = [2, 0], sizes = [1, 256], strides = [1, 1]} : vector<4x256xf32> to vector<1x256xf32>
    %2107 = vector.extract_strided_slice %2103 {offsets = [3, 0], sizes = [1, 256], strides = [1, 1]} : vector<4x256xf32> to vector<1x256xf32>
    %c2_101 = arith.constant 2 : index
    %2108 = memref.load %arg4[%c2_101] : memref<144xf32, #tpu.memory_space<smem>>
    %2109 = vector.broadcast %2108 : f32 to vector<1x256xf32>
    %2110 = arith.mulf %2109, %2104 : vector<1x256xf32>
    %2111 = arith.addf %2049, %2110 : vector<1x256xf32>
    %c11_102 = arith.constant 11 : index
    %2112 = memref.load %arg4[%c11_102] : memref<144xf32, #tpu.memory_space<smem>>
    %2113 = vector.broadcast %2112 : f32 to vector<1x256xf32>
    %2114 = arith.mulf %2113, %2105 : vector<1x256xf32>
    %2115 = arith.addf %2111, %2114 : vector<1x256xf32>
    %c20_103 = arith.constant 20 : index
    %2116 = memref.load %arg4[%c20_103] : memref<144xf32, #tpu.memory_space<smem>>
    %2117 = vector.broadcast %2116 : f32 to vector<1x256xf32>
    %2118 = arith.mulf %2117, %2106 : vector<1x256xf32>
    %2119 = arith.addf %2115, %2118 : vector<1x256xf32>
    %c29_104 = arith.constant 29 : index
    %2120 = memref.load %arg4[%c29_104] : memref<144xf32, #tpu.memory_space<smem>>
    %2121 = vector.broadcast %2120 : f32 to vector<1x256xf32>
    %2122 = arith.mulf %2121, %2107 : vector<1x256xf32>
    %2123 = arith.addf %2119, %2122 : vector<1x256xf32>
    %c38_105 = arith.constant 38 : index
    %2124 = memref.load %arg4[%c38_105] : memref<144xf32, #tpu.memory_space<smem>>
    %2125 = vector.broadcast %2124 : f32 to vector<1x256xf32>
    %2126 = arith.mulf %2125, %2104 : vector<1x256xf32>
    %2127 = arith.addf %2065, %2126 : vector<1x256xf32>
    %c47_106 = arith.constant 47 : index
    %2128 = memref.load %arg4[%c47_106] : memref<144xf32, #tpu.memory_space<smem>>
    %2129 = vector.broadcast %2128 : f32 to vector<1x256xf32>
    %2130 = arith.mulf %2129, %2105 : vector<1x256xf32>
    %2131 = arith.addf %2127, %2130 : vector<1x256xf32>
    %c56_107 = arith.constant 56 : index
    %2132 = memref.load %arg4[%c56_107] : memref<144xf32, #tpu.memory_space<smem>>
    %2133 = vector.broadcast %2132 : f32 to vector<1x256xf32>
    %2134 = arith.mulf %2133, %2106 : vector<1x256xf32>
    %2135 = arith.addf %2131, %2134 : vector<1x256xf32>
    %c65_108 = arith.constant 65 : index
    %2136 = memref.load %arg4[%c65_108] : memref<144xf32, #tpu.memory_space<smem>>
    %2137 = vector.broadcast %2136 : f32 to vector<1x256xf32>
    %2138 = arith.mulf %2137, %2107 : vector<1x256xf32>
    %2139 = arith.addf %2135, %2138 : vector<1x256xf32>
    %c74_109 = arith.constant 74 : index
    %2140 = memref.load %arg4[%c74_109] : memref<144xf32, #tpu.memory_space<smem>>
    %2141 = vector.broadcast %2140 : f32 to vector<1x256xf32>
    %2142 = arith.mulf %2141, %2104 : vector<1x256xf32>
    %2143 = arith.addf %2081, %2142 : vector<1x256xf32>
    %c83_110 = arith.constant 83 : index
    %2144 = memref.load %arg4[%c83_110] : memref<144xf32, #tpu.memory_space<smem>>
    %2145 = vector.broadcast %2144 : f32 to vector<1x256xf32>
    %2146 = arith.mulf %2145, %2105 : vector<1x256xf32>
    %2147 = arith.addf %2143, %2146 : vector<1x256xf32>
    %c92_111 = arith.constant 92 : index
    %2148 = memref.load %arg4[%c92_111] : memref<144xf32, #tpu.memory_space<smem>>
    %2149 = vector.broadcast %2148 : f32 to vector<1x256xf32>
    %2150 = arith.mulf %2149, %2106 : vector<1x256xf32>
    %2151 = arith.addf %2147, %2150 : vector<1x256xf32>
    %c101_112 = arith.constant 101 : index
    %2152 = memref.load %arg4[%c101_112] : memref<144xf32, #tpu.memory_space<smem>>
    %2153 = vector.broadcast %2152 : f32 to vector<1x256xf32>
    %2154 = arith.mulf %2153, %2107 : vector<1x256xf32>
    %2155 = arith.addf %2151, %2154 : vector<1x256xf32>
    %c110_113 = arith.constant 110 : index
    %2156 = memref.load %arg4[%c110_113] : memref<144xf32, #tpu.memory_space<smem>>
    %2157 = vector.broadcast %2156 : f32 to vector<1x256xf32>
    %2158 = arith.mulf %2157, %2104 : vector<1x256xf32>
    %2159 = arith.addf %2097, %2158 : vector<1x256xf32>
    %c119_114 = arith.constant 119 : index
    %2160 = memref.load %arg4[%c119_114] : memref<144xf32, #tpu.memory_space<smem>>
    %2161 = vector.broadcast %2160 : f32 to vector<1x256xf32>
    %2162 = arith.mulf %2161, %2105 : vector<1x256xf32>
    %2163 = arith.addf %2159, %2162 : vector<1x256xf32>
    %c128_115 = arith.constant 128 : index
    %2164 = memref.load %arg4[%c128_115] : memref<144xf32, #tpu.memory_space<smem>>
    %2165 = vector.broadcast %2164 : f32 to vector<1x256xf32>
    %2166 = arith.mulf %2165, %2106 : vector<1x256xf32>
    %2167 = arith.addf %2163, %2166 : vector<1x256xf32>
    %c137_116 = arith.constant 137 : index
    %2168 = memref.load %arg4[%c137_116] : memref<144xf32, #tpu.memory_space<smem>>
    %2169 = vector.broadcast %2168 : f32 to vector<1x256xf32>
    %2170 = arith.mulf %2169, %2107 : vector<1x256xf32>
    %2171 = arith.addf %2167, %2170 : vector<1x256xf32>
    %c1_i32_117 = arith.constant 1 : i32
    %2172 = tpu.dynamic_rotate %1933 by %c1_i32_117 dim 1 : vector<4x256xf32>, i32 -> vector<4x256xf32>
    %2173 = arith.andi %24, %44 : vector<1x256xi1>
    %cst_118 = arith.constant 0.000000e+00 : f32
    %2174 = vector.shape_cast %2173 : vector<1x256xi1> to vector<1x256xi1>
    %2175 = vector.broadcast %2174 : vector<1x256xi1> to vector<4x256xi1>
    %2176 = vector.broadcast %cst_118 : f32 to vector<4x256xf32>
    %2177 = arith.select %2175, %2172, %2176 : vector<4x256xi1>, vector<4x256xf32>
    %2178 = vector.extract_strided_slice %2177 {offsets = [0, 0], sizes = [1, 256], strides = [1, 1]} : vector<4x256xf32> to vector<1x256xf32>
    %2179 = vector.extract_strided_slice %2177 {offsets = [1, 0], sizes = [1, 256], strides = [1, 1]} : vector<4x256xf32> to vector<1x256xf32>
    %2180 = vector.extract_strided_slice %2177 {offsets = [2, 0], sizes = [1, 256], strides = [1, 1]} : vector<4x256xf32> to vector<1x256xf32>
    %2181 = vector.extract_strided_slice %2177 {offsets = [3, 0], sizes = [1, 256], strides = [1, 1]} : vector<4x256xf32> to vector<1x256xf32>
    %c3_119 = arith.constant 3 : index
    %2182 = memref.load %arg4[%c3_119] : memref<144xf32, #tpu.memory_space<smem>>
    %2183 = vector.broadcast %2182 : f32 to vector<1x256xf32>
    %2184 = arith.mulf %2183, %2178 : vector<1x256xf32>
    %2185 = arith.addf %2123, %2184 : vector<1x256xf32>
    %c12_120 = arith.constant 12 : index
    %2186 = memref.load %arg4[%c12_120] : memref<144xf32, #tpu.memory_space<smem>>
    %2187 = vector.broadcast %2186 : f32 to vector<1x256xf32>
    %2188 = arith.mulf %2187, %2179 : vector<1x256xf32>
    %2189 = arith.addf %2185, %2188 : vector<1x256xf32>
    %c21_121 = arith.constant 21 : index
    %2190 = memref.load %arg4[%c21_121] : memref<144xf32, #tpu.memory_space<smem>>
    %2191 = vector.broadcast %2190 : f32 to vector<1x256xf32>
    %2192 = arith.mulf %2191, %2180 : vector<1x256xf32>
    %2193 = arith.addf %2189, %2192 : vector<1x256xf32>
    %c30_122 = arith.constant 30 : index
    %2194 = memref.load %arg4[%c30_122] : memref<144xf32, #tpu.memory_space<smem>>
    %2195 = vector.broadcast %2194 : f32 to vector<1x256xf32>
    %2196 = arith.mulf %2195, %2181 : vector<1x256xf32>
    %2197 = arith.addf %2193, %2196 : vector<1x256xf32>
    %c39_123 = arith.constant 39 : index
    %2198 = memref.load %arg4[%c39_123] : memref<144xf32, #tpu.memory_space<smem>>
    %2199 = vector.broadcast %2198 : f32 to vector<1x256xf32>
    %2200 = arith.mulf %2199, %2178 : vector<1x256xf32>
    %2201 = arith.addf %2139, %2200 : vector<1x256xf32>
    %c48_124 = arith.constant 48 : index
    %2202 = memref.load %arg4[%c48_124] : memref<144xf32, #tpu.memory_space<smem>>
    %2203 = vector.broadcast %2202 : f32 to vector<1x256xf32>
    %2204 = arith.mulf %2203, %2179 : vector<1x256xf32>
    %2205 = arith.addf %2201, %2204 : vector<1x256xf32>
    %c57_125 = arith.constant 57 : index
    %2206 = memref.load %arg4[%c57_125] : memref<144xf32, #tpu.memory_space<smem>>
    %2207 = vector.broadcast %2206 : f32 to vector<1x256xf32>
    %2208 = arith.mulf %2207, %2180 : vector<1x256xf32>
    %2209 = arith.addf %2205, %2208 : vector<1x256xf32>
    %c66_126 = arith.constant 66 : index
    %2210 = memref.load %arg4[%c66_126] : memref<144xf32, #tpu.memory_space<smem>>
    %2211 = vector.broadcast %2210 : f32 to vector<1x256xf32>
    %2212 = arith.mulf %2211, %2181 : vector<1x256xf32>
    %2213 = arith.addf %2209, %2212 : vector<1x256xf32>
    %c75_127 = arith.constant 75 : index
    %2214 = memref.load %arg4[%c75_127] : memref<144xf32, #tpu.memory_space<smem>>
    %2215 = vector.broadcast %2214 : f32 to vector<1x256xf32>
    %2216 = arith.mulf %2215, %2178 : vector<1x256xf32>
    %2217 = arith.addf %2155, %2216 : vector<1x256xf32>
    %c84_128 = arith.constant 84 : index
    %2218 = memref.load %arg4[%c84_128] : memref<144xf32, #tpu.memory_space<smem>>
    %2219 = vector.broadcast %2218 : f32 to vector<1x256xf32>
    %2220 = arith.mulf %2219, %2179 : vector<1x256xf32>
    %2221 = arith.addf %2217, %2220 : vector<1x256xf32>
    %c93_129 = arith.constant 93 : index
    %2222 = memref.load %arg4[%c93_129] : memref<144xf32, #tpu.memory_space<smem>>
    %2223 = vector.broadcast %2222 : f32 to vector<1x256xf32>
    %2224 = arith.mulf %2223, %2180 : vector<1x256xf32>
    %2225 = arith.addf %2221, %2224 : vector<1x256xf32>
    %c102_130 = arith.constant 102 : index
    %2226 = memref.load %arg4[%c102_130] : memref<144xf32, #tpu.memory_space<smem>>
    %2227 = vector.broadcast %2226 : f32 to vector<1x256xf32>
    %2228 = arith.mulf %2227, %2181 : vector<1x256xf32>
    %2229 = arith.addf %2225, %2228 : vector<1x256xf32>
    %c111_131 = arith.constant 111 : index
    %2230 = memref.load %arg4[%c111_131] : memref<144xf32, #tpu.memory_space<smem>>
    %2231 = vector.broadcast %2230 : f32 to vector<1x256xf32>
    %2232 = arith.mulf %2231, %2178 : vector<1x256xf32>
    %2233 = arith.addf %2171, %2232 : vector<1x256xf32>
    %c120_132 = arith.constant 120 : index
    %2234 = memref.load %arg4[%c120_132] : memref<144xf32, #tpu.memory_space<smem>>
    %2235 = vector.broadcast %2234 : f32 to vector<1x256xf32>
    %2236 = arith.mulf %2235, %2179 : vector<1x256xf32>
    %2237 = arith.addf %2233, %2236 : vector<1x256xf32>
    %c129_133 = arith.constant 129 : index
    %2238 = memref.load %arg4[%c129_133] : memref<144xf32, #tpu.memory_space<smem>>
    %2239 = vector.broadcast %2238 : f32 to vector<1x256xf32>
    %2240 = arith.mulf %2239, %2180 : vector<1x256xf32>
    %2241 = arith.addf %2237, %2240 : vector<1x256xf32>
    %c138_134 = arith.constant 138 : index
    %2242 = memref.load %arg4[%c138_134] : memref<144xf32, #tpu.memory_space<smem>>
    %2243 = vector.broadcast %2242 : f32 to vector<1x256xf32>
    %2244 = arith.mulf %2243, %2181 : vector<1x256xf32>
    %2245 = arith.addf %2241, %2244 : vector<1x256xf32>
    %2246 = arith.andi %24, %49 : vector<1x256xi1>
    %cst_135 = arith.constant 0.000000e+00 : f32
    %2247 = vector.shape_cast %2246 : vector<1x256xi1> to vector<1x256xi1>
    %2248 = vector.broadcast %2247 : vector<1x256xi1> to vector<4x256xi1>
    %2249 = vector.broadcast %cst_135 : f32 to vector<4x256xf32>
    %2250 = arith.select %2248, %1933, %2249 : vector<4x256xi1>, vector<4x256xf32>
    %2251 = vector.extract_strided_slice %2250 {offsets = [0, 0], sizes = [1, 256], strides = [1, 1]} : vector<4x256xf32> to vector<1x256xf32>
    %2252 = vector.extract_strided_slice %2250 {offsets = [1, 0], sizes = [1, 256], strides = [1, 1]} : vector<4x256xf32> to vector<1x256xf32>
    %2253 = vector.extract_strided_slice %2250 {offsets = [2, 0], sizes = [1, 256], strides = [1, 1]} : vector<4x256xf32> to vector<1x256xf32>
    %2254 = vector.extract_strided_slice %2250 {offsets = [3, 0], sizes = [1, 256], strides = [1, 1]} : vector<4x256xf32> to vector<1x256xf32>
    %c4_136 = arith.constant 4 : index
    %2255 = memref.load %arg4[%c4_136] : memref<144xf32, #tpu.memory_space<smem>>
    %2256 = vector.broadcast %2255 : f32 to vector<1x256xf32>
    %2257 = arith.mulf %2256, %2251 : vector<1x256xf32>
    %2258 = arith.addf %2197, %2257 : vector<1x256xf32>
    %c13_137 = arith.constant 13 : index
    %2259 = memref.load %arg4[%c13_137] : memref<144xf32, #tpu.memory_space<smem>>
    %2260 = vector.broadcast %2259 : f32 to vector<1x256xf32>
    %2261 = arith.mulf %2260, %2252 : vector<1x256xf32>
    %2262 = arith.addf %2258, %2261 : vector<1x256xf32>
    %c22_138 = arith.constant 22 : index
    %2263 = memref.load %arg4[%c22_138] : memref<144xf32, #tpu.memory_space<smem>>
    %2264 = vector.broadcast %2263 : f32 to vector<1x256xf32>
    %2265 = arith.mulf %2264, %2253 : vector<1x256xf32>
    %2266 = arith.addf %2262, %2265 : vector<1x256xf32>
    %c31_139 = arith.constant 31 : index
    %2267 = memref.load %arg4[%c31_139] : memref<144xf32, #tpu.memory_space<smem>>
    %2268 = vector.broadcast %2267 : f32 to vector<1x256xf32>
    %2269 = arith.mulf %2268, %2254 : vector<1x256xf32>
    %2270 = arith.addf %2266, %2269 : vector<1x256xf32>
    %c40_140 = arith.constant 40 : index
    %2271 = memref.load %arg4[%c40_140] : memref<144xf32, #tpu.memory_space<smem>>
    %2272 = vector.broadcast %2271 : f32 to vector<1x256xf32>
    %2273 = arith.mulf %2272, %2251 : vector<1x256xf32>
    %2274 = arith.addf %2213, %2273 : vector<1x256xf32>
    %c49_141 = arith.constant 49 : index
    %2275 = memref.load %arg4[%c49_141] : memref<144xf32, #tpu.memory_space<smem>>
    %2276 = vector.broadcast %2275 : f32 to vector<1x256xf32>
    %2277 = arith.mulf %2276, %2252 : vector<1x256xf32>
    %2278 = arith.addf %2274, %2277 : vector<1x256xf32>
    %c58_142 = arith.constant 58 : index
    %2279 = memref.load %arg4[%c58_142] : memref<144xf32, #tpu.memory_space<smem>>
    %2280 = vector.broadcast %2279 : f32 to vector<1x256xf32>
    %2281 = arith.mulf %2280, %2253 : vector<1x256xf32>
    %2282 = arith.addf %2278, %2281 : vector<1x256xf32>
    %c67_143 = arith.constant 67 : index
    %2283 = memref.load %arg4[%c67_143] : memref<144xf32, #tpu.memory_space<smem>>
    %2284 = vector.broadcast %2283 : f32 to vector<1x256xf32>
    %2285 = arith.mulf %2284, %2254 : vector<1x256xf32>
    %2286 = arith.addf %2282, %2285 : vector<1x256xf32>
    %c76_144 = arith.constant 76 : index
    %2287 = memref.load %arg4[%c76_144] : memref<144xf32, #tpu.memory_space<smem>>
    %2288 = vector.broadcast %2287 : f32 to vector<1x256xf32>
    %2289 = arith.mulf %2288, %2251 : vector<1x256xf32>
    %2290 = arith.addf %2229, %2289 : vector<1x256xf32>
    %c85_145 = arith.constant 85 : index
    %2291 = memref.load %arg4[%c85_145] : memref<144xf32, #tpu.memory_space<smem>>
    %2292 = vector.broadcast %2291 : f32 to vector<1x256xf32>
    %2293 = arith.mulf %2292, %2252 : vector<1x256xf32>
    %2294 = arith.addf %2290, %2293 : vector<1x256xf32>
    %c94_146 = arith.constant 94 : index
    %2295 = memref.load %arg4[%c94_146] : memref<144xf32, #tpu.memory_space<smem>>
    %2296 = vector.broadcast %2295 : f32 to vector<1x256xf32>
    %2297 = arith.mulf %2296, %2253 : vector<1x256xf32>
    %2298 = arith.addf %2294, %2297 : vector<1x256xf32>
    %c103_147 = arith.constant 103 : index
    %2299 = memref.load %arg4[%c103_147] : memref<144xf32, #tpu.memory_space<smem>>
    %2300 = vector.broadcast %2299 : f32 to vector<1x256xf32>
    %2301 = arith.mulf %2300, %2254 : vector<1x256xf32>
    %2302 = arith.addf %2298, %2301 : vector<1x256xf32>
    %c112_148 = arith.constant 112 : index
    %2303 = memref.load %arg4[%c112_148] : memref<144xf32, #tpu.memory_space<smem>>
    %2304 = vector.broadcast %2303 : f32 to vector<1x256xf32>
    %2305 = arith.mulf %2304, %2251 : vector<1x256xf32>
    %2306 = arith.addf %2245, %2305 : vector<1x256xf32>
    %c121_149 = arith.constant 121 : index
    %2307 = memref.load %arg4[%c121_149] : memref<144xf32, #tpu.memory_space<smem>>
    %2308 = vector.broadcast %2307 : f32 to vector<1x256xf32>
    %2309 = arith.mulf %2308, %2252 : vector<1x256xf32>
    %2310 = arith.addf %2306, %2309 : vector<1x256xf32>
    %c130_150 = arith.constant 130 : index
    %2311 = memref.load %arg4[%c130_150] : memref<144xf32, #tpu.memory_space<smem>>
    %2312 = vector.broadcast %2311 : f32 to vector<1x256xf32>
    %2313 = arith.mulf %2312, %2253 : vector<1x256xf32>
    %2314 = arith.addf %2310, %2313 : vector<1x256xf32>
    %c139_151 = arith.constant 139 : index
    %2315 = memref.load %arg4[%c139_151] : memref<144xf32, #tpu.memory_space<smem>>
    %2316 = vector.broadcast %2315 : f32 to vector<1x256xf32>
    %2317 = arith.mulf %2316, %2254 : vector<1x256xf32>
    %2318 = arith.addf %2314, %2317 : vector<1x256xf32>
    %c255_i32_152 = arith.constant 255 : i32
    %2319 = tpu.dynamic_rotate %1933 by %c255_i32_152 dim 1 : vector<4x256xf32>, i32 -> vector<4x256xf32>
    %2320 = arith.andi %24, %54 : vector<1x256xi1>
    %cst_153 = arith.constant 0.000000e+00 : f32
    %2321 = vector.shape_cast %2320 : vector<1x256xi1> to vector<1x256xi1>
    %2322 = vector.broadcast %2321 : vector<1x256xi1> to vector<4x256xi1>
    %2323 = vector.broadcast %cst_153 : f32 to vector<4x256xf32>
    %2324 = arith.select %2322, %2319, %2323 : vector<4x256xi1>, vector<4x256xf32>
    %2325 = vector.extract_strided_slice %2324 {offsets = [0, 0], sizes = [1, 256], strides = [1, 1]} : vector<4x256xf32> to vector<1x256xf32>
    %2326 = vector.extract_strided_slice %2324 {offsets = [1, 0], sizes = [1, 256], strides = [1, 1]} : vector<4x256xf32> to vector<1x256xf32>
    %2327 = vector.extract_strided_slice %2324 {offsets = [2, 0], sizes = [1, 256], strides = [1, 1]} : vector<4x256xf32> to vector<1x256xf32>
    %2328 = vector.extract_strided_slice %2324 {offsets = [3, 0], sizes = [1, 256], strides = [1, 1]} : vector<4x256xf32> to vector<1x256xf32>
    %c5_154 = arith.constant 5 : index
    %2329 = memref.load %arg4[%c5_154] : memref<144xf32, #tpu.memory_space<smem>>
    %2330 = vector.broadcast %2329 : f32 to vector<1x256xf32>
    %2331 = arith.mulf %2330, %2325 : vector<1x256xf32>
    %2332 = arith.addf %2270, %2331 : vector<1x256xf32>
    %c14_155 = arith.constant 14 : index
    %2333 = memref.load %arg4[%c14_155] : memref<144xf32, #tpu.memory_space<smem>>
    %2334 = vector.broadcast %2333 : f32 to vector<1x256xf32>
    %2335 = arith.mulf %2334, %2326 : vector<1x256xf32>
    %2336 = arith.addf %2332, %2335 : vector<1x256xf32>
    %c23_156 = arith.constant 23 : index
    %2337 = memref.load %arg4[%c23_156] : memref<144xf32, #tpu.memory_space<smem>>
    %2338 = vector.broadcast %2337 : f32 to vector<1x256xf32>
    %2339 = arith.mulf %2338, %2327 : vector<1x256xf32>
    %2340 = arith.addf %2336, %2339 : vector<1x256xf32>
    %c32_157 = arith.constant 32 : index
    %2341 = memref.load %arg4[%c32_157] : memref<144xf32, #tpu.memory_space<smem>>
    %2342 = vector.broadcast %2341 : f32 to vector<1x256xf32>
    %2343 = arith.mulf %2342, %2328 : vector<1x256xf32>
    %2344 = arith.addf %2340, %2343 : vector<1x256xf32>
    %c41_158 = arith.constant 41 : index
    %2345 = memref.load %arg4[%c41_158] : memref<144xf32, #tpu.memory_space<smem>>
    %2346 = vector.broadcast %2345 : f32 to vector<1x256xf32>
    %2347 = arith.mulf %2346, %2325 : vector<1x256xf32>
    %2348 = arith.addf %2286, %2347 : vector<1x256xf32>
    %c50_159 = arith.constant 50 : index
    %2349 = memref.load %arg4[%c50_159] : memref<144xf32, #tpu.memory_space<smem>>
    %2350 = vector.broadcast %2349 : f32 to vector<1x256xf32>
    %2351 = arith.mulf %2350, %2326 : vector<1x256xf32>
    %2352 = arith.addf %2348, %2351 : vector<1x256xf32>
    %c59_160 = arith.constant 59 : index
    %2353 = memref.load %arg4[%c59_160] : memref<144xf32, #tpu.memory_space<smem>>
    %2354 = vector.broadcast %2353 : f32 to vector<1x256xf32>
    %2355 = arith.mulf %2354, %2327 : vector<1x256xf32>
    %2356 = arith.addf %2352, %2355 : vector<1x256xf32>
    %c68_161 = arith.constant 68 : index
    %2357 = memref.load %arg4[%c68_161] : memref<144xf32, #tpu.memory_space<smem>>
    %2358 = vector.broadcast %2357 : f32 to vector<1x256xf32>
    %2359 = arith.mulf %2358, %2328 : vector<1x256xf32>
    %2360 = arith.addf %2356, %2359 : vector<1x256xf32>
    %c77_162 = arith.constant 77 : index
    %2361 = memref.load %arg4[%c77_162] : memref<144xf32, #tpu.memory_space<smem>>
    %2362 = vector.broadcast %2361 : f32 to vector<1x256xf32>
    %2363 = arith.mulf %2362, %2325 : vector<1x256xf32>
    %2364 = arith.addf %2302, %2363 : vector<1x256xf32>
    %c86_163 = arith.constant 86 : index
    %2365 = memref.load %arg4[%c86_163] : memref<144xf32, #tpu.memory_space<smem>>
    %2366 = vector.broadcast %2365 : f32 to vector<1x256xf32>
    %2367 = arith.mulf %2366, %2326 : vector<1x256xf32>
    %2368 = arith.addf %2364, %2367 : vector<1x256xf32>
    %c95_164 = arith.constant 95 : index
    %2369 = memref.load %arg4[%c95_164] : memref<144xf32, #tpu.memory_space<smem>>
    %2370 = vector.broadcast %2369 : f32 to vector<1x256xf32>
    %2371 = arith.mulf %2370, %2327 : vector<1x256xf32>
    %2372 = arith.addf %2368, %2371 : vector<1x256xf32>
    %c104_165 = arith.constant 104 : index
    %2373 = memref.load %arg4[%c104_165] : memref<144xf32, #tpu.memory_space<smem>>
    %2374 = vector.broadcast %2373 : f32 to vector<1x256xf32>
    %2375 = arith.mulf %2374, %2328 : vector<1x256xf32>
    %2376 = arith.addf %2372, %2375 : vector<1x256xf32>
    %c113_166 = arith.constant 113 : index
    %2377 = memref.load %arg4[%c113_166] : memref<144xf32, #tpu.memory_space<smem>>
    %2378 = vector.broadcast %2377 : f32 to vector<1x256xf32>
    %2379 = arith.mulf %2378, %2325 : vector<1x256xf32>
    %2380 = arith.addf %2318, %2379 : vector<1x256xf32>
    %c122_167 = arith.constant 122 : index
    %2381 = memref.load %arg4[%c122_167] : memref<144xf32, #tpu.memory_space<smem>>
    %2382 = vector.broadcast %2381 : f32 to vector<1x256xf32>
    %2383 = arith.mulf %2382, %2326 : vector<1x256xf32>
    %2384 = arith.addf %2380, %2383 : vector<1x256xf32>
    %c131_168 = arith.constant 131 : index
    %2385 = memref.load %arg4[%c131_168] : memref<144xf32, #tpu.memory_space<smem>>
    %2386 = vector.broadcast %2385 : f32 to vector<1x256xf32>
    %2387 = arith.mulf %2386, %2327 : vector<1x256xf32>
    %2388 = arith.addf %2384, %2387 : vector<1x256xf32>
    %c140_169 = arith.constant 140 : index
    %2389 = memref.load %arg4[%c140_169] : memref<144xf32, #tpu.memory_space<smem>>
    %2390 = vector.broadcast %2389 : f32 to vector<1x256xf32>
    %2391 = arith.mulf %2390, %2328 : vector<1x256xf32>
    %2392 = arith.addf %2388, %2391 : vector<1x256xf32>
    %c241_i32_170 = arith.constant 241 : i32
    %2393 = tpu.dynamic_rotate %1933 by %c241_i32_170 dim 1 : vector<4x256xf32>, i32 -> vector<4x256xf32>
    %2394 = arith.andi %29, %44 : vector<1x256xi1>
    %cst_171 = arith.constant 0.000000e+00 : f32
    %2395 = vector.shape_cast %2394 : vector<1x256xi1> to vector<1x256xi1>
    %2396 = vector.broadcast %2395 : vector<1x256xi1> to vector<4x256xi1>
    %2397 = vector.broadcast %cst_171 : f32 to vector<4x256xf32>
    %2398 = arith.select %2396, %2393, %2397 : vector<4x256xi1>, vector<4x256xf32>
    %2399 = vector.extract_strided_slice %2398 {offsets = [0, 0], sizes = [1, 256], strides = [1, 1]} : vector<4x256xf32> to vector<1x256xf32>
    %2400 = vector.extract_strided_slice %2398 {offsets = [1, 0], sizes = [1, 256], strides = [1, 1]} : vector<4x256xf32> to vector<1x256xf32>
    %2401 = vector.extract_strided_slice %2398 {offsets = [2, 0], sizes = [1, 256], strides = [1, 1]} : vector<4x256xf32> to vector<1x256xf32>
    %2402 = vector.extract_strided_slice %2398 {offsets = [3, 0], sizes = [1, 256], strides = [1, 1]} : vector<4x256xf32> to vector<1x256xf32>
    %c6_172 = arith.constant 6 : index
    %2403 = memref.load %arg4[%c6_172] : memref<144xf32, #tpu.memory_space<smem>>
    %2404 = vector.broadcast %2403 : f32 to vector<1x256xf32>
    %2405 = arith.mulf %2404, %2399 : vector<1x256xf32>
    %2406 = arith.addf %2344, %2405 : vector<1x256xf32>
    %c15_173 = arith.constant 15 : index
    %2407 = memref.load %arg4[%c15_173] : memref<144xf32, #tpu.memory_space<smem>>
    %2408 = vector.broadcast %2407 : f32 to vector<1x256xf32>
    %2409 = arith.mulf %2408, %2400 : vector<1x256xf32>
    %2410 = arith.addf %2406, %2409 : vector<1x256xf32>
    %c24_174 = arith.constant 24 : index
    %2411 = memref.load %arg4[%c24_174] : memref<144xf32, #tpu.memory_space<smem>>
    %2412 = vector.broadcast %2411 : f32 to vector<1x256xf32>
    %2413 = arith.mulf %2412, %2401 : vector<1x256xf32>
    %2414 = arith.addf %2410, %2413 : vector<1x256xf32>
    %c33_175 = arith.constant 33 : index
    %2415 = memref.load %arg4[%c33_175] : memref<144xf32, #tpu.memory_space<smem>>
    %2416 = vector.broadcast %2415 : f32 to vector<1x256xf32>
    %2417 = arith.mulf %2416, %2402 : vector<1x256xf32>
    %2418 = arith.addf %2414, %2417 : vector<1x256xf32>
    %c42_176 = arith.constant 42 : index
    %2419 = memref.load %arg4[%c42_176] : memref<144xf32, #tpu.memory_space<smem>>
    %2420 = vector.broadcast %2419 : f32 to vector<1x256xf32>
    %2421 = arith.mulf %2420, %2399 : vector<1x256xf32>
    %2422 = arith.addf %2360, %2421 : vector<1x256xf32>
    %c51_177 = arith.constant 51 : index
    %2423 = memref.load %arg4[%c51_177] : memref<144xf32, #tpu.memory_space<smem>>
    %2424 = vector.broadcast %2423 : f32 to vector<1x256xf32>
    %2425 = arith.mulf %2424, %2400 : vector<1x256xf32>
    %2426 = arith.addf %2422, %2425 : vector<1x256xf32>
    %c60_178 = arith.constant 60 : index
    %2427 = memref.load %arg4[%c60_178] : memref<144xf32, #tpu.memory_space<smem>>
    %2428 = vector.broadcast %2427 : f32 to vector<1x256xf32>
    %2429 = arith.mulf %2428, %2401 : vector<1x256xf32>
    %2430 = arith.addf %2426, %2429 : vector<1x256xf32>
    %c69_179 = arith.constant 69 : index
    %2431 = memref.load %arg4[%c69_179] : memref<144xf32, #tpu.memory_space<smem>>
    %2432 = vector.broadcast %2431 : f32 to vector<1x256xf32>
    %2433 = arith.mulf %2432, %2402 : vector<1x256xf32>
    %2434 = arith.addf %2430, %2433 : vector<1x256xf32>
    %c78_180 = arith.constant 78 : index
    %2435 = memref.load %arg4[%c78_180] : memref<144xf32, #tpu.memory_space<smem>>
    %2436 = vector.broadcast %2435 : f32 to vector<1x256xf32>
    %2437 = arith.mulf %2436, %2399 : vector<1x256xf32>
    %2438 = arith.addf %2376, %2437 : vector<1x256xf32>
    %c87_181 = arith.constant 87 : index
    %2439 = memref.load %arg4[%c87_181] : memref<144xf32, #tpu.memory_space<smem>>
    %2440 = vector.broadcast %2439 : f32 to vector<1x256xf32>
    %2441 = arith.mulf %2440, %2400 : vector<1x256xf32>
    %2442 = arith.addf %2438, %2441 : vector<1x256xf32>
    %c96_182 = arith.constant 96 : index
    %2443 = memref.load %arg4[%c96_182] : memref<144xf32, #tpu.memory_space<smem>>
    %2444 = vector.broadcast %2443 : f32 to vector<1x256xf32>
    %2445 = arith.mulf %2444, %2401 : vector<1x256xf32>
    %2446 = arith.addf %2442, %2445 : vector<1x256xf32>
    %c105_183 = arith.constant 105 : index
    %2447 = memref.load %arg4[%c105_183] : memref<144xf32, #tpu.memory_space<smem>>
    %2448 = vector.broadcast %2447 : f32 to vector<1x256xf32>
    %2449 = arith.mulf %2448, %2402 : vector<1x256xf32>
    %2450 = arith.addf %2446, %2449 : vector<1x256xf32>
    %c114_184 = arith.constant 114 : index
    %2451 = memref.load %arg4[%c114_184] : memref<144xf32, #tpu.memory_space<smem>>
    %2452 = vector.broadcast %2451 : f32 to vector<1x256xf32>
    %2453 = arith.mulf %2452, %2399 : vector<1x256xf32>
    %2454 = arith.addf %2392, %2453 : vector<1x256xf32>
    %c123_185 = arith.constant 123 : index
    %2455 = memref.load %arg4[%c123_185] : memref<144xf32, #tpu.memory_space<smem>>
    %2456 = vector.broadcast %2455 : f32 to vector<1x256xf32>
    %2457 = arith.mulf %2456, %2400 : vector<1x256xf32>
    %2458 = arith.addf %2454, %2457 : vector<1x256xf32>
    %c132_186 = arith.constant 132 : index
    %2459 = memref.load %arg4[%c132_186] : memref<144xf32, #tpu.memory_space<smem>>
    %2460 = vector.broadcast %2459 : f32 to vector<1x256xf32>
    %2461 = arith.mulf %2460, %2401 : vector<1x256xf32>
    %2462 = arith.addf %2458, %2461 : vector<1x256xf32>
    %c141_187 = arith.constant 141 : index
    %2463 = memref.load %arg4[%c141_187] : memref<144xf32, #tpu.memory_space<smem>>
    %2464 = vector.broadcast %2463 : f32 to vector<1x256xf32>
    %2465 = arith.mulf %2464, %2402 : vector<1x256xf32>
    %2466 = arith.addf %2462, %2465 : vector<1x256xf32>
    %c240_i32_188 = arith.constant 240 : i32
    %2467 = tpu.dynamic_rotate %1933 by %c240_i32_188 dim 1 : vector<4x256xf32>, i32 -> vector<4x256xf32>
    %2468 = arith.andi %29, %49 : vector<1x256xi1>
    %cst_189 = arith.constant 0.000000e+00 : f32
    %2469 = vector.shape_cast %2468 : vector<1x256xi1> to vector<1x256xi1>
    %2470 = vector.broadcast %2469 : vector<1x256xi1> to vector<4x256xi1>
    %2471 = vector.broadcast %cst_189 : f32 to vector<4x256xf32>
    %2472 = arith.select %2470, %2467, %2471 : vector<4x256xi1>, vector<4x256xf32>
    %2473 = vector.extract_strided_slice %2472 {offsets = [0, 0], sizes = [1, 256], strides = [1, 1]} : vector<4x256xf32> to vector<1x256xf32>
    %2474 = vector.extract_strided_slice %2472 {offsets = [1, 0], sizes = [1, 256], strides = [1, 1]} : vector<4x256xf32> to vector<1x256xf32>
    %2475 = vector.extract_strided_slice %2472 {offsets = [2, 0], sizes = [1, 256], strides = [1, 1]} : vector<4x256xf32> to vector<1x256xf32>
    %2476 = vector.extract_strided_slice %2472 {offsets = [3, 0], sizes = [1, 256], strides = [1, 1]} : vector<4x256xf32> to vector<1x256xf32>
    %c7_190 = arith.constant 7 : index
    %2477 = memref.load %arg4[%c7_190] : memref<144xf32, #tpu.memory_space<smem>>
    %2478 = vector.broadcast %2477 : f32 to vector<1x256xf32>
    %2479 = arith.mulf %2478, %2473 : vector<1x256xf32>
    %2480 = arith.addf %2418, %2479 : vector<1x256xf32>
    %c16_191 = arith.constant 16 : index
    %2481 = memref.load %arg4[%c16_191] : memref<144xf32, #tpu.memory_space<smem>>
    %2482 = vector.broadcast %2481 : f32 to vector<1x256xf32>
    %2483 = arith.mulf %2482, %2474 : vector<1x256xf32>
    %2484 = arith.addf %2480, %2483 : vector<1x256xf32>
    %c25_192 = arith.constant 25 : index
    %2485 = memref.load %arg4[%c25_192] : memref<144xf32, #tpu.memory_space<smem>>
    %2486 = vector.broadcast %2485 : f32 to vector<1x256xf32>
    %2487 = arith.mulf %2486, %2475 : vector<1x256xf32>
    %2488 = arith.addf %2484, %2487 : vector<1x256xf32>
    %c34_193 = arith.constant 34 : index
    %2489 = memref.load %arg4[%c34_193] : memref<144xf32, #tpu.memory_space<smem>>
    %2490 = vector.broadcast %2489 : f32 to vector<1x256xf32>
    %2491 = arith.mulf %2490, %2476 : vector<1x256xf32>
    %2492 = arith.addf %2488, %2491 : vector<1x256xf32>
    %c43_194 = arith.constant 43 : index
    %2493 = memref.load %arg4[%c43_194] : memref<144xf32, #tpu.memory_space<smem>>
    %2494 = vector.broadcast %2493 : f32 to vector<1x256xf32>
    %2495 = arith.mulf %2494, %2473 : vector<1x256xf32>
    %2496 = arith.addf %2434, %2495 : vector<1x256xf32>
    %c52_195 = arith.constant 52 : index
    %2497 = memref.load %arg4[%c52_195] : memref<144xf32, #tpu.memory_space<smem>>
    %2498 = vector.broadcast %2497 : f32 to vector<1x256xf32>
    %2499 = arith.mulf %2498, %2474 : vector<1x256xf32>
    %2500 = arith.addf %2496, %2499 : vector<1x256xf32>
    %c61_196 = arith.constant 61 : index
    %2501 = memref.load %arg4[%c61_196] : memref<144xf32, #tpu.memory_space<smem>>
    %2502 = vector.broadcast %2501 : f32 to vector<1x256xf32>
    %2503 = arith.mulf %2502, %2475 : vector<1x256xf32>
    %2504 = arith.addf %2500, %2503 : vector<1x256xf32>
    %c70_197 = arith.constant 70 : index
    %2505 = memref.load %arg4[%c70_197] : memref<144xf32, #tpu.memory_space<smem>>
    %2506 = vector.broadcast %2505 : f32 to vector<1x256xf32>
    %2507 = arith.mulf %2506, %2476 : vector<1x256xf32>
    %2508 = arith.addf %2504, %2507 : vector<1x256xf32>
    %c79_198 = arith.constant 79 : index
    %2509 = memref.load %arg4[%c79_198] : memref<144xf32, #tpu.memory_space<smem>>
    %2510 = vector.broadcast %2509 : f32 to vector<1x256xf32>
    %2511 = arith.mulf %2510, %2473 : vector<1x256xf32>
    %2512 = arith.addf %2450, %2511 : vector<1x256xf32>
    %c88_199 = arith.constant 88 : index
    %2513 = memref.load %arg4[%c88_199] : memref<144xf32, #tpu.memory_space<smem>>
    %2514 = vector.broadcast %2513 : f32 to vector<1x256xf32>
    %2515 = arith.mulf %2514, %2474 : vector<1x256xf32>
    %2516 = arith.addf %2512, %2515 : vector<1x256xf32>
    %c97_200 = arith.constant 97 : index
    %2517 = memref.load %arg4[%c97_200] : memref<144xf32, #tpu.memory_space<smem>>
    %2518 = vector.broadcast %2517 : f32 to vector<1x256xf32>
    %2519 = arith.mulf %2518, %2475 : vector<1x256xf32>
    %2520 = arith.addf %2516, %2519 : vector<1x256xf32>
    %c106_201 = arith.constant 106 : index
    %2521 = memref.load %arg4[%c106_201] : memref<144xf32, #tpu.memory_space<smem>>
    %2522 = vector.broadcast %2521 : f32 to vector<1x256xf32>
    %2523 = arith.mulf %2522, %2476 : vector<1x256xf32>
    %2524 = arith.addf %2520, %2523 : vector<1x256xf32>
    %c115_202 = arith.constant 115 : index
    %2525 = memref.load %arg4[%c115_202] : memref<144xf32, #tpu.memory_space<smem>>
    %2526 = vector.broadcast %2525 : f32 to vector<1x256xf32>
    %2527 = arith.mulf %2526, %2473 : vector<1x256xf32>
    %2528 = arith.addf %2466, %2527 : vector<1x256xf32>
    %c124_203 = arith.constant 124 : index
    %2529 = memref.load %arg4[%c124_203] : memref<144xf32, #tpu.memory_space<smem>>
    %2530 = vector.broadcast %2529 : f32 to vector<1x256xf32>
    %2531 = arith.mulf %2530, %2474 : vector<1x256xf32>
    %2532 = arith.addf %2528, %2531 : vector<1x256xf32>
    %c133_204 = arith.constant 133 : index
    %2533 = memref.load %arg4[%c133_204] : memref<144xf32, #tpu.memory_space<smem>>
    %2534 = vector.broadcast %2533 : f32 to vector<1x256xf32>
    %2535 = arith.mulf %2534, %2475 : vector<1x256xf32>
    %2536 = arith.addf %2532, %2535 : vector<1x256xf32>
    %c142_205 = arith.constant 142 : index
    %2537 = memref.load %arg4[%c142_205] : memref<144xf32, #tpu.memory_space<smem>>
    %2538 = vector.broadcast %2537 : f32 to vector<1x256xf32>
    %2539 = arith.mulf %2538, %2476 : vector<1x256xf32>
    %2540 = arith.addf %2536, %2539 : vector<1x256xf32>
    %c239_i32_206 = arith.constant 239 : i32
    %2541 = tpu.dynamic_rotate %1933 by %c239_i32_206 dim 1 : vector<4x256xf32>, i32 -> vector<4x256xf32>
    %2542 = arith.andi %29, %54 : vector<1x256xi1>
    %cst_207 = arith.constant 0.000000e+00 : f32
    %2543 = vector.shape_cast %2542 : vector<1x256xi1> to vector<1x256xi1>
    %2544 = vector.broadcast %2543 : vector<1x256xi1> to vector<4x256xi1>
    %2545 = vector.broadcast %cst_207 : f32 to vector<4x256xf32>
    %2546 = arith.select %2544, %2541, %2545 : vector<4x256xi1>, vector<4x256xf32>
    %2547 = vector.extract_strided_slice %2546 {offsets = [0, 0], sizes = [1, 256], strides = [1, 1]} : vector<4x256xf32> to vector<1x256xf32>
    %2548 = vector.extract_strided_slice %2546 {offsets = [1, 0], sizes = [1, 256], strides = [1, 1]} : vector<4x256xf32> to vector<1x256xf32>
    %2549 = vector.extract_strided_slice %2546 {offsets = [2, 0], sizes = [1, 256], strides = [1, 1]} : vector<4x256xf32> to vector<1x256xf32>
    %2550 = vector.extract_strided_slice %2546 {offsets = [3, 0], sizes = [1, 256], strides = [1, 1]} : vector<4x256xf32> to vector<1x256xf32>
    %c8_208 = arith.constant 8 : index
    %2551 = memref.load %arg4[%c8_208] : memref<144xf32, #tpu.memory_space<smem>>
    %2552 = vector.broadcast %2551 : f32 to vector<1x256xf32>
    %2553 = arith.mulf %2552, %2547 : vector<1x256xf32>
    %2554 = arith.addf %2492, %2553 : vector<1x256xf32>
    %c17_209 = arith.constant 17 : index
    %2555 = memref.load %arg4[%c17_209] : memref<144xf32, #tpu.memory_space<smem>>
    %2556 = vector.broadcast %2555 : f32 to vector<1x256xf32>
    %2557 = arith.mulf %2556, %2548 : vector<1x256xf32>
    %2558 = arith.addf %2554, %2557 : vector<1x256xf32>
    %c26_210 = arith.constant 26 : index
    %2559 = memref.load %arg4[%c26_210] : memref<144xf32, #tpu.memory_space<smem>>
    %2560 = vector.broadcast %2559 : f32 to vector<1x256xf32>
    %2561 = arith.mulf %2560, %2549 : vector<1x256xf32>
    %2562 = arith.addf %2558, %2561 : vector<1x256xf32>
    %c35_211 = arith.constant 35 : index
    %2563 = memref.load %arg4[%c35_211] : memref<144xf32, #tpu.memory_space<smem>>
    %2564 = vector.broadcast %2563 : f32 to vector<1x256xf32>
    %2565 = arith.mulf %2564, %2550 : vector<1x256xf32>
    %2566 = arith.addf %2562, %2565 : vector<1x256xf32>
    %c44_212 = arith.constant 44 : index
    %2567 = memref.load %arg4[%c44_212] : memref<144xf32, #tpu.memory_space<smem>>
    %2568 = vector.broadcast %2567 : f32 to vector<1x256xf32>
    %2569 = arith.mulf %2568, %2547 : vector<1x256xf32>
    %2570 = arith.addf %2508, %2569 : vector<1x256xf32>
    %c53_213 = arith.constant 53 : index
    %2571 = memref.load %arg4[%c53_213] : memref<144xf32, #tpu.memory_space<smem>>
    %2572 = vector.broadcast %2571 : f32 to vector<1x256xf32>
    %2573 = arith.mulf %2572, %2548 : vector<1x256xf32>
    %2574 = arith.addf %2570, %2573 : vector<1x256xf32>
    %c62_214 = arith.constant 62 : index
    %2575 = memref.load %arg4[%c62_214] : memref<144xf32, #tpu.memory_space<smem>>
    %2576 = vector.broadcast %2575 : f32 to vector<1x256xf32>
    %2577 = arith.mulf %2576, %2549 : vector<1x256xf32>
    %2578 = arith.addf %2574, %2577 : vector<1x256xf32>
    %c71_215 = arith.constant 71 : index
    %2579 = memref.load %arg4[%c71_215] : memref<144xf32, #tpu.memory_space<smem>>
    %2580 = vector.broadcast %2579 : f32 to vector<1x256xf32>
    %2581 = arith.mulf %2580, %2550 : vector<1x256xf32>
    %2582 = arith.addf %2578, %2581 : vector<1x256xf32>
    %c80_216 = arith.constant 80 : index
    %2583 = memref.load %arg4[%c80_216] : memref<144xf32, #tpu.memory_space<smem>>
    %2584 = vector.broadcast %2583 : f32 to vector<1x256xf32>
    %2585 = arith.mulf %2584, %2547 : vector<1x256xf32>
    %2586 = arith.addf %2524, %2585 : vector<1x256xf32>
    %c89_217 = arith.constant 89 : index
    %2587 = memref.load %arg4[%c89_217] : memref<144xf32, #tpu.memory_space<smem>>
    %2588 = vector.broadcast %2587 : f32 to vector<1x256xf32>
    %2589 = arith.mulf %2588, %2548 : vector<1x256xf32>
    %2590 = arith.addf %2586, %2589 : vector<1x256xf32>
    %c98_218 = arith.constant 98 : index
    %2591 = memref.load %arg4[%c98_218] : memref<144xf32, #tpu.memory_space<smem>>
    %2592 = vector.broadcast %2591 : f32 to vector<1x256xf32>
    %2593 = arith.mulf %2592, %2549 : vector<1x256xf32>
    %2594 = arith.addf %2590, %2593 : vector<1x256xf32>
    %c107_219 = arith.constant 107 : index
    %2595 = memref.load %arg4[%c107_219] : memref<144xf32, #tpu.memory_space<smem>>
    %2596 = vector.broadcast %2595 : f32 to vector<1x256xf32>
    %2597 = arith.mulf %2596, %2550 : vector<1x256xf32>
    %2598 = arith.addf %2594, %2597 : vector<1x256xf32>
    %c116_220 = arith.constant 116 : index
    %2599 = memref.load %arg4[%c116_220] : memref<144xf32, #tpu.memory_space<smem>>
    %2600 = vector.broadcast %2599 : f32 to vector<1x256xf32>
    %2601 = arith.mulf %2600, %2547 : vector<1x256xf32>
    %2602 = arith.addf %2540, %2601 : vector<1x256xf32>
    %c125_221 = arith.constant 125 : index
    %2603 = memref.load %arg4[%c125_221] : memref<144xf32, #tpu.memory_space<smem>>
    %2604 = vector.broadcast %2603 : f32 to vector<1x256xf32>
    %2605 = arith.mulf %2604, %2548 : vector<1x256xf32>
    %2606 = arith.addf %2602, %2605 : vector<1x256xf32>
    %c134_222 = arith.constant 134 : index
    %2607 = memref.load %arg4[%c134_222] : memref<144xf32, #tpu.memory_space<smem>>
    %2608 = vector.broadcast %2607 : f32 to vector<1x256xf32>
    %2609 = arith.mulf %2608, %2549 : vector<1x256xf32>
    %2610 = arith.addf %2606, %2609 : vector<1x256xf32>
    %c143_223 = arith.constant 143 : index
    %2611 = memref.load %arg4[%c143_223] : memref<144xf32, #tpu.memory_space<smem>>
    %2612 = vector.broadcast %2611 : f32 to vector<1x256xf32>
    %2613 = arith.mulf %2612, %2550 : vector<1x256xf32>
    %2614 = arith.addf %2610, %2613 : vector<1x256xf32>
    %cst_224 = arith.constant 0.000000e+00 : f32
    %2615 = vector.broadcast %cst_224 : f32 to vector<1x256xf32>
    %2616 = arith.maximumf %2566, %2615 : vector<1x256xf32>
    %cst_225 = arith.constant 0.000000e+00 : f32
    %2617 = vector.broadcast %cst_225 : f32 to vector<1x256xf32>
    %2618 = arith.maximumf %2582, %2617 : vector<1x256xf32>
    %cst_226 = arith.constant 0.000000e+00 : f32
    %2619 = vector.broadcast %cst_226 : f32 to vector<1x256xf32>
    %2620 = arith.maximumf %2598, %2619 : vector<1x256xf32>
    %cst_227 = arith.constant 0.000000e+00 : f32
    %2621 = vector.broadcast %cst_227 : f32 to vector<1x256xf32>
    %2622 = arith.maximumf %2614, %2621 : vector<1x256xf32>
    %cst_228 = arith.constant 0.000000e+00 : f32
    %2623 = vector.broadcast %cst_228 : f32 to vector<1x256xf32>
    %c0_229 = arith.constant 0 : index
    %2624 = memref.load %arg7[%c0_229] : memref<3xf32, #tpu.memory_space<smem>>
    %2625 = vector.broadcast %2624 : f32 to vector<1x256xf32>
    %2626 = arith.addf %2623, %2625 : vector<1x256xf32>
    %c0_230 = arith.constant 0 : index
    %2627 = memref.load %arg6[%c0_230] : memref<12xf32, #tpu.memory_space<smem>>
    %2628 = vector.broadcast %2627 : f32 to vector<1x256xf32>
    %2629 = arith.mulf %2628, %2616 : vector<1x256xf32>
    %2630 = arith.addf %2626, %2629 : vector<1x256xf32>
    %c1_231 = arith.constant 1 : index
    %2631 = memref.load %arg6[%c1_231] : memref<12xf32, #tpu.memory_space<smem>>
    %2632 = vector.broadcast %2631 : f32 to vector<1x256xf32>
    %2633 = arith.mulf %2632, %2618 : vector<1x256xf32>
    %2634 = arith.addf %2630, %2633 : vector<1x256xf32>
    %c2_232 = arith.constant 2 : index
    %2635 = memref.load %arg6[%c2_232] : memref<12xf32, #tpu.memory_space<smem>>
    %2636 = vector.broadcast %2635 : f32 to vector<1x256xf32>
    %2637 = arith.mulf %2636, %2620 : vector<1x256xf32>
    %2638 = arith.addf %2634, %2637 : vector<1x256xf32>
    %c3_233 = arith.constant 3 : index
    %2639 = memref.load %arg6[%c3_233] : memref<12xf32, #tpu.memory_space<smem>>
    %2640 = vector.broadcast %2639 : f32 to vector<1x256xf32>
    %2641 = arith.mulf %2640, %2622 : vector<1x256xf32>
    %2642 = arith.addf %2638, %2641 : vector<1x256xf32>
    %2643 = arith.negf %2642 : vector<1x256xf32>
    %2644 = math.exp %2643 : vector<1x256xf32>
    %cst_234 = arith.constant 1.000000e+00 : f32
    %2645 = vector.broadcast %cst_234 : f32 to vector<1x256xf32>
    %2646 = arith.addf %2645, %2644 : vector<1x256xf32>
    %2647 = arith.divf %2645, %2646 : vector<1x256xf32>
    %cst_235 = arith.constant 0.000000e+00 : f32
    %2648 = vector.broadcast %cst_235 : f32 to vector<1x256xf32>
    %c1_236 = arith.constant 1 : index
    %2649 = memref.load %arg7[%c1_236] : memref<3xf32, #tpu.memory_space<smem>>
    %2650 = vector.broadcast %2649 : f32 to vector<1x256xf32>
    %2651 = arith.addf %2648, %2650 : vector<1x256xf32>
    %c4_237 = arith.constant 4 : index
    %2652 = memref.load %arg6[%c4_237] : memref<12xf32, #tpu.memory_space<smem>>
    %2653 = vector.broadcast %2652 : f32 to vector<1x256xf32>
    %2654 = arith.mulf %2653, %2616 : vector<1x256xf32>
    %2655 = arith.addf %2651, %2654 : vector<1x256xf32>
    %c5_238 = arith.constant 5 : index
    %2656 = memref.load %arg6[%c5_238] : memref<12xf32, #tpu.memory_space<smem>>
    %2657 = vector.broadcast %2656 : f32 to vector<1x256xf32>
    %2658 = arith.mulf %2657, %2618 : vector<1x256xf32>
    %2659 = arith.addf %2655, %2658 : vector<1x256xf32>
    %c6_239 = arith.constant 6 : index
    %2660 = memref.load %arg6[%c6_239] : memref<12xf32, #tpu.memory_space<smem>>
    %2661 = vector.broadcast %2660 : f32 to vector<1x256xf32>
    %2662 = arith.mulf %2661, %2620 : vector<1x256xf32>
    %2663 = arith.addf %2659, %2662 : vector<1x256xf32>
    %c7_240 = arith.constant 7 : index
    %2664 = memref.load %arg6[%c7_240] : memref<12xf32, #tpu.memory_space<smem>>
    %2665 = vector.broadcast %2664 : f32 to vector<1x256xf32>
    %2666 = arith.mulf %2665, %2622 : vector<1x256xf32>
    %2667 = arith.addf %2663, %2666 : vector<1x256xf32>
    %2668 = arith.negf %2667 : vector<1x256xf32>
    %2669 = math.exp %2668 : vector<1x256xf32>
    %cst_241 = arith.constant 1.000000e+00 : f32
    %2670 = vector.broadcast %cst_241 : f32 to vector<1x256xf32>
    %2671 = arith.addf %2670, %2669 : vector<1x256xf32>
    %2672 = arith.divf %2670, %2671 : vector<1x256xf32>
    %cst_242 = arith.constant 0.000000e+00 : f32
    %2673 = vector.broadcast %cst_242 : f32 to vector<1x256xf32>
    %c2_243 = arith.constant 2 : index
    %2674 = memref.load %arg7[%c2_243] : memref<3xf32, #tpu.memory_space<smem>>
    %2675 = vector.broadcast %2674 : f32 to vector<1x256xf32>
    %2676 = arith.addf %2673, %2675 : vector<1x256xf32>
    %c8_244 = arith.constant 8 : index
    %2677 = memref.load %arg6[%c8_244] : memref<12xf32, #tpu.memory_space<smem>>
    %2678 = vector.broadcast %2677 : f32 to vector<1x256xf32>
    %2679 = arith.mulf %2678, %2616 : vector<1x256xf32>
    %2680 = arith.addf %2676, %2679 : vector<1x256xf32>
    %c9_245 = arith.constant 9 : index
    %2681 = memref.load %arg6[%c9_245] : memref<12xf32, #tpu.memory_space<smem>>
    %2682 = vector.broadcast %2681 : f32 to vector<1x256xf32>
    %2683 = arith.mulf %2682, %2618 : vector<1x256xf32>
    %2684 = arith.addf %2680, %2683 : vector<1x256xf32>
    %c10_246 = arith.constant 10 : index
    %2685 = memref.load %arg6[%c10_246] : memref<12xf32, #tpu.memory_space<smem>>
    %2686 = vector.broadcast %2685 : f32 to vector<1x256xf32>
    %2687 = arith.mulf %2686, %2620 : vector<1x256xf32>
    %2688 = arith.addf %2684, %2687 : vector<1x256xf32>
    %c11_247 = arith.constant 11 : index
    %2689 = memref.load %arg6[%c11_247] : memref<12xf32, #tpu.memory_space<smem>>
    %2690 = vector.broadcast %2689 : f32 to vector<1x256xf32>
    %2691 = arith.mulf %2690, %2622 : vector<1x256xf32>
    %2692 = arith.addf %2688, %2691 : vector<1x256xf32>
    %2693 = arith.negf %2692 : vector<1x256xf32>
    %2694 = math.exp %2693 : vector<1x256xf32>
    %cst_248 = arith.constant 1.000000e+00 : f32
    %2695 = vector.broadcast %cst_248 : f32 to vector<1x256xf32>
    %2696 = arith.addf %2695, %2694 : vector<1x256xf32>
    %2697 = arith.divf %2695, %2696 : vector<1x256xf32>
    %cst_249 = arith.constant 0.000000e+00 : f32
    %2698 = vector.broadcast %cst_249 : f32 to vector<4x256xf32>
    %2699 = arith.maximumf %1, %2698 : vector<4x256xf32>
    %cst_250 = arith.constant 1.000000e+00 : f32
    %2700 = vector.broadcast %cst_250 : f32 to vector<4x256xf32>
    %2701 = arith.subf %1, %2700 : vector<4x256xf32>
    %cst_251 = arith.constant 0.000000e+00 : f32
    %2702 = vector.broadcast %cst_251 : f32 to vector<4x256xf32>
    %2703 = arith.maximumf %2701, %2702 : vector<4x256xf32>
    %2704 = arith.subf %2699, %2703 : vector<4x256xf32>
    %2705 = vector.broadcast %2647 : vector<1x256xf32> to vector<4x256xf32>
    %2706 = arith.mulf %2705, %2704 : vector<4x256xf32>
    %cst_252 = arith.constant 1.000000e+00 : f32
    %2707 = vector.broadcast %cst_252 : f32 to vector<4x256xf32>
    %2708 = arith.subf %2707, %2704 : vector<4x256xf32>
    %2709 = arith.mulf %2706, %2708 : vector<4x256xf32>
    %2710 = arith.addf %2704, %2709 : vector<4x256xf32>
    %2711 = vector.broadcast %2672 : vector<1x256xf32> to vector<4x256xf32>
    %2712 = arith.mulf %2711, %2710 : vector<4x256xf32>
    %cst_253 = arith.constant 1.000000e+00 : f32
    %2713 = vector.broadcast %cst_253 : f32 to vector<4x256xf32>
    %2714 = arith.subf %2713, %2710 : vector<4x256xf32>
    %2715 = arith.mulf %2712, %2714 : vector<4x256xf32>
    %2716 = arith.addf %2710, %2715 : vector<4x256xf32>
    %2717 = vector.broadcast %2697 : vector<1x256xf32> to vector<4x256xf32>
    %2718 = arith.mulf %2717, %2716 : vector<4x256xf32>
    %cst_254 = arith.constant 1.000000e+00 : f32
    %2719 = vector.broadcast %cst_254 : f32 to vector<4x256xf32>
    %2720 = arith.subf %2719, %2716 : vector<4x256xf32>
    %2721 = arith.mulf %2718, %2720 : vector<4x256xf32>
    %2722 = arith.addf %2716, %2721 : vector<4x256xf32>
    %c0_255 = arith.constant 0 : index
    %c0_256 = arith.constant 0 : index
    %c0_257 = arith.constant 0 : index
    %2723 = vector.load %arg8[%c0_255, %c0_256, %c0_257] : memref<1x4x256xf32, #tpu.memory_space<vmem>>, vector<1x4x256xf32>
    %2724 = vector.shape_cast %2723 : vector<1x4x256xf32> to vector<4x256xf32>
    %2725 = vector.shape_cast %2722 : vector<4x256xf32> to vector<1x4x256xf32>
    tpu.vector_store %arg8[%c0_255, %c0_256, %c0_257], %2725 {strides = array<i32>} : memref<1x4x256xf32, #tpu.memory_space<vmem>>, vector<1x4x256xf32>,
    return
  }
  func.func @transform_0(%arg0: i32) -> (i32, i32, i32) {
    %c0_i32 = arith.constant 0 : i32
    %c0_i32_0 = arith.constant 0 : i32
    %c0_i32_1 = arith.constant 0 : i32
    return %arg0, %c0_i32, %c0_i32_0 : i32, i32, i32
  }
  func.func @transform_1(%arg0: i32) -> i32 {
    %c0_i32 = arith.constant 0 : i32
    %c0_i32_0 = arith.constant 0 : i32
    return %c0_i32 : i32
  }
  func.func @transform_2(%arg0: i32) -> i32 {
    %c0_i32 = arith.constant 0 : i32
    %c0_i32_0 = arith.constant 0 : i32
    return %c0_i32 : i32
  }
  func.func @transform_3(%arg0: i32) -> i32 {
    %c0_i32 = arith.constant 0 : i32
    %c0_i32_0 = arith.constant 0 : i32
    return %c0_i32 : i32
  }
  func.func @transform_4(%arg0: i32) -> i32 {
    %c0_i32 = arith.constant 0 : i32
    %c0_i32_0 = arith.constant 0 : i32
    return %c0_i32 : i32
  }
  func.func @transform_5(%arg0: i32) -> i32 {
    %c0_i32 = arith.constant 0 : i32
    %c0_i32_0 = arith.constant 0 : i32
    return %c0_i32 : i32
  }
  func.func @transform_6(%arg0: i32) -> i32 {
    %c0_i32 = arith.constant 0 : i32
    %c0_i32_0 = arith.constant 0 : i32
    return %c0_i32 : i32
  }
  func.func @transform_7(%arg0: i32) -> (i32, i32, i32) {
    %c0_i32 = arith.constant 0 : i32
    %c0_i32_0 = arith.constant 0 : i32
    %c0_i32_1 = arith.constant 0 : i32
    return %arg0, %c0_i32, %c0_i32_0 : i32, i32, i32
  }
}

</mosaic_0001>

<llo_original>
// kernel: curve_ca_layer.1
$region0: #{curve_ca_layer.1}
  #allocation0 [shape = 'u32[]', space=smem, size = 0x4, offset = 0x4, fixed_abs, tag = 'smem constant byte address 0x4 - core index']
  #allocation1 [shape = 'u32[144,128]{1,0:T(1,128)}', space=vmem, size = 0x12000, scoped, tag = 'internal scratch']
  %s0 = inlined_call_operand.vmem [shape: f32[2,4,256], index: 0, kind: input, shape index: {}]
  %s1 = inlined_call_operand.vmem [shape: f32[400], index: 1, kind: input, shape index: {}]
  %s2 = inlined_call_operand.vmem [shape: f32[4], index: 2, kind: input, shape index: {}]
  %s3 = inlined_call_operand.vmem [shape: f32[144], index: 3, kind: input, shape index: {}]
  %s4 = inlined_call_operand.vmem [shape: f32[4], index: 4, kind: input, shape index: {}]
  %s5 = inlined_call_operand.vmem [shape: f32[12], index: 5, kind: input, shape index: {}]
  %s6 = inlined_call_operand.vmem [shape: f32[3], index: 6, kind: input, shape index: {}]
  %s7 = inlined_call_operand.vmem [shape: f32[2,4,256], index: 7, kind: output, shape index: {}]
  %s8 = sld [smem:[#allocation0]]
  $region85: #{curve_ca_layer.1} parent=0
    _
  %s10 = ssub.s32 1, %s8
  %s11 = scalar_select 0, %s10, %s8
  $region1: #{curve_ca_layer.1} parent=0
    #allocation2 [shape = 'u8[2048]{0}', space=smem, size = 0x800, scoped, tag = 'input window, operand 1, single buffered']
    #allocation3 [shape = 's32[2]{0}', space=sflag, size = 0x8, scoped, tag = 'scoped memory for curve_ca_layer.1']
    #allocation4 [shape = 'u8[512]{0}', space=smem, size = 0x200, scoped, tag = 'input window, operand 2, single buffered']
    #allocation5 [shape = 's32[1]{0}', space=sflag, size = 0x4, scoped, tag = 'scoped memory for curve_ca_layer.1']
    #allocation6 [shape = 'u8[1024]{0}', space=smem, size = 0x400, scoped, tag = 'input window, operand 3, single buffered']
    #allocation7 [shape = 'u8[512]{0}', space=smem, size = 0x200, scoped, tag = 'input window, operand 4, single buffered']
    #allocation8 [shape = 's32[1]{0}', space=sflag, size = 0x4, scoped, tag = 'scoped memory for curve_ca_layer.1']
    #allocation9 [shape = 'u8[512]{0}', space=smem, size = 0x200, scoped, tag = 'input window, operand 5, single buffered']
    #allocation10 [shape = 'u8[512]{0}', space=smem, size = 0x200, scoped, tag = 'input window, operand 6, single buffered']
    #allocation11 [shape = 's32[1]{0}', space=sflag, size = 0x4, scoped, tag = 'scoped memory for curve_ca_layer.1']
    %12 = vsyncpa [#allocation3], 0
    %13 = vsyncpa [#allocation5], 0
    %14 = vsyncpa [#allocation8], 0
    %15 = vsyncpa [#allocation11], 0
    loop: start=0, step=1, limit=4
    $region2: #{curve_ca_layer.1} parent=1 // loop_pre_header
      _
    $region3: #{curve_ca_layer.1} parent=1 // loop_header
      %s17 = sphi 0, %s21
      %p18 = scmp.ge.s32.totalorder %s17, 4
      %s27 = sphi 0, %s29
      %s30 = sphi 0, %s27
      %s31 = sphi 0, %s30
      %s47 = sphi 0, %s31
      %s51 = sphi 0, %s51
      %s53 = sphi 0, %s51
      %s54 = sphi 0, %s53
      %s68 = sphi 0, %s54
      %s72 = sphi 0, %s72
      %s74 = sphi 0, %s72
      %s75 = sphi 0, %s74
      %s89 = sphi 0, %s75
      %s93 = sphi 0, %s93
      %s95 = sphi 0, %s93
      %s96 = sphi 0, %s95
      %s110 = sphi 0, %s96
      %s114 = sphi 0, %s114
      %s116 = sphi 0, %s114
      %s117 = sphi 0, %s116
      %s131 = sphi 0, %s117
      %s135 = sphi 0, %s135
      %s137 = sphi 0, %s135
      %s138 = sphi 0, %s137
      %s152 = sphi 0, %s138
      %s156 = sphi 0, %s156
      %s158 = sphi 0, %s156
      %s159 = sphi 0, %s158
      %s173 = sphi 0, %s159
      %s179 = sphi 0, %s181
      %s182 = sphi 0, %s179
      %s183 = sphi 0, %s182
      %s199 = sphi 0, %s183
    $region4: #{curve_ca_layer.1} parent=1 // loop_header_branch
      %20 = sbr.rel (%p18) target = $region8
    $region5: #{curve_ca_layer.1} parent=1 // loop_body
      %s22 = ssub.s32 %s17, 1
      %s23 = ssub.s32 %s17, 2
      %s24 = sadd.s32 %s17, 1
      %s25 = ssub.s32 %s17, %s24
      %p26 = scmp.eq.s32.totalorder %s25, 0
      %s28 = sadd.s32 %s27, 1
      %s29 = scalar_select %p26, %s27, %s28
      %p32 = pneg %p26
      %p33 = scmp.eq.s32.totalorder %s17, 1
      %p34 = por %p32, %p33
      %p35 = scmp.ne.s32.totalorder %s27, %s30
      %p36 = scmp.eq.s32.totalorder %s17, 0
      %p37 = por %p35, %p36
      %p38 = scmp.ne.s32.totalorder %s27, %s30
      %p39 = scmp.eq.s32.totalorder %s22, 1
      %p40 = por %p38, %p39
      %p41 = scmp.ne.s32.totalorder %s30, %s31
      %p42 = scmp.eq.s32.totalorder %s22, 0
      %p43 = por %p41, %p42
      %p44 = scmp.ne.s32.totalorder %s30, %s31
      %p45 = scmp.eq.s32.totalorder %s23, 1
      %p46 = por %p44, %p45
      %p48 = scmp.ne.s32.totalorder %s31, %s47
      %p49 = scmp.eq.s32.totalorder %s23, 0
      %p50 = por %p48, %p49
      %s52 = sadd.s32 %s51, 1
      %p55 = scmp.eq.s32.totalorder %s17, 1
      %p56 = scmp.ne.s32.totalorder %s51, %s53
      %p57 = scmp.eq.s32.totalorder %s17, 0
      %p58 = por %p56, %p57
      %p59 = scmp.ne.s32.totalorder %s51, %s53
      %p60 = scmp.eq.s32.totalorder %s22, 1
      %p61 = por %p59, %p60
      %p62 = scmp.ne.s32.totalorder %s53, %s54
      %p63 = scmp.eq.s32.totalorder %s22, 0
      %p64 = por %p62, %p63
      %p65 = scmp.ne.s32.totalorder %s53, %s54
      %p66 = scmp.eq.s32.totalorder %s23, 1
      %p67 = por %p65, %p66
      %p69 = scmp.ne.s32.totalorder %s54, %s68
      %p70 = scmp.eq.s32.totalorder %s23, 0
      %p71 = por %p69, %p70
      %s73 = sadd.s32 %s72, 1
      %p76 = scmp.eq.s32.totalorder %s17, 1
      %p77 = scmp.ne.s32.totalorder %s72, %s74
      %p78 = scmp.eq.s32.totalorder %s17, 0
      %p79 = por %p77, %p78
      %p80 = scmp.ne.s32.totalorder %s72, %s74
      %p81 = scmp.eq.s32.totalorder %s22, 1
      %p82 = por %p80, %p81
      %p83 = scmp.ne.s32.totalorder %s74, %s75
      %p84 = scmp.eq.s32.totalorder %s22, 0
      %p85 = por %p83, %p84
      %p86 = scmp.ne.s32.totalorder %s74, %s75
      %p87 = scmp.eq.s32.totalorder %s23, 1
      %p88 = por %p86, %p87
      %p90 = scmp.ne.s32.totalorder %s75, %s89
      %p91 = scmp.eq.s32.totalorder %s23, 0
      %p92 = por %p90, %p91
      %s94 = sadd.s32 %s93, 1
      %p97 = scmp.eq.s32.totalorder %s17, 1
      %p98 = scmp.ne.s32.totalorder %s93, %s95
      %p99 = scmp.eq.s32.totalorder %s17, 0
      %p100 = por %p98, %p99
      %p101 = scmp.ne.s32.totalorder %s93, %s95
      %p102 = scmp.eq.s32.totalorder %s22, 1
      %p103 = por %p101, %p102
      %p104 = scmp.ne.s32.totalorder %s95, %s96
      %p105 = scmp.eq.s32.totalorder %s22, 0
      %p106 = por %p104, %p105
      %p107 = scmp.ne.s32.totalorder %s95, %s96
      %p108 = scmp.eq.s32.totalorder %s23, 1
      %p109 = por %p107, %p108
      %p111 = scmp.ne.s32.totalorder %s96, %s110
      %p112 = scmp.eq.s32.totalorder %s23, 0
      %p113 = por %p111, %p112
      %s115 = sadd.s32 %s114, 1
      %p118 = scmp.eq.s32.totalorder %s17, 1
      %p119 = scmp.ne.s32.totalorder %s114, %s116
      %p120 = scmp.eq.s32.totalorder %s17, 0
      %p121 = por %p119, %p120
      %p122 = scmp.ne.s32.totalorder %s114, %s116
      %p123 = scmp.eq.s32.totalorder %s22, 1
      %p124 = por %p122, %p123
      %p125 = scmp.ne.s32.totalorder %s116, %s117
      %p126 = scmp.eq.s32.totalorder %s22, 0
      %p127 = por %p125, %p126
      %p128 = scmp.ne.s32.totalorder %s116, %s117
      %p129 = scmp.eq.s32.totalorder %s23, 1
      %p130 = por %p128, %p129
      %p132 = scmp.ne.s32.totalorder %s117, %s131
      %p133 = scmp.eq.s32.totalorder %s23, 0
      %p134 = por %p132, %p133
      %s136 = sadd.s32 %s135, 1
      %p139 = scmp.eq.s32.totalorder %s17, 1
      %p140 = scmp.ne.s32.totalorder %s135, %s137
      %p141 = scmp.eq.s32.totalorder %s17, 0
      %p142 = por %p140, %p141
      %p143 = scmp.ne.s32.totalorder %s135, %s137
      %p144 = scmp.eq.s32.totalorder %s22, 1
      %p145 = por %p143, %p144
      %p146 = scmp.ne.s32.totalorder %s137, %s138
      %p147 = scmp.eq.s32.totalorder %s22, 0
      %p148 = por %p146, %p147
      %p149 = scmp.ne.s32.totalorder %s137, %s138
      %p150 = scmp.eq.s32.totalorder %s23, 1
      %p151 = por %p149, %p150
      %p153 = scmp.ne.s32.totalorder %s138, %s152
      %p154 = scmp.eq.s32.totalorder %s23, 0
      %p155 = por %p153, %p154
      %s157 = sadd.s32 %s156, 1
      %p160 = scmp.eq.s32.totalorder %s17, 1
      %p161 = scmp.ne.s32.totalorder %s156, %s158
      %p162 = scmp.eq.s32.totalorder %s17, 0
      %p163 = por %p161, %p162
      %p164 = scmp.ne.s32.totalorder %s156, %s158
      %p165 = scmp.eq.s32.totalorder %s22, 1
      %p166 = por %p164, %p165
      %p167 = scmp.ne.s32.totalorder %s158, %s159
      %p168 = scmp.eq.s32.totalorder %s22, 0
      %p169 = por %p167, %p168
      %p170 = scmp.ne.s32.totalorder %s158, %s159
      %p171 = scmp.eq.s32.totalorder %s23, 1
      %p172 = por %p170, %p171
      %p174 = scmp.ne.s32.totalorder %s159, %s173
      %p175 = scmp.eq.s32.totalorder %s23, 0
      %p176 = por %p174, %p175
      %s177 = ssub.s32 %s17, %s24
      %p178 = scmp.eq.s32.totalorder %s177, 0
      %s180 = sadd.s32 %s179, 1
      %s181 = scalar_select %p178, %s179, %s180
      %p184 = pneg %p178
      %p185 = scmp.eq.s32.totalorder %s17, 1
      %p186 = por %p184, %p185
      %p187 = scmp.ne.s32.totalorder %s179, %s182
      %p188 = scmp.eq.s32.totalorder %s17, 0
      %p189 = por %p187, %p188
      %p190 = scmp.ne.s32.totalorder %s179, %s182
      %p191 = scmp.eq.s32.totalorder %s22, 1
      %p192 = por %p190, %p191
      %p193 = scmp.ne.s32.totalorder %s182, %s183
      %p194 = scmp.eq.s32.totalorder %s22, 0
      %p195 = por %p193, %p194
      %p196 = scmp.ne.s32.totalorder %s182, %s183
      %p197 = scmp.eq.s32.totalorder %s23, 1
      %p198 = por %p196, %p197
      %p200 = scmp.ne.s32.totalorder %s183, %s199
      %p201 = scmp.eq.s32.totalorder %s23, 0
      %p202 = por %p200, %p201
      %p203 = scmp.le.s32.totalorder 1, %s17
      %p204 = scmp.lt.s32.totalorder %s17, 3
      %p205 = pnand %p203, %p204
      %p206 = pneg %p205
      // Predicated region
      $region9: #{curve_ca_layer.1} parent=5 // pred_check
        _
      $region10: #{curve_ca_layer.1} parent=5 // pred_check_branch
        %208 = sbr.rel (%p205) target = $region12
      $region11: #{curve_ca_layer.1} parent=5 // pred_region
        %s209 = ssub.s32 %s17, 1
        // Predicated region
        $region13: #{curve_ca_layer.1} parent=11 // pred_check
          %p210 = pneg %p64
        $region14: #{curve_ca_layer.1} parent=11 // pred_check_branch
          %212 = sbr.rel (%p210) target = $region16
        $region15: #{curve_ca_layer.1} parent=11 // pred_region
          %s214 = ssub.s32 64, 64
          %215 = vsyncadd [#allocation3], %s214
          %s217 = sshll.u32 %s1, 4
          %s218 = int_to_ptr.vmem [resolvable:$true] %s217
          %220 = dma.vmem_to_smem %s218, 64, [#allocation2], [#allocation3]
        $region16: #{curve_ca_layer.1} parent=11 // pred_fallthru
          _
        // Predicated region
        $region17: #{curve_ca_layer.1} parent=11 // pred_check
          %p221 = pneg %p85
        $region18: #{curve_ca_layer.1} parent=11 // pred_check_branch
          %223 = sbr.rel (%p221) target = $region20
        $region19: #{curve_ca_layer.1} parent=11 // pred_region
          %s225 = ssub.s32 16, 16
          %226 = vsyncadd [#allocation5], %s225
          %s228 = sshll.u32 %s2, 4
          %s229 = int_to_ptr.vmem [resolvable:$true] %s228
          %231 = dma.vmem_to_smem %s229, 16, [#allocation4], [#allocation5]
        $region20: #{curve_ca_layer.1} parent=11 // pred_fallthru
          _
        // Predicated region
        $region21: #{curve_ca_layer.1} parent=11 // pred_check
          %p232 = pneg %p106
        $region22: #{curve_ca_layer.1} parent=11 // pred_check_branch
          %234 = sbr.rel (%p232) target = $region24
        $region23: #{curve_ca_layer.1} parent=11 // pred_region
          %s236 = ssub.s32 32, 32
          %237 = vsyncadd [#allocation5], %s236
          %s239 = sshll.u32 %s3, 4
          %s240 = int_to_ptr.vmem [resolvable:$true] %s239
          %242 = dma.vmem_to_smem %s240, 32, [#allocation6], [#allocation5]
        $region24: #{curve_ca_layer.1} parent=11 // pred_fallthru
          _
        // Predicated region
        $region25: #{curve_ca_layer.1} parent=11 // pred_check
          %p243 = pneg %p127
        $region26: #{curve_ca_layer.1} parent=11 // pred_check_branch
          %245 = sbr.rel (%p243) target = $region28
        $region27: #{curve_ca_layer.1} parent=11 // pred_region
          %s247 = ssub.s32 16, 16
          %248 = vsyncadd [#allocation8], %s247
          %s250 = sshll.u32 %s4, 4
          %s251 = int_to_ptr.vmem [resolvable:$true] %s250
          %253 = dma.vmem_to_smem %s251, 16, [#allocation7], [#allocation8]
        $region28: #{curve_ca_layer.1} parent=11 // pred_fallthru
          _
        // Predicated region
        $region29: #{curve_ca_layer.1} parent=11 // pred_check
          %p254 = pneg %p148
        $region30: #{curve_ca_layer.1} parent=11 // pred_check_branch
          %256 = sbr.rel (%p254) target = $region32
        $region31: #{curve_ca_layer.1} parent=11 // pred_region
          %s258 = ssub.s32 16, 16
          %259 = vsyncadd [#allocation8], %s258
          %s261 = sshll.u32 %s5, 4
          %s262 = int_to_ptr.vmem [resolvable:$true] %s261
          %264 = dma.vmem_to_smem %s262, 16, [#allocation9], [#allocation8]
        $region32: #{curve_ca_layer.1} parent=11 // pred_fallthru
          _
        // Predicated region
        $region33: #{curve_ca_layer.1} parent=11 // pred_check
          %p265 = pneg %p169
        $region34: #{curve_ca_layer.1} parent=11 // pred_check_branch
          %267 = sbr.rel (%p265) target = $region36
        $region35: #{curve_ca_layer.1} parent=11 // pred_region
          %s269 = ssub.s32 16, 16
          %270 = vsyncadd [#allocation11], %s269
          %s272 = sshll.u32 %s6, 4
          %s273 = int_to_ptr.vmem [resolvable:$true] %s272
          %275 = dma.vmem_to_smem %s273, 16, [#allocation10], [#allocation11]
        $region36: #{curve_ca_layer.1} parent=11 // pred_fallthru
          _
      $region12: #{curve_ca_layer.1} parent=5 // pred_fallthru
        _
      %p276 = scmp.lt.s32.totalorder %s17, 2
      // Predicated region
      $region37: #{curve_ca_layer.1} parent=5 // pred_check
        %p277 = pneg %p276
      $region38: #{curve_ca_layer.1} parent=5 // pred_check_branch
        %279 = sbr.rel (%p277) target = $region40
      $region39: #{curve_ca_layer.1} parent=5 // pred_region
        // Predicated region
        $region41: #{curve_ca_layer.1} parent=39 // pred_check
          %p280 = pneg %p37
        $region42: #{curve_ca_layer.1} parent=39 // pred_check_branch
          %282 = sbr.rel (%p280) target = $region44
        $region43: #{curve_ca_layer.1} parent=39 // pred_region
          %p283 = scmp.lt.s32.totalorder %s17, 1
          %s284 = scalar_select %p283, %s17, 1
          %s285 = smul.addr %s284, 2
          %s286 = smul.addr %s285, 4
          %s287 = scalar_lea.vmem %s0, %s286
        $region44: #{curve_ca_layer.1} parent=39 // pred_fallthru
          _
      $region40: #{curve_ca_layer.1} parent=5 // pred_fallthru
        _
      %p288 = scmp.le.s32.totalorder 1, %s17
      %p289 = scmp.lt.s32.totalorder %s17, 3
      %p290 = pnand %p288, %p289
      %p291 = pneg %p290
      // Predicated region
      $region45: #{curve_ca_layer.1} parent=5 // pred_check
        _
      $region46: #{curve_ca_layer.1} parent=5 // pred_check_branch
        %293 = sbr.rel (%p290) target = $region48
      $region47: #{curve_ca_layer.1} parent=5 // pred_region
        %s294 = ssub.s32 %s17, 1
        // Predicated region
        $region49: #{curve_ca_layer.1} parent=47 // pred_check
          %p295 = pneg %p64
        $region50: #{curve_ca_layer.1} parent=47 // pred_check_branch
          %297 = sbr.rel (%p295) target = $region52
        $region51: #{curve_ca_layer.1} parent=47 // pred_region
          %298 = dma.done [#allocation3], 64
        $region52: #{curve_ca_layer.1} parent=47 // pred_fallthru
          _
        // Predicated region
        $region53: #{curve_ca_layer.1} parent=47 // pred_check
          %p299 = pneg %p85
        $region54: #{curve_ca_layer.1} parent=47 // pred_check_branch
          %301 = sbr.rel (%p299) target = $region56
        $region55: #{curve_ca_layer.1} parent=47 // pred_region
          %302 = dma.done [#allocation5], 16
        $region56: #{curve_ca_layer.1} parent=47 // pred_fallthru
          _
        // Predicated region
        $region57: #{curve_ca_layer.1} parent=47 // pred_check
          %p303 = pneg %p106
        $region58: #{curve_ca_layer.1} parent=47 // pred_check_branch
          %305 = sbr.rel (%p303) target = $region60
        $region59: #{curve_ca_layer.1} parent=47 // pred_region
          %306 = dma.done [#allocation5], 32
        $region60: #{curve_ca_layer.1} parent=47 // pred_fallthru
          _
        // Predicated region
        $region61: #{curve_ca_layer.1} parent=47 // pred_check
          %p307 = pneg %p127
        $region62: #{curve_ca_layer.1} parent=47 // pred_check_branch
          %309 = sbr.rel (%p307) target = $region64
        $region63: #{curve_ca_layer.1} parent=47 // pred_region
          %310 = dma.done [#allocation8], 16
        $region64: #{curve_ca_layer.1} parent=47 // pred_fallthru
          _
        // Predicated region
        $region65: #{curve_ca_layer.1} parent=47 // pred_check
          %p311 = pneg %p148
        $region66: #{curve_ca_layer.1} parent=47 // pred_check_branch
          %313 = sbr.rel (%p311) target = $region68
        $region67: #{curve_ca_layer.1} parent=47 // pred_region
          %314 = dma.done [#allocation8], 16
        $region68: #{curve_ca_layer.1} parent=47 // pred_fallthru
          _
        // Predicated region
        $region69: #{curve_ca_layer.1} parent=47 // pred_check
          %p315 = pneg %p169
        $region70: #{curve_ca_layer.1} parent=47 // pred_check_branch
          %317 = sbr.rel (%p315) target = $region72
        $region71: #{curve_ca_layer.1} parent=47 // pred_region
          %318 = dma.done [#allocation11], 16
        $region72: #{curve_ca_layer.1} parent=47 // pred_fallthru
          _
        %319 = sfence
        %p320 = scmp.lt.s32.totalorder %s22, 1
        %s321 = scalar_select %p320, %s22, 1
        %s322 = smul.addr %s321, 2
        %s323 = smul.addr %s322, 4
        %s324 = scalar_lea.vmem %s0, %s323
        %p325 = pneg %p43
        %p326 = pneg %p40
        %p327 = pneg %p64
        %p328 = pneg %p61
        %p329 = pneg %p85
        %p330 = pneg %p82
        %p331 = pneg %p106
        %p332 = pneg %p103
        %p333 = pneg %p127
        %p334 = pneg %p124
        %p335 = pneg %p148
        %p336 = pneg %p145
        %p337 = pneg %p169
        %p338 = pneg %p166
        %p339 = pneg %p195
        %p340 = pneg %p192
        %p341 = scmp.lt.s32.totalorder %s22, 1
        %s342 = scalar_select %p341, %s22, 1
        %s343 = smul.addr %s342, 2
        %s344 = smul.addr %s343, 4
        %s345 = scalar_lea.vmem %s7, %s344
        %p346 = scmp.lt.s32.totalorder %s22, 1
        %s347 = scalar_select %p346, %s22, 1
        %s348 = smul.addr %s347, 2
        %s349 = smul.addr %s348, 4
        %s350 = scalar_lea.vmem %s0, %s349
        %p351 = scmp.lt.s32.totalorder %s22, 1
        %s352 = scalar_select %p351, %s22, 1
        %s353 = smul.addr %s352, 2
        %s354 = smul.addr %s353, 4
        %s355 = scalar_lea.vmem %s7, %s354
        %v356 = vld [vmem:[%s350] sm:$0xff]
        %v357 = vlaneseq
        %v358 = vand.u32 %v357, 127
        %v359 = vadd.s32 %v358, 128
        %v360 = vcvt.s32.f32 %v358
        %v361 = vcvt.s32.f32 %v359
        %v362 = vrcp.pop 16.0
        %v363 = vmul.f32 %v360, %v362
        %v364 = vmul.f32 %v361, %v362
        %v365 = vfloor.f32 %v363
        %v366 = vfloor.f32 %v364
        %v367 = vmul.f32 %v365, 16.0
        %v368 = vmul.f32 %v366, 16.0
        %v369 = vsub.f32 %v360, %v367
        %v370 = vsub.f32 %v361, %v368
        %vm371 = vcmp.ge.s32.totalorder %v358, 32
        %vm372 = vcmp.ge.s32.totalorder %v359, 32
        %vm373 = vcmp.lt.s32.totalorder %v358, 288
        %vm374 = vcmp.lt.s32.totalorder %v359, 288
        %vm375 = vmand %vm371, %vm373
        %vm376 = vmand %vm372, %vm374
        %vm377 = vcmp.ge.s32.totalorder %v358, 16
        %vm378 = vcmp.ge.s32.totalorder %v359, 16
        %vm379 = vcmp.lt.s32.totalorder %v358, 272
        %vm380 = vcmp.lt.s32.totalorder %v359, 272
        %vm381 = vmand %vm377, %vm379
        %vm382 = vmand %vm378, %vm380
        %vm383 = vcmp.ge.s32.totalorder %v358, 0
        %vm384 = vcmp.ge.s32.totalorder %v359, 0
        %vm385 = vcmp.lt.s32.totalorder %v358, 256
        %vm386 = vcmp.lt.s32.totalorder %v359, 256
        %vm387 = vmand %vm383, %vm385
        %vm388 = vmand %vm384, %vm386
        %vm389 = vcmp.ge.s32.totalorder %v358, 4294967280
        %vm390 = vcmp.ge.s32.totalorder %v359, 4294967280
        %vm391 = vcmp.lt.s32.totalorder %v358, 240
        %vm392 = vcmp.lt.s32.totalorder %v359, 240
        %vm393 = vmand %vm389, %vm391
        %vm394 = vmand %vm390, %vm392
        %vm395 = vcmp.ge.s32.totalorder %v358, 4294967264
        %vm396 = vcmp.ge.s32.totalorder %v359, 4294967264
        %vm397 = vcmp.lt.s32.totalorder %v358, 224
        %vm398 = vcmp.lt.s32.totalorder %v359, 224
        %vm399 = vmand %vm395, %vm397
        %vm400 = vmand %vm396, %vm398
        %vm401 = vcmp.ge.f32.partialorder %v369, 2.0
        %vm402 = vcmp.ge.f32.partialorder %v370, 2.0
        %vm403 = vcmp.lt.f32.partialorder %v369, 18.0
        %vm404 = vcmp.lt.f32.partialorder %v370, 18.0
        %vm405 = vmand %vm401, %vm403
        %vm406 = vmand %vm402, %vm404
        %vm407 = vcmp.ge.f32.partialorder %v369, 1.0
        %vm408 = vcmp.ge.f32.partialorder %v370, 1.0
        %vm409 = vcmp.lt.f32.partialorder %v369, 17.0
        %vm410 = vcmp.lt.f32.partialorder %v370, 17.0
        %vm411 = vmand %vm407, %vm409
        %vm412 = vmand %vm408, %vm410
        %vm413 = vcmp.ge.f32.partialorder %v369, 0.0
        %vm414 = vcmp.ge.f32.partialorder %v370, 0.0
        %vm415 = vcmp.lt.f32.partialorder %v369, 16.0
        %vm416 = vcmp.lt.f32.partialorder %v370, 16.0
        %vm417 = vmand %vm413, %vm415
        %vm418 = vmand %vm414, %vm416
        %vm419 = vcmp.ge.f32.partialorder %v369, -1.0
        %vm420 = vcmp.ge.f32.partialorder %v370, -1.0
        %vm421 = vcmp.lt.f32.partialorder %v369, 15.0
        %vm422 = vcmp.lt.f32.partialorder %v370, 15.0
        %vm423 = vmand %vm419, %vm421
        %vm424 = vmand %vm420, %vm422
        %vm425 = vcmp.ge.f32.partialorder %v369, -2.0
        %vm426 = vcmp.ge.f32.partialorder %v370, -2.0
        %vm427 = vcmp.lt.f32.partialorder %v369, 14.0
        %vm428 = vcmp.lt.f32.partialorder %v370, 14.0
        %vm429 = vmand %vm425, %vm427
        %vm430 = vmand %vm426, %vm428
        %s431 = sld [smem:[#allocation4]]
        %v432 = vstv %s431
        %v433 = vadd.f32 %v432, 0.0
        %s434 = sld [smem:[#allocation4 + $0x1]]
        %v435 = vstv %s434
        %v436 = vadd.f32 %v435, 0.0
        %s437 = sld [smem:[#allocation4 + $0x2]]
        %v438 = vstv %s437
        %v439 = vadd.f32 %v438, 0.0
        %s440 = sld [smem:[#allocation4 + $0x3]]
        %v441 = vstv %s440
        %v442 = vadd.f32 %v441, 0.0
        %v444 = vcombine.high %v356, %v356
        %446 = vrot.lane.b32.xlu0 %v356, 34
        %v447 = vpop.permute.xlu0 %446
        %448 = vrot.lane.b32.xlu0 %v444, 34
        %v449 = vpop.permute.xlu0 %448
        %vm450 = vcmp.lt.s32.totalorder %v358, 34
        %v451 = vsel %vm450, %v447, %v449
        %v452 = vsel %vm450, %v449, %v447
        %vm453 = vmand %vm375, %vm405
        %vm454 = vmand %vm376, %vm406
        %v455 = vsel %vm453, 1, 0
        %v456 = vsel %vm454, 1, 0
        %vm457 = vcmp.eq.s32.totalorder %v455, 1
        %vm458 = vcmp.eq.s32.totalorder %v456, 1
        %v459 = vsel %vm457, %v452, 0.0
        %v460 = vsel %vm458, %v451, 0.0
        %s461 = sld [smem:[#allocation2]]
        %v462 = vstv %s461
        %v463 = vmul.f32 %v462, %v459
        %v464 = vmul.f32 %v462, %v460
        %v465 = vadd.f32 %v433, %v463
        %v466 = vadd.f32 %v433, %v464
        %s467 = sld [smem:[#allocation2 + $0x19]]
        %v468 = vstv %s467
        %v469 = vmul.f32 %v468, %v459
        %v470 = vmul.f32 %v468, %v460
        %v473 = vrot.slane %v469, 1
        %v474 = vrot.slane %v470, 1
        %v477 = vadd.f32 %v465, %v473
        %v478 = vadd.f32 %v466, %v474
        %s479 = sld [smem:[#allocation2 + $0x32]]
        %v480 = vstv %s479
        %v481 = vmul.f32 %v480, %v459
        %v482 = vmul.f32 %v480, %v460
        %v485 = vrot.slane %v481, 2
        %v486 = vrot.slane %v482, 2
        %v489 = vadd.f32 %v477, %v485
        %v490 = vadd.f32 %v478, %v486
        %s491 = sld [smem:[#allocation2 + $0x4b]]
        %v492 = vstv %s491
        %v493 = vmul.f32 %v492, %v459
        %v494 = vmul.f32 %v492, %v460
        %v497 = vrot.slane %v493, 3
        %v498 = vrot.slane %v494, 3
        %v501 = vadd.f32 %v489, %v497
        %v502 = vadd.f32 %v490, %v498
        %s503 = sld [smem:[#allocation2 + $0x64]]
        %v504 = vstv %s503
        %v505 = vmul.f32 %v504, %v459
        %v506 = vmul.f32 %v504, %v460
        %v507 = vadd.f32 %v436, %v505
        %v508 = vadd.f32 %v436, %v506
        %s509 = sld [smem:[#allocation2 + $0x7d]]
        %v510 = vstv %s509
        %v511 = vmul.f32 %v510, %v459
        %v512 = vmul.f32 %v510, %v460
        %v515 = vrot.slane %v511, 1
        %v516 = vrot.slane %v512, 1
        %v519 = vadd.f32 %v507, %v515
        %v520 = vadd.f32 %v508, %v516
        %s521 = sld [smem:[#allocation2 + $0x96]]
        %v522 = vstv %s521
        %v523 = vmul.f32 %v522, %v459
        %v524 = vmul.f32 %v522, %v460
        %v527 = vrot.slane %v523, 2
        %v528 = vrot.slane %v524, 2
        %v531 = vadd.f32 %v519, %v527
        %v532 = vadd.f32 %v520, %v528
        %s533 = sld [smem:[#allocation2 + $0xaf]]
        %v534 = vstv %s533
        %v535 = vmul.f32 %v534, %v459
        %v536 = vmul.f32 %v534, %v460
        %v539 = vrot.slane %v535, 3
        %v540 = vrot.slane %v536, 3
        %v543 = vadd.f32 %v531, %v539
        %v544 = vadd.f32 %v532, %v540
        %s545 = sld [smem:[#allocation2 + $0xc8]]
        %v546 = vstv %s545
        %v547 = vmul.f32 %v546, %v459
        %v548 = vmul.f32 %v546, %v460
        %v549 = vadd.f32 %v439, %v547
        %v550 = vadd.f32 %v439, %v548
        %s551 = sld [smem:[#allocation2 + $0xe1]]
        %v552 = vstv %s551
        %v553 = vmul.f32 %v552, %v459
        %v554 = vmul.f32 %v552, %v460
        %v557 = vrot.slane %v553, 1
        %v558 = vrot.slane %v554, 1
        %v561 = vadd.f32 %v549, %v557
        %v562 = vadd.f32 %v550, %v558
        %s563 = sld [smem:[#allocation2 + $0xfa]]
        %v564 = vstv %s563
        %v565 = vmul.f32 %v564, %v459
        %v566 = vmul.f32 %v564, %v460
        %v569 = vrot.slane %v565, 2
        %v570 = vrot.slane %v566, 2
        %v573 = vadd.f32 %v561, %v569
        %v574 = vadd.f32 %v562, %v570
        %s575 = sld [smem:[#allocation2 + $0x113]]
        %v576 = vstv %s575
        %v577 = vmul.f32 %v576, %v459
        %v578 = vmul.f32 %v576, %v460
        %v581 = vrot.slane %v577, 3
        %v582 = vrot.slane %v578, 3
        %v585 = vadd.f32 %v573, %v581
        %v586 = vadd.f32 %v574, %v582
        %s587 = sld [smem:[#allocation2 + $0x12c]]
        %v588 = vstv %s587
        %v589 = vmul.f32 %v588, %v459
        %v590 = vmul.f32 %v588, %v460
        %v591 = vadd.f32 %v442, %v589
        %v592 = vadd.f32 %v442, %v590
        %s593 = sld [smem:[#allocation2 + $0x145]]
        %v594 = vstv %s593
        %v595 = vmul.f32 %v594, %v459
        %v596 = vmul.f32 %v594, %v460
        %v599 = vrot.slane %v595, 1
        %v600 = vrot.slane %v596, 1
        %v603 = vadd.f32 %v591, %v599
        %v604 = vadd.f32 %v592, %v600
        %s605 = sld [smem:[#allocation2 + $0x15e]]
        %v606 = vstv %s605
        %v607 = vmul.f32 %v606, %v459
        %v608 = vmul.f32 %v606, %v460
        %v611 = vrot.slane %v607, 2
        %v612 = vrot.slane %v608, 2
        %v615 = vadd.f32 %v603, %v611
        %v616 = vadd.f32 %v604, %v612
        %s617 = sld [smem:[#allocation2 + $0x177]]
        %v618 = vstv %s617
        %v619 = vmul.f32 %v618, %v459
        %v620 = vmul.f32 %v618, %v460
        %v623 = vrot.slane %v619, 3
        %v624 = vrot.slane %v620, 3
        %v627 = vadd.f32 %v615, %v623
        %v628 = vadd.f32 %v616, %v624
        %629 = vrot.lane.b32.xlu0 %v356, 33
        %v630 = vpop.permute.xlu0 %629
        %631 = vrot.lane.b32.xlu0 %v444, 33
        %v632 = vpop.permute.xlu0 %631
        %vm633 = vcmp.lt.s32.totalorder %v358, 33
        %v634 = vsel %vm633, %v630, %v632
        %v635 = vsel %vm633, %v632, %v630
        %vm636 = vmand %vm375, %vm411
        %vm637 = vmand %vm376, %vm412
        %v638 = vsel %vm636, 1, 0
        %v639 = vsel %vm637, 1, 0
        %vm640 = vcmp.eq.s32.totalorder %v638, 1
        %vm641 = vcmp.eq.s32.totalorder %v639, 1
        %v642 = vsel %vm640, %v635, 0.0
        %v643 = vsel %vm641, %v634, 0.0
        %s644 = sld [smem:[#allocation2 + $0x1]]
        %v645 = vstv %s644
        %v646 = vmul.f32 %v645, %v642
        %v647 = vmul.f32 %v645, %v643
        %v648 = vadd.f32 %v501, %v646
        %v649 = vadd.f32 %v502, %v647
        %s650 = sld [smem:[#allocation2 + $0x1a]]
        %v651 = vstv %s650
        %v652 = vmul.f32 %v651, %v642
        %v653 = vmul.f32 %v651, %v643
        %v656 = vrot.slane %v652, 1
        %v657 = vrot.slane %v653, 1
        %v660 = vadd.f32 %v648, %v656
        %v661 = vadd.f32 %v649, %v657
        %s662 = sld [smem:[#allocation2 + $0x33]]
        %v663 = vstv %s662
        %v664 = vmul.f32 %v663, %v642
        %v665 = vmul.f32 %v663, %v643
        %v668 = vrot.slane %v664, 2
        %v669 = vrot.slane %v665, 2
        %v672 = vadd.f32 %v660, %v668
        %v673 = vadd.f32 %v661, %v669
        %s674 = sld [smem:[#allocation2 + $0x4c]]
        %v675 = vstv %s674
        %v676 = vmul.f32 %v675, %v642
        %v677 = vmul.f32 %v675, %v643
        %v680 = vrot.slane %v676, 3
        %v681 = vrot.slane %v677, 3
        %v684 = vadd.f32 %v672, %v680
        %v685 = vadd.f32 %v673, %v681
        %s686 = sld [smem:[#allocation2 + $0x65]]
        %v687 = vstv %s686
        %v688 = vmul.f32 %v687, %v642
        %v689 = vmul.f32 %v687, %v643
        %v690 = vadd.f32 %v543, %v688
        %v691 = vadd.f32 %v544, %v689
        %s692 = sld [smem:[#allocation2 + $0x7e]]
        %v693 = vstv %s692
        %v694 = vmul.f32 %v693, %v642
        %v695 = vmul.f32 %v693, %v643
        %v698 = vrot.slane %v694, 1
        %v699 = vrot.slane %v695, 1
        %v702 = vadd.f32 %v690, %v698
        %v703 = vadd.f32 %v691, %v699
        %s704 = sld [smem:[#allocation2 + $0x97]]
        %v705 = vstv %s704
        %v706 = vmul.f32 %v705, %v642
        %v707 = vmul.f32 %v705, %v643
        %v710 = vrot.slane %v706, 2
        %v711 = vrot.slane %v707, 2
        %v714 = vadd.f32 %v702, %v710
        %v715 = vadd.f32 %v703, %v711
        %s716 = sld [smem:[#allocation2 + $0xb0]]
        %v717 = vstv %s716
        %v718 = vmul.f32 %v717, %v642
        %v719 = vmul.f32 %v717, %v643
        %v722 = vrot.slane %v718, 3
        %v723 = vrot.slane %v719, 3
        %v726 = vadd.f32 %v714, %v722
        %v727 = vadd.f32 %v715, %v723
        %s728 = sld [smem:[#allocation2 + $0xc9]]
        %v729 = vstv %s728
        %v730 = vmul.f32 %v729, %v642
        %v731 = vmul.f32 %v729, %v643
        %v732 = vadd.f32 %v585, %v730
        %v733 = vadd.f32 %v586, %v731
        %s734 = sld [smem:[#allocation2 + $0xe2]]
        %v735 = vstv %s734
        %v736 = vmul.f32 %v735, %v642
        %v737 = vmul.f32 %v735, %v643
        %v740 = vrot.slane %v736, 1
        %v741 = vrot.slane %v737, 1
        %v744 = vadd.f32 %v732, %v740
        %v745 = vadd.f32 %v733, %v741
        %s746 = sld [smem:[#allocation2 + $0xfb]]
        %v747 = vstv %s746
        %v748 = vmul.f32 %v747, %v642
        %v749 = vmul.f32 %v747, %v643
        %v752 = vrot.slane %v748, 2
        %v753 = vrot.slane %v749, 2
        %v756 = vadd.f32 %v744, %v752
        %v757 = vadd.f32 %v745, %v753
        %s758 = sld [smem:[#allocation2 + $0x114]]
        %v759 = vstv %s758
        %v760 = vmul.f32 %v759, %v642
        %v761 = vmul.f32 %v759, %v643
        %v764 = vrot.slane %v760, 3
        %v765 = vrot.slane %v761, 3
        %v768 = vadd.f32 %v756, %v764
        %v769 = vadd.f32 %v757, %v765
        %s770 = sld [smem:[#allocation2 + $0x12d]]
        %v771 = vstv %s770
        %v772 = vmul.f32 %v771, %v642
        %v773 = vmul.f32 %v771, %v643
        %v774 = vadd.f32 %v627, %v772
        %v775 = vadd.f32 %v628, %v773
        %s776 = sld [smem:[#allocation2 + $0x146]]
        %v777 = vstv %s776
        %v778 = vmul.f32 %v777, %v642
        %v779 = vmul.f32 %v777, %v643
        %v782 = vrot.slane %v778, 1
        %v783 = vrot.slane %v779, 1
        %v786 = vadd.f32 %v774, %v782
        %v787 = vadd.f32 %v775, %v783
        %s788 = sld [smem:[#allocation2 + $0x15f]]
        %v789 = vstv %s788
        %v790 = vmul.f32 %v789, %v642
        %v791 = vmul.f32 %v789, %v643
        %v794 = vrot.slane %v790, 2
        %v795 = vrot.slane %v791, 2
        %v798 = vadd.f32 %v786, %v794
        %v799 = vadd.f32 %v787, %v795
        %s800 = sld [smem:[#allocation2 + $0x178]]
        %v801 = vstv %s800
        %v802 = vmul.f32 %v801, %v642
        %v803 = vmul.f32 %v801, %v643
        %v806 = vrot.slane %v802, 3
        %v807 = vrot.slane %v803, 3
        %v810 = vadd.f32 %v798, %v806
        %v811 = vadd.f32 %v799, %v807
        %812 = vrot.lane.b32.xlu0 %v356, 32
        %v813 = vpop.permute.xlu0 %812
        %814 = vrot.lane.b32.xlu0 %v444, 32
        %v815 = vpop.permute.xlu0 %814
        %vm816 = vcmp.lt.s32.totalorder %v358, 32
        %v817 = vsel %vm816, %v813, %v815
        %v818 = vsel %vm816, %v815, %v813
        %vm819 = vmand %vm375, %vm417
        %vm820 = vmand %vm376, %vm418
        %v821 = vsel %vm819, 1, 0
        %v822 = vsel %vm820, 1, 0
        %vm823 = vcmp.eq.s32.totalorder %v821, 1
        %vm824 = vcmp.eq.s32.totalorder %v822, 1
        %v825 = vsel %vm823, %v818, 0.0
        %v826 = vsel %vm824, %v817, 0.0
        %s827 = sld [smem:[#allocation2 + $0x2]]
        %v828 = vstv %s827
        %v829 = vmul.f32 %v828, %v825
        %v830 = vmul.f32 %v828, %v826
        %v831 = vadd.f32 %v684, %v829
        %v832 = vadd.f32 %v685, %v830
        %s833 = sld [smem:[#allocation2 + $0x1b]]
        %v834 = vstv %s833
        %v835 = vmul.f32 %v834, %v825
        %v836 = vmul.f32 %v834, %v826
        %v839 = vrot.slane %v835, 1
        %v840 = vrot.slane %v836, 1
        %v843 = vadd.f32 %v831, %v839
        %v844 = vadd.f32 %v832, %v840
        %s845 = sld [smem:[#allocation2 + $0x34]]
        %v846 = vstv %s845
        %v847 = vmul.f32 %v846, %v825
        %v848 = vmul.f32 %v846, %v826
        %v851 = vrot.slane %v847, 2
        %v852 = vrot.slane %v848, 2
        %v855 = vadd.f32 %v843, %v851
        %v856 = vadd.f32 %v844, %v852
        %s857 = sld [smem:[#allocation2 + $0x4d]]
        %v858 = vstv %s857
        %v859 = vmul.f32 %v858, %v825
        %v860 = vmul.f32 %v858, %v826
        %v863 = vrot.slane %v859, 3
        %v864 = vrot.slane %v860, 3
        %v867 = vadd.f32 %v855, %v863
        %v868 = vadd.f32 %v856, %v864
        %s869 = sld [smem:[#allocation2 + $0x66]]
        %v870 = vstv %s869
        %v871 = vmul.f32 %v870, %v825
        %v872 = vmul.f32 %v870, %v826
        %v873 = vadd.f32 %v726, %v871
        %v874 = vadd.f32 %v727, %v872
        %s875 = sld [smem:[#allocation2 + $0x7f]]
        %v876 = vstv %s875
        %v877 = vmul.f32 %v876, %v825
        %v878 = vmul.f32 %v876, %v826
        %v881 = vrot.slane %v877, 1
        %v882 = vrot.slane %v878, 1
        %v885 = vadd.f32 %v873, %v881
        %v886 = vadd.f32 %v874, %v882
        %s887 = sld [smem:[#allocation2 + $0x98]]
        %v888 = vstv %s887
        %v889 = vmul.f32 %v888, %v825
        %v890 = vmul.f32 %v888, %v826
        %v893 = vrot.slane %v889, 2
        %v894 = vrot.slane %v890, 2
        %v897 = vadd.f32 %v885, %v893
        %v898 = vadd.f32 %v886, %v894
        %s899 = sld [smem:[#allocation2 + $0xb1]]
        %v900 = vstv %s899
        %v901 = vmul.f32 %v900, %v825
        %v902 = vmul.f32 %v900, %v826
        %v905 = vrot.slane %v901, 3
        %v906 = vrot.slane %v902, 3
        %v909 = vadd.f32 %v897, %v905
        %v910 = vadd.f32 %v898, %v906
        %s911 = sld [smem:[#allocation2 + $0xca]]
        %v912 = vstv %s911
        %v913 = vmul.f32 %v912, %v825
        %v914 = vmul.f32 %v912, %v826
        %v915 = vadd.f32 %v768, %v913
        %v916 = vadd.f32 %v769, %v914
        %s917 = sld [smem:[#allocation2 + $0xe3]]
        %v918 = vstv %s917
        %v919 = vmul.f32 %v918, %v825
        %v920 = vmul.f32 %v918, %v826
        %v923 = vrot.slane %v919, 1
        %v924 = vrot.slane %v920, 1
        %v927 = vadd.f32 %v915, %v923
        %v928 = vadd.f32 %v916, %v924
        %s929 = sld [smem:[#allocation2 + $0xfc]]
        %v930 = vstv %s929
        %v931 = vmul.f32 %v930, %v825
        %v932 = vmul.f32 %v930, %v826
        %v935 = vrot.slane %v931, 2
        %v936 = vrot.slane %v932, 2
        %v939 = vadd.f32 %v927, %v935
        %v940 = vadd.f32 %v928, %v936
        %s941 = sld [smem:[#allocation2 + $0x115]]
        %v942 = vstv %s941
        %v943 = vmul.f32 %v942, %v825
        %v944 = vmul.f32 %v942, %v826
        %v947 = vrot.slane %v943, 3
        %v948 = vrot.slane %v944, 3
        %v951 = vadd.f32 %v939, %v947
        %v952 = vadd.f32 %v940, %v948
        %s953 = sld [smem:[#allocation2 + $0x12e]]
        %v954 = vstv %s953
        %v955 = vmul.f32 %v954, %v825
        %v956 = vmul.f32 %v954, %v826
        %v957 = vadd.f32 %v810, %v955
        %v958 = vadd.f32 %v811, %v956
        %s959 = sld [smem:[#allocation2 + $0x147]]
        %v960 = vstv %s959
        %v961 = vmul.f32 %v960, %v825
        %v962 = vmul.f32 %v960, %v826
        %v965 = vrot.slane %v961, 1
        %v966 = vrot.slane %v962, 1
        %v969 = vadd.f32 %v957, %v965
        %v970 = vadd.f32 %v958, %v966
        %s971 = sld [smem:[#allocation2 + $0x160]]
        %v972 = vstv %s971
        %v973 = vmul.f32 %v972, %v825
        %v974 = vmul.f32 %v972, %v826
        %v977 = vrot.slane %v973, 2
        %v978 = vrot.slane %v974, 2
        %v981 = vadd.f32 %v969, %v977
        %v982 = vadd.f32 %v970, %v978
        %s983 = sld [smem:[#allocation2 + $0x179]]
        %v984 = vstv %s983
        %v985 = vmul.f32 %v984, %v825
        %v986 = vmul.f32 %v984, %v826
        %v989 = vrot.slane %v985, 3
        %v990 = vrot.slane %v986, 3
        %v993 = vadd.f32 %v981, %v989
        %v994 = vadd.f32 %v982, %v990
        %995 = vrot.lane.b32.xlu0 %v356, 31
        %v996 = vpop.permute.xlu0 %995
        %997 = vrot.lane.b32.xlu0 %v444, 31
        %v998 = vpop.permute.xlu0 %997
        %vm999 = vcmp.lt.s32.totalorder %v358, 31
        %v1000 = vsel %vm999, %v996, %v998
        %v1001 = vsel %vm999, %v998, %v996
        %vm1002 = vmand %vm375, %vm423
        %vm1003 = vmand %vm376, %vm424
        %v1004 = vsel %vm1002, 1, 0
        %v1005 = vsel %vm1003, 1, 0
        %vm1006 = vcmp.eq.s32.totalorder %v1004, 1
        %vm1007 = vcmp.eq.s32.totalorder %v1005, 1
        %v1008 = vsel %vm1006, %v1001, 0.0
        %v1009 = vsel %vm1007, %v1000, 0.0
        %s1010 = sld [smem:[#allocation2 + $0x3]]
        %v1011 = vstv %s1010
        %v1012 = vmul.f32 %v1011, %v1008
        %v1013 = vmul.f32 %v1011, %v1009
        %v1014 = vadd.f32 %v867, %v1012
        %v1015 = vadd.f32 %v868, %v1013
        %s1016 = sld [smem:[#allocation2 + $0x1c]]
        %v1017 = vstv %s1016
        %v1018 = vmul.f32 %v1017, %v1008
        %v1019 = vmul.f32 %v1017, %v1009
        %v1022 = vrot.slane %v1018, 1
        %v1023 = vrot.slane %v1019, 1
        %v1026 = vadd.f32 %v1014, %v1022
        %v1027 = vadd.f32 %v1015, %v1023
        %s1028 = sld [smem:[#allocation2 + $0x35]]
        %v1029 = vstv %s1028
        %v1030 = vmul.f32 %v1029, %v1008
        %v1031 = vmul.f32 %v1029, %v1009
        %v1034 = vrot.slane %v1030, 2
        %v1035 = vrot.slane %v1031, 2
        %v1038 = vadd.f32 %v1026, %v1034
        %v1039 = vadd.f32 %v1027, %v1035
        %s1040 = sld [smem:[#allocation2 + $0x4e]]
        %v1041 = vstv %s1040
        %v1042 = vmul.f32 %v1041, %v1008
        %v1043 = vmul.f32 %v1041, %v1009
        %v1046 = vrot.slane %v1042, 3
        %v1047 = vrot.slane %v1043, 3
        %v1050 = vadd.f32 %v1038, %v1046
        %v1051 = vadd.f32 %v1039, %v1047
        %s1052 = sld [smem:[#allocation2 + $0x67]]
        %v1053 = vstv %s1052
        %v1054 = vmul.f32 %v1053, %v1008
        %v1055 = vmul.f32 %v1053, %v1009
        %v1056 = vadd.f32 %v909, %v1054
        %v1057 = vadd.f32 %v910, %v1055
        %s1058 = sld [smem:[#allocation2 + $0x80]]
        %v1059 = vstv %s1058
        %v1060 = vmul.f32 %v1059, %v1008
        %v1061 = vmul.f32 %v1059, %v1009
        %v1064 = vrot.slane %v1060, 1
        %v1065 = vrot.slane %v1061, 1
        %v1068 = vadd.f32 %v1056, %v1064
        %v1069 = vadd.f32 %v1057, %v1065
        %s1070 = sld [smem:[#allocation2 + $0x99]]
        %v1071 = vstv %s1070
        %v1072 = vmul.f32 %v1071, %v1008
        %v1073 = vmul.f32 %v1071, %v1009
        %v1076 = vrot.slane %v1072, 2
        %v1077 = vrot.slane %v1073, 2
        %v1080 = vadd.f32 %v1068, %v1076
        %v1081 = vadd.f32 %v1069, %v1077
        %s1082 = sld [smem:[#allocation2 + $0xb2]]
        %v1083 = vstv %s1082
        %v1084 = vmul.f32 %v1083, %v1008
        %v1085 = vmul.f32 %v1083, %v1009
        %v1088 = vrot.slane %v1084, 3
        %v1089 = vrot.slane %v1085, 3
        %v1092 = vadd.f32 %v1080, %v1088
        %v1093 = vadd.f32 %v1081, %v1089
        %s1094 = sld [smem:[#allocation2 + $0xcb]]
        %v1095 = vstv %s1094
        %v1096 = vmul.f32 %v1095, %v1008
        %v1097 = vmul.f32 %v1095, %v1009
        %v1098 = vadd.f32 %v951, %v1096
        %v1099 = vadd.f32 %v952, %v1097
        %s1100 = sld [smem:[#allocation2 + $0xe4]]
        %v1101 = vstv %s1100
        %v1102 = vmul.f32 %v1101, %v1008
        %v1103 = vmul.f32 %v1101, %v1009
        %v1106 = vrot.slane %v1102, 1
        %v1107 = vrot.slane %v1103, 1
        %v1110 = vadd.f32 %v1098, %v1106
        %v1111 = vadd.f32 %v1099, %v1107
        %s1112 = sld [smem:[#allocation2 + $0xfd]]
        %v1113 = vstv %s1112
        %v1114 = vmul.f32 %v1113, %v1008
        %v1115 = vmul.f32 %v1113, %v1009
        %v1118 = vrot.slane %v1114, 2
        %v1119 = vrot.slane %v1115, 2
        %v1122 = vadd.f32 %v1110, %v1118
        %v1123 = vadd.f32 %v1111, %v1119
        %s1124 = sld [smem:[#allocation2 + $0x116]]
        %v1125 = vstv %s1124
        %v1126 = vmul.f32 %v1125, %v1008
        %v1127 = vmul.f32 %v1125, %v1009
        %v1130 = vrot.slane %v1126, 3
        %v1131 = vrot.slane %v1127, 3
        %v1134 = vadd.f32 %v1122, %v1130
        %v1135 = vadd.f32 %v1123, %v1131
        %s1136 = sld [smem:[#allocation2 + $0x12f]]
        %v1137 = vstv %s1136
        %v1138 = vmul.f32 %v1137, %v1008
        %v1139 = vmul.f32 %v1137, %v1009
        %v1140 = vadd.f32 %v993, %v1138
        %v1141 = vadd.f32 %v994, %v1139
        %s1142 = sld [smem:[#allocation2 + $0x148]]
        %v1143 = vstv %s1142
        %v1144 = vmul.f32 %v1143, %v1008
        %v1145 = vmul.f32 %v1143, %v1009
        %v1148 = vrot.slane %v1144, 1
        %v1149 = vrot.slane %v1145, 1
        %v1152 = vadd.f32 %v1140, %v1148
        %v1153 = vadd.f32 %v1141, %v1149
        %s1154 = sld [smem:[#allocation2 + $0x161]]
        %v1155 = vstv %s1154
        %v1156 = vmul.f32 %v1155, %v1008
        %v1157 = vmul.f32 %v1155, %v1009
        %v1160 = vrot.slane %v1156, 2
        %v1161 = vrot.slane %v1157, 2
        %v1164 = vadd.f32 %v1152, %v1160
        %v1165 = vadd.f32 %v1153, %v1161
        %s1166 = sld [smem:[#allocation2 + $0x17a]]
        %v1167 = vstv %s1166
        %v1168 = vmul.f32 %v1167, %v1008
        %v1169 = vmul.f32 %v1167, %v1009
        %v1172 = vrot.slane %v1168, 3
        %v1173 = vrot.slane %v1169, 3
        %v1176 = vadd.f32 %v1164, %v1172
        %v1177 = vadd.f32 %v1165, %v1173
        %1178 = vrot.lane.b32.xlu0 %v356, 30
        %v1179 = vpop.permute.xlu0 %1178
        %1180 = vrot.lane.b32.xlu0 %v444, 30
        %v1181 = vpop.permute.xlu0 %1180
        %vm1182 = vcmp.lt.s32.totalorder %v358, 30
        %v1183 = vsel %vm1182, %v1179, %v1181
        %v1184 = vsel %vm1182, %v1181, %v1179
        %vm1185 = vmand %vm375, %vm429
        %vm1186 = vmand %vm376, %vm430
        %v1187 = vsel %vm1185, 1, 0
        %v1188 = vsel %vm1186, 1, 0
        %vm1189 = vcmp.eq.s32.totalorder %v1187, 1
        %vm1190 = vcmp.eq.s32.totalorder %v1188, 1
        %v1191 = vsel %vm1189, %v1184, 0.0
        %v1192 = vsel %vm1190, %v1183, 0.0
        %s1193 = sld [smem:[#allocation2 + $0x4]]
        %v1194 = vstv %s1193
        %v1195 = vmul.f32 %v1194, %v1191
        %v1196 = vmul.f32 %v1194, %v1192
        %v1197 = vadd.f32 %v1050, %v1195
        %v1198 = vadd.f32 %v1051, %v1196
        %s1199 = sld [smem:[#allocation2 + $0x1d]]
        %v1200 = vstv %s1199
        %v1201 = vmul.f32 %v1200, %v1191
        %v1202 = vmul.f32 %v1200, %v1192
        %v1205 = vrot.slane %v1201, 1
        %v1206 = vrot.slane %v1202, 1
        %v1209 = vadd.f32 %v1197, %v1205
        %v1210 = vadd.f32 %v1198, %v1206
        %s1211 = sld [smem:[#allocation2 + $0x36]]
        %v1212 = vstv %s1211
        %v1213 = vmul.f32 %v1212, %v1191
        %v1214 = vmul.f32 %v1212, %v1192
        %v1217 = vrot.slane %v1213, 2
        %v1218 = vrot.slane %v1214, 2
        %v1221 = vadd.f32 %v1209, %v1217
        %v1222 = vadd.f32 %v1210, %v1218
        %s1223 = sld [smem:[#allocation2 + $0x4f]]
        %v1224 = vstv %s1223
        %v1225 = vmul.f32 %v1224, %v1191
        %v1226 = vmul.f32 %v1224, %v1192
        %v1229 = vrot.slane %v1225, 3
        %v1230 = vrot.slane %v1226, 3
        %v1233 = vadd.f32 %v1221, %v1229
        %v1234 = vadd.f32 %v1222, %v1230
        %s1235 = sld [smem:[#allocation2 + $0x68]]
        %v1236 = vstv %s1235
        %v1237 = vmul.f32 %v1236, %v1191
        %v1238 = vmul.f32 %v1236, %v1192
        %v1239 = vadd.f32 %v1092, %v1237
        %v1240 = vadd.f32 %v1093, %v1238
        %s1241 = sld [smem:[#allocation2 + $0x81]]
        %v1242 = vstv %s1241
        %v1243 = vmul.f32 %v1242, %v1191
        %v1244 = vmul.f32 %v1242, %v1192
        %v1247 = vrot.slane %v1243, 1
        %v1248 = vrot.slane %v1244, 1
        %v1251 = vadd.f32 %v1239, %v1247
        %v1252 = vadd.f32 %v1240, %v1248
        %s1253 = sld [smem:[#allocation2 + $0x9a]]
        %v1254 = vstv %s1253
        %v1255 = vmul.f32 %v1254, %v1191
        %v1256 = vmul.f32 %v1254, %v1192
        %v1259 = vrot.slane %v1255, 2
        %v1260 = vrot.slane %v1256, 2
        %v1263 = vadd.f32 %v1251, %v1259
        %v1264 = vadd.f32 %v1252, %v1260
        %s1265 = sld [smem:[#allocation2 + $0xb3]]
        %v1266 = vstv %s1265
        %v1267 = vmul.f32 %v1266, %v1191
        %v1268 = vmul.f32 %v1266, %v1192
        %v1271 = vrot.slane %v1267, 3
        %v1272 = vrot.slane %v1268, 3
        %v1275 = vadd.f32 %v1263, %v1271
        %v1276 = vadd.f32 %v1264, %v1272
        %s1277 = sld [smem:[#allocation2 + $0xcc]]
        %v1278 = vstv %s1277
        %v1279 = vmul.f32 %v1278, %v1191
        %v1280 = vmul.f32 %v1278, %v1192
        %v1281 = vadd.f32 %v1134, %v1279
        %v1282 = vadd.f32 %v1135, %v1280
        %s1283 = sld [smem:[#allocation2 + $0xe5]]
        %v1284 = vstv %s1283
        %v1285 = vmul.f32 %v1284, %v1191
        %v1286 = vmul.f32 %v1284, %v1192
        %v1289 = vrot.slane %v1285, 1
        %v1290 = vrot.slane %v1286, 1
        %v1293 = vadd.f32 %v1281, %v1289
        %v1294 = vadd.f32 %v1282, %v1290
        %s1295 = sld [smem:[#allocation2 + $0xfe]]
        %v1296 = vstv %s1295
        %v1297 = vmul.f32 %v1296, %v1191
        %v1298 = vmul.f32 %v1296, %v1192
        %v1301 = vrot.slane %v1297, 2
        %v1302 = vrot.slane %v1298, 2
        %v1305 = vadd.f32 %v1293, %v1301
        %v1306 = vadd.f32 %v1294, %v1302
        %s1307 = sld [smem:[#allocation2 + $0x117]]
        %v1308 = vstv %s1307
        %v1309 = vmul.f32 %v1308, %v1191
        %v1310 = vmul.f32 %v1308, %v1192
        %v1313 = vrot.slane %v1309, 3
        %v1314 = vrot.slane %v1310, 3
        %v1317 = vadd.f32 %v1305, %v1313
        %v1318 = vadd.f32 %v1306, %v1314
        %s1319 = sld [smem:[#allocation2 + $0x130]]
        %v1320 = vstv %s1319
        %v1321 = vmul.f32 %v1320, %v1191
        %v1322 = vmul.f32 %v1320, %v1192
        %v1323 = vadd.f32 %v1176, %v1321
        %v1324 = vadd.f32 %v1177, %v1322
        %s1325 = sld [smem:[#allocation2 + $0x149]]
        %v1326 = vstv %s1325
        %v1327 = vmul.f32 %v1326, %v1191
        %v1328 = vmul.f32 %v1326, %v1192
        %v1331 = vrot.slane %v1327, 1
        %v1332 = vrot.slane %v1328, 1
        %v1335 = vadd.f32 %v1323, %v1331
        %v1336 = vadd.f32 %v1324, %v1332
        %s1337 = sld [smem:[#allocation2 + $0x162]]
        %v1338 = vstv %s1337
        %v1339 = vmul.f32 %v1338, %v1191
        %v1340 = vmul.f32 %v1338, %v1192
        %v1343 = vrot.slane %v1339, 2
        %v1344 = vrot.slane %v1340, 2
        %v1347 = vadd.f32 %v1335, %v1343
        %v1348 = vadd.f32 %v1336, %v1344
        %s1349 = sld [smem:[#allocation2 + $0x17b]]
        %v1350 = vstv %s1349
        %v1351 = vmul.f32 %v1350, %v1191
        %v1352 = vmul.f32 %v1350, %v1192
        %v1355 = vrot.slane %v1351, 3
        %v1356 = vrot.slane %v1352, 3
        %v1359 = vadd.f32 %v1347, %v1355
        %v1360 = vadd.f32 %v1348, %v1356
        %1361 = vrot.lane.b32.xlu0 %v356, 18
        %v1362 = vpop.permute.xlu0 %1361
        %1363 = vrot.lane.b32.xlu0 %v444, 18
        %v1364 = vpop.permute.xlu0 %1363
        %vm1365 = vcmp.lt.s32.totalorder %v358, 18
        %v1366 = vsel %vm1365, %v1362, %v1364
        %v1367 = vsel %vm1365, %v1364, %v1362
        %vm1368 = vmand %vm381, %vm405
        %vm1369 = vmand %vm382, %vm406
        %v1370 = vsel %vm1368, 1, 0
        %v1371 = vsel %vm1369, 1, 0
        %vm1372 = vcmp.eq.s32.totalorder %v1370, 1
        %vm1373 = vcmp.eq.s32.totalorder %v1371, 1
        %v1374 = vsel %vm1372, %v1367, 0.0
        %v1375 = vsel %vm1373, %v1366, 0.0
        %s1376 = sld [smem:[#allocation2 + $0x5]]
        %v1377 = vstv %s1376
        %v1378 = vmul.f32 %v1377, %v1374
        %v1379 = vmul.f32 %v1377, %v1375
        %v1380 = vadd.f32 %v1233, %v1378
        %v1381 = vadd.f32 %v1234, %v1379
        %s1382 = sld [smem:[#allocation2 + $0x1e]]
        %v1383 = vstv %s1382
        %v1384 = vmul.f32 %v1383, %v1374
        %v1385 = vmul.f32 %v1383, %v1375
        %v1388 = vrot.slane %v1384, 1
        %v1389 = vrot.slane %v1385, 1
        %v1392 = vadd.f32 %v1380, %v1388
        %v1393 = vadd.f32 %v1381, %v1389
        %s1394 = sld [smem:[#allocation2 + $0x37]]
        %v1395 = vstv %s1394
        %v1396 = vmul.f32 %v1395, %v1374
        %v1397 = vmul.f32 %v1395, %v1375
        %v1400 = vrot.slane %v1396, 2
        %v1401 = vrot.slane %v1397, 2
        %v1404 = vadd.f32 %v1392, %v1400
        %v1405 = vadd.f32 %v1393, %v1401
        %s1406 = sld [smem:[#allocation2 + $0x50]]
        %v1407 = vstv %s1406
        %v1408 = vmul.f32 %v1407, %v1374
        %v1409 = vmul.f32 %v1407, %v1375
        %v1412 = vrot.slane %v1408, 3
        %v1413 = vrot.slane %v1409, 3
        %v1416 = vadd.f32 %v1404, %v1412
        %v1417 = vadd.f32 %v1405, %v1413
        %s1418 = sld [smem:[#allocation2 + $0x69]]
        %v1419 = vstv %s1418
        %v1420 = vmul.f32 %v1419, %v1374
        %v1421 = vmul.f32 %v1419, %v1375
        %v1422 = vadd.f32 %v1275, %v1420
        %v1423 = vadd.f32 %v1276, %v1421
        %s1424 = sld [smem:[#allocation2 + $0x82]]
        %v1425 = vstv %s1424
        %v1426 = vmul.f32 %v1425, %v1374
        %v1427 = vmul.f32 %v1425, %v1375
        %v1430 = vrot.slane %v1426, 1
        %v1431 = vrot.slane %v1427, 1
        %v1434 = vadd.f32 %v1422, %v1430
        %v1435 = vadd.f32 %v1423, %v1431
        %s1436 = sld [smem:[#allocation2 + $0x9b]]
        %v1437 = vstv %s1436
        %v1438 = vmul.f32 %v1437, %v1374
        %v1439 = vmul.f32 %v1437, %v1375
        %v1442 = vrot.slane %v1438, 2
        %v1443 = vrot.slane %v1439, 2
        %v1446 = vadd.f32 %v1434, %v1442
        %v1447 = vadd.f32 %v1435, %v1443
        %s1448 = sld [smem:[#allocation2 + $0xb4]]
        %v1449 = vstv %s1448
        %v1450 = vmul.f32 %v1449, %v1374
        %v1451 = vmul.f32 %v1449, %v1375
        %v1454 = vrot.slane %v1450, 3
        %v1455 = vrot.slane %v1451, 3
        %v1458 = vadd.f32 %v1446, %v1454
        %v1459 = vadd.f32 %v1447, %v1455
        %s1460 = sld [smem:[#allocation2 + $0xcd]]
        %v1461 = vstv %s1460
        %v1462 = vmul.f32 %v1461, %v1374
        %v1463 = vmul.f32 %v1461, %v1375
        %v1464 = vadd.f32 %v1317, %v1462
        %v1465 = vadd.f32 %v1318, %v1463
        %s1466 = sld [smem:[#allocation2 + $0xe6]]
        %v1467 = vstv %s1466
        %v1468 = vmul.f32 %v1467, %v1374
        %v1469 = vmul.f32 %v1467, %v1375
        %v1472 = vrot.slane %v1468, 1
        %v1473 = vrot.slane %v1469, 1
        %v1476 = vadd.f32 %v1464, %v1472
        %v1477 = vadd.f32 %v1465, %v1473
        %s1478 = sld [smem:[#allocation2 + $0xff]]
        %v1479 = vstv %s1478
        %v1480 = vmul.f32 %v1479, %v1374
        %v1481 = vmul.f32 %v1479, %v1375
        %v1484 = vrot.slane %v1480, 2
        %v1485 = vrot.slane %v1481, 2
        %v1488 = vadd.f32 %v1476, %v1484
        %v1489 = vadd.f32 %v1477, %v1485
        %s1490 = sld [smem:[#allocation2 + $0x118]]
        %v1491 = vstv %s1490
        %v1492 = vmul.f32 %v1491, %v1374
        %v1493 = vmul.f32 %v1491, %v1375
        %v1496 = vrot.slane %v1492, 3
        %v1497 = vrot.slane %v1493, 3
        %v1500 = vadd.f32 %v1488, %v1496
        %v1501 = vadd.f32 %v1489, %v1497
        %s1502 = sld [smem:[#allocation2 + $0x131]]
        %v1503 = vstv %s1502
        %v1504 = vmul.f32 %v1503, %v1374
        %v1505 = vmul.f32 %v1503, %v1375
        %v1506 = vadd.f32 %v1359, %v1504
        %v1507 = vadd.f32 %v1360, %v1505
        %s1508 = sld [smem:[#allocation2 + $0x14a]]
        %v1509 = vstv %s1508
        %v1510 = vmul.f32 %v1509, %v1374
        %v1511 = vmul.f32 %v1509, %v1375
        %v1514 = vrot.slane %v1510, 1
        %v1515 = vrot.slane %v1511, 1
        %v1518 = vadd.f32 %v1506, %v1514
        %v1519 = vadd.f32 %v1507, %v1515
        %s1520 = sld [smem:[#allocation2 + $0x163]]
        %v1521 = vstv %s1520
        %v1522 = vmul.f32 %v1521, %v1374
        %v1523 = vmul.f32 %v1521, %v1375
        %v1526 = vrot.slane %v1522, 2
        %v1527 = vrot.slane %v1523, 2
        %v1530 = vadd.f32 %v1518, %v1526
        %v1531 = vadd.f32 %v1519, %v1527
        %s1532 = sld [smem:[#allocation2 + $0x17c]]
        %v1533 = vstv %s1532
        %v1534 = vmul.f32 %v1533, %v1374
        %v1535 = vmul.f32 %v1533, %v1375
        %v1538 = vrot.slane %v1534, 3
        %v1539 = vrot.slane %v1535, 3
        %v1542 = vadd.f32 %v1530, %v1538
        %v1543 = vadd.f32 %v1531, %v1539
        %1544 = vrot.lane.b32.xlu0 %v356, 17
        %v1545 = vpop.permute.xlu0 %1544
        %1546 = vrot.lane.b32.xlu0 %v444, 17
        %v1547 = vpop.permute.xlu0 %1546
        %vm1548 = vcmp.lt.s32.totalorder %v358, 17
        %v1549 = vsel %vm1548, %v1545, %v1547
        %v1550 = vsel %vm1548, %v1547, %v1545
        %vm1551 = vmand %vm381, %vm411
        %vm1552 = vmand %vm382, %vm412
        %v1553 = vsel %vm1551, 1, 0
        %v1554 = vsel %vm1552, 1, 0
        %vm1555 = vcmp.eq.s32.totalorder %v1553, 1
        %vm1556 = vcmp.eq.s32.totalorder %v1554, 1
        %v1557 = vsel %vm1555, %v1550, 0.0
        %v1558 = vsel %vm1556, %v1549, 0.0
        %s1559 = sld [smem:[#allocation2 + $0x6]]
        %v1560 = vstv %s1559
        %v1561 = vmul.f32 %v1560, %v1557
        %v1562 = vmul.f32 %v1560, %v1558
        %v1563 = vadd.f32 %v1416, %v1561
        %v1564 = vadd.f32 %v1417, %v1562
        %s1565 = sld [smem:[#allocation2 + $0x1f]]
        %v1566 = vstv %s1565
        %v1567 = vmul.f32 %v1566, %v1557
        %v1568 = vmul.f32 %v1566, %v1558
        %v1571 = vrot.slane %v1567, 1
        %v1572 = vrot.slane %v1568, 1
        %v1575 = vadd.f32 %v1563, %v1571
        %v1576 = vadd.f32 %v1564, %v1572
        %s1577 = sld [smem:[#allocation2 + $0x38]]
        %v1578 = vstv %s1577
        %v1579 = vmul.f32 %v1578, %v1557
        %v1580 = vmul.f32 %v1578, %v1558
        %v1583 = vrot.slane %v1579, 2
        %v1584 = vrot.slane %v1580, 2
        %v1587 = vadd.f32 %v1575, %v1583
        %v1588 = vadd.f32 %v1576, %v1584
        %s1589 = sld [smem:[#allocation2 + $0x51]]
        %v1590 = vstv %s1589
        %v1591 = vmul.f32 %v1590, %v1557
        %v1592 = vmul.f32 %v1590, %v1558
        %v1595 = vrot.slane %v1591, 3
        %v1596 = vrot.slane %v1592, 3
        %v1599 = vadd.f32 %v1587, %v1595
        %v1600 = vadd.f32 %v1588, %v1596
        %s1601 = sld [smem:[#allocation2 + $0x6a]]
        %v1602 = vstv %s1601
        %v1603 = vmul.f32 %v1602, %v1557
        %v1604 = vmul.f32 %v1602, %v1558
        %v1605 = vadd.f32 %v1458, %v1603
        %v1606 = vadd.f32 %v1459, %v1604
        %s1607 = sld [smem:[#allocation2 + $0x83]]
        %v1608 = vstv %s1607
        %v1609 = vmul.f32 %v1608, %v1557
        %v1610 = vmul.f32 %v1608, %v1558
        %v1613 = vrot.slane %v1609, 1
        %v1614 = vrot.slane %v1610, 1
        %v1617 = vadd.f32 %v1605, %v1613
        %v1618 = vadd.f32 %v1606, %v1614
        %s1619 = sld [smem:[#allocation2 + $0x9c]]
        %v1620 = vstv %s1619
        %v1621 = vmul.f32 %v1620, %v1557
        %v1622 = vmul.f32 %v1620, %v1558
        %v1625 = vrot.slane %v1621, 2
        %v1626 = vrot.slane %v1622, 2
        %v1629 = vadd.f32 %v1617, %v1625
        %v1630 = vadd.f32 %v1618, %v1626
        %s1631 = sld [smem:[#allocation2 + $0xb5]]
        %v1632 = vstv %s1631
        %v1633 = vmul.f32 %v1632, %v1557
        %v1634 = vmul.f32 %v1632, %v1558
        %v1637 = vrot.slane %v1633, 3
        %v1638 = vrot.slane %v1634, 3
        %v1641 = vadd.f32 %v1629, %v1637
        %v1642 = vadd.f32 %v1630, %v1638
        %s1643 = sld [smem:[#allocation2 + $0xce]]
        %v1644 = vstv %s1643
        %v1645 = vmul.f32 %v1644, %v1557
        %v1646 = vmul.f32 %v1644, %v1558
        %v1647 = vadd.f32 %v1500, %v1645
        %v1648 = vadd.f32 %v1501, %v1646
        %s1649 = sld [smem:[#allocation2 + $0xe7]]
        %v1650 = vstv %s1649
        %v1651 = vmul.f32 %v1650, %v1557
        %v1652 = vmul.f32 %v1650, %v1558
        %v1655 = vrot.slane %v1651, 1
        %v1656 = vrot.slane %v1652, 1
        %v1659 = vadd.f32 %v1647, %v1655
        %v1660 = vadd.f32 %v1648, %v1656
        %s1661 = sld [smem:[#allocation2 + $0x100]]
        %v1662 = vstv %s1661
        %v1663 = vmul.f32 %v1662, %v1557
        %v1664 = vmul.f32 %v1662, %v1558
        %v1667 = vrot.slane %v1663, 2
        %v1668 = vrot.slane %v1664, 2
        %v1671 = vadd.f32 %v1659, %v1667
        %v1672 = vadd.f32 %v1660, %v1668
        %s1673 = sld [smem:[#allocation2 + $0x119]]
        %v1674 = vstv %s1673
        %v1675 = vmul.f32 %v1674, %v1557
        %v1676 = vmul.f32 %v1674, %v1558
        %v1679 = vrot.slane %v1675, 3
        %v1680 = vrot.slane %v1676, 3
        %v1683 = vadd.f32 %v1671, %v1679
        %v1684 = vadd.f32 %v1672, %v1680
        %s1685 = sld [smem:[#allocation2 + $0x132]]
        %v1686 = vstv %s1685
        %v1687 = vmul.f32 %v1686, %v1557
        %v1688 = vmul.f32 %v1686, %v1558
        %v1689 = vadd.f32 %v1542, %v1687
        %v1690 = vadd.f32 %v1543, %v1688
        %s1691 = sld [smem:[#allocation2 + $0x14b]]
        %v1692 = vstv %s1691
        %v1693 = vmul.f32 %v1692, %v1557
        %v1694 = vmul.f32 %v1692, %v1558
        %v1697 = vrot.slane %v1693, 1
        %v1698 = vrot.slane %v1694, 1
        %v1701 = vadd.f32 %v1689, %v1697
        %v1702 = vadd.f32 %v1690, %v1698
        %s1703 = sld [smem:[#allocation2 + $0x164]]
        %v1704 = vstv %s1703
        %v1705 = vmul.f32 %v1704, %v1557
        %v1706 = vmul.f32 %v1704, %v1558
        %v1709 = vrot.slane %v1705, 2
        %v1710 = vrot.slane %v1706, 2
        %v1713 = vadd.f32 %v1701, %v1709
        %v1714 = vadd.f32 %v1702, %v1710
        %s1715 = sld [smem:[#allocation2 + $0x17d]]
        %v1716 = vstv %s1715
        %v1717 = vmul.f32 %v1716, %v1557
        %v1718 = vmul.f32 %v1716, %v1558
        %v1721 = vrot.slane %v1717, 3
        %v1722 = vrot.slane %v1718, 3
        %v1725 = vadd.f32 %v1713, %v1721
        %v1726 = vadd.f32 %v1714, %v1722
        %1727 = vrot.lane.b32.xlu0 %v356, 16
        %v1728 = vpop.permute.xlu0 %1727
        %1729 = vrot.lane.b32.xlu0 %v444, 16
        %v1730 = vpop.permute.xlu0 %1729
        %vm1731 = vcmp.lt.s32.totalorder %v358, 16
        %v1732 = vsel %vm1731, %v1728, %v1730
        %v1733 = vsel %vm1731, %v1730, %v1728
        %vm1734 = vmand %vm381, %vm417
        %vm1735 = vmand %vm382, %vm418
        %v1736 = vsel %vm1734, 1, 0
        %v1737 = vsel %vm1735, 1, 0
        %vm1738 = vcmp.eq.s32.totalorder %v1736, 1
        %vm1739 = vcmp.eq.s32.totalorder %v1737, 1
        %v1740 = vsel %vm1738, %v1733, 0.0
        %v1741 = vsel %vm1739, %v1732, 0.0
        %s1742 = sld [smem:[#allocation2 + $0x7]]
        %v1743 = vstv %s1742
        %v1744 = vmul.f32 %v1743, %v1740
        %v1745 = vmul.f32 %v1743, %v1741
        %v1746 = vadd.f32 %v1599, %v1744
        %v1747 = vadd.f32 %v1600, %v1745
        %s1748 = sld [smem:[#allocation2 + $0x20]]
        %v1749 = vstv %s1748
        %v1750 = vmul.f32 %v1749, %v1740
        %v1751 = vmul.f32 %v1749, %v1741
        %v1754 = vrot.slane %v1750, 1
        %v1755 = vrot.slane %v1751, 1
        %v1758 = vadd.f32 %v1746, %v1754
        %v1759 = vadd.f32 %v1747, %v1755
        %s1760 = sld [smem:[#allocation2 + $0x39]]
        %v1761 = vstv %s1760
        %v1762 = vmul.f32 %v1761, %v1740
        %v1763 = vmul.f32 %v1761, %v1741
        %v1766 = vrot.slane %v1762, 2
        %v1767 = vrot.slane %v1763, 2
        %v1770 = vadd.f32 %v1758, %v1766
        %v1771 = vadd.f32 %v1759, %v1767
        %s1772 = sld [smem:[#allocation2 + $0x52]]
        %v1773 = vstv %s1772
        %v1774 = vmul.f32 %v1773, %v1740
        %v1775 = vmul.f32 %v1773, %v1741
        %v1778 = vrot.slane %v1774, 3
        %v1779 = vrot.slane %v1775, 3
        %v1782 = vadd.f32 %v1770, %v1778
        %v1783 = vadd.f32 %v1771, %v1779
        %s1784 = sld [smem:[#allocation2 + $0x6b]]
        %v1785 = vstv %s1784
        %v1786 = vmul.f32 %v1785, %v1740
        %v1787 = vmul.f32 %v1785, %v1741
        %v1788 = vadd.f32 %v1641, %v1786
        %v1789 = vadd.f32 %v1642, %v1787
        %s1790 = sld [smem:[#allocation2 + $0x84]]
        %v1791 = vstv %s1790
        %v1792 = vmul.f32 %v1791, %v1740
        %v1793 = vmul.f32 %v1791, %v1741
        %v1796 = vrot.slane %v1792, 1
        %v1797 = vrot.slane %v1793, 1
        %v1800 = vadd.f32 %v1788, %v1796
        %v1801 = vadd.f32 %v1789, %v1797
        %s1802 = sld [smem:[#allocation2 + $0x9d]]
        %v1803 = vstv %s1802
        %v1804 = vmul.f32 %v1803, %v1740
        %v1805 = vmul.f32 %v1803, %v1741
        %v1808 = vrot.slane %v1804, 2
        %v1809 = vrot.slane %v1805, 2
        %v1812 = vadd.f32 %v1800, %v1808
        %v1813 = vadd.f32 %v1801, %v1809
        %s1814 = sld [smem:[#allocation2 + $0xb6]]
        %v1815 = vstv %s1814
        %v1816 = vmul.f32 %v1815, %v1740
        %v1817 = vmul.f32 %v1815, %v1741
        %v1820 = vrot.slane %v1816, 3
        %v1821 = vrot.slane %v1817, 3
        %v1824 = vadd.f32 %v1812, %v1820
        %v1825 = vadd.f32 %v1813, %v1821
        %s1826 = sld [smem:[#allocation2 + $0xcf]]
        %v1827 = vstv %s1826
        %v1828 = vmul.f32 %v1827, %v1740
        %v1829 = vmul.f32 %v1827, %v1741
        %v1830 = vadd.f32 %v1683, %v1828
        %v1831 = vadd.f32 %v1684, %v1829
        %s1832 = sld [smem:[#allocation2 + $0xe8]]
        %v1833 = vstv %s1832
        %v1834 = vmul.f32 %v1833, %v1740
        %v1835 = vmul.f32 %v1833, %v1741
        %v1838 = vrot.slane %v1834, 1
        %v1839 = vrot.slane %v1835, 1
        %v1842 = vadd.f32 %v1830, %v1838
        %v1843 = vadd.f32 %v1831, %v1839
        %s1844 = sld [smem:[#allocation2 + $0x101]]
        %v1845 = vstv %s1844
        %v1846 = vmul.f32 %v1845, %v1740
        %v1847 = vmul.f32 %v1845, %v1741
        %v1850 = vrot.slane %v1846, 2
        %v1851 = vrot.slane %v1847, 2
        %v1854 = vadd.f32 %v1842, %v1850
        %v1855 = vadd.f32 %v1843, %v1851
        %s1856 = sld [smem:[#allocation2 + $0x11a]]
        %v1857 = vstv %s1856
        %v1858 = vmul.f32 %v1857, %v1740
        %v1859 = vmul.f32 %v1857, %v1741
        %v1862 = vrot.slane %v1858, 3
        %v1863 = vrot.slane %v1859, 3
        %v1866 = vadd.f32 %v1854, %v1862
        %v1867 = vadd.f32 %v1855, %v1863
        %s1868 = sld [smem:[#allocation2 + $0x133]]
        %v1869 = vstv %s1868
        %v1870 = vmul.f32 %v1869, %v1740
        %v1871 = vmul.f32 %v1869, %v1741
        %v1872 = vadd.f32 %v1725, %v1870
        %v1873 = vadd.f32 %v1726, %v1871
        %s1874 = sld [smem:[#allocation2 + $0x14c]]
        %v1875 = vstv %s1874
        %v1876 = vmul.f32 %v1875, %v1740
        %v1877 = vmul.f32 %v1875, %v1741
        %v1880 = vrot.slane %v1876, 1
        %v1881 = vrot.slane %v1877, 1
        %v1884 = vadd.f32 %v1872, %v1880
        %v1885 = vadd.f32 %v1873, %v1881
        %s1886 = sld [smem:[#allocation2 + $0x165]]
        %v1887 = vstv %s1886
        %v1888 = vmul.f32 %v1887, %v1740
        %v1889 = vmul.f32 %v1887, %v1741
        %v1892 = vrot.slane %v1888, 2
        %v1893 = vrot.slane %v1889, 2
        %v1896 = vadd.f32 %v1884, %v1892
        %v1897 = vadd.f32 %v1885, %v1893
        %s1898 = sld [smem:[#allocation2 + $0x17e]]
        %v1899 = vstv %s1898
        %v1900 = vmul.f32 %v1899, %v1740
        %v1901 = vmul.f32 %v1899, %v1741
        %v1904 = vrot.slane %v1900, 3
        %v1905 = vrot.slane %v1901, 3
        %v1908 = vadd.f32 %v1896, %v1904
        %v1909 = vadd.f32 %v1897, %v1905
        %1910 = vrot.lane.b32.xlu0 %v356, 15
        %v1911 = vpop.permute.xlu0 %1910
        %1912 = vrot.lane.b32.xlu0 %v444, 15
        %v1913 = vpop.permute.xlu0 %1912
        %vm1914 = vcmp.lt.s32.totalorder %v358, 15
        %v1915 = vsel %vm1914, %v1911, %v1913
        %v1916 = vsel %vm1914, %v1913, %v1911
        %vm1917 = vmand %vm381, %vm423
        %vm1918 = vmand %vm382, %vm424
        %v1919 = vsel %vm1917, 1, 0
        %v1920 = vsel %vm1918, 1, 0
        %vm1921 = vcmp.eq.s32.totalorder %v1919, 1
        %vm1922 = vcmp.eq.s32.totalorder %v1920, 1
        %v1923 = vsel %vm1921, %v1916, 0.0
        %v1924 = vsel %vm1922, %v1915, 0.0
        %s1925 = sld [smem:[#allocation2 + $0x8]]
        %v1926 = vstv %s1925
        %v1927 = vmul.f32 %v1926, %v1923
        %v1928 = vmul.f32 %v1926, %v1924
        %v1929 = vadd.f32 %v1782, %v1927
        %v1930 = vadd.f32 %v1783, %v1928
        %s1931 = sld [smem:[#allocation2 + $0x21]]
        %v1932 = vstv %s1931
        %v1933 = vmul.f32 %v1932, %v1923
        %v1934 = vmul.f32 %v1932, %v1924
        %v1937 = vrot.slane %v1933, 1
        %v1938 = vrot.slane %v1934, 1
        %v1941 = vadd.f32 %v1929, %v1937
        %v1942 = vadd.f32 %v1930, %v1938
        %s1943 = sld [smem:[#allocation2 + $0x3a]]
        %v1944 = vstv %s1943
        %v1945 = vmul.f32 %v1944, %v1923
        %v1946 = vmul.f32 %v1944, %v1924
        %v1949 = vrot.slane %v1945, 2
        %v1950 = vrot.slane %v1946, 2
        %v1953 = vadd.f32 %v1941, %v1949
        %v1954 = vadd.f32 %v1942, %v1950
        %s1955 = sld [smem:[#allocation2 + $0x53]]
        %v1956 = vstv %s1955
        %v1957 = vmul.f32 %v1956, %v1923
        %v1958 = vmul.f32 %v1956, %v1924
        %v1961 = vrot.slane %v1957, 3
        %v1962 = vrot.slane %v1958, 3
        %v1965 = vadd.f32 %v1953, %v1961
        %v1966 = vadd.f32 %v1954, %v1962
        %s1967 = sld [smem:[#allocation2 + $0x6c]]
        %v1968 = vstv %s1967
        %v1969 = vmul.f32 %v1968, %v1923
        %v1970 = vmul.f32 %v1968, %v1924
        %v1971 = vadd.f32 %v1824, %v1969
        %v1972 = vadd.f32 %v1825, %v1970
        %s1973 = sld [smem:[#allocation2 + $0x85]]
        %v1974 = vstv %s1973
        %v1975 = vmul.f32 %v1974, %v1923
        %v1976 = vmul.f32 %v1974, %v1924
        %v1979 = vrot.slane %v1975, 1
        %v1980 = vrot.slane %v1976, 1
        %v1983 = vadd.f32 %v1971, %v1979
        %v1984 = vadd.f32 %v1972, %v1980
        %s1985 = sld [smem:[#allocation2 + $0x9e]]
        %v1986 = vstv %s1985
        %v1987 = vmul.f32 %v1986, %v1923
        %v1988 = vmul.f32 %v1986, %v1924
        %v1991 = vrot.slane %v1987, 2
        %v1992 = vrot.slane %v1988, 2
        %v1995 = vadd.f32 %v1983, %v1991
        %v1996 = vadd.f32 %v1984, %v1992
        %s1997 = sld [smem:[#allocation2 + $0xb7]]
        %v1998 = vstv %s1997
        %v1999 = vmul.f32 %v1998, %v1923
        %v2000 = vmul.f32 %v1998, %v1924
        %v2003 = vrot.slane %v1999, 3
        %v2004 = vrot.slane %v2000, 3
        %v2007 = vadd.f32 %v1995, %v2003
        %v2008 = vadd.f32 %v1996, %v2004
        %s2009 = sld [smem:[#allocation2 + $0xd0]]
        %v2010 = vstv %s2009
        %v2011 = vmul.f32 %v2010, %v1923
        %v2012 = vmul.f32 %v2010, %v1924
        %v2013 = vadd.f32 %v1866, %v2011
        %v2014 = vadd.f32 %v1867, %v2012
        %s2015 = sld [smem:[#allocation2 + $0xe9]]
        %v2016 = vstv %s2015
        %v2017 = vmul.f32 %v2016, %v1923
        %v2018 = vmul.f32 %v2016, %v1924
        %v2021 = vrot.slane %v2017, 1
        %v2022 = vrot.slane %v2018, 1
        %v2025 = vadd.f32 %v2013, %v2021
        %v2026 = vadd.f32 %v2014, %v2022
        %s2027 = sld [smem:[#allocation2 + $0x102]]
        %v2028 = vstv %s2027
        %v2029 = vmul.f32 %v2028, %v1923
        %v2030 = vmul.f32 %v2028, %v1924
        %v2033 = vrot.slane %v2029, 2
        %v2034 = vrot.slane %v2030, 2
        %v2037 = vadd.f32 %v2025, %v2033
        %v2038 = vadd.f32 %v2026, %v2034
        %s2039 = sld [smem:[#allocation2 + $0x11b]]
        %v2040 = vstv %s2039
        %v2041 = vmul.f32 %v2040, %v1923
        %v2042 = vmul.f32 %v2040, %v1924
        %v2045 = vrot.slane %v2041, 3
        %v2046 = vrot.slane %v2042, 3
        %v2049 = vadd.f32 %v2037, %v2045
        %v2050 = vadd.f32 %v2038, %v2046
        %s2051 = sld [smem:[#allocation2 + $0x134]]
        %v2052 = vstv %s2051
        %v2053 = vmul.f32 %v2052, %v1923
        %v2054 = vmul.f32 %v2052, %v1924
        %v2055 = vadd.f32 %v1908, %v2053
        %v2056 = vadd.f32 %v1909, %v2054
        %s2057 = sld [smem:[#allocation2 + $0x14d]]
        %v2058 = vstv %s2057
        %v2059 = vmul.f32 %v2058, %v1923
        %v2060 = vmul.f32 %v2058, %v1924
        %v2063 = vrot.slane %v2059, 1
        %v2064 = vrot.slane %v2060, 1
        %v2067 = vadd.f32 %v2055, %v2063
        %v2068 = vadd.f32 %v2056, %v2064
        %s2069 = sld [smem:[#allocation2 + $0x166]]
        %v2070 = vstv %s2069
        %v2071 = vmul.f32 %v2070, %v1923
        %v2072 = vmul.f32 %v2070, %v1924
        %v2075 = vrot.slane %v2071, 2
        %v2076 = vrot.slane %v2072, 2
        %v2079 = vadd.f32 %v2067, %v2075
        %v2080 = vadd.f32 %v2068, %v2076
        %s2081 = sld [smem:[#allocation2 + $0x17f]]
        %v2082 = vstv %s2081
        %v2083 = vmul.f32 %v2082, %v1923
        %v2084 = vmul.f32 %v2082, %v1924
        %v2087 = vrot.slane %v2083, 3
        %v2088 = vrot.slane %v2084, 3
        %v2091 = vadd.f32 %v2079, %v2087
        %v2092 = vadd.f32 %v2080, %v2088
        %2093 = vrot.lane.b32.xlu0 %v356, 14
        %v2094 = vpop.permute.xlu0 %2093
        %2095 = vrot.lane.b32.xlu0 %v444, 14
        %v2096 = vpop.permute.xlu0 %2095
        %vm2097 = vcmp.lt.s32.totalorder %v358, 14
        %v2098 = vsel %vm2097, %v2094, %v2096
        %v2099 = vsel %vm2097, %v2096, %v2094
        %vm2100 = vmand %vm381, %vm429
        %vm2101 = vmand %vm382, %vm430
        %v2102 = vsel %vm2100, 1, 0
        %v2103 = vsel %vm2101, 1, 0
        %vm2104 = vcmp.eq.s32.totalorder %v2102, 1
        %vm2105 = vcmp.eq.s32.totalorder %v2103, 1
        %v2106 = vsel %vm2104, %v2099, 0.0
        %v2107 = vsel %vm2105, %v2098, 0.0
        %s2108 = sld [smem:[#allocation2 + $0x9]]
        %v2109 = vstv %s2108
        %v2110 = vmul.f32 %v2109, %v2106
        %v2111 = vmul.f32 %v2109, %v2107
        %v2112 = vadd.f32 %v1965, %v2110
        %v2113 = vadd.f32 %v1966, %v2111
        %s2114 = sld [smem:[#allocation2 + $0x22]]
        %v2115 = vstv %s2114
        %v2116 = vmul.f32 %v2115, %v2106
        %v2117 = vmul.f32 %v2115, %v2107
        %v2120 = vrot.slane %v2116, 1
        %v2121 = vrot.slane %v2117, 1
        %v2124 = vadd.f32 %v2112, %v2120
        %v2125 = vadd.f32 %v2113, %v2121
        %s2126 = sld [smem:[#allocation2 + $0x3b]]
        %v2127 = vstv %s2126
        %v2128 = vmul.f32 %v2127, %v2106
        %v2129 = vmul.f32 %v2127, %v2107
        %v2132 = vrot.slane %v2128, 2
        %v2133 = vrot.slane %v2129, 2
        %v2136 = vadd.f32 %v2124, %v2132
        %v2137 = vadd.f32 %v2125, %v2133
        %s2138 = sld [smem:[#allocation2 + $0x54]]
        %v2139 = vstv %s2138
        %v2140 = vmul.f32 %v2139, %v2106
        %v2141 = vmul.f32 %v2139, %v2107
        %v2144 = vrot.slane %v2140, 3
        %v2145 = vrot.slane %v2141, 3
        %v2148 = vadd.f32 %v2136, %v2144
        %v2149 = vadd.f32 %v2137, %v2145
        %s2150 = sld [smem:[#allocation2 + $0x6d]]
        %v2151 = vstv %s2150
        %v2152 = vmul.f32 %v2151, %v2106
        %v2153 = vmul.f32 %v2151, %v2107
        %v2154 = vadd.f32 %v2007, %v2152
        %v2155 = vadd.f32 %v2008, %v2153
        %s2156 = sld [smem:[#allocation2 + $0x86]]
        %v2157 = vstv %s2156
        %v2158 = vmul.f32 %v2157, %v2106
        %v2159 = vmul.f32 %v2157, %v2107
        %v2162 = vrot.slane %v2158, 1
        %v2163 = vrot.slane %v2159, 1
        %v2166 = vadd.f32 %v2154, %v2162
        %v2167 = vadd.f32 %v2155, %v2163
        %s2168 = sld [smem:[#allocation2 + $0x9f]]
        %v2169 = vstv %s2168
        %v2170 = vmul.f32 %v2169, %v2106
        %v2171 = vmul.f32 %v2169, %v2107
        %v2174 = vrot.slane %v2170, 2
        %v2175 = vrot.slane %v2171, 2
        %v2178 = vadd.f32 %v2166, %v2174
        %v2179 = vadd.f32 %v2167, %v2175
        %s2180 = sld [smem:[#allocation2 + $0xb8]]
        %v2181 = vstv %s2180
        %v2182 = vmul.f32 %v2181, %v2106
        %v2183 = vmul.f32 %v2181, %v2107
        %v2186 = vrot.slane %v2182, 3
        %v2187 = vrot.slane %v2183, 3
        %v2190 = vadd.f32 %v2178, %v2186
        %v2191 = vadd.f32 %v2179, %v2187
        %s2192 = sld [smem:[#allocation2 + $0xd1]]
        %v2193 = vstv %s2192
        %v2194 = vmul.f32 %v2193, %v2106
        %v2195 = vmul.f32 %v2193, %v2107
        %v2196 = vadd.f32 %v2049, %v2194
        %v2197 = vadd.f32 %v2050, %v2195
        %s2198 = sld [smem:[#allocation2 + $0xea]]
        %v2199 = vstv %s2198
        %v2200 = vmul.f32 %v2199, %v2106
        %v2201 = vmul.f32 %v2199, %v2107
        %v2204 = vrot.slane %v2200, 1
        %v2205 = vrot.slane %v2201, 1
        %v2208 = vadd.f32 %v2196, %v2204
        %v2209 = vadd.f32 %v2197, %v2205
        %s2210 = sld [smem:[#allocation2 + $0x103]]
        %v2211 = vstv %s2210
        %v2212 = vmul.f32 %v2211, %v2106
        %v2213 = vmul.f32 %v2211, %v2107
        %v2216 = vrot.slane %v2212, 2
        %v2217 = vrot.slane %v2213, 2
        %v2220 = vadd.f32 %v2208, %v2216
        %v2221 = vadd.f32 %v2209, %v2217
        %s2222 = sld [smem:[#allocation2 + $0x11c]]
        %v2223 = vstv %s2222
        %v2224 = vmul.f32 %v2223, %v2106
        %v2225 = vmul.f32 %v2223, %v2107
        %v2228 = vrot.slane %v2224, 3
        %v2229 = vrot.slane %v2225, 3
        %v2232 = vadd.f32 %v2220, %v2228
        %v2233 = vadd.f32 %v2221, %v2229
        %s2234 = sld [smem:[#allocation2 + $0x135]]
        %v2235 = vstv %s2234
        %v2236 = vmul.f32 %v2235, %v2106
        %v2237 = vmul.f32 %v2235, %v2107
        %v2238 = vadd.f32 %v2091, %v2236
        %v2239 = vadd.f32 %v2092, %v2237
        %s2240 = sld [smem:[#allocation2 + $0x14e]]
        %v2241 = vstv %s2240
        %v2242 = vmul.f32 %v2241, %v2106
        %v2243 = vmul.f32 %v2241, %v2107
        %v2246 = vrot.slane %v2242, 1
        %v2247 = vrot.slane %v2243, 1
        %v2250 = vadd.f32 %v2238, %v2246
        %v2251 = vadd.f32 %v2239, %v2247
        %s2252 = sld [smem:[#allocation2 + $0x167]]
        %v2253 = vstv %s2252
        %v2254 = vmul.f32 %v2253, %v2106
        %v2255 = vmul.f32 %v2253, %v2107
        %v2258 = vrot.slane %v2254, 2
        %v2259 = vrot.slane %v2255, 2
        %v2262 = vadd.f32 %v2250, %v2258
        %v2263 = vadd.f32 %v2251, %v2259
        %s2264 = sld [smem:[#allocation2 + $0x180]]
        %v2265 = vstv %s2264
        %v2266 = vmul.f32 %v2265, %v2106
        %v2267 = vmul.f32 %v2265, %v2107
        %v2270 = vrot.slane %v2266, 3
        %v2271 = vrot.slane %v2267, 3
        %v2274 = vadd.f32 %v2262, %v2270
        %v2275 = vadd.f32 %v2263, %v2271
        %2276 = vrot.lane.b32.xlu0 %v356, 2
        %v2277 = vpop.permute.xlu0 %2276
        %2278 = vrot.lane.b32.xlu0 %v444, 2
        %v2279 = vpop.permute.xlu0 %2278
        %vm2280 = vcmp.lt.s32.totalorder %v358, 2
        %v2281 = vsel %vm2280, %v2277, %v2279
        %v2282 = vsel %vm2280, %v2279, %v2277
        %vm2283 = vmand %vm387, %vm405
        %vm2284 = vmand %vm388, %vm406
        %v2285 = vsel %vm2283, 1, 0
        %v2286 = vsel %vm2284, 1, 0
        %vm2287 = vcmp.eq.s32.totalorder %v2285, 1
        %vm2288 = vcmp.eq.s32.totalorder %v2286, 1
        %v2289 = vsel %vm2287, %v2282, 0.0
        %v2290 = vsel %vm2288, %v2281, 0.0
        %s2291 = sld [smem:[#allocation2 + $0xa]]
        %v2292 = vstv %s2291
        %v2293 = vmul.f32 %v2292, %v2289
        %v2294 = vmul.f32 %v2292, %v2290
        %v2295 = vadd.f32 %v2148, %v2293
        %v2296 = vadd.f32 %v2149, %v2294
        %s2297 = sld [smem:[#allocation2 + $0x23]]
        %v2298 = vstv %s2297
        %v2299 = vmul.f32 %v2298, %v2289
        %v2300 = vmul.f32 %v2298, %v2290
        %v2303 = vrot.slane %v2299, 1
        %v2304 = vrot.slane %v2300, 1
        %v2307 = vadd.f32 %v2295, %v2303
        %v2308 = vadd.f32 %v2296, %v2304
        %s2309 = sld [smem:[#allocation2 + $0x3c]]
        %v2310 = vstv %s2309
        %v2311 = vmul.f32 %v2310, %v2289
        %v2312 = vmul.f32 %v2310, %v2290
        %v2315 = vrot.slane %v2311, 2
        %v2316 = vrot.slane %v2312, 2
        %v2319 = vadd.f32 %v2307, %v2315
        %v2320 = vadd.f32 %v2308, %v2316
        %s2321 = sld [smem:[#allocation2 + $0x55]]
        %v2322 = vstv %s2321
        %v2323 = vmul.f32 %v2322, %v2289
        %v2324 = vmul.f32 %v2322, %v2290
        %v2327 = vrot.slane %v2323, 3
        %v2328 = vrot.slane %v2324, 3
        %v2331 = vadd.f32 %v2319, %v2327
        %v2332 = vadd.f32 %v2320, %v2328
        %s2333 = sld [smem:[#allocation2 + $0x6e]]
        %v2334 = vstv %s2333
        %v2335 = vmul.f32 %v2334, %v2289
        %v2336 = vmul.f32 %v2334, %v2290
        %v2337 = vadd.f32 %v2190, %v2335
        %v2338 = vadd.f32 %v2191, %v2336
        %s2339 = sld [smem:[#allocation2 + $0x87]]
        %v2340 = vstv %s2339
        %v2341 = vmul.f32 %v2340, %v2289
        %v2342 = vmul.f32 %v2340, %v2290
        %v2345 = vrot.slane %v2341, 1
        %v2346 = vrot.slane %v2342, 1
        %v2349 = vadd.f32 %v2337, %v2345
        %v2350 = vadd.f32 %v2338, %v2346
        %s2351 = sld [smem:[#allocation2 + $0xa0]]
        %v2352 = vstv %s2351
        %v2353 = vmul.f32 %v2352, %v2289
        %v2354 = vmul.f32 %v2352, %v2290
        %v2357 = vrot.slane %v2353, 2
        %v2358 = vrot.slane %v2354, 2
        %v2361 = vadd.f32 %v2349, %v2357
        %v2362 = vadd.f32 %v2350, %v2358
        %s2363 = sld [smem:[#allocation2 + $0xb9]]
        %v2364 = vstv %s2363
        %v2365 = vmul.f32 %v2364, %v2289
        %v2366 = vmul.f32 %v2364, %v2290
        %v2369 = vrot.slane %v2365, 3
        %v2370 = vrot.slane %v2366, 3
        %v2373 = vadd.f32 %v2361, %v2369
        %v2374 = vadd.f32 %v2362, %v2370
        %s2375 = sld [smem:[#allocation2 + $0xd2]]
        %v2376 = vstv %s2375
        %v2377 = vmul.f32 %v2376, %v2289
        %v2378 = vmul.f32 %v2376, %v2290
        %v2379 = vadd.f32 %v2232, %v2377
        %v2380 = vadd.f32 %v2233, %v2378
        %s2381 = sld [smem:[#allocation2 + $0xeb]]
        %v2382 = vstv %s2381
        %v2383 = vmul.f32 %v2382, %v2289
        %v2384 = vmul.f32 %v2382, %v2290
        %v2387 = vrot.slane %v2383, 1
        %v2388 = vrot.slane %v2384, 1
        %v2391 = vadd.f32 %v2379, %v2387
        %v2392 = vadd.f32 %v2380, %v2388
        %s2393 = sld [smem:[#allocation2 + $0x104]]
        %v2394 = vstv %s2393
        %v2395 = vmul.f32 %v2394, %v2289
        %v2396 = vmul.f32 %v2394, %v2290
        %v2399 = vrot.slane %v2395, 2
        %v2400 = vrot.slane %v2396, 2
        %v2403 = vadd.f32 %v2391, %v2399
        %v2404 = vadd.f32 %v2392, %v2400
        %s2405 = sld [smem:[#allocation2 + $0x11d]]
        %v2406 = vstv %s2405
        %v2407 = vmul.f32 %v2406, %v2289
        %v2408 = vmul.f32 %v2406, %v2290
        %v2411 = vrot.slane %v2407, 3
        %v2412 = vrot.slane %v2408, 3
        %v2415 = vadd.f32 %v2403, %v2411
        %v2416 = vadd.f32 %v2404, %v2412
        %s2417 = sld [smem:[#allocation2 + $0x136]]
        %v2418 = vstv %s2417
        %v2419 = vmul.f32 %v2418, %v2289
        %v2420 = vmul.f32 %v2418, %v2290
        %v2421 = vadd.f32 %v2274, %v2419
        %v2422 = vadd.f32 %v2275, %v2420
        %s2423 = sld [smem:[#allocation2 + $0x14f]]
        %v2424 = vstv %s2423
        %v2425 = vmul.f32 %v2424, %v2289
        %v2426 = vmul.f32 %v2424, %v2290
        %v2429 = vrot.slane %v2425, 1
        %v2430 = vrot.slane %v2426, 1
        %v2433 = vadd.f32 %v2421, %v2429
        %v2434 = vadd.f32 %v2422, %v2430
        %s2435 = sld [smem:[#allocation2 + $0x168]]
        %v2436 = vstv %s2435
        %v2437 = vmul.f32 %v2436, %v2289
        %v2438 = vmul.f32 %v2436, %v2290
        %v2441 = vrot.slane %v2437, 2
        %v2442 = vrot.slane %v2438, 2
        %v2445 = vadd.f32 %v2433, %v2441
        %v2446 = vadd.f32 %v2434, %v2442
        %s2447 = sld [smem:[#allocation2 + $0x181]]
        %v2448 = vstv %s2447
        %v2449 = vmul.f32 %v2448, %v2289
        %v2450 = vmul.f32 %v2448, %v2290
        %v2453 = vrot.slane %v2449, 3
        %v2454 = vrot.slane %v2450, 3
        %v2457 = vadd.f32 %v2445, %v2453
        %v2458 = vadd.f32 %v2446, %v2454
        %2459 = vrot.lane.b32.xlu0 %v356, 1
        %v2460 = vpop.permute.xlu0 %2459
        %2461 = vrot.lane.b32.xlu0 %v444, 1
        %v2462 = vpop.permute.xlu0 %2461
        %vm2463 = vcmp.lt.s32.totalorder %v358, 1
        %v2464 = vsel %vm2463, %v2460, %v2462
        %v2465 = vsel %vm2463, %v2462, %v2460
        %vm2466 = vmand %vm387, %vm411
        %vm2467 = vmand %vm388, %vm412
        %v2468 = vsel %vm2466, 1, 0
        %v2469 = vsel %vm2467, 1, 0
        %vm2470 = vcmp.eq.s32.totalorder %v2468, 1
        %vm2471 = vcmp.eq.s32.totalorder %v2469, 1
        %v2472 = vsel %vm2470, %v2465, 0.0
        %v2473 = vsel %vm2471, %v2464, 0.0
        %s2474 = sld [smem:[#allocation2 + $0xb]]
        %v2475 = vstv %s2474
        %v2476 = vmul.f32 %v2475, %v2472
        %v2477 = vmul.f32 %v2475, %v2473
        %v2478 = vadd.f32 %v2331, %v2476
        %v2479 = vadd.f32 %v2332, %v2477
        %s2480 = sld [smem:[#allocation2 + $0x24]]
        %v2481 = vstv %s2480
        %v2482 = vmul.f32 %v2481, %v2472
        %v2483 = vmul.f32 %v2481, %v2473
        %v2486 = vrot.slane %v2482, 1
        %v2487 = vrot.slane %v2483, 1
        %v2490 = vadd.f32 %v2478, %v2486
        %v2491 = vadd.f32 %v2479, %v2487
        %s2492 = sld [smem:[#allocation2 + $0x3d]]
        %v2493 = vstv %s2492
        %v2494 = vmul.f32 %v2493, %v2472
        %v2495 = vmul.f32 %v2493, %v2473
        %v2498 = vrot.slane %v2494, 2
        %v2499 = vrot.slane %v2495, 2
        %v2502 = vadd.f32 %v2490, %v2498
        %v2503 = vadd.f32 %v2491, %v2499
        %s2504 = sld [smem:[#allocation2 + $0x56]]
        %v2505 = vstv %s2504
        %v2506 = vmul.f32 %v2505, %v2472
        %v2507 = vmul.f32 %v2505, %v2473
        %v2510 = vrot.slane %v2506, 3
        %v2511 = vrot.slane %v2507, 3
        %v2514 = vadd.f32 %v2502, %v2510
        %v2515 = vadd.f32 %v2503, %v2511
        %s2516 = sld [smem:[#allocation2 + $0x6f]]
        %v2517 = vstv %s2516
        %v2518 = vmul.f32 %v2517, %v2472
        %v2519 = vmul.f32 %v2517, %v2473
        %v2520 = vadd.f32 %v2373, %v2518
        %v2521 = vadd.f32 %v2374, %v2519
        %s2522 = sld [smem:[#allocation2 + $0x88]]
        %v2523 = vstv %s2522
        %v2524 = vmul.f32 %v2523, %v2472
        %v2525 = vmul.f32 %v2523, %v2473
        %v2528 = vrot.slane %v2524, 1
        %v2529 = vrot.slane %v2525, 1
        %v2532 = vadd.f32 %v2520, %v2528
        %v2533 = vadd.f32 %v2521, %v2529
        %s2534 = sld [smem:[#allocation2 + $0xa1]]
        %v2535 = vstv %s2534
        %v2536 = vmul.f32 %v2535, %v2472
        %v2537 = vmul.f32 %v2535, %v2473
        %v2540 = vrot.slane %v2536, 2
        %v2541 = vrot.slane %v2537, 2
        %v2544 = vadd.f32 %v2532, %v2540
        %v2545 = vadd.f32 %v2533, %v2541
        %s2546 = sld [smem:[#allocation2 + $0xba]]
        %v2547 = vstv %s2546
        %v2548 = vmul.f32 %v2547, %v2472
        %v2549 = vmul.f32 %v2547, %v2473
        %v2552 = vrot.slane %v2548, 3
        %v2553 = vrot.slane %v2549, 3
        %v2556 = vadd.f32 %v2544, %v2552
        %v2557 = vadd.f32 %v2545, %v2553
        %s2558 = sld [smem:[#allocation2 + $0xd3]]
        %v2559 = vstv %s2558
        %v2560 = vmul.f32 %v2559, %v2472
        %v2561 = vmul.f32 %v2559, %v2473
        %v2562 = vadd.f32 %v2415, %v2560
        %v2563 = vadd.f32 %v2416, %v2561
        %s2564 = sld [smem:[#allocation2 + $0xec]]
        %v2565 = vstv %s2564
        %v2566 = vmul.f32 %v2565, %v2472
        %v2567 = vmul.f32 %v2565, %v2473
        %v2570 = vrot.slane %v2566, 1
        %v2571 = vrot.slane %v2567, 1
        %v2574 = vadd.f32 %v2562, %v2570
        %v2575 = vadd.f32 %v2563, %v2571
        %s2576 = sld [smem:[#allocation2 + $0x105]]
        %v2577 = vstv %s2576
        %v2578 = vmul.f32 %v2577, %v2472
        %v2579 = vmul.f32 %v2577, %v2473
        %v2582 = vrot.slane %v2578, 2
        %v2583 = vrot.slane %v2579, 2
        %v2586 = vadd.f32 %v2574, %v2582
        %v2587 = vadd.f32 %v2575, %v2583
        %s2588 = sld [smem:[#allocation2 + $0x11e]]
        %v2589 = vstv %s2588
        %v2590 = vmul.f32 %v2589, %v2472
        %v2591 = vmul.f32 %v2589, %v2473
        %v2594 = vrot.slane %v2590, 3
        %v2595 = vrot.slane %v2591, 3
        %v2598 = vadd.f32 %v2586, %v2594
        %v2599 = vadd.f32 %v2587, %v2595
        %s2600 = sld [smem:[#allocation2 + $0x137]]
        %v2601 = vstv %s2600
        %v2602 = vmul.f32 %v2601, %v2472
        %v2603 = vmul.f32 %v2601, %v2473
        %v2604 = vadd.f32 %v2457, %v2602
        %v2605 = vadd.f32 %v2458, %v2603
        %s2606 = sld [smem:[#allocation2 + $0x150]]
        %v2607 = vstv %s2606
        %v2608 = vmul.f32 %v2607, %v2472
        %v2609 = vmul.f32 %v2607, %v2473
        %v2612 = vrot.slane %v2608, 1
        %v2613 = vrot.slane %v2609, 1
        %v2616 = vadd.f32 %v2604, %v2612
        %v2617 = vadd.f32 %v2605, %v2613
        %s2618 = sld [smem:[#allocation2 + $0x169]]
        %v2619 = vstv %s2618
        %v2620 = vmul.f32 %v2619, %v2472
        %v2621 = vmul.f32 %v2619, %v2473
        %v2624 = vrot.slane %v2620, 2
        %v2625 = vrot.slane %v2621, 2
        %v2628 = vadd.f32 %v2616, %v2624
        %v2629 = vadd.f32 %v2617, %v2625
        %s2630 = sld [smem:[#allocation2 + $0x182]]
        %v2631 = vstv %s2630
        %v2632 = vmul.f32 %v2631, %v2472
        %v2633 = vmul.f32 %v2631, %v2473
        %v2636 = vrot.slane %v2632, 3
        %v2637 = vrot.slane %v2633, 3
        %v2640 = vadd.f32 %v2628, %v2636
        %v2641 = vadd.f32 %v2629, %v2637
        %vm2642 = vmand %vm387, %vm417
        %vm2643 = vmand %vm388, %vm418
        %v2644 = vsel %vm2642, 1, 0
        %v2645 = vsel %vm2643, 1, 0
        %vm2646 = vcmp.eq.s32.totalorder %v2644, 1
        %vm2647 = vcmp.eq.s32.totalorder %v2645, 1
        %v2648 = vsel %vm2646, %v356, 0.0
        %v2649 = vsel %vm2647, %v444, 0.0
        %s2650 = sld [smem:[#allocation2 + $0xc]]
        %v2651 = vstv %s2650
        %v2652 = vmul.f32 %v2651, %v2648
        %v2653 = vmul.f32 %v2651, %v2649
        %v2654 = vadd.f32 %v2514, %v2652
        %v2655 = vadd.f32 %v2515, %v2653
        %s2656 = sld [smem:[#allocation2 + $0x25]]
        %v2657 = vstv %s2656
        %v2658 = vmul.f32 %v2657, %v2648
        %v2659 = vmul.f32 %v2657, %v2649
        %v2662 = vrot.slane %v2658, 1
        %v2663 = vrot.slane %v2659, 1
        %v2666 = vadd.f32 %v2654, %v2662
        %v2667 = vadd.f32 %v2655, %v2663
        %s2668 = sld [smem:[#allocation2 + $0x3e]]
        %v2669 = vstv %s2668
        %v2670 = vmul.f32 %v2669, %v2648
        %v2671 = vmul.f32 %v2669, %v2649
        %v2674 = vrot.slane %v2670, 2
        %v2675 = vrot.slane %v2671, 2
        %v2678 = vadd.f32 %v2666, %v2674
        %v2679 = vadd.f32 %v2667, %v2675
        %s2680 = sld [smem:[#allocation2 + $0x57]]
        %v2681 = vstv %s2680
        %v2682 = vmul.f32 %v2681, %v2648
        %v2683 = vmul.f32 %v2681, %v2649
        %v2686 = vrot.slane %v2682, 3
        %v2687 = vrot.slane %v2683, 3
        %v2690 = vadd.f32 %v2678, %v2686
        %v2691 = vadd.f32 %v2679, %v2687
        %s2692 = sld [smem:[#allocation2 + $0x70]]
        %v2693 = vstv %s2692
        %v2694 = vmul.f32 %v2693, %v2648
        %v2695 = vmul.f32 %v2693, %v2649
        %v2696 = vadd.f32 %v2556, %v2694
        %v2697 = vadd.f32 %v2557, %v2695
        %s2698 = sld [smem:[#allocation2 + $0x89]]
        %v2699 = vstv %s2698
        %v2700 = vmul.f32 %v2699, %v2648
        %v2701 = vmul.f32 %v2699, %v2649
        %v2704 = vrot.slane %v2700, 1
        %v2705 = vrot.slane %v2701, 1
        %v2708 = vadd.f32 %v2696, %v2704
        %v2709 = vadd.f32 %v2697, %v2705
        %s2710 = sld [smem:[#allocation2 + $0xa2]]
        %v2711 = vstv %s2710
        %v2712 = vmul.f32 %v2711, %v2648
        %v2713 = vmul.f32 %v2711, %v2649
        %v2716 = vrot.slane %v2712, 2
        %v2717 = vrot.slane %v2713, 2
        %v2720 = vadd.f32 %v2708, %v2716
        %v2721 = vadd.f32 %v2709, %v2717
        %s2722 = sld [smem:[#allocation2 + $0xbb]]
        %v2723 = vstv %s2722
        %v2724 = vmul.f32 %v2723, %v2648
        %v2725 = vmul.f32 %v2723, %v2649
        %v2728 = vrot.slane %v2724, 3
        %v2729 = vrot.slane %v2725, 3
        %v2732 = vadd.f32 %v2720, %v2728
        %v2733 = vadd.f32 %v2721, %v2729
        %s2734 = sld [smem:[#allocation2 + $0xd4]]
        %v2735 = vstv %s2734
        %v2736 = vmul.f32 %v2735, %v2648
        %v2737 = vmul.f32 %v2735, %v2649
        %v2738 = vadd.f32 %v2598, %v2736
        %v2739 = vadd.f32 %v2599, %v2737
        %s2740 = sld [smem:[#allocation2 + $0xed]]
        %v2741 = vstv %s2740
        %v2742 = vmul.f32 %v2741, %v2648
        %v2743 = vmul.f32 %v2741, %v2649
        %v2746 = vrot.slane %v2742, 1
        %v2747 = vrot.slane %v2743, 1
        %v2750 = vadd.f32 %v2738, %v2746
        %v2751 = vadd.f32 %v2739, %v2747
        %s2752 = sld [smem:[#allocation2 + $0x106]]
        %v2753 = vstv %s2752
        %v2754 = vmul.f32 %v2753, %v2648
        %v2755 = vmul.f32 %v2753, %v2649
        %v2758 = vrot.slane %v2754, 2
        %v2759 = vrot.slane %v2755, 2
        %v2762 = vadd.f32 %v2750, %v2758
        %v2763 = vadd.f32 %v2751, %v2759
        %s2764 = sld [smem:[#allocation2 + $0x11f]]
        %v2765 = vstv %s2764
        %v2766 = vmul.f32 %v2765, %v2648
        %v2767 = vmul.f32 %v2765, %v2649
        %v2770 = vrot.slane %v2766, 3
        %v2771 = vrot.slane %v2767, 3
        %v2774 = vadd.f32 %v2762, %v2770
        %v2775 = vadd.f32 %v2763, %v2771
        %s2776 = sld [smem:[#allocation2 + $0x138]]
        %v2777 = vstv %s2776
        %v2778 = vmul.f32 %v2777, %v2648
        %v2779 = vmul.f32 %v2777, %v2649
        %v2780 = vadd.f32 %v2640, %v2778
        %v2781 = vadd.f32 %v2641, %v2779
        %s2782 = sld [smem:[#allocation2 + $0x151]]
        %v2783 = vstv %s2782
        %v2784 = vmul.f32 %v2783, %v2648
        %v2785 = vmul.f32 %v2783, %v2649
        %v2788 = vrot.slane %v2784, 1
        %v2789 = vrot.slane %v2785, 1
        %v2792 = vadd.f32 %v2780, %v2788
        %v2793 = vadd.f32 %v2781, %v2789
        %s2794 = sld [smem:[#allocation2 + $0x16a]]
        %v2795 = vstv %s2794
        %v2796 = vmul.f32 %v2795, %v2648
        %v2797 = vmul.f32 %v2795, %v2649
        %v2800 = vrot.slane %v2796, 2
        %v2801 = vrot.slane %v2797, 2
        %v2804 = vadd.f32 %v2792, %v2800
        %v2805 = vadd.f32 %v2793, %v2801
        %s2806 = sld [smem:[#allocation2 + $0x183]]
        %v2807 = vstv %s2806
        %v2808 = vmul.f32 %v2807, %v2648
        %v2809 = vmul.f32 %v2807, %v2649
        %v2812 = vrot.slane %v2808, 3
        %v2813 = vrot.slane %v2809, 3
        %v2816 = vadd.f32 %v2804, %v2812
        %v2817 = vadd.f32 %v2805, %v2813
        %2818 = vrot.lane.b32.xlu0 %v356, 127
        %v2819 = vpop.permute.xlu0 %2818
        %2820 = vrot.lane.b32.xlu0 %v444, 127
        %v2821 = vpop.permute.xlu0 %2820
        %vm2822 = vcmp.lt.s32.totalorder %v358, 127
        %v2823 = vsel %vm2822, %v2819, %v2821
        %v2824 = vsel %vm2822, %v2821, %v2819
        %vm2825 = vmand %vm387, %vm423
        %vm2826 = vmand %vm388, %vm424
        %v2827 = vsel %vm2825, 1, 0
        %v2828 = vsel %vm2826, 1, 0
        %vm2829 = vcmp.eq.s32.totalorder %v2827, 1
        %vm2830 = vcmp.eq.s32.totalorder %v2828, 1
        %v2831 = vsel %vm2829, %v2823, 0.0
        %v2832 = vsel %vm2830, %v2824, 0.0
        %s2833 = sld [smem:[#allocation2 + $0xd]]
        %v2834 = vstv %s2833
        %v2835 = vmul.f32 %v2834, %v2831
        %v2836 = vmul.f32 %v2834, %v2832
        %v2837 = vadd.f32 %v2690, %v2835
        %v2838 = vadd.f32 %v2691, %v2836
        %s2839 = sld [smem:[#allocation2 + $0x26]]
        %v2840 = vstv %s2839
        %v2841 = vmul.f32 %v2840, %v2831
        %v2842 = vmul.f32 %v2840, %v2832
        %v2845 = vrot.slane %v2841, 1
        %v2846 = vrot.slane %v2842, 1
        %v2849 = vadd.f32 %v2837, %v2845
        %v2850 = vadd.f32 %v2838, %v2846
        %s2851 = sld [smem:[#allocation2 + $0x3f]]
        %v2852 = vstv %s2851
        %v2853 = vmul.f32 %v2852, %v2831
        %v2854 = vmul.f32 %v2852, %v2832
        %v2857 = vrot.slane %v2853, 2
        %v2858 = vrot.slane %v2854, 2
        %v2861 = vadd.f32 %v2849, %v2857
        %v2862 = vadd.f32 %v2850, %v2858
        %s2863 = sld [smem:[#allocation2 + $0x58]]
        %v2864 = vstv %s2863
        %v2865 = vmul.f32 %v2864, %v2831
        %v2866 = vmul.f32 %v2864, %v2832
        %v2869 = vrot.slane %v2865, 3
        %v2870 = vrot.slane %v2866, 3
        %v2873 = vadd.f32 %v2861, %v2869
        %v2874 = vadd.f32 %v2862, %v2870
        %s2875 = sld [smem:[#allocation2 + $0x71]]
        %v2876 = vstv %s2875
        %v2877 = vmul.f32 %v2876, %v2831
        %v2878 = vmul.f32 %v2876, %v2832
        %v2879 = vadd.f32 %v2732, %v2877
        %v2880 = vadd.f32 %v2733, %v2878
        %s2881 = sld [smem:[#allocation2 + $0x8a]]
        %v2882 = vstv %s2881
        %v2883 = vmul.f32 %v2882, %v2831
        %v2884 = vmul.f32 %v2882, %v2832
        %v2887 = vrot.slane %v2883, 1
        %v2888 = vrot.slane %v2884, 1
        %v2891 = vadd.f32 %v2879, %v2887
        %v2892 = vadd.f32 %v2880, %v2888
        %s2893 = sld [smem:[#allocation2 + $0xa3]]
        %v2894 = vstv %s2893
        %v2895 = vmul.f32 %v2894, %v2831
        %v2896 = vmul.f32 %v2894, %v2832
        %v2899 = vrot.slane %v2895, 2
        %v2900 = vrot.slane %v2896, 2
        %v2903 = vadd.f32 %v2891, %v2899
        %v2904 = vadd.f32 %v2892, %v2900
        %s2905 = sld [smem:[#allocation2 + $0xbc]]
        %v2906 = vstv %s2905
        %v2907 = vmul.f32 %v2906, %v2831
        %v2908 = vmul.f32 %v2906, %v2832
        %v2911 = vrot.slane %v2907, 3
        %v2912 = vrot.slane %v2908, 3
        %v2915 = vadd.f32 %v2903, %v2911
        %v2916 = vadd.f32 %v2904, %v2912
        %s2917 = sld [smem:[#allocation2 + $0xd5]]
        %v2918 = vstv %s2917
        %v2919 = vmul.f32 %v2918, %v2831
        %v2920 = vmul.f32 %v2918, %v2832
        %v2921 = vadd.f32 %v2774, %v2919
        %v2922 = vadd.f32 %v2775, %v2920
        %s2923 = sld [smem:[#allocation2 + $0xee]]
        %v2924 = vstv %s2923
        %v2925 = vmul.f32 %v2924, %v2831
        %v2926 = vmul.f32 %v2924, %v2832
        %v2929 = vrot.slane %v2925, 1
        %v2930 = vrot.slane %v2926, 1
        %v2933 = vadd.f32 %v2921, %v2929
        %v2934 = vadd.f32 %v2922, %v2930
        %s2935 = sld [smem:[#allocation2 + $0x107]]
        %v2936 = vstv %s2935
        %v2937 = vmul.f32 %v2936, %v2831
        %v2938 = vmul.f32 %v2936, %v2832
        %v2941 = vrot.slane %v2937, 2
        %v2942 = vrot.slane %v2938, 2
        %v2945 = vadd.f32 %v2933, %v2941
        %v2946 = vadd.f32 %v2934, %v2942
        %s2947 = sld [smem:[#allocation2 + $0x120]]
        %v2948 = vstv %s2947
        %v2949 = vmul.f32 %v2948, %v2831
        %v2950 = vmul.f32 %v2948, %v2832
        %v2953 = vrot.slane %v2949, 3
        %v2954 = vrot.slane %v2950, 3
        %v2957 = vadd.f32 %v2945, %v2953
        %v2958 = vadd.f32 %v2946, %v2954
        %s2959 = sld [smem:[#allocation2 + $0x139]]
        %v2960 = vstv %s2959
        %v2961 = vmul.f32 %v2960, %v2831
        %v2962 = vmul.f32 %v2960, %v2832
        %v2963 = vadd.f32 %v2816, %v2961
        %v2964 = vadd.f32 %v2817, %v2962
        %s2965 = sld [smem:[#allocation2 + $0x152]]
        %v2966 = vstv %s2965
        %v2967 = vmul.f32 %v2966, %v2831
        %v2968 = vmul.f32 %v2966, %v2832
        %v2971 = vrot.slane %v2967, 1
        %v2972 = vrot.slane %v2968, 1
        %v2975 = vadd.f32 %v2963, %v2971
        %v2976 = vadd.f32 %v2964, %v2972
        %s2977 = sld [smem:[#allocation2 + $0x16b]]
        %v2978 = vstv %s2977
        %v2979 = vmul.f32 %v2978, %v2831
        %v2980 = vmul.f32 %v2978, %v2832
        %v2983 = vrot.slane %v2979, 2
        %v2984 = vrot.slane %v2980, 2
        %v2987 = vadd.f32 %v2975, %v2983
        %v2988 = vadd.f32 %v2976, %v2984
        %s2989 = sld [smem:[#allocation2 + $0x184]]
        %v2990 = vstv %s2989
        %v2991 = vmul.f32 %v2990, %v2831
        %v2992 = vmul.f32 %v2990, %v2832
        %v2995 = vrot.slane %v2991, 3
        %v2996 = vrot.slane %v2992, 3
        %v2999 = vadd.f32 %v2987, %v2995
        %v3000 = vadd.f32 %v2988, %v2996
        %3001 = vrot.lane.b32.xlu0 %v356, 126
        %v3002 = vpop.permute.xlu0 %3001
        %3003 = vrot.lane.b32.xlu0 %v444, 126
        %v3004 = vpop.permute.xlu0 %3003
        %vm3005 = vcmp.lt.s32.totalorder %v358, 126
        %v3006 = vsel %vm3005, %v3002, %v3004
        %v3007 = vsel %vm3005, %v3004, %v3002
        %vm3008 = vmand %vm387, %vm429
        %vm3009 = vmand %vm388, %vm430
        %v3010 = vsel %vm3008, 1, 0
        %v3011 = vsel %vm3009, 1, 0
        %vm3012 = vcmp.eq.s32.totalorder %v3010, 1
        %vm3013 = vcmp.eq.s32.totalorder %v3011, 1
        %v3014 = vsel %vm3012, %v3006, 0.0
        %v3015 = vsel %vm3013, %v3007, 0.0
        %s3016 = sld [smem:[#allocation2 + $0xe]]
        %v3017 = vstv %s3016
        %v3018 = vmul.f32 %v3017, %v3014
        %v3019 = vmul.f32 %v3017, %v3015
        %v3020 = vadd.f32 %v2873, %v3018
        %v3021 = vadd.f32 %v2874, %v3019
        %s3022 = sld [smem:[#allocation2 + $0x27]]
        %v3023 = vstv %s3022
        %v3024 = vmul.f32 %v3023, %v3014
        %v3025 = vmul.f32 %v3023, %v3015
        %v3028 = vrot.slane %v3024, 1
        %v3029 = vrot.slane %v3025, 1
        %v3032 = vadd.f32 %v3020, %v3028
        %v3033 = vadd.f32 %v3021, %v3029
        %s3034 = sld [smem:[#allocation2 + $0x40]]
        %v3035 = vstv %s3034
        %v3036 = vmul.f32 %v3035, %v3014
        %v3037 = vmul.f32 %v3035, %v3015
        %v3040 = vrot.slane %v3036, 2
        %v3041 = vrot.slane %v3037, 2
        %v3044 = vadd.f32 %v3032, %v3040
        %v3045 = vadd.f32 %v3033, %v3041
        %s3046 = sld [smem:[#allocation2 + $0x59]]
        %v3047 = vstv %s3046
        %v3048 = vmul.f32 %v3047, %v3014
        %v3049 = vmul.f32 %v3047, %v3015
        %v3052 = vrot.slane %v3048, 3
        %v3053 = vrot.slane %v3049, 3
        %v3056 = vadd.f32 %v3044, %v3052
        %v3057 = vadd.f32 %v3045, %v3053
        %s3058 = sld [smem:[#allocation2 + $0x72]]
        %v3059 = vstv %s3058
        %v3060 = vmul.f32 %v3059, %v3014
        %v3061 = vmul.f32 %v3059, %v3015
        %v3062 = vadd.f32 %v2915, %v3060
        %v3063 = vadd.f32 %v2916, %v3061
        %s3064 = sld [smem:[#allocation2 + $0x8b]]
        %v3065 = vstv %s3064
        %v3066 = vmul.f32 %v3065, %v3014
        %v3067 = vmul.f32 %v3065, %v3015
        %v3070 = vrot.slane %v3066, 1
        %v3071 = vrot.slane %v3067, 1
        %v3074 = vadd.f32 %v3062, %v3070
        %v3075 = vadd.f32 %v3063, %v3071
        %s3076 = sld [smem:[#allocation2 + $0xa4]]
        %v3077 = vstv %s3076
        %v3078 = vmul.f32 %v3077, %v3014
        %v3079 = vmul.f32 %v3077, %v3015
        %v3082 = vrot.slane %v3078, 2
        %v3083 = vrot.slane %v3079, 2
        %v3086 = vadd.f32 %v3074, %v3082
        %v3087 = vadd.f32 %v3075, %v3083
        %s3088 = sld [smem:[#allocation2 + $0xbd]]
        %v3089 = vstv %s3088
        %v3090 = vmul.f32 %v3089, %v3014
        %v3091 = vmul.f32 %v3089, %v3015
        %v3094 = vrot.slane %v3090, 3
        %v3095 = vrot.slane %v3091, 3
        %v3098 = vadd.f32 %v3086, %v3094
        %v3099 = vadd.f32 %v3087, %v3095
        %s3100 = sld [smem:[#allocation2 + $0xd6]]
        %v3101 = vstv %s3100
        %v3102 = vmul.f32 %v3101, %v3014
        %v3103 = vmul.f32 %v3101, %v3015
        %v3104 = vadd.f32 %v2957, %v3102
        %v3105 = vadd.f32 %v2958, %v3103
        %s3106 = sld [smem:[#allocation2 + $0xef]]
        %v3107 = vstv %s3106
        %v3108 = vmul.f32 %v3107, %v3014
        %v3109 = vmul.f32 %v3107, %v3015
        %v3112 = vrot.slane %v3108, 1
        %v3113 = vrot.slane %v3109, 1
        %v3116 = vadd.f32 %v3104, %v3112
        %v3117 = vadd.f32 %v3105, %v3113
        %s3118 = sld [smem:[#allocation2 + $0x108]]
        %v3119 = vstv %s3118
        %v3120 = vmul.f32 %v3119, %v3014
        %v3121 = vmul.f32 %v3119, %v3015
        %v3124 = vrot.slane %v3120, 2
        %v3125 = vrot.slane %v3121, 2
        %v3128 = vadd.f32 %v3116, %v3124
        %v3129 = vadd.f32 %v3117, %v3125
        %s3130 = sld [smem:[#allocation2 + $0x121]]
        %v3131 = vstv %s3130
        %v3132 = vmul.f32 %v3131, %v3014
        %v3133 = vmul.f32 %v3131, %v3015
        %v3136 = vrot.slane %v3132, 3
        %v3137 = vrot.slane %v3133, 3
        %v3140 = vadd.f32 %v3128, %v3136
        %v3141 = vadd.f32 %v3129, %v3137
        %s3142 = sld [smem:[#allocation2 + $0x13a]]
        %v3143 = vstv %s3142
        %v3144 = vmul.f32 %v3143, %v3014
        %v3145 = vmul.f32 %v3143, %v3015
        %v3146 = vadd.f32 %v2999, %v3144
        %v3147 = vadd.f32 %v3000, %v3145
        %s3148 = sld [smem:[#allocation2 + $0x153]]
        %v3149 = vstv %s3148
        %v3150 = vmul.f32 %v3149, %v3014
        %v3151 = vmul.f32 %v3149, %v3015
        %v3154 = vrot.slane %v3150, 1
        %v3155 = vrot.slane %v3151, 1
        %v3158 = vadd.f32 %v3146, %v3154
        %v3159 = vadd.f32 %v3147, %v3155
        %s3160 = sld [smem:[#allocation2 + $0x16c]]
        %v3161 = vstv %s3160
        %v3162 = vmul.f32 %v3161, %v3014
        %v3163 = vmul.f32 %v3161, %v3015
        %v3166 = vrot.slane %v3162, 2
        %v3167 = vrot.slane %v3163, 2
        %v3170 = vadd.f32 %v3158, %v3166
        %v3171 = vadd.f32 %v3159, %v3167
        %s3172 = sld [smem:[#allocation2 + $0x185]]
        %v3173 = vstv %s3172
        %v3174 = vmul.f32 %v3173, %v3014
        %v3175 = vmul.f32 %v3173, %v3015
        %v3178 = vrot.slane %v3174, 3
        %v3179 = vrot.slane %v3175, 3
        %v3182 = vadd.f32 %v3170, %v3178
        %v3183 = vadd.f32 %v3171, %v3179
        %3184 = vrot.lane.b32.xlu0 %v356, 114
        %v3185 = vpop.permute.xlu0 %3184
        %3186 = vrot.lane.b32.xlu0 %v444, 114
        %v3187 = vpop.permute.xlu0 %3186
        %vm3188 = vcmp.lt.s32.totalorder %v358, 114
        %v3189 = vsel %vm3188, %v3185, %v3187
        %v3190 = vsel %vm3188, %v3187, %v3185
        %vm3191 = vmand %vm393, %vm405
        %vm3192 = vmand %vm394, %vm406
        %v3193 = vsel %vm3191, 1, 0
        %v3194 = vsel %vm3192, 1, 0
        %vm3195 = vcmp.eq.s32.totalorder %v3193, 1
        %vm3196 = vcmp.eq.s32.totalorder %v3194, 1
        %v3197 = vsel %vm3195, %v3189, 0.0
        %v3198 = vsel %vm3196, %v3190, 0.0
        %s3199 = sld [smem:[#allocation2 + $0xf]]
        %v3200 = vstv %s3199
        %v3201 = vmul.f32 %v3200, %v3197
        %v3202 = vmul.f32 %v3200, %v3198
        %v3203 = vadd.f32 %v3056, %v3201
        %v3204 = vadd.f32 %v3057, %v3202
        %s3205 = sld [smem:[#allocation2 + $0x28]]
        %v3206 = vstv %s3205
        %v3207 = vmul.f32 %v3206, %v3197
        %v3208 = vmul.f32 %v3206, %v3198
        %v3211 = vrot.slane %v3207, 1
        %v3212 = vrot.slane %v3208, 1
        %v3215 = vadd.f32 %v3203, %v3211
        %v3216 = vadd.f32 %v3204, %v3212
        %s3217 = sld [smem:[#allocation2 + $0x41]]
        %v3218 = vstv %s3217
        %v3219 = vmul.f32 %v3218, %v3197
        %v3220 = vmul.f32 %v3218, %v3198
        %v3223 = vrot.slane %v3219, 2
        %v3224 = vrot.slane %v3220, 2
        %v3227 = vadd.f32 %v3215, %v3223
        %v3228 = vadd.f32 %v3216, %v3224
        %s3229 = sld [smem:[#allocation2 + $0x5a]]
        %v3230 = vstv %s3229
        %v3231 = vmul.f32 %v3230, %v3197
        %v3232 = vmul.f32 %v3230, %v3198
        %v3235 = vrot.slane %v3231, 3
        %v3236 = vrot.slane %v3232, 3
        %v3239 = vadd.f32 %v3227, %v3235
        %v3240 = vadd.f32 %v3228, %v3236
        %s3241 = sld [smem:[#allocation2 + $0x73]]
        %v3242 = vstv %s3241
        %v3243 = vmul.f32 %v3242, %v3197
        %v3244 = vmul.f32 %v3242, %v3198
        %v3245 = vadd.f32 %v3098, %v3243
        %v3246 = vadd.f32 %v3099, %v3244
        %s3247 = sld [smem:[#allocation2 + $0x8c]]
        %v3248 = vstv %s3247
        %v3249 = vmul.f32 %v3248, %v3197
        %v3250 = vmul.f32 %v3248, %v3198
        %v3253 = vrot.slane %v3249, 1
        %v3254 = vrot.slane %v3250, 1
        %v3257 = vadd.f32 %v3245, %v3253
        %v3258 = vadd.f32 %v3246, %v3254
        %s3259 = sld [smem:[#allocation2 + $0xa5]]
        %v3260 = vstv %s3259
        %v3261 = vmul.f32 %v3260, %v3197
        %v3262 = vmul.f32 %v3260, %v3198
        %v3265 = vrot.slane %v3261, 2
        %v3266 = vrot.slane %v3262, 2
        %v3269 = vadd.f32 %v3257, %v3265
        %v3270 = vadd.f32 %v3258, %v3266
        %s3271 = sld [smem:[#allocation2 + $0xbe]]
        %v3272 = vstv %s3271
        %v3273 = vmul.f32 %v3272, %v3197
        %v3274 = vmul.f32 %v3272, %v3198
        %v3277 = vrot.slane %v3273, 3
        %v3278 = vrot.slane %v3274, 3
        %v3281 = vadd.f32 %v3269, %v3277
        %v3282 = vadd.f32 %v3270, %v3278
        %s3283 = sld [smem:[#allocation2 + $0xd7]]
        %v3284 = vstv %s3283
        %v3285 = vmul.f32 %v3284, %v3197
        %v3286 = vmul.f32 %v3284, %v3198
        %v3287 = vadd.f32 %v3140, %v3285
        %v3288 = vadd.f32 %v3141, %v3286
        %s3289 = sld [smem:[#allocation2 + $0xf0]]
        %v3290 = vstv %s3289
        %v3291 = vmul.f32 %v3290, %v3197
        %v3292 = vmul.f32 %v3290, %v3198
        %v3295 = vrot.slane %v3291, 1
        %v3296 = vrot.slane %v3292, 1
        %v3299 = vadd.f32 %v3287, %v3295
        %v3300 = vadd.f32 %v3288, %v3296
        %s3301 = sld [smem:[#allocation2 + $0x109]]
        %v3302 = vstv %s3301
        %v3303 = vmul.f32 %v3302, %v3197
        %v3304 = vmul.f32 %v3302, %v3198
        %v3307 = vrot.slane %v3303, 2
        %v3308 = vrot.slane %v3304, 2
        %v3311 = vadd.f32 %v3299, %v3307
        %v3312 = vadd.f32 %v3300, %v3308
        %s3313 = sld [smem:[#allocation2 + $0x122]]
        %v3314 = vstv %s3313
        %v3315 = vmul.f32 %v3314, %v3197
        %v3316 = vmul.f32 %v3314, %v3198
        %v3319 = vrot.slane %v3315, 3
        %v3320 = vrot.slane %v3316, 3
        %v3323 = vadd.f32 %v3311, %v3319
        %v3324 = vadd.f32 %v3312, %v3320
        %s3325 = sld [smem:[#allocation2 + $0x13b]]
        %v3326 = vstv %s3325
        %v3327 = vmul.f32 %v3326, %v3197
        %v3328 = vmul.f32 %v3326, %v3198
        %v3329 = vadd.f32 %v3182, %v3327
        %v3330 = vadd.f32 %v3183, %v3328
        %s3331 = sld [smem:[#allocation2 + $0x154]]
        %v3332 = vstv %s3331
        %v3333 = vmul.f32 %v3332, %v3197
        %v3334 = vmul.f32 %v3332, %v3198
        %v3337 = vrot.slane %v3333, 1
        %v3338 = vrot.slane %v3334, 1
        %v3341 = vadd.f32 %v3329, %v3337
        %v3342 = vadd.f32 %v3330, %v3338
        %s3343 = sld [smem:[#allocation2 + $0x16d]]
        %v3344 = vstv %s3343
        %v3345 = vmul.f32 %v3344, %v3197
        %v3346 = vmul.f32 %v3344, %v3198
        %v3349 = vrot.slane %v3345, 2
        %v3350 = vrot.slane %v3346, 2
        %v3353 = vadd.f32 %v3341, %v3349
        %v3354 = vadd.f32 %v3342, %v3350
        %s3355 = sld [smem:[#allocation2 + $0x186]]
        %v3356 = vstv %s3355
        %v3357 = vmul.f32 %v3356, %v3197
        %v3358 = vmul.f32 %v3356, %v3198
        %v3361 = vrot.slane %v3357, 3
        %v3362 = vrot.slane %v3358, 3
        %v3365 = vadd.f32 %v3353, %v3361
        %v3366 = vadd.f32 %v3354, %v3362
        %3367 = vrot.lane.b32.xlu0 %v356, 113
        %v3368 = vpop.permute.xlu0 %3367
        %3369 = vrot.lane.b32.xlu0 %v444, 113
        %v3370 = vpop.permute.xlu0 %3369
        %vm3371 = vcmp.lt.s32.totalorder %v358, 113
        %v3372 = vsel %vm3371, %v3368, %v3370
        %v3373 = vsel %vm3371, %v3370, %v3368
        %vm3374 = vmand %vm393, %vm411
        %vm3375 = vmand %vm394, %vm412
        %v3376 = vsel %vm3374, 1, 0
        %v3377 = vsel %vm3375, 1, 0
        %vm3378 = vcmp.eq.s32.totalorder %v3376, 1
        %vm3379 = vcmp.eq.s32.totalorder %v3377, 1
        %v3380 = vsel %vm3378, %v3372, 0.0
        %v3381 = vsel %vm3379, %v3373, 0.0
        %s3382 = sld [smem:[#allocation2 + $0x10]]
        %v3383 = vstv %s3382
        %v3384 = vmul.f32 %v3383, %v3380
        %v3385 = vmul.f32 %v3383, %v3381
        %v3386 = vadd.f32 %v3239, %v3384
        %v3387 = vadd.f32 %v3240, %v3385
        %s3388 = sld [smem:[#allocation2 + $0x29]]
        %v3389 = vstv %s3388
        %v3390 = vmul.f32 %v3389, %v3380
        %v3391 = vmul.f32 %v3389, %v3381
        %v3394 = vrot.slane %v3390, 1
        %v3395 = vrot.slane %v3391, 1
        %v3398 = vadd.f32 %v3386, %v3394
        %v3399 = vadd.f32 %v3387, %v3395
        %s3400 = sld [smem:[#allocation2 + $0x42]]
        %v3401 = vstv %s3400
        %v3402 = vmul.f32 %v3401, %v3380
        %v3403 = vmul.f32 %v3401, %v3381
        %v3406 = vrot.slane %v3402, 2
        %v3407 = vrot.slane %v3403, 2
        %v3410 = vadd.f32 %v3398, %v3406
        %v3411 = vadd.f32 %v3399, %v3407
        %s3412 = sld [smem:[#allocation2 + $0x5b]]
        %v3413 = vstv %s3412
        %v3414 = vmul.f32 %v3413, %v3380
        %v3415 = vmul.f32 %v3413, %v3381
        %v3418 = vrot.slane %v3414, 3
        %v3419 = vrot.slane %v3415, 3
        %v3422 = vadd.f32 %v3410, %v3418
        %v3423 = vadd.f32 %v3411, %v3419
        %s3424 = sld [smem:[#allocation2 + $0x74]]
        %v3425 = vstv %s3424
        %v3426 = vmul.f32 %v3425, %v3380
        %v3427 = vmul.f32 %v3425, %v3381
        %v3428 = vadd.f32 %v3281, %v3426
        %v3429 = vadd.f32 %v3282, %v3427
        %s3430 = sld [smem:[#allocation2 + $0x8d]]
        %v3431 = vstv %s3430
        %v3432 = vmul.f32 %v3431, %v3380
        %v3433 = vmul.f32 %v3431, %v3381
        %v3436 = vrot.slane %v3432, 1
        %v3437 = vrot.slane %v3433, 1
        %v3440 = vadd.f32 %v3428, %v3436
        %v3441 = vadd.f32 %v3429, %v3437
        %s3442 = sld [smem:[#allocation2 + $0xa6]]
        %v3443 = vstv %s3442
        %v3444 = vmul.f32 %v3443, %v3380
        %v3445 = vmul.f32 %v3443, %v3381
        %v3448 = vrot.slane %v3444, 2
        %v3449 = vrot.slane %v3445, 2
        %v3452 = vadd.f32 %v3440, %v3448
        %v3453 = vadd.f32 %v3441, %v3449
        %s3454 = sld [smem:[#allocation2 + $0xbf]]
        %v3455 = vstv %s3454
        %v3456 = vmul.f32 %v3455, %v3380
        %v3457 = vmul.f32 %v3455, %v3381
        %v3460 = vrot.slane %v3456, 3
        %v3461 = vrot.slane %v3457, 3
        %v3464 = vadd.f32 %v3452, %v3460
        %v3465 = vadd.f32 %v3453, %v3461
        %s3466 = sld [smem:[#allocation2 + $0xd8]]
        %v3467 = vstv %s3466
        %v3468 = vmul.f32 %v3467, %v3380
        %v3469 = vmul.f32 %v3467, %v3381
        %v3470 = vadd.f32 %v3323, %v3468
        %v3471 = vadd.f32 %v3324, %v3469
        %s3472 = sld [smem:[#allocation2 + $0xf1]]
        %v3473 = vstv %s3472
        %v3474 = vmul.f32 %v3473, %v3380
        %v3475 = vmul.f32 %v3473, %v3381
        %v3478 = vrot.slane %v3474, 1
        %v3479 = vrot.slane %v3475, 1
        %v3482 = vadd.f32 %v3470, %v3478
        %v3483 = vadd.f32 %v3471, %v3479
        %s3484 = sld [smem:[#allocation2 + $0x10a]]
        %v3485 = vstv %s3484
        %v3486 = vmul.f32 %v3485, %v3380
        %v3487 = vmul.f32 %v3485, %v3381
        %v3490 = vrot.slane %v3486, 2
        %v3491 = vrot.slane %v3487, 2
        %v3494 = vadd.f32 %v3482, %v3490
        %v3495 = vadd.f32 %v3483, %v3491
        %s3496 = sld [smem:[#allocation2 + $0x123]]
        %v3497 = vstv %s3496
        %v3498 = vmul.f32 %v3497, %v3380
        %v3499 = vmul.f32 %v3497, %v3381
        %v3502 = vrot.slane %v3498, 3
        %v3503 = vrot.slane %v3499, 3
        %v3506 = vadd.f32 %v3494, %v3502
        %v3507 = vadd.f32 %v3495, %v3503
        %s3508 = sld [smem:[#allocation2 + $0x13c]]
        %v3509 = vstv %s3508
        %v3510 = vmul.f32 %v3509, %v3380
        %v3511 = vmul.f32 %v3509, %v3381
        %v3512 = vadd.f32 %v3365, %v3510
        %v3513 = vadd.f32 %v3366, %v3511
        %s3514 = sld [smem:[#allocation2 + $0x155]]
        %v3515 = vstv %s3514
        %v3516 = vmul.f32 %v3515, %v3380
        %v3517 = vmul.f32 %v3515, %v3381
        %v3520 = vrot.slane %v3516, 1
        %v3521 = vrot.slane %v3517, 1
        %v3524 = vadd.f32 %v3512, %v3520
        %v3525 = vadd.f32 %v3513, %v3521
        %s3526 = sld [smem:[#allocation2 + $0x16e]]
        %v3527 = vstv %s3526
        %v3528 = vmul.f32 %v3527, %v3380
        %v3529 = vmul.f32 %v3527, %v3381
        %v3532 = vrot.slane %v3528, 2
        %v3533 = vrot.slane %v3529, 2
        %v3536 = vadd.f32 %v3524, %v3532
        %v3537 = vadd.f32 %v3525, %v3533
        %s3538 = sld [smem:[#allocation2 + $0x187]]
        %v3539 = vstv %s3538
        %v3540 = vmul.f32 %v3539, %v3380
        %v3541 = vmul.f32 %v3539, %v3381
        %v3544 = vrot.slane %v3540, 3
        %v3545 = vrot.slane %v3541, 3
        %v3548 = vadd.f32 %v3536, %v3544
        %v3549 = vadd.f32 %v3537, %v3545
        %3550 = vrot.lane.b32.xlu0 %v356, 112
        %v3551 = vpop.permute.xlu0 %3550
        %3552 = vrot.lane.b32.xlu0 %v444, 112
        %v3553 = vpop.permute.xlu0 %3552
        %vm3554 = vcmp.lt.s32.totalorder %v358, 112
        %v3555 = vsel %vm3554, %v3551, %v3553
        %v3556 = vsel %vm3554, %v3553, %v3551
        %vm3557 = vmand %vm393, %vm417
        %vm3558 = vmand %vm394, %vm418
        %v3559 = vsel %vm3557, 1, 0
        %v3560 = vsel %vm3558, 1, 0
        %vm3561 = vcmp.eq.s32.totalorder %v3559, 1
        %vm3562 = vcmp.eq.s32.totalorder %v3560, 1
        %v3563 = vsel %vm3561, %v3555, 0.0
        %v3564 = vsel %vm3562, %v3556, 0.0
        %s3565 = sld [smem:[#allocation2 + $0x11]]
        %v3566 = vstv %s3565
        %v3567 = vmul.f32 %v3566, %v3563
        %v3568 = vmul.f32 %v3566, %v3564
        %v3569 = vadd.f32 %v3422, %v3567
        %v3570 = vadd.f32 %v3423, %v3568
        %s3571 = sld [smem:[#allocation2 + $0x2a]]
        %v3572 = vstv %s3571
        %v3573 = vmul.f32 %v3572, %v3563
        %v3574 = vmul.f32 %v3572, %v3564
        %v3577 = vrot.slane %v3573, 1
        %v3578 = vrot.slane %v3574, 1
        %v3581 = vadd.f32 %v3569, %v3577
        %v3582 = vadd.f32 %v3570, %v3578
        %s3583 = sld [smem:[#allocation2 + $0x43]]
        %v3584 = vstv %s3583
        %v3585 = vmul.f32 %v3584, %v3563
        %v3586 = vmul.f32 %v3584, %v3564
        %v3589 = vrot.slane %v3585, 2
        %v3590 = vrot.slane %v3586, 2
        %v3593 = vadd.f32 %v3581, %v3589
        %v3594 = vadd.f32 %v3582, %v3590
        %s3595 = sld [smem:[#allocation2 + $0x5c]]
        %v3596 = vstv %s3595
        %v3597 = vmul.f32 %v3596, %v3563
        %v3598 = vmul.f32 %v3596, %v3564
        %v3601 = vrot.slane %v3597, 3
        %v3602 = vrot.slane %v3598, 3
        %v3605 = vadd.f32 %v3593, %v3601
        %v3606 = vadd.f32 %v3594, %v3602
        %s3607 = sld [smem:[#allocation2 + $0x75]]
        %v3608 = vstv %s3607
        %v3609 = vmul.f32 %v3608, %v3563
        %v3610 = vmul.f32 %v3608, %v3564
        %v3611 = vadd.f32 %v3464, %v3609
        %v3612 = vadd.f32 %v3465, %v3610
        %s3613 = sld [smem:[#allocation2 + $0x8e]]
        %v3614 = vstv %s3613
        %v3615 = vmul.f32 %v3614, %v3563
        %v3616 = vmul.f32 %v3614, %v3564
        %v3619 = vrot.slane %v3615, 1
        %v3620 = vrot.slane %v3616, 1
        %v3623 = vadd.f32 %v3611, %v3619
        %v3624 = vadd.f32 %v3612, %v3620
        %s3625 = sld [smem:[#allocation2 + $0xa7]]
        %v3626 = vstv %s3625
        %v3627 = vmul.f32 %v3626, %v3563
        %v3628 = vmul.f32 %v3626, %v3564
        %v3631 = vrot.slane %v3627, 2
        %v3632 = vrot.slane %v3628, 2
        %v3635 = vadd.f32 %v3623, %v3631
        %v3636 = vadd.f32 %v3624, %v3632
        %s3637 = sld [smem:[#allocation2 + $0xc0]]
        %v3638 = vstv %s3637
        %v3639 = vmul.f32 %v3638, %v3563
        %v3640 = vmul.f32 %v3638, %v3564
        %v3643 = vrot.slane %v3639, 3
        %v3644 = vrot.slane %v3640, 3
        %v3647 = vadd.f32 %v3635, %v3643
        %v3648 = vadd.f32 %v3636, %v3644
        %s3649 = sld [smem:[#allocation2 + $0xd9]]
        %v3650 = vstv %s3649
        %v3651 = vmul.f32 %v3650, %v3563
        %v3652 = vmul.f32 %v3650, %v3564
        %v3653 = vadd.f32 %v3506, %v3651
        %v3654 = vadd.f32 %v3507, %v3652
        %s3655 = sld [smem:[#allocation2 + $0xf2]]
        %v3656 = vstv %s3655
        %v3657 = vmul.f32 %v3656, %v3563
        %v3658 = vmul.f32 %v3656, %v3564
        %v3661 = vrot.slane %v3657, 1
        %v3662 = vrot.slane %v3658, 1
        %v3665 = vadd.f32 %v3653, %v3661
        %v3666 = vadd.f32 %v3654, %v3662
        %s3667 = sld [smem:[#allocation2 + $0x10b]]
        %v3668 = vstv %s3667
        %v3669 = vmul.f32 %v3668, %v3563
        %v3670 = vmul.f32 %v3668, %v3564
        %v3673 = vrot.slane %v3669, 2
        %v3674 = vrot.slane %v3670, 2
        %v3677 = vadd.f32 %v3665, %v3673
        %v3678 = vadd.f32 %v3666, %v3674
        %s3679 = sld [smem:[#allocation2 + $0x124]]
        %v3680 = vstv %s3679
        %v3681 = vmul.f32 %v3680, %v3563
        %v3682 = vmul.f32 %v3680, %v3564
        %v3685 = vrot.slane %v3681, 3
        %v3686 = vrot.slane %v3682, 3
        %v3689 = vadd.f32 %v3677, %v3685
        %v3690 = vadd.f32 %v3678, %v3686
        %s3691 = sld [smem:[#allocation2 + $0x13d]]
        %v3692 = vstv %s3691
        %v3693 = vmul.f32 %v3692, %v3563
        %v3694 = vmul.f32 %v3692, %v3564
        %v3695 = vadd.f32 %v3548, %v3693
        %v3696 = vadd.f32 %v3549, %v3694
        %s3697 = sld [smem:[#allocation2 + $0x156]]
        %v3698 = vstv %s3697
        %v3699 = vmul.f32 %v3698, %v3563
        %v3700 = vmul.f32 %v3698, %v3564
        %v3703 = vrot.slane %v3699, 1
        %v3704 = vrot.slane %v3700, 1
        %v3707 = vadd.f32 %v3695, %v3703
        %v3708 = vadd.f32 %v3696, %v3704
        %s3709 = sld [smem:[#allocation2 + $0x16f]]
        %v3710 = vstv %s3709
        %v3711 = vmul.f32 %v3710, %v3563
        %v3712 = vmul.f32 %v3710, %v3564
        %v3715 = vrot.slane %v3711, 2
        %v3716 = vrot.slane %v3712, 2
        %v3719 = vadd.f32 %v3707, %v3715
        %v3720 = vadd.f32 %v3708, %v3716
        %s3721 = sld [smem:[#allocation2 + $0x188]]
        %v3722 = vstv %s3721
        %v3723 = vmul.f32 %v3722, %v3563
        %v3724 = vmul.f32 %v3722, %v3564
        %v3727 = vrot.slane %v3723, 3
        %v3728 = vrot.slane %v3724, 3
        %v3731 = vadd.f32 %v3719, %v3727
        %v3732 = vadd.f32 %v3720, %v3728
        %3733 = vrot.lane.b32.xlu0 %v356, 111
        %v3734 = vpop.permute.xlu0 %3733
        %3735 = vrot.lane.b32.xlu0 %v444, 111
        %v3736 = vpop.permute.xlu0 %3735
        %vm3737 = vcmp.lt.s32.totalorder %v358, 111
        %v3738 = vsel %vm3737, %v3734, %v3736
        %v3739 = vsel %vm3737, %v3736, %v3734
        %vm3740 = vmand %vm393, %vm423
        %vm3741 = vmand %vm394, %vm424
        %v3742 = vsel %vm3740, 1, 0
        %v3743 = vsel %vm3741, 1, 0
        %vm3744 = vcmp.eq.s32.totalorder %v3742, 1
        %vm3745 = vcmp.eq.s32.totalorder %v3743, 1
        %v3746 = vsel %vm3744, %v3738, 0.0
        %v3747 = vsel %vm3745, %v3739, 0.0
        %s3748 = sld [smem:[#allocation2 + $0x12]]
        %v3749 = vstv %s3748
        %v3750 = vmul.f32 %v3749, %v3746
        %v3751 = vmul.f32 %v3749, %v3747
        %v3752 = vadd.f32 %v3605, %v3750
        %v3753 = vadd.f32 %v3606, %v3751
        %s3754 = sld [smem:[#allocation2 + $0x2b]]
        %v3755 = vstv %s3754
        %v3756 = vmul.f32 %v3755, %v3746
        %v3757 = vmul.f32 %v3755, %v3747
        %v3760 = vrot.slane %v3756, 1
        %v3761 = vrot.slane %v3757, 1
        %v3764 = vadd.f32 %v3752, %v3760
        %v3765 = vadd.f32 %v3753, %v3761
        %s3766 = sld [smem:[#allocation2 + $0x44]]
        %v3767 = vstv %s3766
        %v3768 = vmul.f32 %v3767, %v3746
        %v3769 = vmul.f32 %v3767, %v3747
        %v3772 = vrot.slane %v3768, 2
        %v3773 = vrot.slane %v3769, 2
        %v3776 = vadd.f32 %v3764, %v3772
        %v3777 = vadd.f32 %v3765, %v3773
        %s3778 = sld [smem:[#allocation2 + $0x5d]]
        %v3779 = vstv %s3778
        %v3780 = vmul.f32 %v3779, %v3746
        %v3781 = vmul.f32 %v3779, %v3747
        %v3784 = vrot.slane %v3780, 3
        %v3785 = vrot.slane %v3781, 3
        %v3788 = vadd.f32 %v3776, %v3784
        %v3789 = vadd.f32 %v3777, %v3785
        %s3790 = sld [smem:[#allocation2 + $0x76]]
        %v3791 = vstv %s3790
        %v3792 = vmul.f32 %v3791, %v3746
        %v3793 = vmul.f32 %v3791, %v3747
        %v3794 = vadd.f32 %v3647, %v3792
        %v3795 = vadd.f32 %v3648, %v3793
        %s3796 = sld [smem:[#allocation2 + $0x8f]]
        %v3797 = vstv %s3796
        %v3798 = vmul.f32 %v3797, %v3746
        %v3799 = vmul.f32 %v3797, %v3747
        %v3802 = vrot.slane %v3798, 1
        %v3803 = vrot.slane %v3799, 1
        %v3806 = vadd.f32 %v3794, %v3802
        %v3807 = vadd.f32 %v3795, %v3803
        %s3808 = sld [smem:[#allocation2 + $0xa8]]
        %v3809 = vstv %s3808
        %v3810 = vmul.f32 %v3809, %v3746
        %v3811 = vmul.f32 %v3809, %v3747
        %v3814 = vrot.slane %v3810, 2
        %v3815 = vrot.slane %v3811, 2
        %v3818 = vadd.f32 %v3806, %v3814
        %v3819 = vadd.f32 %v3807, %v3815
        %s3820 = sld [smem:[#allocation2 + $0xc1]]
        %v3821 = vstv %s3820
        %v3822 = vmul.f32 %v3821, %v3746
        %v3823 = vmul.f32 %v3821, %v3747
        %v3826 = vrot.slane %v3822, 3
        %v3827 = vrot.slane %v3823, 3
        %v3830 = vadd.f32 %v3818, %v3826
        %v3831 = vadd.f32 %v3819, %v3827
        %s3832 = sld [smem:[#allocation2 + $0xda]]
        %v3833 = vstv %s3832
        %v3834 = vmul.f32 %v3833, %v3746
        %v3835 = vmul.f32 %v3833, %v3747
        %v3836 = vadd.f32 %v3689, %v3834
        %v3837 = vadd.f32 %v3690, %v3835
        %s3838 = sld [smem:[#allocation2 + $0xf3]]
        %v3839 = vstv %s3838
        %v3840 = vmul.f32 %v3839, %v3746
        %v3841 = vmul.f32 %v3839, %v3747
        %v3844 = vrot.slane %v3840, 1
        %v3845 = vrot.slane %v3841, 1
        %v3848 = vadd.f32 %v3836, %v3844
        %v3849 = vadd.f32 %v3837, %v3845
        %s3850 = sld [smem:[#allocation2 + $0x10c]]
        %v3851 = vstv %s3850
        %v3852 = vmul.f32 %v3851, %v3746
        %v3853 = vmul.f32 %v3851, %v3747
        %v3856 = vrot.slane %v3852, 2
        %v3857 = vrot.slane %v3853, 2
        %v3860 = vadd.f32 %v3848, %v3856
        %v3861 = vadd.f32 %v3849, %v3857
        %s3862 = sld [smem:[#allocation2 + $0x125]]
        %v3863 = vstv %s3862
        %v3864 = vmul.f32 %v3863, %v3746
        %v3865 = vmul.f32 %v3863, %v3747
        %v3868 = vrot.slane %v3864, 3
        %v3869 = vrot.slane %v3865, 3
        %v3872 = vadd.f32 %v3860, %v3868
        %v3873 = vadd.f32 %v3861, %v3869
        %s3874 = sld [smem:[#allocation2 + $0x13e]]
        %v3875 = vstv %s3874
        %v3876 = vmul.f32 %v3875, %v3746
        %v3877 = vmul.f32 %v3875, %v3747
        %v3878 = vadd.f32 %v3731, %v3876
        %v3879 = vadd.f32 %v3732, %v3877
        %s3880 = sld [smem:[#allocation2 + $0x157]]
        %v3881 = vstv %s3880
        %v3882 = vmul.f32 %v3881, %v3746
        %v3883 = vmul.f32 %v3881, %v3747
        %v3886 = vrot.slane %v3882, 1
        %v3887 = vrot.slane %v3883, 1
        %v3890 = vadd.f32 %v3878, %v3886
        %v3891 = vadd.f32 %v3879, %v3887
        %s3892 = sld [smem:[#allocation2 + $0x170]]
        %v3893 = vstv %s3892
        %v3894 = vmul.f32 %v3893, %v3746
        %v3895 = vmul.f32 %v3893, %v3747
        %v3898 = vrot.slane %v3894, 2
        %v3899 = vrot.slane %v3895, 2
        %v3902 = vadd.f32 %v3890, %v3898
        %v3903 = vadd.f32 %v3891, %v3899
        %s3904 = sld [smem:[#allocation2 + $0x189]]
        %v3905 = vstv %s3904
        %v3906 = vmul.f32 %v3905, %v3746
        %v3907 = vmul.f32 %v3905, %v3747
        %v3910 = vrot.slane %v3906, 3
        %v3911 = vrot.slane %v3907, 3
        %v3914 = vadd.f32 %v3902, %v3910
        %v3915 = vadd.f32 %v3903, %v3911
        %3916 = vrot.lane.b32.xlu0 %v356, 110
        %v3917 = vpop.permute.xlu0 %3916
        %3918 = vrot.lane.b32.xlu0 %v444, 110
        %v3919 = vpop.permute.xlu0 %3918
        %vm3920 = vcmp.lt.s32.totalorder %v358, 110
        %v3921 = vsel %vm3920, %v3917, %v3919
        %v3922 = vsel %vm3920, %v3919, %v3917
        %vm3923 = vmand %vm393, %vm429
        %vm3924 = vmand %vm394, %vm430
        %v3925 = vsel %vm3923, 1, 0
        %v3926 = vsel %vm3924, 1, 0
        %vm3927 = vcmp.eq.s32.totalorder %v3925, 1
        %vm3928 = vcmp.eq.s32.totalorder %v3926, 1
        %v3929 = vsel %vm3927, %v3921, 0.0
        %v3930 = vsel %vm3928, %v3922, 0.0
        %s3931 = sld [smem:[#allocation2 + $0x13]]
        %v3932 = vstv %s3931
        %v3933 = vmul.f32 %v3932, %v3929
        %v3934 = vmul.f32 %v3932, %v3930
        %v3935 = vadd.f32 %v3788, %v3933
        %v3936 = vadd.f32 %v3789, %v3934
        %s3937 = sld [smem:[#allocation2 + $0x2c]]
        %v3938 = vstv %s3937
        %v3939 = vmul.f32 %v3938, %v3929
        %v3940 = vmul.f32 %v3938, %v3930
        %v3943 = vrot.slane %v3939, 1
        %v3944 = vrot.slane %v3940, 1
        %v3947 = vadd.f32 %v3935, %v3943
        %v3948 = vadd.f32 %v3936, %v3944
        %s3949 = sld [smem:[#allocation2 + $0x45]]
        %v3950 = vstv %s3949
        %v3951 = vmul.f32 %v3950, %v3929
        %v3952 = vmul.f32 %v3950, %v3930
        %v3955 = vrot.slane %v3951, 2
        %v3956 = vrot.slane %v3952, 2
        %v3959 = vadd.f32 %v3947, %v3955
        %v3960 = vadd.f32 %v3948, %v3956
        %s3961 = sld [smem:[#allocation2 + $0x5e]]
        %v3962 = vstv %s3961
        %v3963 = vmul.f32 %v3962, %v3929
        %v3964 = vmul.f32 %v3962, %v3930
        %v3967 = vrot.slane %v3963, 3
        %v3968 = vrot.slane %v3964, 3
        %v3971 = vadd.f32 %v3959, %v3967
        %v3972 = vadd.f32 %v3960, %v3968
        %s3973 = sld [smem:[#allocation2 + $0x77]]
        %v3974 = vstv %s3973
        %v3975 = vmul.f32 %v3974, %v3929
        %v3976 = vmul.f32 %v3974, %v3930
        %v3977 = vadd.f32 %v3830, %v3975
        %v3978 = vadd.f32 %v3831, %v3976
        %s3979 = sld [smem:[#allocation2 + $0x90]]
        %v3980 = vstv %s3979
        %v3981 = vmul.f32 %v3980, %v3929
        %v3982 = vmul.f32 %v3980, %v3930
        %v3985 = vrot.slane %v3981, 1
        %v3986 = vrot.slane %v3982, 1
        %v3989 = vadd.f32 %v3977, %v3985
        %v3990 = vadd.f32 %v3978, %v3986
        %s3991 = sld [smem:[#allocation2 + $0xa9]]
        %v3992 = vstv %s3991
        %v3993 = vmul.f32 %v3992, %v3929
        %v3994 = vmul.f32 %v3992, %v3930
        %v3997 = vrot.slane %v3993, 2
        %v3998 = vrot.slane %v3994, 2
        %v4001 = vadd.f32 %v3989, %v3997
        %v4002 = vadd.f32 %v3990, %v3998
        %s4003 = sld [smem:[#allocation2 + $0xc2]]
        %v4004 = vstv %s4003
        %v4005 = vmul.f32 %v4004, %v3929
        %v4006 = vmul.f32 %v4004, %v3930
        %v4009 = vrot.slane %v4005, 3
        %v4010 = vrot.slane %v4006, 3
        %v4013 = vadd.f32 %v4001, %v4009
        %v4014 = vadd.f32 %v4002, %v4010
        %s4015 = sld [smem:[#allocation2 + $0xdb]]
        %v4016 = vstv %s4015
        %v4017 = vmul.f32 %v4016, %v3929
        %v4018 = vmul.f32 %v4016, %v3930
        %v4019 = vadd.f32 %v3872, %v4017
        %v4020 = vadd.f32 %v3873, %v4018
        %s4021 = sld [smem:[#allocation2 + $0xf4]]
        %v4022 = vstv %s4021
        %v4023 = vmul.f32 %v4022, %v3929
        %v4024 = vmul.f32 %v4022, %v3930
        %v4027 = vrot.slane %v4023, 1
        %v4028 = vrot.slane %v4024, 1
        %v4031 = vadd.f32 %v4019, %v4027
        %v4032 = vadd.f32 %v4020, %v4028
        %s4033 = sld [smem:[#allocation2 + $0x10d]]
        %v4034 = vstv %s4033
        %v4035 = vmul.f32 %v4034, %v3929
        %v4036 = vmul.f32 %v4034, %v3930
        %v4039 = vrot.slane %v4035, 2
        %v4040 = vrot.slane %v4036, 2
        %v4043 = vadd.f32 %v4031, %v4039
        %v4044 = vadd.f32 %v4032, %v4040
        %s4045 = sld [smem:[#allocation2 + $0x126]]
        %v4046 = vstv %s4045
        %v4047 = vmul.f32 %v4046, %v3929
        %v4048 = vmul.f32 %v4046, %v3930
        %v4051 = vrot.slane %v4047, 3
        %v4052 = vrot.slane %v4048, 3
        %v4055 = vadd.f32 %v4043, %v4051
        %v4056 = vadd.f32 %v4044, %v4052
        %s4057 = sld [smem:[#allocation2 + $0x13f]]
        %v4058 = vstv %s4057
        %v4059 = vmul.f32 %v4058, %v3929
        %v4060 = vmul.f32 %v4058, %v3930
        %v4061 = vadd.f32 %v3914, %v4059
        %v4062 = vadd.f32 %v3915, %v4060
        %s4063 = sld [smem:[#allocation2 + $0x158]]
        %v4064 = vstv %s4063
        %v4065 = vmul.f32 %v4064, %v3929
        %v4066 = vmul.f32 %v4064, %v3930
        %v4069 = vrot.slane %v4065, 1
        %v4070 = vrot.slane %v4066, 1
        %v4073 = vadd.f32 %v4061, %v4069
        %v4074 = vadd.f32 %v4062, %v4070
        %s4075 = sld [smem:[#allocation2 + $0x171]]
        %v4076 = vstv %s4075
        %v4077 = vmul.f32 %v4076, %v3929
        %v4078 = vmul.f32 %v4076, %v3930
        %v4081 = vrot.slane %v4077, 2
        %v4082 = vrot.slane %v4078, 2
        %v4085 = vadd.f32 %v4073, %v4081
        %v4086 = vadd.f32 %v4074, %v4082
        %s4087 = sld [smem:[#allocation2 + $0x18a]]
        %v4088 = vstv %s4087
        %v4089 = vmul.f32 %v4088, %v3929
        %v4090 = vmul.f32 %v4088, %v3930
        %v4093 = vrot.slane %v4089, 3
        %v4094 = vrot.slane %v4090, 3
        %v4097 = vadd.f32 %v4085, %v4093
        %v4098 = vadd.f32 %v4086, %v4094
        %4099 = vrot.lane.b32.xlu0 %v356, 98
        %v4100 = vpop.permute.xlu0 %4099
        %4101 = vrot.lane.b32.xlu0 %v444, 98
        %v4102 = vpop.permute.xlu0 %4101
        %vm4103 = vcmp.lt.s32.totalorder %v358, 98
        %v4104 = vsel %vm4103, %v4100, %v4102
        %v4105 = vsel %vm4103, %v4102, %v4100
        %vm4106 = vmand %vm399, %vm405
        %vm4107 = vmand %vm400, %vm406
        %v4108 = vsel %vm4106, 1, 0
        %v4109 = vsel %vm4107, 1, 0
        %vm4110 = vcmp.eq.s32.totalorder %v4108, 1
        %vm4111 = vcmp.eq.s32.totalorder %v4109, 1
        %v4112 = vsel %vm4110, %v4104, 0.0
        %v4113 = vsel %vm4111, %v4105, 0.0
        %s4114 = sld [smem:[#allocation2 + $0x14]]
        %v4115 = vstv %s4114
        %v4116 = vmul.f32 %v4115, %v4112
        %v4117 = vmul.f32 %v4115, %v4113
        %v4118 = vadd.f32 %v3971, %v4116
        %v4119 = vadd.f32 %v3972, %v4117
        %s4120 = sld [smem:[#allocation2 + $0x2d]]
        %v4121 = vstv %s4120
        %v4122 = vmul.f32 %v4121, %v4112
        %v4123 = vmul.f32 %v4121, %v4113
        %v4126 = vrot.slane %v4122, 1
        %v4127 = vrot.slane %v4123, 1
        %v4130 = vadd.f32 %v4118, %v4126
        %v4131 = vadd.f32 %v4119, %v4127
        %s4132 = sld [smem:[#allocation2 + $0x46]]
        %v4133 = vstv %s4132
        %v4134 = vmul.f32 %v4133, %v4112
        %v4135 = vmul.f32 %v4133, %v4113
        %v4138 = vrot.slane %v4134, 2
        %v4139 = vrot.slane %v4135, 2
        %v4142 = vadd.f32 %v4130, %v4138
        %v4143 = vadd.f32 %v4131, %v4139
        %s4144 = sld [smem:[#allocation2 + $0x5f]]
        %v4145 = vstv %s4144
        %v4146 = vmul.f32 %v4145, %v4112
        %v4147 = vmul.f32 %v4145, %v4113
        %v4150 = vrot.slane %v4146, 3
        %v4151 = vrot.slane %v4147, 3
        %v4154 = vadd.f32 %v4142, %v4150
        %v4155 = vadd.f32 %v4143, %v4151
        %s4156 = sld [smem:[#allocation2 + $0x78]]
        %v4157 = vstv %s4156
        %v4158 = vmul.f32 %v4157, %v4112
        %v4159 = vmul.f32 %v4157, %v4113
        %v4160 = vadd.f32 %v4013, %v4158
        %v4161 = vadd.f32 %v4014, %v4159
        %s4162 = sld [smem:[#allocation2 + $0x91]]
        %v4163 = vstv %s4162
        %v4164 = vmul.f32 %v4163, %v4112
        %v4165 = vmul.f32 %v4163, %v4113
        %v4168 = vrot.slane %v4164, 1
        %v4169 = vrot.slane %v4165, 1
        %v4172 = vadd.f32 %v4160, %v4168
        %v4173 = vadd.f32 %v4161, %v4169
        %s4174 = sld [smem:[#allocation2 + $0xaa]]
        %v4175 = vstv %s4174
        %v4176 = vmul.f32 %v4175, %v4112
        %v4177 = vmul.f32 %v4175, %v4113
        %v4180 = vrot.slane %v4176, 2
        %v4181 = vrot.slane %v4177, 2
        %v4184 = vadd.f32 %v4172, %v4180
        %v4185 = vadd.f32 %v4173, %v4181
        %s4186 = sld [smem:[#allocation2 + $0xc3]]
        %v4187 = vstv %s4186
        %v4188 = vmul.f32 %v4187, %v4112
        %v4189 = vmul.f32 %v4187, %v4113
        %v4192 = vrot.slane %v4188, 3
        %v4193 = vrot.slane %v4189, 3
        %v4196 = vadd.f32 %v4184, %v4192
        %v4197 = vadd.f32 %v4185, %v4193
        %s4198 = sld [smem:[#allocation2 + $0xdc]]
        %v4199 = vstv %s4198
        %v4200 = vmul.f32 %v4199, %v4112
        %v4201 = vmul.f32 %v4199, %v4113
        %v4202 = vadd.f32 %v4055, %v4200
        %v4203 = vadd.f32 %v4056, %v4201
        %s4204 = sld [smem:[#allocation2 + $0xf5]]
        %v4205 = vstv %s4204
        %v4206 = vmul.f32 %v4205, %v4112
        %v4207 = vmul.f32 %v4205, %v4113
        %v4210 = vrot.slane %v4206, 1
        %v4211 = vrot.slane %v4207, 1
        %v4214 = vadd.f32 %v4202, %v4210
        %v4215 = vadd.f32 %v4203, %v4211
        %s4216 = sld [smem:[#allocation2 + $0x10e]]
        %v4217 = vstv %s4216
        %v4218 = vmul.f32 %v4217, %v4112
        %v4219 = vmul.f32 %v4217, %v4113
        %v4222 = vrot.slane %v4218, 2
        %v4223 = vrot.slane %v4219, 2
        %v4226 = vadd.f32 %v4214, %v4222
        %v4227 = vadd.f32 %v4215, %v4223
        %s4228 = sld [smem:[#allocation2 + $0x127]]
        %v4229 = vstv %s4228
        %v4230 = vmul.f32 %v4229, %v4112
        %v4231 = vmul.f32 %v4229, %v4113
        %v4234 = vrot.slane %v4230, 3
        %v4235 = vrot.slane %v4231, 3
        %v4238 = vadd.f32 %v4226, %v4234
        %v4239 = vadd.f32 %v4227, %v4235
        %s4240 = sld [smem:[#allocation2 + $0x140]]
        %v4241 = vstv %s4240
        %v4242 = vmul.f32 %v4241, %v4112
        %v4243 = vmul.f32 %v4241, %v4113
        %v4244 = vadd.f32 %v4097, %v4242
        %v4245 = vadd.f32 %v4098, %v4243
        %s4246 = sld [smem:[#allocation2 + $0x159]]
        %v4247 = vstv %s4246
        %v4248 = vmul.f32 %v4247, %v4112
        %v4249 = vmul.f32 %v4247, %v4113
        %v4252 = vrot.slane %v4248, 1
        %v4253 = vrot.slane %v4249, 1
        %v4256 = vadd.f32 %v4244, %v4252
        %v4257 = vadd.f32 %v4245, %v4253
        %s4258 = sld [smem:[#allocation2 + $0x172]]
        %v4259 = vstv %s4258
        %v4260 = vmul.f32 %v4259, %v4112
        %v4261 = vmul.f32 %v4259, %v4113
        %v4264 = vrot.slane %v4260, 2
        %v4265 = vrot.slane %v4261, 2
        %v4268 = vadd.f32 %v4256, %v4264
        %v4269 = vadd.f32 %v4257, %v4265
        %s4270 = sld [smem:[#allocation2 + $0x18b]]
        %v4271 = vstv %s4270
        %v4272 = vmul.f32 %v4271, %v4112
        %v4273 = vmul.f32 %v4271, %v4113
        %v4276 = vrot.slane %v4272, 3
        %v4277 = vrot.slane %v4273, 3
        %v4280 = vadd.f32 %v4268, %v4276
        %v4281 = vadd.f32 %v4269, %v4277
        %4282 = vrot.lane.b32.xlu0 %v356, 97
        %v4283 = vpop.permute.xlu0 %4282
        %4284 = vrot.lane.b32.xlu0 %v444, 97
        %v4285 = vpop.permute.xlu0 %4284
        %vm4286 = vcmp.lt.s32.totalorder %v358, 97
        %v4287 = vsel %vm4286, %v4283, %v4285
        %v4288 = vsel %vm4286, %v4285, %v4283
        %vm4289 = vmand %vm399, %vm411
        %vm4290 = vmand %vm400, %vm412
        %v4291 = vsel %vm4289, 1, 0
        %v4292 = vsel %vm4290, 1, 0
        %vm4293 = vcmp.eq.s32.totalorder %v4291, 1
        %vm4294 = vcmp.eq.s32.totalorder %v4292, 1
        %v4295 = vsel %vm4293, %v4287, 0.0
        %v4296 = vsel %vm4294, %v4288, 0.0
        %s4297 = sld [smem:[#allocation2 + $0x15]]
        %v4298 = vstv %s4297
        %v4299 = vmul.f32 %v4298, %v4295
        %v4300 = vmul.f32 %v4298, %v4296
        %v4301 = vadd.f32 %v4154, %v4299
        %v4302 = vadd.f32 %v4155, %v4300
        %s4303 = sld [smem:[#allocation2 + $0x2e]]
        %v4304 = vstv %s4303
        %v4305 = vmul.f32 %v4304, %v4295
        %v4306 = vmul.f32 %v4304, %v4296
        %v4309 = vrot.slane %v4305, 1
        %v4310 = vrot.slane %v4306, 1
        %v4313 = vadd.f32 %v4301, %v4309
        %v4314 = vadd.f32 %v4302, %v4310
        %s4315 = sld [smem:[#allocation2 + $0x47]]
        %v4316 = vstv %s4315
        %v4317 = vmul.f32 %v4316, %v4295
        %v4318 = vmul.f32 %v4316, %v4296
        %v4321 = vrot.slane %v4317, 2
        %v4322 = vrot.slane %v4318, 2
        %v4325 = vadd.f32 %v4313, %v4321
        %v4326 = vadd.f32 %v4314, %v4322
        %s4327 = sld [smem:[#allocation2 + $0x60]]
        %v4328 = vstv %s4327
        %v4329 = vmul.f32 %v4328, %v4295
        %v4330 = vmul.f32 %v4328, %v4296
        %v4333 = vrot.slane %v4329, 3
        %v4334 = vrot.slane %v4330, 3
        %v4337 = vadd.f32 %v4325, %v4333
        %v4338 = vadd.f32 %v4326, %v4334
        %s4339 = sld [smem:[#allocation2 + $0x79]]
        %v4340 = vstv %s4339
        %v4341 = vmul.f32 %v4340, %v4295
        %v4342 = vmul.f32 %v4340, %v4296
        %v4343 = vadd.f32 %v4196, %v4341
        %v4344 = vadd.f32 %v4197, %v4342
        %s4345 = sld [smem:[#allocation2 + $0x92]]
        %v4346 = vstv %s4345
        %v4347 = vmul.f32 %v4346, %v4295
        %v4348 = vmul.f32 %v4346, %v4296
        %v4351 = vrot.slane %v4347, 1
        %v4352 = vrot.slane %v4348, 1
        %v4355 = vadd.f32 %v4343, %v4351
        %v4356 = vadd.f32 %v4344, %v4352
        %s4357 = sld [smem:[#allocation2 + $0xab]]
        %v4358 = vstv %s4357
        %v4359 = vmul.f32 %v4358, %v4295
        %v4360 = vmul.f32 %v4358, %v4296
        %v4363 = vrot.slane %v4359, 2
        %v4364 = vrot.slane %v4360, 2
        %v4367 = vadd.f32 %v4355, %v4363
        %v4368 = vadd.f32 %v4356, %v4364
        %s4369 = sld [smem:[#allocation2 + $0xc4]]
        %v4370 = vstv %s4369
        %v4371 = vmul.f32 %v4370, %v4295
        %v4372 = vmul.f32 %v4370, %v4296
        %v4375 = vrot.slane %v4371, 3
        %v4376 = vrot.slane %v4372, 3
        %v4379 = vadd.f32 %v4367, %v4375
        %v4380 = vadd.f32 %v4368, %v4376
        %s4381 = sld [smem:[#allocation2 + $0xdd]]
        %v4382 = vstv %s4381
        %v4383 = vmul.f32 %v4382, %v4295
        %v4384 = vmul.f32 %v4382, %v4296
        %v4385 = vadd.f32 %v4238, %v4383
        %v4386 = vadd.f32 %v4239, %v4384
        %s4387 = sld [smem:[#allocation2 + $0xf6]]
        %v4388 = vstv %s4387
        %v4389 = vmul.f32 %v4388, %v4295
        %v4390 = vmul.f32 %v4388, %v4296
        %v4393 = vrot.slane %v4389, 1
        %v4394 = vrot.slane %v4390, 1
        %v4397 = vadd.f32 %v4385, %v4393
        %v4398 = vadd.f32 %v4386, %v4394
        %s4399 = sld [smem:[#allocation2 + $0x10f]]
        %v4400 = vstv %s4399
        %v4401 = vmul.f32 %v4400, %v4295
        %v4402 = vmul.f32 %v4400, %v4296
        %v4405 = vrot.slane %v4401, 2
        %v4406 = vrot.slane %v4402, 2
        %v4409 = vadd.f32 %v4397, %v4405
        %v4410 = vadd.f32 %v4398, %v4406
        %s4411 = sld [smem:[#allocation2 + $0x128]]
        %v4412 = vstv %s4411
        %v4413 = vmul.f32 %v4412, %v4295
        %v4414 = vmul.f32 %v4412, %v4296
        %v4417 = vrot.slane %v4413, 3
        %v4418 = vrot.slane %v4414, 3
        %v4421 = vadd.f32 %v4409, %v4417
        %v4422 = vadd.f32 %v4410, %v4418
        %s4423 = sld [smem:[#allocation2 + $0x141]]
        %v4424 = vstv %s4423
        %v4425 = vmul.f32 %v4424, %v4295
        %v4426 = vmul.f32 %v4424, %v4296
        %v4427 = vadd.f32 %v4280, %v4425
        %v4428 = vadd.f32 %v4281, %v4426
        %s4429 = sld [smem:[#allocation2 + $0x15a]]
        %v4430 = vstv %s4429
        %v4431 = vmul.f32 %v4430, %v4295
        %v4432 = vmul.f32 %v4430, %v4296
        %v4435 = vrot.slane %v4431, 1
        %v4436 = vrot.slane %v4432, 1
        %v4439 = vadd.f32 %v4427, %v4435
        %v4440 = vadd.f32 %v4428, %v4436
        %s4441 = sld [smem:[#allocation2 + $0x173]]
        %v4442 = vstv %s4441
        %v4443 = vmul.f32 %v4442, %v4295
        %v4444 = vmul.f32 %v4442, %v4296
        %v4447 = vrot.slane %v4443, 2
        %v4448 = vrot.slane %v4444, 2
        %v4451 = vadd.f32 %v4439, %v4447
        %v4452 = vadd.f32 %v4440, %v4448
        %s4453 = sld [smem:[#allocation2 + $0x18c]]
        %v4454 = vstv %s4453
        %v4455 = vmul.f32 %v4454, %v4295
        %v4456 = vmul.f32 %v4454, %v4296
        %v4459 = vrot.slane %v4455, 3
        %v4460 = vrot.slane %v4456, 3
        %v4463 = vadd.f32 %v4451, %v4459
        %v4464 = vadd.f32 %v4452, %v4460
        %4465 = vrot.lane.b32.xlu0 %v356, 96
        %v4466 = vpop.permute.xlu0 %4465
        %4467 = vrot.lane.b32.xlu0 %v444, 96
        %v4468 = vpop.permute.xlu0 %4467
        %vm4469 = vcmp.lt.s32.totalorder %v358, 96
        %v4470 = vsel %vm4469, %v4466, %v4468
        %v4471 = vsel %vm4469, %v4468, %v4466
        %vm4472 = vmand %vm399, %vm417
        %vm4473 = vmand %vm400, %vm418
        %v4474 = vsel %vm4472, 1, 0
        %v4475 = vsel %vm4473, 1, 0
        %vm4476 = vcmp.eq.s32.totalorder %v4474, 1
        %vm4477 = vcmp.eq.s32.totalorder %v4475, 1
        %v4478 = vsel %vm4476, %v4470, 0.0
        %v4479 = vsel %vm4477, %v4471, 0.0
        %s4480 = sld [smem:[#allocation2 + $0x16]]
        %v4481 = vstv %s4480
        %v4482 = vmul.f32 %v4481, %v4478
        %v4483 = vmul.f32 %v4481, %v4479
        %v4484 = vadd.f32 %v4337, %v4482
        %v4485 = vadd.f32 %v4338, %v4483
        %s4486 = sld [smem:[#allocation2 + $0x2f]]
        %v4487 = vstv %s4486
        %v4488 = vmul.f32 %v4487, %v4478
        %v4489 = vmul.f32 %v4487, %v4479
        %v4492 = vrot.slane %v4488, 1
        %v4493 = vrot.slane %v4489, 1
        %v4496 = vadd.f32 %v4484, %v4492
        %v4497 = vadd.f32 %v4485, %v4493
        %s4498 = sld [smem:[#allocation2 + $0x48]]
        %v4499 = vstv %s4498
        %v4500 = vmul.f32 %v4499, %v4478
        %v4501 = vmul.f32 %v4499, %v4479
        %v4504 = vrot.slane %v4500, 2
        %v4505 = vrot.slane %v4501, 2
        %v4508 = vadd.f32 %v4496, %v4504
        %v4509 = vadd.f32 %v4497, %v4505
        %s4510 = sld [smem:[#allocation2 + $0x61]]
        %v4511 = vstv %s4510
        %v4512 = vmul.f32 %v4511, %v4478
        %v4513 = vmul.f32 %v4511, %v4479
        %v4516 = vrot.slane %v4512, 3
        %v4517 = vrot.slane %v4513, 3
        %v4520 = vadd.f32 %v4508, %v4516
        %v4521 = vadd.f32 %v4509, %v4517
        %s4522 = sld [smem:[#allocation2 + $0x7a]]
        %v4523 = vstv %s4522
        %v4524 = vmul.f32 %v4523, %v4478
        %v4525 = vmul.f32 %v4523, %v4479
        %v4526 = vadd.f32 %v4379, %v4524
        %v4527 = vadd.f32 %v4380, %v4525
        %s4528 = sld [smem:[#allocation2 + $0x93]]
        %v4529 = vstv %s4528
        %v4530 = vmul.f32 %v4529, %v4478
        %v4531 = vmul.f32 %v4529, %v4479
        %v4534 = vrot.slane %v4530, 1
        %v4535 = vrot.slane %v4531, 1
        %v4538 = vadd.f32 %v4526, %v4534
        %v4539 = vadd.f32 %v4527, %v4535
        %s4540 = sld [smem:[#allocation2 + $0xac]]
        %v4541 = vstv %s4540
        %v4542 = vmul.f32 %v4541, %v4478
        %v4543 = vmul.f32 %v4541, %v4479
        %v4546 = vrot.slane %v4542, 2
        %v4547 = vrot.slane %v4543, 2
        %v4550 = vadd.f32 %v4538, %v4546
        %v4551 = vadd.f32 %v4539, %v4547
        %s4552 = sld [smem:[#allocation2 + $0xc5]]
        %v4553 = vstv %s4552
        %v4554 = vmul.f32 %v4553, %v4478
        %v4555 = vmul.f32 %v4553, %v4479
        %v4558 = vrot.slane %v4554, 3
        %v4559 = vrot.slane %v4555, 3
        %v4562 = vadd.f32 %v4550, %v4558
        %v4563 = vadd.f32 %v4551, %v4559
        %s4564 = sld [smem:[#allocation2 + $0xde]]
        %v4565 = vstv %s4564
        %v4566 = vmul.f32 %v4565, %v4478
        %v4567 = vmul.f32 %v4565, %v4479
        %v4568 = vadd.f32 %v4421, %v4566
        %v4569 = vadd.f32 %v4422, %v4567
        %s4570 = sld [smem:[#allocation2 + $0xf7]]
        %v4571 = vstv %s4570
        %v4572 = vmul.f32 %v4571, %v4478
        %v4573 = vmul.f32 %v4571, %v4479
        %v4576 = vrot.slane %v4572, 1
        %v4577 = vrot.slane %v4573, 1
        %v4580 = vadd.f32 %v4568, %v4576
        %v4581 = vadd.f32 %v4569, %v4577
        %s4582 = sld [smem:[#allocation2 + $0x110]]
        %v4583 = vstv %s4582
        %v4584 = vmul.f32 %v4583, %v4478
        %v4585 = vmul.f32 %v4583, %v4479
        %v4588 = vrot.slane %v4584, 2
        %v4589 = vrot.slane %v4585, 2
        %v4592 = vadd.f32 %v4580, %v4588
        %v4593 = vadd.f32 %v4581, %v4589
        %s4594 = sld [smem:[#allocation2 + $0x129]]
        %v4595 = vstv %s4594
        %v4596 = vmul.f32 %v4595, %v4478
        %v4597 = vmul.f32 %v4595, %v4479
        %v4600 = vrot.slane %v4596, 3
        %v4601 = vrot.slane %v4597, 3
        %v4604 = vadd.f32 %v4592, %v4600
        %v4605 = vadd.f32 %v4593, %v4601
        %s4606 = sld [smem:[#allocation2 + $0x142]]
        %v4607 = vstv %s4606
        %v4608 = vmul.f32 %v4607, %v4478
        %v4609 = vmul.f32 %v4607, %v4479
        %v4610 = vadd.f32 %v4463, %v4608
        %v4611 = vadd.f32 %v4464, %v4609
        %s4612 = sld [smem:[#allocation2 + $0x15b]]
        %v4613 = vstv %s4612
        %v4614 = vmul.f32 %v4613, %v4478
        %v4615 = vmul.f32 %v4613, %v4479
        %v4618 = vrot.slane %v4614, 1
        %v4619 = vrot.slane %v4615, 1
        %v4622 = vadd.f32 %v4610, %v4618
        %v4623 = vadd.f32 %v4611, %v4619
        %s4624 = sld [smem:[#allocation2 + $0x174]]
        %v4625 = vstv %s4624
        %v4626 = vmul.f32 %v4625, %v4478
        %v4627 = vmul.f32 %v4625, %v4479
        %v4630 = vrot.slane %v4626, 2
        %v4631 = vrot.slane %v4627, 2
        %v4634 = vadd.f32 %v4622, %v4630
        %v4635 = vadd.f32 %v4623, %v4631
        %s4636 = sld [smem:[#allocation2 + $0x18d]]
        %v4637 = vstv %s4636
        %v4638 = vmul.f32 %v4637, %v4478
        %v4639 = vmul.f32 %v4637, %v4479
        %v4642 = vrot.slane %v4638, 3
        %v4643 = vrot.slane %v4639, 3
        %v4646 = vadd.f32 %v4634, %v4642
        %v4647 = vadd.f32 %v4635, %v4643
        %4648 = vrot.lane.b32.xlu0 %v356, 95
        %v4649 = vpop.permute.xlu0 %4648
        %4650 = vrot.lane.b32.xlu0 %v444, 95
        %v4651 = vpop.permute.xlu0 %4650
        %vm4652 = vcmp.lt.s32.totalorder %v358, 95
        %v4653 = vsel %vm4652, %v4649, %v4651
        %v4654 = vsel %vm4652, %v4651, %v4649
        %vm4655 = vmand %vm399, %vm423
        %vm4656 = vmand %vm400, %vm424
        %v4657 = vsel %vm4655, 1, 0
        %v4658 = vsel %vm4656, 1, 0
        %vm4659 = vcmp.eq.s32.totalorder %v4657, 1
        %vm4660 = vcmp.eq.s32.totalorder %v4658, 1
        %v4661 = vsel %vm4659, %v4653, 0.0
        %v4662 = vsel %vm4660, %v4654, 0.0
        %s4663 = sld [smem:[#allocation2 + $0x17]]
        %v4664 = vstv %s4663
        %v4665 = vmul.f32 %v4664, %v4661
        %v4666 = vmul.f32 %v4664, %v4662
        %v4667 = vadd.f32 %v4520, %v4665
        %v4668 = vadd.f32 %v4521, %v4666
        %s4669 = sld [smem:[#allocation2 + $0x30]]
        %v4670 = vstv %s4669
        %v4671 = vmul.f32 %v4670, %v4661
        %v4672 = vmul.f32 %v4670, %v4662
        %v4675 = vrot.slane %v4671, 1
        %v4676 = vrot.slane %v4672, 1
        %v4679 = vadd.f32 %v4667, %v4675
        %v4680 = vadd.f32 %v4668, %v4676
        %s4681 = sld [smem:[#allocation2 + $0x49]]
        %v4682 = vstv %s4681
        %v4683 = vmul.f32 %v4682, %v4661
        %v4684 = vmul.f32 %v4682, %v4662
        %v4687 = vrot.slane %v4683, 2
        %v4688 = vrot.slane %v4684, 2
        %v4691 = vadd.f32 %v4679, %v4687
        %v4692 = vadd.f32 %v4680, %v4688
        %s4693 = sld [smem:[#allocation2 + $0x62]]
        %v4694 = vstv %s4693
        %v4695 = vmul.f32 %v4694, %v4661
        %v4696 = vmul.f32 %v4694, %v4662
        %v4699 = vrot.slane %v4695, 3
        %v4700 = vrot.slane %v4696, 3
        %v4703 = vadd.f32 %v4691, %v4699
        %v4704 = vadd.f32 %v4692, %v4700
        %s4705 = sld [smem:[#allocation2 + $0x7b]]
        %v4706 = vstv %s4705
        %v4707 = vmul.f32 %v4706, %v4661
        %v4708 = vmul.f32 %v4706, %v4662
        %v4709 = vadd.f32 %v4562, %v4707
        %v4710 = vadd.f32 %v4563, %v4708
        %s4711 = sld [smem:[#allocation2 + $0x94]]
        %v4712 = vstv %s4711
        %v4713 = vmul.f32 %v4712, %v4661
        %v4714 = vmul.f32 %v4712, %v4662
        %v4717 = vrot.slane %v4713, 1
        %v4718 = vrot.slane %v4714, 1
        %v4721 = vadd.f32 %v4709, %v4717
        %v4722 = vadd.f32 %v4710, %v4718
        %s4723 = sld [smem:[#allocation2 + $0xad]]
        %v4724 = vstv %s4723
        %v4725 = vmul.f32 %v4724, %v4661
        %v4726 = vmul.f32 %v4724, %v4662
        %v4729 = vrot.slane %v4725, 2
        %v4730 = vrot.slane %v4726, 2
        %v4733 = vadd.f32 %v4721, %v4729
        %v4734 = vadd.f32 %v4722, %v4730
        %s4735 = sld [smem:[#allocation2 + $0xc6]]
        %v4736 = vstv %s4735
        %v4737 = vmul.f32 %v4736, %v4661
        %v4738 = vmul.f32 %v4736, %v4662
        %v4741 = vrot.slane %v4737, 3
        %v4742 = vrot.slane %v4738, 3
        %v4745 = vadd.f32 %v4733, %v4741
        %v4746 = vadd.f32 %v4734, %v4742
        %s4747 = sld [smem:[#allocation2 + $0xdf]]
        %v4748 = vstv %s4747
        %v4749 = vmul.f32 %v4748, %v4661
        %v4750 = vmul.f32 %v4748, %v4662
        %v4751 = vadd.f32 %v4604, %v4749
        %v4752 = vadd.f32 %v4605, %v4750
        %s4753 = sld [smem:[#allocation2 + $0xf8]]
        %v4754 = vstv %s4753
        %v4755 = vmul.f32 %v4754, %v4661
        %v4756 = vmul.f32 %v4754, %v4662
        %v4759 = vrot.slane %v4755, 1
        %v4760 = vrot.slane %v4756, 1
        %v4763 = vadd.f32 %v4751, %v4759
        %v4764 = vadd.f32 %v4752, %v4760
        %s4765 = sld [smem:[#allocation2 + $0x111]]
        %v4766 = vstv %s4765
        %v4767 = vmul.f32 %v4766, %v4661
        %v4768 = vmul.f32 %v4766, %v4662
        %v4771 = vrot.slane %v4767, 2
        %v4772 = vrot.slane %v4768, 2
        %v4775 = vadd.f32 %v4763, %v4771
        %v4776 = vadd.f32 %v4764, %v4772
        %s4777 = sld [smem:[#allocation2 + $0x12a]]
        %v4778 = vstv %s4777
        %v4779 = vmul.f32 %v4778, %v4661
        %v4780 = vmul.f32 %v4778, %v4662
        %v4783 = vrot.slane %v4779, 3
        %v4784 = vrot.slane %v4780, 3
        %v4787 = vadd.f32 %v4775, %v4783
        %v4788 = vadd.f32 %v4776, %v4784
        %s4789 = sld [smem:[#allocation2 + $0x143]]
        %v4790 = vstv %s4789
        %v4791 = vmul.f32 %v4790, %v4661
        %v4792 = vmul.f32 %v4790, %v4662
        %v4793 = vadd.f32 %v4646, %v4791
        %v4794 = vadd.f32 %v4647, %v4792
        %s4795 = sld [smem:[#allocation2 + $0x15c]]
        %v4796 = vstv %s4795
        %v4797 = vmul.f32 %v4796, %v4661
        %v4798 = vmul.f32 %v4796, %v4662
        %v4801 = vrot.slane %v4797, 1
        %v4802 = vrot.slane %v4798, 1
        %v4805 = vadd.f32 %v4793, %v4801
        %v4806 = vadd.f32 %v4794, %v4802
        %s4807 = sld [smem:[#allocation2 + $0x175]]
        %v4808 = vstv %s4807
        %v4809 = vmul.f32 %v4808, %v4661
        %v4810 = vmul.f32 %v4808, %v4662
        %v4813 = vrot.slane %v4809, 2
        %v4814 = vrot.slane %v4810, 2
        %v4817 = vadd.f32 %v4805, %v4813
        %v4818 = vadd.f32 %v4806, %v4814
        %s4819 = sld [smem:[#allocation2 + $0x18e]]
        %v4820 = vstv %s4819
        %v4821 = vmul.f32 %v4820, %v4661
        %v4822 = vmul.f32 %v4820, %v4662
        %v4825 = vrot.slane %v4821, 3
        %v4826 = vrot.slane %v4822, 3
        %v4829 = vadd.f32 %v4817, %v4825
        %v4830 = vadd.f32 %v4818, %v4826
        %4831 = vrot.lane.b32.xlu0 %v356, 94
        %v4832 = vpop.permute.xlu0 %4831
        %4833 = vrot.lane.b32.xlu0 %v444, 94
        %v4834 = vpop.permute.xlu0 %4833
        %vm4835 = vcmp.lt.s32.totalorder %v358, 94
        %v4836 = vsel %vm4835, %v4832, %v4834
        %v4837 = vsel %vm4835, %v4834, %v4832
        %vm4838 = vmand %vm399, %vm429
        %vm4839 = vmand %vm400, %vm430
        %v4840 = vsel %vm4838, 1, 0
        %v4841 = vsel %vm4839, 1, 0
        %vm4842 = vcmp.eq.s32.totalorder %v4840, 1
        %vm4843 = vcmp.eq.s32.totalorder %v4841, 1
        %v4844 = vsel %vm4842, %v4836, 0.0
        %v4845 = vsel %vm4843, %v4837, 0.0
        %s4846 = sld [smem:[#allocation2 + $0x18]]
        %v4847 = vstv %s4846
        %v4848 = vmul.f32 %v4847, %v4844
        %v4849 = vmul.f32 %v4847, %v4845
        %v4850 = vadd.f32 %v4703, %v4848
        %v4851 = vadd.f32 %v4704, %v4849
        %s4852 = sld [smem:[#allocation2 + $0x31]]
        %v4853 = vstv %s4852
        %v4854 = vmul.f32 %v4853, %v4844
        %v4855 = vmul.f32 %v4853, %v4845
        %v4858 = vrot.slane %v4854, 1
        %v4859 = vrot.slane %v4855, 1
        %v4862 = vadd.f32 %v4850, %v4858
        %v4863 = vadd.f32 %v4851, %v4859
        %s4864 = sld [smem:[#allocation2 + $0x4a]]
        %v4865 = vstv %s4864
        %v4866 = vmul.f32 %v4865, %v4844
        %v4867 = vmul.f32 %v4865, %v4845
        %v4870 = vrot.slane %v4866, 2
        %v4871 = vrot.slane %v4867, 2
        %v4874 = vadd.f32 %v4862, %v4870
        %v4875 = vadd.f32 %v4863, %v4871
        %s4876 = sld [smem:[#allocation2 + $0x63]]
        %v4877 = vstv %s4876
        %v4878 = vmul.f32 %v4877, %v4844
        %v4879 = vmul.f32 %v4877, %v4845
        %v4882 = vrot.slane %v4878, 3
        %v4883 = vrot.slane %v4879, 3
        %v4886 = vadd.f32 %v4874, %v4882
        %v4887 = vadd.f32 %v4875, %v4883
        %s4888 = sld [smem:[#allocation2 + $0x7c]]
        %v4889 = vstv %s4888
        %v4890 = vmul.f32 %v4889, %v4844
        %v4891 = vmul.f32 %v4889, %v4845
        %v4892 = vadd.f32 %v4745, %v4890
        %v4893 = vadd.f32 %v4746, %v4891
        %s4894 = sld [smem:[#allocation2 + $0x95]]
        %v4895 = vstv %s4894
        %v4896 = vmul.f32 %v4895, %v4844
        %v4897 = vmul.f32 %v4895, %v4845
        %v4900 = vrot.slane %v4896, 1
        %v4901 = vrot.slane %v4897, 1
        %v4904 = vadd.f32 %v4892, %v4900
        %v4905 = vadd.f32 %v4893, %v4901
        %s4906 = sld [smem:[#allocation2 + $0xae]]
        %v4907 = vstv %s4906
        %v4908 = vmul.f32 %v4907, %v4844
        %v4909 = vmul.f32 %v4907, %v4845
        %v4912 = vrot.slane %v4908, 2
        %v4913 = vrot.slane %v4909, 2
        %v4916 = vadd.f32 %v4904, %v4912
        %v4917 = vadd.f32 %v4905, %v4913
        %s4918 = sld [smem:[#allocation2 + $0xc7]]
        %v4919 = vstv %s4918
        %v4920 = vmul.f32 %v4919, %v4844
        %v4921 = vmul.f32 %v4919, %v4845
        %v4924 = vrot.slane %v4920, 3
        %v4925 = vrot.slane %v4921, 3
        %v4928 = vadd.f32 %v4916, %v4924
        %v4929 = vadd.f32 %v4917, %v4925
        %s4930 = sld [smem:[#allocation2 + $0xe0]]
        %v4931 = vstv %s4930
        %v4932 = vmul.f32 %v4931, %v4844
        %v4933 = vmul.f32 %v4931, %v4845
        %v4934 = vadd.f32 %v4787, %v4932
        %v4935 = vadd.f32 %v4788, %v4933
        %s4936 = sld [smem:[#allocation2 + $0xf9]]
        %v4937 = vstv %s4936
        %v4938 = vmul.f32 %v4937, %v4844
        %v4939 = vmul.f32 %v4937, %v4845
        %v4942 = vrot.slane %v4938, 1
        %v4943 = vrot.slane %v4939, 1
        %v4946 = vadd.f32 %v4934, %v4942
        %v4947 = vadd.f32 %v4935, %v4943
        %s4948 = sld [smem:[#allocation2 + $0x112]]
        %v4949 = vstv %s4948
        %v4950 = vmul.f32 %v4949, %v4844
        %v4951 = vmul.f32 %v4949, %v4845
        %v4954 = vrot.slane %v4950, 2
        %v4955 = vrot.slane %v4951, 2
        %v4958 = vadd.f32 %v4946, %v4954
        %v4959 = vadd.f32 %v4947, %v4955
        %s4960 = sld [smem:[#allocation2 + $0x12b]]
        %v4961 = vstv %s4960
        %v4962 = vmul.f32 %v4961, %v4844
        %v4963 = vmul.f32 %v4961, %v4845
        %v4966 = vrot.slane %v4962, 3
        %v4967 = vrot.slane %v4963, 3
        %v4970 = vadd.f32 %v4958, %v4966
        %v4971 = vadd.f32 %v4959, %v4967
        %s4972 = sld [smem:[#allocation2 + $0x144]]
        %v4973 = vstv %s4972
        %v4974 = vmul.f32 %v4973, %v4844
        %v4975 = vmul.f32 %v4973, %v4845
        %v4976 = vadd.f32 %v4829, %v4974
        %v4977 = vadd.f32 %v4830, %v4975
        %s4978 = sld [smem:[#allocation2 + $0x15d]]
        %v4979 = vstv %s4978
        %v4980 = vmul.f32 %v4979, %v4844
        %v4981 = vmul.f32 %v4979, %v4845
        %v4984 = vrot.slane %v4980, 1
        %v4985 = vrot.slane %v4981, 1
        %v4988 = vadd.f32 %v4976, %v4984
        %v4989 = vadd.f32 %v4977, %v4985
        %s4990 = sld [smem:[#allocation2 + $0x176]]
        %v4991 = vstv %s4990
        %v4992 = vmul.f32 %v4991, %v4844
        %v4993 = vmul.f32 %v4991, %v4845
        %v4996 = vrot.slane %v4992, 2
        %v4997 = vrot.slane %v4993, 2
        %v5000 = vadd.f32 %v4988, %v4996
        %v5001 = vadd.f32 %v4989, %v4997
        %s5002 = sld [smem:[#allocation2 + $0x18f]]
        %v5003 = vstv %s5002
        %v5004 = vmul.f32 %v5003, %v4844
        %v5005 = vmul.f32 %v5003, %v4845
        %v5008 = vrot.slane %v5004, 3
        %v5009 = vrot.slane %v5005, 3
        %v5012 = vadd.f32 %v5000, %v5008
        %v5013 = vadd.f32 %v5001, %v5009
        %v5014 = vmax.f32 %v4886, 0.0
        %v5015 = vmax.f32 %v4887, 0.0
        %v5016 = vmax.f32 %v4928, 0.0
        %v5017 = vmax.f32 %v4929, 0.0
        %v5018 = vmax.f32 %v4970, 0.0
        %v5019 = vmax.f32 %v4971, 0.0
        %v5020 = vmax.f32 %v5012, 0.0
        %v5021 = vmax.f32 %v5013, 0.0
        %v5024 = vrot.slane %v5016, 7
        %v5025 = vrot.slane %v5017, 7
        %v5030 = vrot.slane %v5018, 6
        %v5031 = vrot.slane %v5019, 6
        %v5036 = vrot.slane %v5020, 5
        %v5037 = vrot.slane %v5021, 5
        %vm5040 = vcmask 1040384
        %v5041 = vsel %vm5040, %v5014, %v5024
        %v5042 = vsel %vm5040, %v5015, %v5025
        %vm5043 = vcmask 1041408
        %v5044 = vsel %vm5043, %v5041, %v5030
        %v5045 = vsel %vm5043, %v5042, %v5031
        %vm5046 = vcmask 1042432
        %v5047 = vsel %vm5046, %v5044, %v5036
        %v5048 = vsel %vm5046, %v5045, %v5037
        %s5049 = sld [smem:[#allocation7]]
        %v5050 = vstv %s5049
        %v5051 = vadd.f32 %v5050, 0.0
        %s5052 = sld [smem:[#allocation7 + $0x1]]
        %v5053 = vstv %s5052
        %v5054 = vadd.f32 %v5053, 0.0
        %s5055 = sld [smem:[#allocation7 + $0x2]]
        %v5056 = vstv %s5055
        %v5057 = vadd.f32 %v5056, 0.0
        %s5058 = sld [smem:[#allocation7 + $0x3]]
        %v5059 = vstv %s5058
        %v5060 = vadd.f32 %v5059, 0.0
        %5061 = vrot.lane.b32.xlu0 %v5047, 17
        %v5062 = vpop.permute.xlu0 %5061
        %5063 = vrot.lane.b32.xlu0 %v5048, 17
        %v5064 = vpop.permute.xlu0 %5063
        %v5065 = vsel %vm1548, %v5062, %v5064
        %v5066 = vsel %vm1548, %v5064, %v5062
        %v5067 = vsel %vm1555, %v5066, 0.0
        %v5068 = vsel %vm1556, %v5065, 0.0
        %s5069 = sld [smem:[#allocation6]]
        %v5070 = vstv %s5069
        %v5071 = vmul.f32 %v5070, %v5067
        %v5072 = vmul.f32 %v5070, %v5068
        %v5073 = vadd.f32 %v5051, %v5071
        %v5074 = vadd.f32 %v5051, %v5072
        %s5075 = sld [smem:[#allocation6 + $0x9]]
        %v5076 = vstv %s5075
        %v5077 = vmul.f32 %v5076, %v5067
        %v5078 = vmul.f32 %v5076, %v5068
        %v5081 = vrot.slane %v5077, 1
        %v5082 = vrot.slane %v5078, 1
        %v5085 = vadd.f32 %v5073, %v5081
        %v5086 = vadd.f32 %v5074, %v5082
        %s5087 = sld [smem:[#allocation6 + $0x12]]
        %v5088 = vstv %s5087
        %v5089 = vmul.f32 %v5088, %v5067
        %v5090 = vmul.f32 %v5088, %v5068
        %v5093 = vrot.slane %v5089, 2
        %v5094 = vrot.slane %v5090, 2
        %v5097 = vadd.f32 %v5085, %v5093
        %v5098 = vadd.f32 %v5086, %v5094
        %s5099 = sld [smem:[#allocation6 + $0x1b]]
        %v5100 = vstv %s5099
        %v5101 = vmul.f32 %v5100, %v5067
        %v5102 = vmul.f32 %v5100, %v5068
        %v5105 = vrot.slane %v5101, 3
        %v5106 = vrot.slane %v5102, 3
        %v5109 = vadd.f32 %v5097, %v5105
        %v5110 = vadd.f32 %v5098, %v5106
        %s5111 = sld [smem:[#allocation6 + $0x24]]
        %v5112 = vstv %s5111
        %v5113 = vmul.f32 %v5112, %v5067
        %v5114 = vmul.f32 %v5112, %v5068
        %v5115 = vadd.f32 %v5054, %v5113
        %v5116 = vadd.f32 %v5054, %v5114
        %s5117 = sld [smem:[#allocation6 + $0x2d]]
        %v5118 = vstv %s5117
        %v5119 = vmul.f32 %v5118, %v5067
        %v5120 = vmul.f32 %v5118, %v5068
        %v5123 = vrot.slane %v5119, 1
        %v5124 = vrot.slane %v5120, 1
        %v5127 = vadd.f32 %v5115, %v5123
        %v5128 = vadd.f32 %v5116, %v5124
        %s5129 = sld [smem:[#allocation6 + $0x36]]
        %v5130 = vstv %s5129
        %v5131 = vmul.f32 %v5130, %v5067
        %v5132 = vmul.f32 %v5130, %v5068
        %v5135 = vrot.slane %v5131, 2
        %v5136 = vrot.slane %v5132, 2
        %v5139 = vadd.f32 %v5127, %v5135
        %v5140 = vadd.f32 %v5128, %v5136
        %s5141 = sld [smem:[#allocation6 + $0x3f]]
        %v5142 = vstv %s5141
        %v5143 = vmul.f32 %v5142, %v5067
        %v5144 = vmul.f32 %v5142, %v5068
        %v5147 = vrot.slane %v5143, 3
        %v5148 = vrot.slane %v5144, 3
        %v5151 = vadd.f32 %v5139, %v5147
        %v5152 = vadd.f32 %v5140, %v5148
        %s5153 = sld [smem:[#allocation6 + $0x48]]
        %v5154 = vstv %s5153
        %v5155 = vmul.f32 %v5154, %v5067
        %v5156 = vmul.f32 %v5154, %v5068
        %v5157 = vadd.f32 %v5057, %v5155
        %v5158 = vadd.f32 %v5057, %v5156
        %s5159 = sld [smem:[#allocation6 + $0x51]]
        %v5160 = vstv %s5159
        %v5161 = vmul.f32 %v5160, %v5067
        %v5162 = vmul.f32 %v5160, %v5068
        %v5165 = vrot.slane %v5161, 1
        %v5166 = vrot.slane %v5162, 1
        %v5169 = vadd.f32 %v5157, %v5165
        %v5170 = vadd.f32 %v5158, %v5166
        %s5171 = sld [smem:[#allocation6 + $0x5a]]
        %v5172 = vstv %s5171
        %v5173 = vmul.f32 %v5172, %v5067
        %v5174 = vmul.f32 %v5172, %v5068
        %v5177 = vrot.slane %v5173, 2
        %v5178 = vrot.slane %v5174, 2
        %v5181 = vadd.f32 %v5169, %v5177
        %v5182 = vadd.f32 %v5170, %v5178
        %s5183 = sld [smem:[#allocation6 + $0x63]]
        %v5184 = vstv %s5183
        %v5185 = vmul.f32 %v5184, %v5067
        %v5186 = vmul.f32 %v5184, %v5068
        %v5189 = vrot.slane %v5185, 3
        %v5190 = vrot.slane %v5186, 3
        %v5193 = vadd.f32 %v5181, %v5189
        %v5194 = vadd.f32 %v5182, %v5190
        %s5195 = sld [smem:[#allocation6 + $0x6c]]
        %v5196 = vstv %s5195
        %v5197 = vmul.f32 %v5196, %v5067
        %v5198 = vmul.f32 %v5196, %v5068
        %v5199 = vadd.f32 %v5060, %v5197
        %v5200 = vadd.f32 %v5060, %v5198
        %s5201 = sld [smem:[#allocation6 + $0x75]]
        %v5202 = vstv %s5201
        %v5203 = vmul.f32 %v5202, %v5067
        %v5204 = vmul.f32 %v5202, %v5068
        %v5207 = vrot.slane %v5203, 1
        %v5208 = vrot.slane %v5204, 1
        %v5211 = vadd.f32 %v5199, %v5207
        %v5212 = vadd.f32 %v5200, %v5208
        %s5213 = sld [smem:[#allocation6 + $0x7e]]
        %v5214 = vstv %s5213
        %v5215 = vmul.f32 %v5214, %v5067
        %v5216 = vmul.f32 %v5214, %v5068
        %v5219 = vrot.slane %v5215, 2
        %v5220 = vrot.slane %v5216, 2
        %v5223 = vadd.f32 %v5211, %v5219
        %v5224 = vadd.f32 %v5212, %v5220
        %s5225 = sld [smem:[#allocation6 + $0x87]]
        %v5226 = vstv %s5225
        %v5227 = vmul.f32 %v5226, %v5067
        %v5228 = vmul.f32 %v5226, %v5068
        %v5231 = vrot.slane %v5227, 3
        %v5232 = vrot.slane %v5228, 3
        %v5235 = vadd.f32 %v5223, %v5231
        %v5236 = vadd.f32 %v5224, %v5232
        %5237 = vrot.lane.b32.xlu0 %v5047, 16
        %v5238 = vpop.permute.xlu0 %5237
        %5239 = vrot.lane.b32.xlu0 %v5048, 16
        %v5240 = vpop.permute.xlu0 %5239
        %v5241 = vsel %vm1731, %v5238, %v5240
        %v5242 = vsel %vm1731, %v5240, %v5238
        %v5243 = vsel %vm1738, %v5242, 0.0
        %v5244 = vsel %vm1739, %v5241, 0.0
        %s5245 = sld [smem:[#allocation6 + $0x1]]
        %v5246 = vstv %s5245
        %v5247 = vmul.f32 %v5246, %v5243
        %v5248 = vmul.f32 %v5246, %v5244
        %v5249 = vadd.f32 %v5109, %v5247
        %v5250 = vadd.f32 %v5110, %v5248
        %s5251 = sld [smem:[#allocation6 + $0xa]]
        %v5252 = vstv %s5251
        %v5253 = vmul.f32 %v5252, %v5243
        %v5254 = vmul.f32 %v5252, %v5244
        %v5257 = vrot.slane %v5253, 1
        %v5258 = vrot.slane %v5254, 1
        %v5261 = vadd.f32 %v5249, %v5257
        %v5262 = vadd.f32 %v5250, %v5258
        %s5263 = sld [smem:[#allocation6 + $0x13]]
        %v5264 = vstv %s5263
        %v5265 = vmul.f32 %v5264, %v5243
        %v5266 = vmul.f32 %v5264, %v5244
        %v5269 = vrot.slane %v5265, 2
        %v5270 = vrot.slane %v5266, 2
        %v5273 = vadd.f32 %v5261, %v5269
        %v5274 = vadd.f32 %v5262, %v5270
        %s5275 = sld [smem:[#allocation6 + $0x1c]]
        %v5276 = vstv %s5275
        %v5277 = vmul.f32 %v5276, %v5243
        %v5278 = vmul.f32 %v5276, %v5244
        %v5281 = vrot.slane %v5277, 3
        %v5282 = vrot.slane %v5278, 3
        %v5285 = vadd.f32 %v5273, %v5281
        %v5286 = vadd.f32 %v5274, %v5282
        %s5287 = sld [smem:[#allocation6 + $0x25]]
        %v5288 = vstv %s5287
        %v5289 = vmul.f32 %v5288, %v5243
        %v5290 = vmul.f32 %v5288, %v5244
        %v5291 = vadd.f32 %v5151, %v5289
        %v5292 = vadd.f32 %v5152, %v5290
        %s5293 = sld [smem:[#allocation6 + $0x2e]]
        %v5294 = vstv %s5293
        %v5295 = vmul.f32 %v5294, %v5243
        %v5296 = vmul.f32 %v5294, %v5244
        %v5299 = vrot.slane %v5295, 1
        %v5300 = vrot.slane %v5296, 1
        %v5303 = vadd.f32 %v5291, %v5299
        %v5304 = vadd.f32 %v5292, %v5300
        %s5305 = sld [smem:[#allocation6 + $0x37]]
        %v5306 = vstv %s5305
        %v5307 = vmul.f32 %v5306, %v5243
        %v5308 = vmul.f32 %v5306, %v5244
        %v5311 = vrot.slane %v5307, 2
        %v5312 = vrot.slane %v5308, 2
        %v5315 = vadd.f32 %v5303, %v5311
        %v5316 = vadd.f32 %v5304, %v5312
        %s5317 = sld [smem:[#allocation6 + $0x40]]
        %v5318 = vstv %s5317
        %v5319 = vmul.f32 %v5318, %v5243
        %v5320 = vmul.f32 %v5318, %v5244
        %v5323 = vrot.slane %v5319, 3
        %v5324 = vrot.slane %v5320, 3
        %v5327 = vadd.f32 %v5315, %v5323
        %v5328 = vadd.f32 %v5316, %v5324
        %s5329 = sld [smem:[#allocation6 + $0x49]]
        %v5330 = vstv %s5329
        %v5331 = vmul.f32 %v5330, %v5243
        %v5332 = vmul.f32 %v5330, %v5244
        %v5333 = vadd.f32 %v5193, %v5331
        %v5334 = vadd.f32 %v5194, %v5332
        %s5335 = sld [smem:[#allocation6 + $0x52]]
        %v5336 = vstv %s5335
        %v5337 = vmul.f32 %v5336, %v5243
        %v5338 = vmul.f32 %v5336, %v5244
        %v5341 = vrot.slane %v5337, 1
        %v5342 = vrot.slane %v5338, 1
        %v5345 = vadd.f32 %v5333, %v5341
        %v5346 = vadd.f32 %v5334, %v5342
        %s5347 = sld [smem:[#allocation6 + $0x5b]]
        %v5348 = vstv %s5347
        %v5349 = vmul.f32 %v5348, %v5243
        %v5350 = vmul.f32 %v5348, %v5244
        %v5353 = vrot.slane %v5349, 2
        %v5354 = vrot.slane %v5350, 2
        %v5357 = vadd.f32 %v5345, %v5353
        %v5358 = vadd.f32 %v5346, %v5354
        %s5359 = sld [smem:[#allocation6 + $0x64]]
        %v5360 = vstv %s5359
        %v5361 = vmul.f32 %v5360, %v5243
        %v5362 = vmul.f32 %v5360, %v5244
        %v5365 = vrot.slane %v5361, 3
        %v5366 = vrot.slane %v5362, 3
        %v5369 = vadd.f32 %v5357, %v5365
        %v5370 = vadd.f32 %v5358, %v5366
        %s5371 = sld [smem:[#allocation6 + $0x6d]]
        %v5372 = vstv %s5371
        %v5373 = vmul.f32 %v5372, %v5243
        %v5374 = vmul.f32 %v5372, %v5244
        %v5375 = vadd.f32 %v5235, %v5373
        %v5376 = vadd.f32 %v5236, %v5374
        %s5377 = sld [smem:[#allocation6 + $0x76]]
        %v5378 = vstv %s5377
        %v5379 = vmul.f32 %v5378, %v5243
        %v5380 = vmul.f32 %v5378, %v5244
        %v5383 = vrot.slane %v5379, 1
        %v5384 = vrot.slane %v5380, 1
        %v5387 = vadd.f32 %v5375, %v5383
        %v5388 = vadd.f32 %v5376, %v5384
        %s5389 = sld [smem:[#allocation6 + $0x7f]]
        %v5390 = vstv %s5389
        %v5391 = vmul.f32 %v5390, %v5243
        %v5392 = vmul.f32 %v5390, %v5244
        %v5395 = vrot.slane %v5391, 2
        %v5396 = vrot.slane %v5392, 2
        %v5399 = vadd.f32 %v5387, %v5395
        %v5400 = vadd.f32 %v5388, %v5396
        %s5401 = sld [smem:[#allocation6 + $0x88]]
        %v5402 = vstv %s5401
        %v5403 = vmul.f32 %v5402, %v5243
        %v5404 = vmul.f32 %v5402, %v5244
        %v5407 = vrot.slane %v5403, 3
        %v5408 = vrot.slane %v5404, 3
        %v5411 = vadd.f32 %v5399, %v5407
        %v5412 = vadd.f32 %v5400, %v5408
        %5413 = vrot.lane.b32.xlu0 %v5047, 15
        %v5414 = vpop.permute.xlu0 %5413
        %5415 = vrot.lane.b32.xlu0 %v5048, 15
        %v5416 = vpop.permute.xlu0 %5415
        %v5417 = vsel %vm1914, %v5414, %v5416
        %v5418 = vsel %vm1914, %v5416, %v5414
        %v5419 = vsel %vm1921, %v5418, 0.0
        %v5420 = vsel %vm1922, %v5417, 0.0
        %s5421 = sld [smem:[#allocation6 + $0x2]]
        %v5422 = vstv %s5421
        %v5423 = vmul.f32 %v5422, %v5419
        %v5424 = vmul.f32 %v5422, %v5420
        %v5425 = vadd.f32 %v5285, %v5423
        %v5426 = vadd.f32 %v5286, %v5424
        %s5427 = sld [smem:[#allocation6 + $0xb]]
        %v5428 = vstv %s5427
        %v5429 = vmul.f32 %v5428, %v5419
        %v5430 = vmul.f32 %v5428, %v5420
        %v5433 = vrot.slane %v5429, 1
        %v5434 = vrot.slane %v5430, 1
        %v5437 = vadd.f32 %v5425, %v5433
        %v5438 = vadd.f32 %v5426, %v5434
        %s5439 = sld [smem:[#allocation6 + $0x14]]
        %v5440 = vstv %s5439
        %v5441 = vmul.f32 %v5440, %v5419
        %v5442 = vmul.f32 %v5440, %v5420
        %v5445 = vrot.slane %v5441, 2
        %v5446 = vrot.slane %v5442, 2
        %v5449 = vadd.f32 %v5437, %v5445
        %v5450 = vadd.f32 %v5438, %v5446
        %s5451 = sld [smem:[#allocation6 + $0x1d]]
        %v5452 = vstv %s5451
        %v5453 = vmul.f32 %v5452, %v5419
        %v5454 = vmul.f32 %v5452, %v5420
        %v5457 = vrot.slane %v5453, 3
        %v5458 = vrot.slane %v5454, 3
        %v5461 = vadd.f32 %v5449, %v5457
        %v5462 = vadd.f32 %v5450, %v5458
        %s5463 = sld [smem:[#allocation6 + $0x26]]
        %v5464 = vstv %s5463
        %v5465 = vmul.f32 %v5464, %v5419
        %v5466 = vmul.f32 %v5464, %v5420
        %v5467 = vadd.f32 %v5327, %v5465
        %v5468 = vadd.f32 %v5328, %v5466
        %s5469 = sld [smem:[#allocation6 + $0x2f]]
        %v5470 = vstv %s5469
        %v5471 = vmul.f32 %v5470, %v5419
        %v5472 = vmul.f32 %v5470, %v5420
        %v5475 = vrot.slane %v5471, 1
        %v5476 = vrot.slane %v5472, 1
        %v5479 = vadd.f32 %v5467, %v5475
        %v5480 = vadd.f32 %v5468, %v5476
        %s5481 = sld [smem:[#allocation6 + $0x38]]
        %v5482 = vstv %s5481
        %v5483 = vmul.f32 %v5482, %v5419
        %v5484 = vmul.f32 %v5482, %v5420
        %v5487 = vrot.slane %v5483, 2
        %v5488 = vrot.slane %v5484, 2
        %v5491 = vadd.f32 %v5479, %v5487
        %v5492 = vadd.f32 %v5480, %v5488
        %s5493 = sld [smem:[#allocation6 + $0x41]]
        %v5494 = vstv %s5493
        %v5495 = vmul.f32 %v5494, %v5419
        %v5496 = vmul.f32 %v5494, %v5420
        %v5499 = vrot.slane %v5495, 3
        %v5500 = vrot.slane %v5496, 3
        %v5503 = vadd.f32 %v5491, %v5499
        %v5504 = vadd.f32 %v5492, %v5500
        %s5505 = sld [smem:[#allocation6 + $0x4a]]
        %v5506 = vstv %s5505
        %v5507 = vmul.f32 %v5506, %v5419
        %v5508 = vmul.f32 %v5506, %v5420
        %v5509 = vadd.f32 %v5369, %v5507
        %v5510 = vadd.f32 %v5370, %v5508
        %s5511 = sld [smem:[#allocation6 + $0x53]]
        %v5512 = vstv %s5511
        %v5513 = vmul.f32 %v5512, %v5419
        %v5514 = vmul.f32 %v5512, %v5420
        %v5517 = vrot.slane %v5513, 1
        %v5518 = vrot.slane %v5514, 1
        %v5521 = vadd.f32 %v5509, %v5517
        %v5522 = vadd.f32 %v5510, %v5518
        %s5523 = sld [smem:[#allocation6 + $0x5c]]
        %v5524 = vstv %s5523
        %v5525 = vmul.f32 %v5524, %v5419
        %v5526 = vmul.f32 %v5524, %v5420
        %v5529 = vrot.slane %v5525, 2
        %v5530 = vrot.slane %v5526, 2
        %v5533 = vadd.f32 %v5521, %v5529
        %v5534 = vadd.f32 %v5522, %v5530
        %s5535 = sld [smem:[#allocation6 + $0x65]]
        %v5536 = vstv %s5535
        %v5537 = vmul.f32 %v5536, %v5419
        %v5538 = vmul.f32 %v5536, %v5420
        %v5541 = vrot.slane %v5537, 3
        %v5542 = vrot.slane %v5538, 3
        %v5545 = vadd.f32 %v5533, %v5541
        %v5546 = vadd.f32 %v5534, %v5542
        %s5547 = sld [smem:[#allocation6 + $0x6e]]
        %v5548 = vstv %s5547
        %v5549 = vmul.f32 %v5548, %v5419
        %v5550 = vmul.f32 %v5548, %v5420
        %v5551 = vadd.f32 %v5411, %v5549
        %v5552 = vadd.f32 %v5412, %v5550
        %s5553 = sld [smem:[#allocation6 + $0x77]]
        %v5554 = vstv %s5553
        %v5555 = vmul.f32 %v5554, %v5419
        %v5556 = vmul.f32 %v5554, %v5420
        %v5559 = vrot.slane %v5555, 1
        %v5560 = vrot.slane %v5556, 1
        %v5563 = vadd.f32 %v5551, %v5559
        %v5564 = vadd.f32 %v5552, %v5560
        %s5565 = sld [smem:[#allocation6 + $0x80]]
        %v5566 = vstv %s5565
        %v5567 = vmul.f32 %v5566, %v5419
        %v5568 = vmul.f32 %v5566, %v5420
        %v5571 = vrot.slane %v5567, 2
        %v5572 = vrot.slane %v5568, 2
        %v5575 = vadd.f32 %v5563, %v5571
        %v5576 = vadd.f32 %v5564, %v5572
        %s5577 = sld [smem:[#allocation6 + $0x89]]
        %v5578 = vstv %s5577
        %v5579 = vmul.f32 %v5578, %v5419
        %v5580 = vmul.f32 %v5578, %v5420
        %v5583 = vrot.slane %v5579, 3
        %v5584 = vrot.slane %v5580, 3
        %v5587 = vadd.f32 %v5575, %v5583
        %v5588 = vadd.f32 %v5576, %v5584
        %5589 = vrot.lane.b32.xlu0 %v5047, 1
        %v5590 = vpop.permute.xlu0 %5589
        %5591 = vrot.lane.b32.xlu0 %v5048, 1
        %v5592 = vpop.permute.xlu0 %5591
        %v5593 = vsel %vm2463, %v5590, %v5592
        %v5594 = vsel %vm2463, %v5592, %v5590
        %v5595 = vsel %vm2470, %v5594, 0.0
        %v5596 = vsel %vm2471, %v5593, 0.0
        %s5597 = sld [smem:[#allocation6 + $0x3]]
        %v5598 = vstv %s5597
        %v5599 = vmul.f32 %v5598, %v5595
        %v5600 = vmul.f32 %v5598, %v5596
        %v5601 = vadd.f32 %v5461, %v5599
        %v5602 = vadd.f32 %v5462, %v5600
        %s5603 = sld [smem:[#allocation6 + $0xc]]
        %v5604 = vstv %s5603
        %v5605 = vmul.f32 %v5604, %v5595
        %v5606 = vmul.f32 %v5604, %v5596
        %v5609 = vrot.slane %v5605, 1
        %v5610 = vrot.slane %v5606, 1
        %v5613 = vadd.f32 %v5601, %v5609
        %v5614 = vadd.f32 %v5602, %v5610
        %s5615 = sld [smem:[#allocation6 + $0x15]]
        %v5616 = vstv %s5615
        %v5617 = vmul.f32 %v5616, %v5595
        %v5618 = vmul.f32 %v5616, %v5596
        %v5621 = vrot.slane %v5617, 2
        %v5622 = vrot.slane %v5618, 2
        %v5625 = vadd.f32 %v5613, %v5621
        %v5626 = vadd.f32 %v5614, %v5622
        %s5627 = sld [smem:[#allocation6 + $0x1e]]
        %v5628 = vstv %s5627
        %v5629 = vmul.f32 %v5628, %v5595
        %v5630 = vmul.f32 %v5628, %v5596
        %v5633 = vrot.slane %v5629, 3
        %v5634 = vrot.slane %v5630, 3
        %v5637 = vadd.f32 %v5625, %v5633
        %v5638 = vadd.f32 %v5626, %v5634
        %s5639 = sld [smem:[#allocation6 + $0x27]]
        %v5640 = vstv %s5639
        %v5641 = vmul.f32 %v5640, %v5595
        %v5642 = vmul.f32 %v5640, %v5596
        %v5643 = vadd.f32 %v5503, %v5641
        %v5644 = vadd.f32 %v5504, %v5642
        %s5645 = sld [smem:[#allocation6 + $0x30]]
        %v5646 = vstv %s5645
        %v5647 = vmul.f32 %v5646, %v5595
        %v5648 = vmul.f32 %v5646, %v5596
        %v5651 = vrot.slane %v5647, 1
        %v5652 = vrot.slane %v5648, 1
        %v5655 = vadd.f32 %v5643, %v5651
        %v5656 = vadd.f32 %v5644, %v5652
        %s5657 = sld [smem:[#allocation6 + $0x39]]
        %v5658 = vstv %s5657
        %v5659 = vmul.f32 %v5658, %v5595
        %v5660 = vmul.f32 %v5658, %v5596
        %v5663 = vrot.slane %v5659, 2
        %v5664 = vrot.slane %v5660, 2
        %v5667 = vadd.f32 %v5655, %v5663
        %v5668 = vadd.f32 %v5656, %v5664
        %s5669 = sld [smem:[#allocation6 + $0x42]]
        %v5670 = vstv %s5669
        %v5671 = vmul.f32 %v5670, %v5595
        %v5672 = vmul.f32 %v5670, %v5596
        %v5675 = vrot.slane %v5671, 3
        %v5676 = vrot.slane %v5672, 3
        %v5679 = vadd.f32 %v5667, %v5675
        %v5680 = vadd.f32 %v5668, %v5676
        %s5681 = sld [smem:[#allocation6 + $0x4b]]
        %v5682 = vstv %s5681
        %v5683 = vmul.f32 %v5682, %v5595
        %v5684 = vmul.f32 %v5682, %v5596
        %v5685 = vadd.f32 %v5545, %v5683
        %v5686 = vadd.f32 %v5546, %v5684
        %s5687 = sld [smem:[#allocation6 + $0x54]]
        %v5688 = vstv %s5687
        %v5689 = vmul.f32 %v5688, %v5595
        %v5690 = vmul.f32 %v5688, %v5596
        %v5693 = vrot.slane %v5689, 1
        %v5694 = vrot.slane %v5690, 1
        %v5697 = vadd.f32 %v5685, %v5693
        %v5698 = vadd.f32 %v5686, %v5694
        %s5699 = sld [smem:[#allocation6 + $0x5d]]
        %v5700 = vstv %s5699
        %v5701 = vmul.f32 %v5700, %v5595
        %v5702 = vmul.f32 %v5700, %v5596
        %v5705 = vrot.slane %v5701, 2
        %v5706 = vrot.slane %v5702, 2
        %v5709 = vadd.f32 %v5697, %v5705
        %v5710 = vadd.f32 %v5698, %v5706
        %s5711 = sld [smem:[#allocation6 + $0x66]]
        %v5712 = vstv %s5711
        %v5713 = vmul.f32 %v5712, %v5595
        %v5714 = vmul.f32 %v5712, %v5596
        %v5717 = vrot.slane %v5713, 3
        %v5718 = vrot.slane %v5714, 3
        %v5721 = vadd.f32 %v5709, %v5717
        %v5722 = vadd.f32 %v5710, %v5718
        %s5723 = sld [smem:[#allocation6 + $0x6f]]
        %v5724 = vstv %s5723
        %v5725 = vmul.f32 %v5724, %v5595
        %v5726 = vmul.f32 %v5724, %v5596
        %v5727 = vadd.f32 %v5587, %v5725
        %v5728 = vadd.f32 %v5588, %v5726
        %s5729 = sld [smem:[#allocation6 + $0x78]]
        %v5730 = vstv %s5729
        %v5731 = vmul.f32 %v5730, %v5595
        %v5732 = vmul.f32 %v5730, %v5596
        %v5735 = vrot.slane %v5731, 1
        %v5736 = vrot.slane %v5732, 1
        %v5739 = vadd.f32 %v5727, %v5735
        %v5740 = vadd.f32 %v5728, %v5736
        %s5741 = sld [smem:[#allocation6 + $0x81]]
        %v5742 = vstv %s5741
        %v5743 = vmul.f32 %v5742, %v5595
        %v5744 = vmul.f32 %v5742, %v5596
        %v5747 = vrot.slane %v5743, 2
        %v5748 = vrot.slane %v5744, 2
        %v5751 = vadd.f32 %v5739, %v5747
        %v5752 = vadd.f32 %v5740, %v5748
        %s5753 = sld [smem:[#allocation6 + $0x8a]]
        %v5754 = vstv %s5753
        %v5755 = vmul.f32 %v5754, %v5595
        %v5756 = vmul.f32 %v5754, %v5596
        %v5759 = vrot.slane %v5755, 3
        %v5760 = vrot.slane %v5756, 3
        %v5763 = vadd.f32 %v5751, %v5759
        %v5764 = vadd.f32 %v5752, %v5760
        %v5765 = vsel %vm2646, %v5047, 0.0
        %v5766 = vsel %vm2647, %v5048, 0.0
        %s5767 = sld [smem:[#allocation6 + $0x4]]
        %v5768 = vstv %s5767
        %v5769 = vmul.f32 %v5768, %v5765
        %v5770 = vmul.f32 %v5768, %v5766
        %v5771 = vadd.f32 %v5637, %v5769
        %v5772 = vadd.f32 %v5638, %v5770
        %s5773 = sld [smem:[#allocation6 + $0xd]]
        %v5774 = vstv %s5773
        %v5775 = vmul.f32 %v5774, %v5765
        %v5776 = vmul.f32 %v5774, %v5766
        %v5779 = vrot.slane %v5775, 1
        %v5780 = vrot.slane %v5776, 1
        %v5783 = vadd.f32 %v5771, %v5779
        %v5784 = vadd.f32 %v5772, %v5780
        %s5785 = sld [smem:[#allocation6 + $0x16]]
        %v5786 = vstv %s5785
        %v5787 = vmul.f32 %v5786, %v5765
        %v5788 = vmul.f32 %v5786, %v5766
        %v5791 = vrot.slane %v5787, 2
        %v5792 = vrot.slane %v5788, 2
        %v5795 = vadd.f32 %v5783, %v5791
        %v5796 = vadd.f32 %v5784, %v5792
        %s5797 = sld [smem:[#allocation6 + $0x1f]]
        %v5798 = vstv %s5797
        %v5799 = vmul.f32 %v5798, %v5765
        %v5800 = vmul.f32 %v5798, %v5766
        %v5803 = vrot.slane %v5799, 3
        %v5804 = vrot.slane %v5800, 3
        %v5807 = vadd.f32 %v5795, %v5803
        %v5808 = vadd.f32 %v5796, %v5804
        %s5809 = sld [smem:[#allocation6 + $0x28]]
        %v5810 = vstv %s5809
        %v5811 = vmul.f32 %v5810, %v5765
        %v5812 = vmul.f32 %v5810, %v5766
        %v5813 = vadd.f32 %v5679, %v5811
        %v5814 = vadd.f32 %v5680, %v5812
        %s5815 = sld [smem:[#allocation6 + $0x31]]
        %v5816 = vstv %s5815
        %v5817 = vmul.f32 %v5816, %v5765
        %v5818 = vmul.f32 %v5816, %v5766
        %v5821 = vrot.slane %v5817, 1
        %v5822 = vrot.slane %v5818, 1
        %v5825 = vadd.f32 %v5813, %v5821
        %v5826 = vadd.f32 %v5814, %v5822
        %s5827 = sld [smem:[#allocation6 + $0x3a]]
        %v5828 = vstv %s5827
        %v5829 = vmul.f32 %v5828, %v5765
        %v5830 = vmul.f32 %v5828, %v5766
        %v5833 = vrot.slane %v5829, 2
        %v5834 = vrot.slane %v5830, 2
        %v5837 = vadd.f32 %v5825, %v5833
        %v5838 = vadd.f32 %v5826, %v5834
        %s5839 = sld [smem:[#allocation6 + $0x43]]
        %v5840 = vstv %s5839
        %v5841 = vmul.f32 %v5840, %v5765
        %v5842 = vmul.f32 %v5840, %v5766
        %v5845 = vrot.slane %v5841, 3
        %v5846 = vrot.slane %v5842, 3
        %v5849 = vadd.f32 %v5837, %v5845
        %v5850 = vadd.f32 %v5838, %v5846
        %s5851 = sld [smem:[#allocation6 + $0x4c]]
        %v5852 = vstv %s5851
        %v5853 = vmul.f32 %v5852, %v5765
        %v5854 = vmul.f32 %v5852, %v5766
        %v5855 = vadd.f32 %v5721, %v5853
        %v5856 = vadd.f32 %v5722, %v5854
        %s5857 = sld [smem:[#allocation6 + $0x55]]
        %v5858 = vstv %s5857
        %v5859 = vmul.f32 %v5858, %v5765
        %v5860 = vmul.f32 %v5858, %v5766
        %v5863 = vrot.slane %v5859, 1
        %v5864 = vrot.slane %v5860, 1
        %v5867 = vadd.f32 %v5855, %v5863
        %v5868 = vadd.f32 %v5856, %v5864
        %s5869 = sld [smem:[#allocation6 + $0x5e]]
        %v5870 = vstv %s5869
        %v5871 = vmul.f32 %v5870, %v5765
        %v5872 = vmul.f32 %v5870, %v5766
        %v5875 = vrot.slane %v5871, 2
        %v5876 = vrot.slane %v5872, 2
        %v5879 = vadd.f32 %v5867, %v5875
        %v5880 = vadd.f32 %v5868, %v5876
        %s5881 = sld [smem:[#allocation6 + $0x67]]
        %v5882 = vstv %s5881
        %v5883 = vmul.f32 %v5882, %v5765
        %v5884 = vmul.f32 %v5882, %v5766
        %v5887 = vrot.slane %v5883, 3
        %v5888 = vrot.slane %v5884, 3
        %v5891 = vadd.f32 %v5879, %v5887
        %v5892 = vadd.f32 %v5880, %v5888
        %s5893 = sld [smem:[#allocation6 + $0x70]]
        %v5894 = vstv %s5893
        %v5895 = vmul.f32 %v5894, %v5765
        %v5896 = vmul.f32 %v5894, %v5766
        %v5897 = vadd.f32 %v5763, %v5895
        %v5898 = vadd.f32 %v5764, %v5896
        %s5899 = sld [smem:[#allocation6 + $0x79]]
        %v5900 = vstv %s5899
        %v5901 = vmul.f32 %v5900, %v5765
        %v5902 = vmul.f32 %v5900, %v5766
        %v5905 = vrot.slane %v5901, 1
        %v5906 = vrot.slane %v5902, 1
        %v5909 = vadd.f32 %v5897, %v5905
        %v5910 = vadd.f32 %v5898, %v5906
        %s5911 = sld [smem:[#allocation6 + $0x82]]
        %v5912 = vstv %s5911
        %v5913 = vmul.f32 %v5912, %v5765
        %v5914 = vmul.f32 %v5912, %v5766
        %v5917 = vrot.slane %v5913, 2
        %v5918 = vrot.slane %v5914, 2
        %v5921 = vadd.f32 %v5909, %v5917
        %v5922 = vadd.f32 %v5910, %v5918
        %s5923 = sld [smem:[#allocation6 + $0x8b]]
        %v5924 = vstv %s5923
        %v5925 = vmul.f32 %v5924, %v5765
        %v5926 = vmul.f32 %v5924, %v5766
        %v5929 = vrot.slane %v5925, 3
        %v5930 = vrot.slane %v5926, 3
        %v5933 = vadd.f32 %v5921, %v5929
        %v5934 = vadd.f32 %v5922, %v5930
        %5935 = vrot.lane.b32.xlu0 %v5047, 127
        %v5936 = vpop.permute.xlu0 %5935
        %5937 = vrot.lane.b32.xlu0 %v5048, 127
        %v5938 = vpop.permute.xlu0 %5937
        %v5939 = vsel %vm2822, %v5936, %v5938
        %v5940 = vsel %vm2822, %v5938, %v5936
        %v5941 = vsel %vm2829, %v5939, 0.0
        %v5942 = vsel %vm2830, %v5940, 0.0
        %s5943 = sld [smem:[#allocation6 + $0x5]]
        %v5944 = vstv %s5943
        %v5945 = vmul.f32 %v5944, %v5941
        %v5946 = vmul.f32 %v5944, %v5942
        %v5947 = vadd.f32 %v5807, %v5945
        %v5948 = vadd.f32 %v5808, %v5946
        %s5949 = sld [smem:[#allocation6 + $0xe]]
        %v5950 = vstv %s5949
        %v5951 = vmul.f32 %v5950, %v5941
        %v5952 = vmul.f32 %v5950, %v5942
        %v5955 = vrot.slane %v5951, 1
        %v5956 = vrot.slane %v5952, 1
        %v5959 = vadd.f32 %v5947, %v5955
        %v5960 = vadd.f32 %v5948, %v5956
        %s5961 = sld [smem:[#allocation6 + $0x17]]
        %v5962 = vstv %s5961
        %v5963 = vmul.f32 %v5962, %v5941
        %v5964 = vmul.f32 %v5962, %v5942
        %v5967 = vrot.slane %v5963, 2
        %v5968 = vrot.slane %v5964, 2
        %v5971 = vadd.f32 %v5959, %v5967
        %v5972 = vadd.f32 %v5960, %v5968
        %s5973 = sld [smem:[#allocation6 + $0x20]]
        %v5974 = vstv %s5973
        %v5975 = vmul.f32 %v5974, %v5941
        %v5976 = vmul.f32 %v5974, %v5942
        %v5979 = vrot.slane %v5975, 3
        %v5980 = vrot.slane %v5976, 3
        %v5983 = vadd.f32 %v5971, %v5979
        %v5984 = vadd.f32 %v5972, %v5980
        %s5985 = sld [smem:[#allocation6 + $0x29]]
        %v5986 = vstv %s5985
        %v5987 = vmul.f32 %v5986, %v5941
        %v5988 = vmul.f32 %v5986, %v5942
        %v5989 = vadd.f32 %v5849, %v5987
        %v5990 = vadd.f32 %v5850, %v5988
        %s5991 = sld [smem:[#allocation6 + $0x32]]
        %v5992 = vstv %s5991
        %v5993 = vmul.f32 %v5992, %v5941
        %v5994 = vmul.f32 %v5992, %v5942
        %v5997 = vrot.slane %v5993, 1
        %v5998 = vrot.slane %v5994, 1
        %v6001 = vadd.f32 %v5989, %v5997
        %v6002 = vadd.f32 %v5990, %v5998
        %s6003 = sld [smem:[#allocation6 + $0x3b]]
        %v6004 = vstv %s6003
        %v6005 = vmul.f32 %v6004, %v5941
        %v6006 = vmul.f32 %v6004, %v5942
        %v6009 = vrot.slane %v6005, 2
        %v6010 = vrot.slane %v6006, 2
        %v6013 = vadd.f32 %v6001, %v6009
        %v6014 = vadd.f32 %v6002, %v6010
        %s6015 = sld [smem:[#allocation6 + $0x44]]
        %v6016 = vstv %s6015
        %v6017 = vmul.f32 %v6016, %v5941
        %v6018 = vmul.f32 %v6016, %v5942
        %v6021 = vrot.slane %v6017, 3
        %v6022 = vrot.slane %v6018, 3
        %v6025 = vadd.f32 %v6013, %v6021
        %v6026 = vadd.f32 %v6014, %v6022
        %s6027 = sld [smem:[#allocation6 + $0x4d]]
        %v6028 = vstv %s6027
        %v6029 = vmul.f32 %v6028, %v5941
        %v6030 = vmul.f32 %v6028, %v5942
        %v6031 = vadd.f32 %v5891, %v6029
        %v6032 = vadd.f32 %v5892, %v6030
        %s6033 = sld [smem:[#allocation6 + $0x56]]
        %v6034 = vstv %s6033
        %v6035 = vmul.f32 %v6034, %v5941
        %v6036 = vmul.f32 %v6034, %v5942
        %v6039 = vrot.slane %v6035, 1
        %v6040 = vrot.slane %v6036, 1
        %v6043 = vadd.f32 %v6031, %v6039
        %v6044 = vadd.f32 %v6032, %v6040
        %s6045 = sld [smem:[#allocation6 + $0x5f]]
        %v6046 = vstv %s6045
        %v6047 = vmul.f32 %v6046, %v5941
        %v6048 = vmul.f32 %v6046, %v5942
        %v6051 = vrot.slane %v6047, 2
        %v6052 = vrot.slane %v6048, 2
        %v6055 = vadd.f32 %v6043, %v6051
        %v6056 = vadd.f32 %v6044, %v6052
        %s6057 = sld [smem:[#allocation6 + $0x68]]
        %v6058 = vstv %s6057
        %v6059 = vmul.f32 %v6058, %v5941
        %v6060 = vmul.f32 %v6058, %v5942
        %v6063 = vrot.slane %v6059, 3
        %v6064 = vrot.slane %v6060, 3
        %v6067 = vadd.f32 %v6055, %v6063
        %v6068 = vadd.f32 %v6056, %v6064
        %s6069 = sld [smem:[#allocation6 + $0x71]]
        %v6070 = vstv %s6069
        %v6071 = vmul.f32 %v6070, %v5941
        %v6072 = vmul.f32 %v6070, %v5942
        %v6073 = vadd.f32 %v5933, %v6071
        %v6074 = vadd.f32 %v5934, %v6072
        %s6075 = sld [smem:[#allocation6 + $0x7a]]
        %v6076 = vstv %s6075
        %v6077 = vmul.f32 %v6076, %v5941
        %v6078 = vmul.f32 %v6076, %v5942
        %v6081 = vrot.slane %v6077, 1
        %v6082 = vrot.slane %v6078, 1
        %v6085 = vadd.f32 %v6073, %v6081
        %v6086 = vadd.f32 %v6074, %v6082
        %s6087 = sld [smem:[#allocation6 + $0x83]]
        %v6088 = vstv %s6087
        %v6089 = vmul.f32 %v6088, %v5941
        %v6090 = vmul.f32 %v6088, %v5942
        %v6093 = vrot.slane %v6089, 2
        %v6094 = vrot.slane %v6090, 2
        %v6097 = vadd.f32 %v6085, %v6093
        %v6098 = vadd.f32 %v6086, %v6094
        %s6099 = sld [smem:[#allocation6 + $0x8c]]
        %v6100 = vstv %s6099
        %v6101 = vmul.f32 %v6100, %v5941
        %v6102 = vmul.f32 %v6100, %v5942
        %v6105 = vrot.slane %v6101, 3
        %v6106 = vrot.slane %v6102, 3
        %v6109 = vadd.f32 %v6097, %v6105
        %v6110 = vadd.f32 %v6098, %v6106
        %6111 = vrot.lane.b32.xlu0 %v5047, 113
        %v6112 = vpop.permute.xlu0 %6111
        %6113 = vrot.lane.b32.xlu0 %v5048, 113
        %v6114 = vpop.permute.xlu0 %6113
        %v6115 = vsel %vm3371, %v6112, %v6114
        %v6116 = vsel %vm3371, %v6114, %v6112
        %v6117 = vsel %vm3378, %v6115, 0.0
        %v6118 = vsel %vm3379, %v6116, 0.0
        %s6119 = sld [smem:[#allocation6 + $0x6]]
        %v6120 = vstv %s6119
        %v6121 = vmul.f32 %v6120, %v6117
        %v6122 = vmul.f32 %v6120, %v6118
        %v6123 = vadd.f32 %v5983, %v6121
        %v6124 = vadd.f32 %v5984, %v6122
        %s6125 = sld [smem:[#allocation6 + $0xf]]
        %v6126 = vstv %s6125
        %v6127 = vmul.f32 %v6126, %v6117
        %v6128 = vmul.f32 %v6126, %v6118
        %v6131 = vrot.slane %v6127, 1
        %v6132 = vrot.slane %v6128, 1
        %v6135 = vadd.f32 %v6123, %v6131
        %v6136 = vadd.f32 %v6124, %v6132
        %s6137 = sld [smem:[#allocation6 + $0x18]]
        %v6138 = vstv %s6137
        %v6139 = vmul.f32 %v6138, %v6117
        %v6140 = vmul.f32 %v6138, %v6118
        %v6143 = vrot.slane %v6139, 2
        %v6144 = vrot.slane %v6140, 2
        %v6147 = vadd.f32 %v6135, %v6143
        %v6148 = vadd.f32 %v6136, %v6144
        %s6149 = sld [smem:[#allocation6 + $0x21]]
        %v6150 = vstv %s6149
        %v6151 = vmul.f32 %v6150, %v6117
        %v6152 = vmul.f32 %v6150, %v6118
        %v6155 = vrot.slane %v6151, 3
        %v6156 = vrot.slane %v6152, 3
        %v6159 = vadd.f32 %v6147, %v6155
        %v6160 = vadd.f32 %v6148, %v6156
        %s6161 = sld [smem:[#allocation6 + $0x2a]]
        %v6162 = vstv %s6161
        %v6163 = vmul.f32 %v6162, %v6117
        %v6164 = vmul.f32 %v6162, %v6118
        %v6165 = vadd.f32 %v6025, %v6163
        %v6166 = vadd.f32 %v6026, %v6164
        %s6167 = sld [smem:[#allocation6 + $0x33]]
        %v6168 = vstv %s6167
        %v6169 = vmul.f32 %v6168, %v6117
        %v6170 = vmul.f32 %v6168, %v6118
        %v6173 = vrot.slane %v6169, 1
        %v6174 = vrot.slane %v6170, 1
        %v6177 = vadd.f32 %v6165, %v6173
        %v6178 = vadd.f32 %v6166, %v6174
        %s6179 = sld [smem:[#allocation6 + $0x3c]]
        %v6180 = vstv %s6179
        %v6181 = vmul.f32 %v6180, %v6117
        %v6182 = vmul.f32 %v6180, %v6118
        %v6185 = vrot.slane %v6181, 2
        %v6186 = vrot.slane %v6182, 2
        %v6189 = vadd.f32 %v6177, %v6185
        %v6190 = vadd.f32 %v6178, %v6186
        %s6191 = sld [smem:[#allocation6 + $0x45]]
        %v6192 = vstv %s6191
        %v6193 = vmul.f32 %v6192, %v6117
        %v6194 = vmul.f32 %v6192, %v6118
        %v6197 = vrot.slane %v6193, 3
        %v6198 = vrot.slane %v6194, 3
        %v6201 = vadd.f32 %v6189, %v6197
        %v6202 = vadd.f32 %v6190, %v6198
        %s6203 = sld [smem:[#allocation6 + $0x4e]]
        %v6204 = vstv %s6203
        %v6205 = vmul.f32 %v6204, %v6117
        %v6206 = vmul.f32 %v6204, %v6118
        %v6207 = vadd.f32 %v6067, %v6205
        %v6208 = vadd.f32 %v6068, %v6206
        %s6209 = sld [smem:[#allocation6 + $0x57]]
        %v6210 = vstv %s6209
        %v6211 = vmul.f32 %v6210, %v6117
        %v6212 = vmul.f32 %v6210, %v6118
        %v6215 = vrot.slane %v6211, 1
        %v6216 = vrot.slane %v6212, 1
        %v6219 = vadd.f32 %v6207, %v6215
        %v6220 = vadd.f32 %v6208, %v6216
        %s6221 = sld [smem:[#allocation6 + $0x60]]
        %v6222 = vstv %s6221
        %v6223 = vmul.f32 %v6222, %v6117
        %v6224 = vmul.f32 %v6222, %v6118
        %v6227 = vrot.slane %v6223, 2
        %v6228 = vrot.slane %v6224, 2
        %v6231 = vadd.f32 %v6219, %v6227
        %v6232 = vadd.f32 %v6220, %v6228
        %s6233 = sld [smem:[#allocation6 + $0x69]]
        %v6234 = vstv %s6233
        %v6235 = vmul.f32 %v6234, %v6117
        %v6236 = vmul.f32 %v6234, %v6118
        %v6239 = vrot.slane %v6235, 3
        %v6240 = vrot.slane %v6236, 3
        %v6243 = vadd.f32 %v6231, %v6239
        %v6244 = vadd.f32 %v6232, %v6240
        %s6245 = sld [smem:[#allocation6 + $0x72]]
        %v6246 = vstv %s6245
        %v6247 = vmul.f32 %v6246, %v6117
        %v6248 = vmul.f32 %v6246, %v6118
        %v6249 = vadd.f32 %v6109, %v6247
        %v6250 = vadd.f32 %v6110, %v6248
        %s6251 = sld [smem:[#allocation6 + $0x7b]]
        %v6252 = vstv %s6251
        %v6253 = vmul.f32 %v6252, %v6117
        %v6254 = vmul.f32 %v6252, %v6118
        %v6257 = vrot.slane %v6253, 1
        %v6258 = vrot.slane %v6254, 1
        %v6261 = vadd.f32 %v6249, %v6257
        %v6262 = vadd.f32 %v6250, %v6258
        %s6263 = sld [smem:[#allocation6 + $0x84]]
        %v6264 = vstv %s6263
        %v6265 = vmul.f32 %v6264, %v6117
        %v6266 = vmul.f32 %v6264, %v6118
        %v6269 = vrot.slane %v6265, 2
        %v6270 = vrot.slane %v6266, 2
        %v6273 = vadd.f32 %v6261, %v6269
        %v6274 = vadd.f32 %v6262, %v6270
        %s6275 = sld [smem:[#allocation6 + $0x8d]]
        %v6276 = vstv %s6275
        %v6277 = vmul.f32 %v6276, %v6117
        %v6278 = vmul.f32 %v6276, %v6118
        %v6281 = vrot.slane %v6277, 3
        %v6282 = vrot.slane %v6278, 3
        %v6285 = vadd.f32 %v6273, %v6281
        %v6286 = vadd.f32 %v6274, %v6282
        %6287 = vrot.lane.b32.xlu0 %v5047, 112
        %v6288 = vpop.permute.xlu0 %6287
        %6289 = vrot.lane.b32.xlu0 %v5048, 112
        %v6290 = vpop.permute.xlu0 %6289
        %v6291 = vsel %vm3554, %v6288, %v6290
        %v6292 = vsel %vm3554, %v6290, %v6288
        %v6293 = vsel %vm3561, %v6291, 0.0
        %v6294 = vsel %vm3562, %v6292, 0.0
        %s6295 = sld [smem:[#allocation6 + $0x7]]
        %v6296 = vstv %s6295
        %v6297 = vmul.f32 %v6296, %v6293
        %v6298 = vmul.f32 %v6296, %v6294
        %v6299 = vadd.f32 %v6159, %v6297
        %v6300 = vadd.f32 %v6160, %v6298
        %s6301 = sld [smem:[#allocation6 + $0x10]]
        %v6302 = vstv %s6301
        %v6303 = vmul.f32 %v6302, %v6293
        %v6304 = vmul.f32 %v6302, %v6294
        %v6307 = vrot.slane %v6303, 1
        %v6308 = vrot.slane %v6304, 1
        %v6311 = vadd.f32 %v6299, %v6307
        %v6312 = vadd.f32 %v6300, %v6308
        %s6313 = sld [smem:[#allocation6 + $0x19]]
        %v6314 = vstv %s6313
        %v6315 = vmul.f32 %v6314, %v6293
        %v6316 = vmul.f32 %v6314, %v6294
        %v6319 = vrot.slane %v6315, 2
        %v6320 = vrot.slane %v6316, 2
        %v6323 = vadd.f32 %v6311, %v6319
        %v6324 = vadd.f32 %v6312, %v6320
        %s6325 = sld [smem:[#allocation6 + $0x22]]
        %v6326 = vstv %s6325
        %v6327 = vmul.f32 %v6326, %v6293
        %v6328 = vmul.f32 %v6326, %v6294
        %v6331 = vrot.slane %v6327, 3
        %v6332 = vrot.slane %v6328, 3
        %v6335 = vadd.f32 %v6323, %v6331
        %v6336 = vadd.f32 %v6324, %v6332
        %s6337 = sld [smem:[#allocation6 + $0x2b]]
        %v6338 = vstv %s6337
        %v6339 = vmul.f32 %v6338, %v6293
        %v6340 = vmul.f32 %v6338, %v6294
        %v6341 = vadd.f32 %v6201, %v6339
        %v6342 = vadd.f32 %v6202, %v6340
        %s6343 = sld [smem:[#allocation6 + $0x34]]
        %v6344 = vstv %s6343
        %v6345 = vmul.f32 %v6344, %v6293
        %v6346 = vmul.f32 %v6344, %v6294
        %v6349 = vrot.slane %v6345, 1
        %v6350 = vrot.slane %v6346, 1
        %v6353 = vadd.f32 %v6341, %v6349
        %v6354 = vadd.f32 %v6342, %v6350
        %s6355 = sld [smem:[#allocation6 + $0x3d]]
        %v6356 = vstv %s6355
        %v6357 = vmul.f32 %v6356, %v6293
        %v6358 = vmul.f32 %v6356, %v6294
        %v6361 = vrot.slane %v6357, 2
        %v6362 = vrot.slane %v6358, 2
        %v6365 = vadd.f32 %v6353, %v6361
        %v6366 = vadd.f32 %v6354, %v6362
        %s6367 = sld [smem:[#allocation6 + $0x46]]
        %v6368 = vstv %s6367
        %v6369 = vmul.f32 %v6368, %v6293
        %v6370 = vmul.f32 %v6368, %v6294
        %v6373 = vrot.slane %v6369, 3
        %v6374 = vrot.slane %v6370, 3
        %v6377 = vadd.f32 %v6365, %v6373
        %v6378 = vadd.f32 %v6366, %v6374
        %s6379 = sld [smem:[#allocation6 + $0x4f]]
        %v6380 = vstv %s6379
        %v6381 = vmul.f32 %v6380, %v6293
        %v6382 = vmul.f32 %v6380, %v6294
        %v6383 = vadd.f32 %v6243, %v6381
        %v6384 = vadd.f32 %v6244, %v6382
        %s6385 = sld [smem:[#allocation6 + $0x58]]
        %v6386 = vstv %s6385
        %v6387 = vmul.f32 %v6386, %v6293
        %v6388 = vmul.f32 %v6386, %v6294
        %v6391 = vrot.slane %v6387, 1
        %v6392 = vrot.slane %v6388, 1
        %v6395 = vadd.f32 %v6383, %v6391
        %v6396 = vadd.f32 %v6384, %v6392
        %s6397 = sld [smem:[#allocation6 + $0x61]]
        %v6398 = vstv %s6397
        %v6399 = vmul.f32 %v6398, %v6293
        %v6400 = vmul.f32 %v6398, %v6294
        %v6403 = vrot.slane %v6399, 2
        %v6404 = vrot.slane %v6400, 2
        %v6407 = vadd.f32 %v6395, %v6403
        %v6408 = vadd.f32 %v6396, %v6404
        %s6409 = sld [smem:[#allocation6 + $0x6a]]
        %v6410 = vstv %s6409
        %v6411 = vmul.f32 %v6410, %v6293
        %v6412 = vmul.f32 %v6410, %v6294
        %v6415 = vrot.slane %v6411, 3
        %v6416 = vrot.slane %v6412, 3
        %v6419 = vadd.f32 %v6407, %v6415
        %v6420 = vadd.f32 %v6408, %v6416
        %s6421 = sld [smem:[#allocation6 + $0x73]]
        %v6422 = vstv %s6421
        %v6423 = vmul.f32 %v6422, %v6293
        %v6424 = vmul.f32 %v6422, %v6294
        %v6425 = vadd.f32 %v6285, %v6423
        %v6426 = vadd.f32 %v6286, %v6424
        %s6427 = sld [smem:[#allocation6 + $0x7c]]
        %v6428 = vstv %s6427
        %v6429 = vmul.f32 %v6428, %v6293
        %v6430 = vmul.f32 %v6428, %v6294
        %v6433 = vrot.slane %v6429, 1
        %v6434 = vrot.slane %v6430, 1
        %v6437 = vadd.f32 %v6425, %v6433
        %v6438 = vadd.f32 %v6426, %v6434
        %s6439 = sld [smem:[#allocation6 + $0x85]]
        %v6440 = vstv %s6439
        %v6441 = vmul.f32 %v6440, %v6293
        %v6442 = vmul.f32 %v6440, %v6294
        %v6445 = vrot.slane %v6441, 2
        %v6446 = vrot.slane %v6442, 2
        %v6449 = vadd.f32 %v6437, %v6445
        %v6450 = vadd.f32 %v6438, %v6446
        %s6451 = sld [smem:[#allocation6 + $0x8e]]
        %v6452 = vstv %s6451
        %v6453 = vmul.f32 %v6452, %v6293
        %v6454 = vmul.f32 %v6452, %v6294
        %v6457 = vrot.slane %v6453, 3
        %v6458 = vrot.slane %v6454, 3
        %v6461 = vadd.f32 %v6449, %v6457
        %v6462 = vadd.f32 %v6450, %v6458
        %6463 = vrot.lane.b32.xlu0 %v5047, 111
        %v6464 = vpop.permute.xlu0 %6463
        %6465 = vrot.lane.b32.xlu0 %v5048, 111
        %v6466 = vpop.permute.xlu0 %6465
        %v6467 = vsel %vm3737, %v6464, %v6466
        %v6468 = vsel %vm3737, %v6466, %v6464
        %v6469 = vsel %vm3744, %v6467, 0.0
        %v6470 = vsel %vm3745, %v6468, 0.0
        %s6471 = sld [smem:[#allocation6 + $0x8]]
        %v6472 = vstv %s6471
        %v6473 = vmul.f32 %v6472, %v6469
        %v6474 = vmul.f32 %v6472, %v6470
        %v6475 = vadd.f32 %v6335, %v6473
        %v6476 = vadd.f32 %v6336, %v6474
        %s6477 = sld [smem:[#allocation6 + $0x11]]
        %v6478 = vstv %s6477
        %v6479 = vmul.f32 %v6478, %v6469
        %v6480 = vmul.f32 %v6478, %v6470
        %v6483 = vrot.slane %v6479, 1
        %v6484 = vrot.slane %v6480, 1
        %v6487 = vadd.f32 %v6475, %v6483
        %v6488 = vadd.f32 %v6476, %v6484
        %s6489 = sld [smem:[#allocation6 + $0x1a]]
        %v6490 = vstv %s6489
        %v6491 = vmul.f32 %v6490, %v6469
        %v6492 = vmul.f32 %v6490, %v6470
        %v6495 = vrot.slane %v6491, 2
        %v6496 = vrot.slane %v6492, 2
        %v6499 = vadd.f32 %v6487, %v6495
        %v6500 = vadd.f32 %v6488, %v6496
        %s6501 = sld [smem:[#allocation6 + $0x23]]
        %v6502 = vstv %s6501
        %v6503 = vmul.f32 %v6502, %v6469
        %v6504 = vmul.f32 %v6502, %v6470
        %v6507 = vrot.slane %v6503, 3
        %v6508 = vrot.slane %v6504, 3
        %v6511 = vadd.f32 %v6499, %v6507
        %v6512 = vadd.f32 %v6500, %v6508
        %s6513 = sld [smem:[#allocation6 + $0x2c]]
        %v6514 = vstv %s6513
        %v6515 = vmul.f32 %v6514, %v6469
        %v6516 = vmul.f32 %v6514, %v6470
        %v6517 = vadd.f32 %v6377, %v6515
        %v6518 = vadd.f32 %v6378, %v6516
        %s6519 = sld [smem:[#allocation6 + $0x35]]
        %v6520 = vstv %s6519
        %v6521 = vmul.f32 %v6520, %v6469
        %v6522 = vmul.f32 %v6520, %v6470
        %v6525 = vrot.slane %v6521, 1
        %v6526 = vrot.slane %v6522, 1
        %v6529 = vadd.f32 %v6517, %v6525
        %v6530 = vadd.f32 %v6518, %v6526
        %s6531 = sld [smem:[#allocation6 + $0x3e]]
        %v6532 = vstv %s6531
        %v6533 = vmul.f32 %v6532, %v6469
        %v6534 = vmul.f32 %v6532, %v6470
        %v6537 = vrot.slane %v6533, 2
        %v6538 = vrot.slane %v6534, 2
        %v6541 = vadd.f32 %v6529, %v6537
        %v6542 = vadd.f32 %v6530, %v6538
        %s6543 = sld [smem:[#allocation6 + $0x47]]
        %v6544 = vstv %s6543
        %v6545 = vmul.f32 %v6544, %v6469
        %v6546 = vmul.f32 %v6544, %v6470
        %v6549 = vrot.slane %v6545, 3
        %v6550 = vrot.slane %v6546, 3
        %v6553 = vadd.f32 %v6541, %v6549
        %v6554 = vadd.f32 %v6542, %v6550
        %s6555 = sld [smem:[#allocation6 + $0x50]]
        %v6556 = vstv %s6555
        %v6557 = vmul.f32 %v6556, %v6469
        %v6558 = vmul.f32 %v6556, %v6470
        %v6559 = vadd.f32 %v6419, %v6557
        %v6560 = vadd.f32 %v6420, %v6558
        %s6561 = sld [smem:[#allocation6 + $0x59]]
        %v6562 = vstv %s6561
        %v6563 = vmul.f32 %v6562, %v6469
        %v6564 = vmul.f32 %v6562, %v6470
        %v6567 = vrot.slane %v6563, 1
        %v6568 = vrot.slane %v6564, 1
        %v6571 = vadd.f32 %v6559, %v6567
        %v6572 = vadd.f32 %v6560, %v6568
        %s6573 = sld [smem:[#allocation6 + $0x62]]
        %v6574 = vstv %s6573
        %v6575 = vmul.f32 %v6574, %v6469
        %v6576 = vmul.f32 %v6574, %v6470
        %v6579 = vrot.slane %v6575, 2
        %v6580 = vrot.slane %v6576, 2
        %v6583 = vadd.f32 %v6571, %v6579
        %v6584 = vadd.f32 %v6572, %v6580
        %s6585 = sld [smem:[#allocation6 + $0x6b]]
        %v6586 = vstv %s6585
        %v6587 = vmul.f32 %v6586, %v6469
        %v6588 = vmul.f32 %v6586, %v6470
        %v6591 = vrot.slane %v6587, 3
        %v6592 = vrot.slane %v6588, 3
        %v6595 = vadd.f32 %v6583, %v6591
        %v6596 = vadd.f32 %v6584, %v6592
        %s6597 = sld [smem:[#allocation6 + $0x74]]
        %v6598 = vstv %s6597
        %v6599 = vmul.f32 %v6598, %v6469
        %v6600 = vmul.f32 %v6598, %v6470
        %v6601 = vadd.f32 %v6461, %v6599
        %v6602 = vadd.f32 %v6462, %v6600
        %s6603 = sld [smem:[#allocation6 + $0x7d]]
        %v6604 = vstv %s6603
        %v6605 = vmul.f32 %v6604, %v6469
        %v6606 = vmul.f32 %v6604, %v6470
        %v6609 = vrot.slane %v6605, 1
        %v6610 = vrot.slane %v6606, 1
        %v6613 = vadd.f32 %v6601, %v6609
        %v6614 = vadd.f32 %v6602, %v6610
        %s6615 = sld [smem:[#allocation6 + $0x86]]
        %v6616 = vstv %s6615
        %v6617 = vmul.f32 %v6616, %v6469
        %v6618 = vmul.f32 %v6616, %v6470
        %v6621 = vrot.slane %v6617, 2
        %v6622 = vrot.slane %v6618, 2
        %v6625 = vadd.f32 %v6613, %v6621
        %v6626 = vadd.f32 %v6614, %v6622
        %s6627 = sld [smem:[#allocation6 + $0x8f]]
        %v6628 = vstv %s6627
        %v6629 = vmul.f32 %v6628, %v6469
        %v6630 = vmul.f32 %v6628, %v6470
        %v6633 = vrot.slane %v6629, 3
        %v6634 = vrot.slane %v6630, 3
        %v6637 = vadd.f32 %v6625, %v6633
        %v6638 = vadd.f32 %v6626, %v6634
        %v6639 = vmax.f32 %v6511, 0.0
        %v6640 = vmax.f32 %v6512, 0.0
        %v6641 = vmax.f32 %v6553, 0.0
        %v6642 = vmax.f32 %v6554, 0.0
        %v6643 = vmax.f32 %v6595, 0.0
        %v6644 = vmax.f32 %v6596, 0.0
        %v6645 = vmax.f32 %v6637, 0.0
        %v6646 = vmax.f32 %v6638, 0.0
        %s6647 = sld [smem:[#allocation10]]
        %v6648 = vstv %s6647
        %v6649 = vadd.f32 %v6648, 0.0
        %s6650 = sld [smem:[#allocation9]]
        %v6651 = vstv %s6650
        %v6652 = vmul.f32 %v6651, %v6639
        %v6653 = vmul.f32 %v6651, %v6640
        %v6654 = vadd.f32 %v6649, %v6652
        %v6655 = vadd.f32 %v6649, %v6653
        %s6656 = sld [smem:[#allocation9 + $0x1]]
        %v6657 = vstv %s6656
        %v6658 = vmul.f32 %v6657, %v6641
        %v6659 = vmul.f32 %v6657, %v6642
        %v6660 = vadd.f32 %v6654, %v6658
        %v6661 = vadd.f32 %v6655, %v6659
        %s6662 = sld [smem:[#allocation9 + $0x2]]
        %v6663 = vstv %s6662
        %v6664 = vmul.f32 %v6663, %v6643
        %v6665 = vmul.f32 %v6663, %v6644
        %v6666 = vadd.f32 %v6660, %v6664
        %v6667 = vadd.f32 %v6661, %v6665
        %s6668 = sld [smem:[#allocation9 + $0x3]]
        %v6669 = vstv %s6668
        %v6670 = vmul.f32 %v6669, %v6645
        %v6671 = vmul.f32 %v6669, %v6646
        %v6672 = vadd.f32 %v6666, %v6670
        %v6673 = vadd.f32 %v6667, %v6671
        %v6674 = vxor.u32 %v6672, 2147483648
        %v6675 = vxor.u32 %v6673, 2147483648
        %v6676 = vmul.f32 %v6674, 1.442695
        %v6677 = vpow.pop %v6676
        %v6678 = vmul.f32 %v6675, 1.442695
        %v6679 = vpow.pop %v6678
        %v6680 = vadd.f32 %v6677, 1.0
        %v6681 = vadd.f32 %v6679, 1.0
        %v6682 = vrcp.pop %v6680
        %v6683 = vmul.f32 1.0, %v6682
        %v6684 = vrcp.pop %v6681
        %v6685 = vmul.f32 1.0, %v6684
        %s6686 = sld [smem:[#allocation10 + $0x1]]
        %v6687 = vstv %s6686
        %v6688 = vadd.f32 %v6687, 0.0
        %s6689 = sld [smem:[#allocation9 + $0x4]]
        %v6690 = vstv %s6689
        %v6691 = vmul.f32 %v6690, %v6639
        %v6692 = vmul.f32 %v6690, %v6640
        %v6693 = vadd.f32 %v6688, %v6691
        %v6694 = vadd.f32 %v6688, %v6692
        %s6695 = sld [smem:[#allocation9 + $0x5]]
        %v6696 = vstv %s6695
        %v6697 = vmul.f32 %v6696, %v6641
        %v6698 = vmul.f32 %v6696, %v6642
        %v6699 = vadd.f32 %v6693, %v6697
        %v6700 = vadd.f32 %v6694, %v6698
        %s6701 = sld [smem:[#allocation9 + $0x6]]
        %v6702 = vstv %s6701
        %v6703 = vmul.f32 %v6702, %v6643
        %v6704 = vmul.f32 %v6702, %v6644
        %v6705 = vadd.f32 %v6699, %v6703
        %v6706 = vadd.f32 %v6700, %v6704
        %s6707 = sld [smem:[#allocation9 + $0x7]]
        %v6708 = vstv %s6707
        %v6709 = vmul.f32 %v6708, %v6645
        %v6710 = vmul.f32 %v6708, %v6646
        %v6711 = vadd.f32 %v6705, %v6709
        %v6712 = vadd.f32 %v6706, %v6710
        %v6713 = vxor.u32 %v6711, 2147483648
        %v6714 = vxor.u32 %v6712, 2147483648
        %v6715 = vmul.f32 %v6713, 1.442695
        %v6716 = vpow.pop %v6715
        %v6717 = vmul.f32 %v6714, 1.442695
        %v6718 = vpow.pop %v6717
        %v6719 = vadd.f32 %v6716, 1.0
        %v6720 = vadd.f32 %v6718, 1.0
        %v6721 = vrcp.pop %v6719
        %v6722 = vmul.f32 1.0, %v6721
        %v6723 = vrcp.pop %v6720
        %v6724 = vmul.f32 1.0, %v6723
        %s6725 = sld [smem:[#allocation10 + $0x2]]
        %v6726 = vstv %s6725
        %v6727 = vadd.f32 %v6726, 0.0
        %s6728 = sld [smem:[#allocation9 + $0x8]]
        %v6729 = vstv %s6728
        %v6730 = vmul.f32 %v6729, %v6639
        %v6731 = vmul.f32 %v6729, %v6640
        %v6732 = vadd.f32 %v6727, %v6730
        %v6733 = vadd.f32 %v6727, %v6731
        %s6734 = sld [smem:[#allocation9 + $0x9]]
        %v6735 = vstv %s6734
        %v6736 = vmul.f32 %v6735, %v6641
        %v6737 = vmul.f32 %v6735, %v6642
        %v6738 = vadd.f32 %v6732, %v6736
        %v6739 = vadd.f32 %v6733, %v6737
        %s6740 = sld [smem:[#allocation9 + $0xa]]
        %v6741 = vstv %s6740
        %v6742 = vmul.f32 %v6741, %v6643
        %v6743 = vmul.f32 %v6741, %v6644
        %v6744 = vadd.f32 %v6738, %v6742
        %v6745 = vadd.f32 %v6739, %v6743
        %s6746 = sld [smem:[#allocation9 + $0xb]]
        %v6747 = vstv %s6746
        %v6748 = vmul.f32 %v6747, %v6645
        %v6749 = vmul.f32 %v6747, %v6646
        %v6750 = vadd.f32 %v6744, %v6748
        %v6751 = vadd.f32 %v6745, %v6749
        %v6752 = vxor.u32 %v6750, 2147483648
        %v6753 = vxor.u32 %v6751, 2147483648
        %v6754 = vmul.f32 %v6752, 1.442695
        %v6755 = vpow.pop %v6754
        %v6756 = vmul.f32 %v6753, 1.442695
        %v6757 = vpow.pop %v6756
        %v6758 = vadd.f32 %v6755, 1.0
        %v6759 = vadd.f32 %v6757, 1.0
        %v6760 = vrcp.pop %v6758
        %v6761 = vmul.f32 1.0, %v6760
        %v6762 = vrcp.pop %v6759
        %v6763 = vmul.f32 1.0, %v6762
        %v6764 = vmax.f32 %v356, 0.0
        %v6765 = vsub.f32 %v356, 1.0
        %v6766 = vmax.f32 %v6765, 0.0
        %v6767 = vsub.f32 %v6764, %v6766
        %v6768 = vlaneseq
        %v6769 = vshrl.u32 %v6768, 7
        %v6770 = vsub.s32 0, %v6769
        %v6771 = vrot.slane %v6683, %v6770
        %v6772 = vlaneseq
        %v6773 = vshrl.u32 %v6772, 7
        %v6774 = vsub.s32 0, %v6773
        %v6775 = vrot.slane %v6685, %v6774
        %v6777 = vcombine.high %v6767, %v6767
        %v6779 = vmul.f32 %v6771, %v6767
        %v6780 = vmul.f32 %v6775, %v6777
        %v6781 = vsub.f32 1.0, %v6767
        %v6783 = vcombine.high %v6781, %v6781
        %v6785 = vmul.f32 %v6779, %v6781
        %v6786 = vmul.f32 %v6780, %v6783
        %v6789 = vcombine.low %v6785, %v6786
        %v6791 = vadd.f32 %v6767, %v6789
        %v6792 = vlaneseq
        %v6793 = vshrl.u32 %v6792, 7
        %v6794 = vsub.s32 0, %v6793
        %v6795 = vrot.slane %v6722, %v6794
        %v6796 = vlaneseq
        %v6797 = vshrl.u32 %v6796, 7
        %v6798 = vsub.s32 0, %v6797
        %v6799 = vrot.slane %v6724, %v6798
        %v6801 = vcombine.high %v6791, %v6791
        %v6803 = vmul.f32 %v6795, %v6791
        %v6804 = vmul.f32 %v6799, %v6801
        %v6805 = vsub.f32 1.0, %v6791
        %v6807 = vcombine.high %v6805, %v6805
        %v6809 = vmul.f32 %v6803, %v6805
        %v6810 = vmul.f32 %v6804, %v6807
        %v6813 = vcombine.low %v6809, %v6810
        %v6815 = vadd.f32 %v6791, %v6813
        %v6816 = vlaneseq
        %v6817 = vshrl.u32 %v6816, 7
        %v6818 = vsub.s32 0, %v6817
        %v6819 = vrot.slane %v6761, %v6818
        %v6820 = vlaneseq
        %v6821 = vshrl.u32 %v6820, 7
        %v6822 = vsub.s32 0, %v6821
        %v6823 = vrot.slane %v6763, %v6822
        %v6825 = vcombine.high %v6815, %v6815
        %v6827 = vmul.f32 %v6819, %v6815
        %v6828 = vmul.f32 %v6823, %v6825
        %v6829 = vsub.f32 1.0, %v6815
        %v6831 = vcombine.high %v6829, %v6829
        %v6833 = vmul.f32 %v6827, %v6829
        %v6834 = vmul.f32 %v6828, %v6831
        %v6837 = vcombine.low %v6833, %v6834
        %v6839 = vadd.f32 %v6815, %v6837
        %6840 = vst [vmem:[%s355] sm:$0xff] %v6839
        %p6841 = scmp.lt.s32.totalorder %s22, 1
        %s6842 = scalar_select %p6841, %s22, 1
        %s6843 = smul.addr %s6842, 2
        %s6844 = smul.addr %s6843, 4
        %s6845 = scalar_lea.vmem %s7, %s6844
        // Predicated region
        $region73: #{curve_ca_layer.1} parent=47 // pred_check
          %p6846 = pneg %p192
        $region74: #{curve_ca_layer.1} parent=47 // pred_check_branch
          %6848 = sbr.rel (%p6846) target = $region76
        $region75: #{curve_ca_layer.1} parent=47 // pred_region
          _
        $region76: #{curve_ca_layer.1} parent=47 // pred_fallthru
          _
      $region48: #{curve_ca_layer.1} parent=5 // pred_fallthru
        _
      %p6849 = scmp.le.s32.totalorder 2, %s17
      // Predicated region
      $region77: #{curve_ca_layer.1} parent=5 // pred_check
        %p6850 = pneg %p6849
      $region78: #{curve_ca_layer.1} parent=5 // pred_check_branch
        %6852 = sbr.rel (%p6850) target = $region80
      $region79: #{curve_ca_layer.1} parent=5 // pred_region
        %s6853 = ssub.s32 %s17, 2
        // Predicated region
        $region81: #{curve_ca_layer.1} parent=79 // pred_check
          %p6854 = pneg %p198
        $region82: #{curve_ca_layer.1} parent=79 // pred_check_branch
          %6856 = sbr.rel (%p6854) target = $region84
        $region83: #{curve_ca_layer.1} parent=79 // pred_region
          %p6857 = scmp.lt.s32.totalorder %s23, 1
          %s6858 = scalar_select %p6857, %s23, 1
          %s6859 = smul.addr %s6858, 2
          %s6860 = smul.addr %s6859, 4
          %s6861 = scalar_lea.vmem %s7, %s6860
        $region84: #{curve_ca_layer.1} parent=79 // pred_fallthru
          _
      $region80: #{curve_ca_layer.1} parent=5 // pred_fallthru
        _
    $region6: #{curve_ca_layer.1} parent=1 // loop_footer
      %s21 = sadd.s32 1, %s17
    $region7: #{curve_ca_layer.1} parent=1 // loop_footer_branch
      %16 = sbr.rel target = $region3
    $region8: #{curve_ca_layer.1} parent=1 // loop_exit
      _
    %6862 = vsyncpa [#allocation3], 1
    %s6863 = scalar_lea.sflag [#allocation3], 1
    %6864 = vsyncpa %s6863, 1
    %6865 = vsyncpa [#allocation5], 1
    %6866 = vsyncpa [#allocation8], 1
    %6867 = vsyncpa [#allocation11], 1

</llo_original>
